<compile_context>
chip_gen: v7x
topology: tpu7x:2x2x1
jax: 0.10.0
libtpu: 0.0.40
codegen_flags: <defaults>
</compile_context>

<pallas_src>
import functools

import jax
import jax.numpy as jnp
from jax.experimental import pallas as pl
from jax.experimental.pallas import tpu as pltpu
from jax.scipy.linalg import block_diag


# ----------------------------------------------------------------------------
# Fused kernel: conv1 -> conv2 -> avgpool -> linear -> [|sla] -> 12 VAE branches
# ----------------------------------------------------------------------------
def _fused_kernel(ugvg_ref, sla_ref, eps_ref,
                  w1t_ref, cb1_ref, w2t_ref, cb2_ref,
                  sel_ref, linw_ref, linb_ref,
                  w1e_ref, w1s_ref, b1c_ref,
                  wmu_ref, bmuc_ref, wlv_ref, blvc_ref,
                  w2bd_ref, b2c_ref, wobd_ref, boc_ref,
                  logits_ref, mu_ref, lv_ref, emb_ref,
                  a0_ref, a1_ref,
                  *, B, Cin, C1, C2, H, W, ph, pw):
    f32 = jnp.float32
    Wp = W + 2                       # padded row length
    Lv = H * Wp - 2                  # number of conv-output columns computed
    rh, rw = H // ph, W // pw        # pooling block size (exact: H,W divisible)
    Ls = Lv - (rh - 1) * Wp - (rw - 1)

    # ---- in-kernel zero padding of conv1 input (NCHW -> flat padded rows) ---
    a0_ref[...] = jnp.zeros_like(a0_ref)
    x0 = ugvg_ref[...]                                   # (B, Cin, H, W)
    for h in range(H):
        start = (h + 1) * Wp + 1
        a0_ref[:, :, start:start + W] = x0[:, :, h, :]

    w1t = w1t_ref[...]                                   # (9, C1, Cin)
    cb1 = cb1_ref[...]                                   # (C1, 1)
    w2t = w2t_ref[...]                                   # (9, C2, C1)
    cb2 = cb2_ref[...]                                   # (C2, 1)

    a1_ref[...] = jnp.zeros_like(a1_ref)                 # padded conv2 input
    xp0 = a0_ref[...]                                    # (B, Cin, (H+2)*Wp)

    # ---- conv1: 9 tap matmuls (MXU) + bias + ReLU, scatter into padded scratch
    for b in range(B):
        xb = xp0[b]                                      # (Cin, (H+2)*Wp)
        acc = jnp.zeros((C1, Lv), f32)
        for kh in range(3):
            for kw in range(3):
                s = kh * Wp + kw
                acc = acc + jnp.dot(w1t[kh * 3 + kw], xb[:, s:s + Lv],
                                    preferred_element_type=f32)
        y1 = jnp.maximum(acc + cb1, 0.0)                 # col index = h*Wp + w
        for h in range(H):
            dst = (h + 1) * Wp + 1
            a1_ref[b, :, dst:dst + W] = y1[:, h * Wp:h * Wp + W]

    xp1 = a1_ref[...]                                    # (B, C1, (H+2)*Wp)

    # ---- conv2 + ReLU, then avg-pool block sums (16 shifted adds on the VPU)
    s_rows = []
    for b in range(B):
        xb = xp1[b]
        acc = jnp.zeros((C2, Lv), f32)
        for kh in range(3):
            for kw in range(3):
                s = kh * Wp + kw
                acc = acc + jnp.dot(w2t[kh * 3 + kw], xb[:, s:s + Lv],
                                    preferred_element_type=f32)
        y2 = jnp.maximum(acc + cb2, 0.0)                 # (C2, Lv)
        blk = jnp.zeros((C2, Ls), f32)
        for dr in range(rh):
            for dc in range(rw):
                o = dr * Wp + dc
                blk = blk + y2[:, o:o + Ls]
        s_rows.append(blk)
    s_all = jnp.concatenate(s_rows, axis=0)              # (B*C2, Ls)

    # select the ph*pw pooled positions (1/(rh*rw) folded into sel) on the MXU
    pooled = jnp.dot(s_all, sel_ref[...],
                     preferred_element_type=f32)         # (B*C2, ph*pw)

    # assemble lane-dense (B, C2*ph*pw) features in PyTorch (c, i, j) order
    rows = []
    for b in range(B):
        rows.append(jnp.concatenate(
            [pooled[b * C2 + c:b * C2 + c + 1, :] for c in range(C2)], axis=1))
    x_pool = jnp.concatenate(rows, axis=0)               # (B, C2*ph*pw)

    # original (un-expanded) linear weight
    embed = (jnp.dot(x_pool, linw_ref[...], preferred_element_type=f32)
             + linb_ref[...])                            # (B, out_dim)

    # ---- 12 VAE branches fused via concatenated / block-diagonal weights ----
    sla = sla_ref[...]                                   # (B, sla_dim)
    h1 = jnp.maximum(
        jnp.dot(embed, w1e_ref[...], preferred_element_type=f32)
        + jnp.dot(sla, w1s_ref[...], preferred_element_type=f32)
        + b1c_ref[...], 0.0)                             # (B, L*Hd)
    mu = jnp.dot(h1, wmu_ref[...], preferred_element_type=f32) + bmuc_ref[...]
    lv = jnp.dot(h1, wlv_ref[...], preferred_element_type=f32) + blvc_ref[...]
    z = mu + eps_ref[...] * jnp.exp(0.5 * lv)            # reparameterize
    h2 = jnp.maximum(
        jnp.dot(z, w2bd_ref[...], preferred_element_type=f32) + b2c_ref[...], 0.0)

    logits_ref[...] = (jnp.dot(h2, wobd_ref[...], preferred_element_type=f32)
                       + boc_ref[...])                   # (B, L) lane-dense
    mu_ref[...] = mu                                     # (B, L*Z)
    lv_ref[...] = lv                                     # (B, L*Z)
    emb_ref[...] = embed                                 # (B, out_dim)


def _full_spec(shape):
    nd = len(shape)
    return pl.BlockSpec(shape, lambda i, _nd=nd: (0,) * _nd)


# ----------------------------------------------------------------------------
# Wrapper: one pallas_call for the whole forward pass
# ----------------------------------------------------------------------------
def fused_forward(cfg, fused, ugvg, sla, eps):
    """Returns (logits [B,L], mus list, logvars list, embed [B,out_dim])."""
    B, Cin, H, W = ugvg.shape
    C1, C2 = cfg["C1"], cfg["C2"]
    ph, pw = cfg["ph"], cfg["pw"]
    L, Z = cfg["num_labels"], cfg["latent_dim"]
    out_dim = cfg["out_dim"]
    HpWp = (H + 2) * (W + 2)

    sla_flat = sla.reshape(B, -1)
    eps_flat = eps.reshape(B, L * Z)

    operands = (ugvg, sla_flat, eps_flat,
                fused["w1taps"], fused["cb1"], fused["w2taps"], fused["cb2"],
                fused["sel"], fused["lin_w"], fused["lin_b"],
                fused["w1e"], fused["w1s"], fused["b1c"],
                fused["wmu"], fused["bmuc"], fused["wlv"], fused["blvc"],
                fused["w2bd"], fused["b2c"], fused["wobd"], fused["boc"])

    kernel = functools.partial(
        _fused_kernel, B=B, Cin=Cin, C1=C1, C2=C2, H=H, W=W, ph=ph, pw=pw)

    logits, mu_flat, lv_flat, embed = pl.pallas_call(
        kernel,
        out_shape=(
            jax.ShapeDtypeStruct((B, L), jnp.float32),
            jax.ShapeDtypeStruct((B, L * Z), jnp.float32),
            jax.ShapeDtypeStruct((B, L * Z), jnp.float32),
            jax.ShapeDtypeStruct((B, out_dim), jnp.float32),
        ),
        grid=(1,),
        in_specs=[_full_spec(op.shape) for op in operands],
        out_specs=(_full_spec((B, L)),
                   _full_spec((B, L * Z)),
                   _full_spec((B, L * Z)),
                   _full_spec((B, out_dim))),
        scratch_shapes=[
            pltpu.VMEM((B, Cin, HpWp), jnp.float32),   # padded conv1 input
            pltpu.VMEM((B, C1, HpWp), jnp.float32),    # padded conv2 input
        ],
        compiler_params=pltpu.CompilerParams(
            dimension_semantics=("arbitrary",)),
    )(*operands)

    mus = [mu_flat[:, l * Z:(l + 1) * Z] for l in range(L)]
    logvars = [lv_flat[:, l * Z:(l + 1) * Z] for l in range(L)]
    return logits, mus, logvars, embed


# ----------------------------------------------------------------------------
# Parameter setup (wrapper-side prep, one-time)
# ----------------------------------------------------------------------------
def init_raw_params(key, cfg):
    def nrm(k, shape, scale=0.05):
        return scale * jax.random.normal(k, shape, dtype=jnp.float32)

    Cin, C1, C2 = cfg["Cin"], cfg["C1"], cfg["C2"]
    ph, pw, out_dim = cfg["ph"], cfg["pw"], cfg["out_dim"]
    L, Hd, Z = cfg["num_labels"], cfg["hidden_dim"], cfg["latent_dim"]
    D = out_dim + cfg["sla_dim"]

    keys = jax.random.split(key, 7)
    raw = {
        "conv1_w": nrm(keys[0], (C1, Cin, 3, 3)),
        "conv1_b": nrm(keys[1], (C1,)),
        "conv2_w": nrm(keys[2], (C2, C1, 3, 3)),
        "conv2_b": nrm(keys[3], (C2,)),
        "lin_w": nrm(keys[4], (C2 * ph * pw, out_dim)),   # (in, out) layout
        "lin_b": nrm(keys[5], (out_dim,)),
    }
    vae = []
    for kl in jax.random.split(keys[6], L):
        ks = jax.random.split(kl, 10)
        vae.append({
            "w1": nrm(ks[0], (D, Hd)),  "b1": nrm(ks[1], (Hd,)),
            "wmu": nrm(ks[2], (Hd, Z)), "bmu": nrm(ks[3], (Z,)),
            "wlv": nrm(ks[4], (Hd, Z)), "blv": nrm(ks[5], (Z,)),
            "w2": nrm(ks[6], (Z, Hd)),  "b2": nrm(ks[7], (Hd,)),
            "wo": nrm(ks[8], (Hd, 1)),  "bo": nrm(ks[9], (1,)),
        })
    raw["vae"] = vae
    return raw


def build_fused_params(raw, cfg):
    H, W, ph, pw = cfg["H"], cfg["W"], cfg["ph"], cfg["pw"]
    out_dim = cfg["out_dim"]
    Wp = W + 2
    rh, rw = H // ph, W // pw
    Lv = H * Wp - 2
    Ls = Lv - (rh - 1) * Wp - (rw - 1)

    # 3x3 conv weights restacked per tap: (9, Cout, Cin)
    w1taps = jnp.stack([raw["conv1_w"][:, :, kh, kw]
                        for kh in range(3) for kw in range(3)], axis=0)
    w2taps = jnp.stack([raw["conv2_w"][:, :, kh, kw]
                        for kh in range(3) for kw in range(3)], axis=0)

    # pooling position-selection matrix with the 1/(rh*rw) mean folded in
    pos = jnp.array([i * rh * Wp + j * rw
                     for i in range(ph) for j in range(pw)], dtype=jnp.int32)
    sel = jnp.zeros((Ls, ph * pw), jnp.float32)
    sel = sel.at[pos, jnp.arange(ph * pw)].set(1.0 / (rh * rw))

    vae = raw["vae"]
    fused = {
        "w1taps": w1taps, "cb1": raw["conv1_b"].reshape(-1, 1),
        "w2taps": w2taps, "cb2": raw["conv2_b"].reshape(-1, 1),
        "sel": sel,
        "lin_w": raw["lin_w"], "lin_b": raw["lin_b"].reshape(1, -1),
        # fc1 split into embed part / SLA part, branches concatenated along N
        "w1e": jnp.concatenate([p["w1"][:out_dim] for p in vae], axis=1),
        "w1s": jnp.concatenate([p["w1"][out_dim:] for p in vae], axis=1),
        "b1c": jnp.concatenate([p["b1"] for p in vae]).reshape(1, -1),
        # remaining per-branch layers fused as block-diagonal weights
        "wmu": block_diag(*[p["wmu"] for p in vae]),
        "bmuc": jnp.concatenate([p["bmu"] for p in vae]).reshape(1, -1),
        "wlv": block_diag(*[p["wlv"] for p in vae]),
        "blvc": jnp.concatenate([p["blv"] for p in vae]).reshape(1, -1),
        "w2bd": block_diag(*[p["w2"] for p in vae]),
        "b2c": jnp.concatenate([p["b2"] for p in vae]).reshape(1, -1),
        "wobd": block_diag(*[p["wo"] for p in vae]),
        "boc": jnp.concatenate([p["bo"] for p in vae]).reshape(1, -1),
    }
    return fused


# ----------------------------------------------------------------------------
# Pure-JAX reference (matches the PyTorch module semantics)
# ----------------------------------------------------------------------------
def reference_forward(raw, cfg, ugvg, sla, eps):
    def conv_relu(x, w, b):
        y = jax.lax.conv_general_dilated(
            x, w, window_strides=(1, 1), padding=((1, 1), (1, 1)),
            dimension_numbers=("NCHW", "OIHW", "NCHW"))
        return jnp.maximum(y + b.reshape(1, -1, 1, 1), 0.0)

    B = ugvg.shape[0]
    ph, pw = cfg["ph"], cfg["pw"]
    c2 = conv_relu(conv_relu(ugvg, raw["conv1_w"], raw["conv1_b"]),
                   raw["conv2_w"], raw["conv2_b"])
    _, C2, H, W = c2.shape
    pooled = c2.reshape(B, C2, ph, H // ph, pw, W // pw).mean(axis=(3, 5))
    embed = pooled.reshape(B, -1) @ raw["lin_w"] + raw["lin_b"]
    x = jnp.concatenate([embed, sla.reshape(B, -1)], axis=1)

    logit_cols, mus, lvs = [], [], []
    for l, p in enumerate(raw["vae"]):
        h = jnp.maximum(x @ p["w1"] + p["b1"], 0.0)
        mu = h @ p["wmu"] + p["bmu"]
        lv = h @ p["wlv"] + p["blv"]
        z = mu + eps[:, l, :] * jnp.exp(0.5 * lv)
        h2 = jnp.maximum(z @ p["w2"] + p["b2"], 0.0)
        logit_cols.append(h2 @ p["wo"] + p["bo"])
        mus.append(mu)
        lvs.append(lv)
    return jnp.concatenate(logit_cols, axis=1), mus, lvs, embed


# ----------------------------------------------------------------------------
if __name__ == "__main__":
    # Small shapes consistent with the module (original: B,2,100,160 / (5,5) pool);
    # H, W must be divisible by (pool_h, pool_w) as in the original 100x160 case.
    cfg = dict(B=2, Cin=2, C1=8, C2=8, H=20, W=20, ph=5, pw=5,
               out_dim=32, hidden_dim=32, latent_dim=8, num_labels=12)
    cfg["sla_dim"] = cfg["H"] * cfg["W"]
    B, L, Z = cfg["B"], cfg["num_labels"], cfg["latent_dim"]

    key = jax.random.PRNGKey(0)
    kp, ku, ks, ke = jax.random.split(key, 4)
    raw = init_raw_params(kp, cfg)
    fused = build_fused_params(raw, cfg)

    ugvg = jax.random.normal(ku, (B, cfg["Cin"], cfg["H"], cfg["W"]), jnp.float32)
    sla = jax.random.normal(ks, (B, cfg["H"], cfg["W"]), jnp.float32)
    eps = jax.random.normal(ke, (B, L, Z), jnp.float32)   # replaces torch.randn_like

    logits, mus, logvars, embed = fused_forward(cfg, fused, ugvg, sla, eps)
    jax.block_until_ready(logits)

    # shape / sanity checks
    assert logits.shape == (B, L)
    assert len(mus) == L and all(m.shape == (B, Z) for m in mus)
    assert len(logvars) == L and all(v.shape == (B, Z) for v in logvars)
    assert bool(jnp.all(jnp.isfinite(logits)))

    # numerical check against the pure-JAX reference (loose tol: MXU f32 paths)
    ref_logits, ref_mus, ref_lvs, ref_embed = reference_forward(
        raw, cfg, ugvg, sla, eps)

    def close(a, b, rel=1e-1, absol=2e-3):
        return bool(jnp.max(jnp.abs(a - b)) <= rel * jnp.max(jnp.abs(b)) + absol)

    assert close(embed, ref_embed, rel=5e-2, absol=1e-3)
    assert close(logits, ref_logits)
    assert close(jnp.concatenate(mus, axis=1), jnp.concatenate(ref_mus, axis=1))
    assert close(jnp.concatenate(logvars, axis=1), jnp.concatenate(ref_lvs, axis=1))

    print("KERNEL_OK")
</pallas_src>

<mosaic_0001>
module attributes {stable_mosaic.version = 11 : i64} {
  func.func @_fused_kernel(%arg0: i32, %arg1: memref<2x2x20x20xf32, #tpu.memory_space<vmem>>, %arg2: memref<2x400xf32, #tpu.memory_space<vmem>>, %arg3: memref<2x96xf32, #tpu.memory_space<vmem>>, %arg4: memref<9x8x2xf32, #tpu.memory_space<vmem>>, %arg5: memref<8x1xf32, #tpu.memory_space<vmem>>, %arg6: memref<9x8x8xf32, #tpu.memory_space<vmem>>, %arg7: memref<8x1xf32, #tpu.memory_space<vmem>>, %arg8: memref<369x25xf32, #tpu.memory_space<vmem>>, %arg9: memref<200x32xf32, #tpu.memory_space<vmem>>, %arg10: memref<1x32xf32, #tpu.memory_space<vmem>>, %arg11: memref<32x384xf32, #tpu.memory_space<vmem>>, %arg12: memref<400x384xf32, #tpu.memory_space<vmem>>, %arg13: memref<1x384xf32, #tpu.memory_space<vmem>>, %arg14: memref<384x96xf32, #tpu.memory_space<vmem>>, %arg15: memref<1x96xf32, #tpu.memory_space<vmem>>, %arg16: memref<384x96xf32, #tpu.memory_space<vmem>>, %arg17: memref<1x96xf32, #tpu.memory_space<vmem>>, %arg18: memref<96x384xf32, #tpu.memory_space<vmem>>, %arg19: memref<1x384xf32, #tpu.memory_space<vmem>>, %arg20: memref<384x12xf32, #tpu.memory_space<vmem>>, %arg21: memref<1x12xf32, #tpu.memory_space<vmem>>, %arg22: memref<2x12xf32, #tpu.memory_space<vmem>>, %arg23: memref<2x96xf32, #tpu.memory_space<vmem>>, %arg24: memref<2x96xf32, #tpu.memory_space<vmem>>, %arg25: memref<2x32xf32, #tpu.memory_space<vmem>>, %arg26: memref<2x2x484xf32, #tpu.memory_space<vmem>>, %arg27: memref<2x8x484xf32, #tpu.memory_space<vmem>>) attributes {dimension_semantics = [#tpu.dimension_semantics<arbitrary>], iteration_bounds = array<i64: 1>, scalar_prefetch = 0 : i64, scratch_operands = 2 : i64, tpu.core_type = #tpu.core_type<tc>, window_params = [{pipeline_mode = #tpu.pipeline_mode<synchronous>, transform_indices = @transform_0, window_bounds = array<i64: 2, 2, 20, 20>}, {pipeline_mode = #tpu.pipeline_mode<synchronous>, transform_indices = @transform_1, window_bounds = array<i64: 2, 400>}, {pipeline_mode = #tpu.pipeline_mode<synchronous>, transform_indices = @transform_2, window_bounds = array<i64: 2, 96>}, {pipeline_mode = #tpu.pipeline_mode<synchronous>, transform_indices = @transform_3, window_bounds = array<i64: 9, 8, 2>}, {pipeline_mode = #tpu.pipeline_mode<synchronous>, transform_indices = @transform_4, window_bounds = array<i64: 8, 1>}, {pipeline_mode = #tpu.pipeline_mode<synchronous>, transform_indices = @transform_5, window_bounds = array<i64: 9, 8, 8>}, {pipeline_mode = #tpu.pipeline_mode<synchronous>, transform_indices = @transform_6, window_bounds = array<i64: 8, 1>}, {pipeline_mode = #tpu.pipeline_mode<synchronous>, transform_indices = @transform_7, window_bounds = array<i64: 369, 25>}, {pipeline_mode = #tpu.pipeline_mode<synchronous>, transform_indices = @transform_8, window_bounds = array<i64: 200, 32>}, {pipeline_mode = #tpu.pipeline_mode<synchronous>, transform_indices = @transform_9, window_bounds = array<i64: 1, 32>}, {pipeline_mode = #tpu.pipeline_mode<synchronous>, transform_indices = @transform_10, window_bounds = array<i64: 32, 384>}, {pipeline_mode = #tpu.pipeline_mode<synchronous>, transform_indices = @transform_11, window_bounds = array<i64: 400, 384>}, {pipeline_mode = #tpu.pipeline_mode<synchronous>, transform_indices = @transform_12, window_bounds = array<i64: 1, 384>}, {pipeline_mode = #tpu.pipeline_mode<synchronous>, transform_indices = @transform_13, window_bounds = array<i64: 384, 96>}, {pipeline_mode = #tpu.pipeline_mode<synchronous>, transform_indices = @transform_14, window_bounds = array<i64: 1, 96>}, {pipeline_mode = #tpu.pipeline_mode<synchronous>, transform_indices = @transform_15, window_bounds = array<i64: 384, 96>}, {pipeline_mode = #tpu.pipeline_mode<synchronous>, transform_indices = @transform_16, window_bounds = array<i64: 1, 96>}, {pipeline_mode = #tpu.pipeline_mode<synchronous>, transform_indices = @transform_17, window_bounds = array<i64: 96, 384>}, {pipeline_mode = #tpu.pipeline_mode<synchronous>, transform_indices = @transform_18, window_bounds = array<i64: 1, 384>}, {pipeline_mode = #tpu.pipeline_mode<synchronous>, transform_indices = @transform_19, window_bounds = array<i64: 384, 12>}, {pipeline_mode = #tpu.pipeline_mode<synchronous>, transform_indices = @transform_20, window_bounds = array<i64: 1, 12>}, {pipeline_mode = #tpu.pipeline_mode<synchronous>, transform_indices = @transform_21, window_bounds = array<i64: 2, 12>}, {pipeline_mode = #tpu.pipeline_mode<synchronous>, transform_indices = @transform_22, window_bounds = array<i64: 2, 96>}, {pipeline_mode = #tpu.pipeline_mode<synchronous>, transform_indices = @transform_23, window_bounds = array<i64: 2, 96>}, {pipeline_mode = #tpu.pipeline_mode<synchronous>, transform_indices = @transform_24, window_bounds = array<i64: 2, 32>}]} {
    %cst = arith.constant 0.000000e+00 : f32
    %0 = vector.broadcast %cst : f32 to vector<2x2x484xf32>
    %c0 = arith.constant 0 : index
    %c0_0 = arith.constant 0 : index
    %c0_1 = arith.constant 0 : index
    %1 = vector.load %arg26[%c0, %c0_0, %c0_1] : memref<2x2x484xf32, #tpu.memory_space<vmem>>, vector<2x2x484xf32>
    tpu.vector_store %arg26[%c0, %c0_0, %c0_1], %0 {strides = array<i32>} : memref<2x2x484xf32, #tpu.memory_space<vmem>>, vector<2x2x484xf32>,
    %c0_2 = arith.constant 0 : index
    %c0_3 = arith.constant 0 : index
    %c0_4 = arith.constant 0 : index
    %c0_5 = arith.constant 0 : index
    %2 = vector.load %arg1[%c0_2, %c0_3, %c0_4, %c0_5] : memref<2x2x20x20xf32, #tpu.memory_space<vmem>>, vector<2x2x20x20xf32>
    %3 = vector.extract_strided_slice %2 {offsets = [0, 0, 0, 0], sizes = [2, 2, 1, 20], strides = [1, 1, 1, 1]} : vector<2x2x20x20xf32> to vector<2x2x1x20xf32>
    %4 = vector.shape_cast %3 : vector<2x2x1x20xf32> to vector<2x2x20xf32>
    %c0_6 = arith.constant 0 : index
    %c0_7 = arith.constant 0 : index
    %c23 = arith.constant 23 : index
    %5 = vector.load %arg26[%c0_6, %c0_7, %c23] : memref<2x2x484xf32, #tpu.memory_space<vmem>>, vector<2x2x20xf32>
    tpu.vector_store %arg26[%c0_6, %c0_7, %c23], %4 {strides = array<i32>} : memref<2x2x484xf32, #tpu.memory_space<vmem>>, vector<2x2x20xf32>,
    %6 = vector.extract_strided_slice %2 {offsets = [0, 0, 1, 0], sizes = [2, 2, 1, 20], strides = [1, 1, 1, 1]} : vector<2x2x20x20xf32> to vector<2x2x1x20xf32>
    %7 = vector.shape_cast %6 : vector<2x2x1x20xf32> to vector<2x2x20xf32>
    %c0_8 = arith.constant 0 : index
    %c0_9 = arith.constant 0 : index
    %c45 = arith.constant 45 : index
    %8 = vector.load %arg26[%c0_8, %c0_9, %c45] : memref<2x2x484xf32, #tpu.memory_space<vmem>>, vector<2x2x20xf32>
    tpu.vector_store %arg26[%c0_8, %c0_9, %c45], %7 {strides = array<i32>} : memref<2x2x484xf32, #tpu.memory_space<vmem>>, vector<2x2x20xf32>,
    %9 = vector.extract_strided_slice %2 {offsets = [0, 0, 2, 0], sizes = [2, 2, 1, 20], strides = [1, 1, 1, 1]} : vector<2x2x20x20xf32> to vector<2x2x1x20xf32>
    %10 = vector.shape_cast %9 : vector<2x2x1x20xf32> to vector<2x2x20xf32>
    %c0_10 = arith.constant 0 : index
    %c0_11 = arith.constant 0 : index
    %c67 = arith.constant 67 : index
    %11 = vector.load %arg26[%c0_10, %c0_11, %c67] : memref<2x2x484xf32, #tpu.memory_space<vmem>>, vector<2x2x20xf32>
    tpu.vector_store %arg26[%c0_10, %c0_11, %c67], %10 {strides = array<i32>} : memref<2x2x484xf32, #tpu.memory_space<vmem>>, vector<2x2x20xf32>,
    %12 = vector.extract_strided_slice %2 {offsets = [0, 0, 3, 0], sizes = [2, 2, 1, 20], strides = [1, 1, 1, 1]} : vector<2x2x20x20xf32> to vector<2x2x1x20xf32>
    %13 = vector.shape_cast %12 : vector<2x2x1x20xf32> to vector<2x2x20xf32>
    %c0_12 = arith.constant 0 : index
    %c0_13 = arith.constant 0 : index
    %c89 = arith.constant 89 : index
    %14 = vector.load %arg26[%c0_12, %c0_13, %c89] : memref<2x2x484xf32, #tpu.memory_space<vmem>>, vector<2x2x20xf32>
    tpu.vector_store %arg26[%c0_12, %c0_13, %c89], %13 {strides = array<i32>} : memref<2x2x484xf32, #tpu.memory_space<vmem>>, vector<2x2x20xf32>,
    %15 = vector.extract_strided_slice %2 {offsets = [0, 0, 4, 0], sizes = [2, 2, 1, 20], strides = [1, 1, 1, 1]} : vector<2x2x20x20xf32> to vector<2x2x1x20xf32>
    %16 = vector.shape_cast %15 : vector<2x2x1x20xf32> to vector<2x2x20xf32>
    %c0_14 = arith.constant 0 : index
    %c0_15 = arith.constant 0 : index
    %c111 = arith.constant 111 : index
    %17 = vector.load %arg26[%c0_14, %c0_15, %c111] : memref<2x2x484xf32, #tpu.memory_space<vmem>>, vector<2x2x20xf32>
    tpu.vector_store %arg26[%c0_14, %c0_15, %c111], %16 {strides = array<i32>} : memref<2x2x484xf32, #tpu.memory_space<vmem>>, vector<2x2x20xf32>,
    %18 = vector.extract_strided_slice %2 {offsets = [0, 0, 5, 0], sizes = [2, 2, 1, 20], strides = [1, 1, 1, 1]} : vector<2x2x20x20xf32> to vector<2x2x1x20xf32>
    %19 = vector.shape_cast %18 : vector<2x2x1x20xf32> to vector<2x2x20xf32>
    %c0_16 = arith.constant 0 : index
    %c0_17 = arith.constant 0 : index
    %c133 = arith.constant 133 : index
    %20 = vector.load %arg26[%c0_16, %c0_17, %c133] : memref<2x2x484xf32, #tpu.memory_space<vmem>>, vector<2x2x20xf32>
    tpu.vector_store %arg26[%c0_16, %c0_17, %c133], %19 {strides = array<i32>} : memref<2x2x484xf32, #tpu.memory_space<vmem>>, vector<2x2x20xf32>,
    %21 = vector.extract_strided_slice %2 {offsets = [0, 0, 6, 0], sizes = [2, 2, 1, 20], strides = [1, 1, 1, 1]} : vector<2x2x20x20xf32> to vector<2x2x1x20xf32>
    %22 = vector.shape_cast %21 : vector<2x2x1x20xf32> to vector<2x2x20xf32>
    %c0_18 = arith.constant 0 : index
    %c0_19 = arith.constant 0 : index
    %c155 = arith.constant 155 : index
    %23 = vector.load %arg26[%c0_18, %c0_19, %c155] : memref<2x2x484xf32, #tpu.memory_space<vmem>>, vector<2x2x20xf32>
    tpu.vector_store %arg26[%c0_18, %c0_19, %c155], %22 {strides = array<i32>} : memref<2x2x484xf32, #tpu.memory_space<vmem>>, vector<2x2x20xf32>,
    %24 = vector.extract_strided_slice %2 {offsets = [0, 0, 7, 0], sizes = [2, 2, 1, 20], strides = [1, 1, 1, 1]} : vector<2x2x20x20xf32> to vector<2x2x1x20xf32>
    %25 = vector.shape_cast %24 : vector<2x2x1x20xf32> to vector<2x2x20xf32>
    %c0_20 = arith.constant 0 : index
    %c0_21 = arith.constant 0 : index
    %c177 = arith.constant 177 : index
    %26 = vector.load %arg26[%c0_20, %c0_21, %c177] : memref<2x2x484xf32, #tpu.memory_space<vmem>>, vector<2x2x20xf32>
    tpu.vector_store %arg26[%c0_20, %c0_21, %c177], %25 {strides = array<i32>} : memref<2x2x484xf32, #tpu.memory_space<vmem>>, vector<2x2x20xf32>,
    %27 = vector.extract_strided_slice %2 {offsets = [0, 0, 8, 0], sizes = [2, 2, 1, 20], strides = [1, 1, 1, 1]} : vector<2x2x20x20xf32> to vector<2x2x1x20xf32>
    %28 = vector.shape_cast %27 : vector<2x2x1x20xf32> to vector<2x2x20xf32>
    %c0_22 = arith.constant 0 : index
    %c0_23 = arith.constant 0 : index
    %c199 = arith.constant 199 : index
    %29 = vector.load %arg26[%c0_22, %c0_23, %c199] : memref<2x2x484xf32, #tpu.memory_space<vmem>>, vector<2x2x20xf32>
    tpu.vector_store %arg26[%c0_22, %c0_23, %c199], %28 {strides = array<i32>} : memref<2x2x484xf32, #tpu.memory_space<vmem>>, vector<2x2x20xf32>,
    %30 = vector.extract_strided_slice %2 {offsets = [0, 0, 9, 0], sizes = [2, 2, 1, 20], strides = [1, 1, 1, 1]} : vector<2x2x20x20xf32> to vector<2x2x1x20xf32>
    %31 = vector.shape_cast %30 : vector<2x2x1x20xf32> to vector<2x2x20xf32>
    %c0_24 = arith.constant 0 : index
    %c0_25 = arith.constant 0 : index
    %c221 = arith.constant 221 : index
    %32 = vector.load %arg26[%c0_24, %c0_25, %c221] : memref<2x2x484xf32, #tpu.memory_space<vmem>>, vector<2x2x20xf32>
    tpu.vector_store %arg26[%c0_24, %c0_25, %c221], %31 {strides = array<i32>} : memref<2x2x484xf32, #tpu.memory_space<vmem>>, vector<2x2x20xf32>,
    %33 = vector.extract_strided_slice %2 {offsets = [0, 0, 10, 0], sizes = [2, 2, 1, 20], strides = [1, 1, 1, 1]} : vector<2x2x20x20xf32> to vector<2x2x1x20xf32>
    %34 = vector.shape_cast %33 : vector<2x2x1x20xf32> to vector<2x2x20xf32>
    %c0_26 = arith.constant 0 : index
    %c0_27 = arith.constant 0 : index
    %c243 = arith.constant 243 : index
    %35 = vector.load %arg26[%c0_26, %c0_27, %c243] : memref<2x2x484xf32, #tpu.memory_space<vmem>>, vector<2x2x20xf32>
    tpu.vector_store %arg26[%c0_26, %c0_27, %c243], %34 {strides = array<i32>} : memref<2x2x484xf32, #tpu.memory_space<vmem>>, vector<2x2x20xf32>,
    %36 = vector.extract_strided_slice %2 {offsets = [0, 0, 11, 0], sizes = [2, 2, 1, 20], strides = [1, 1, 1, 1]} : vector<2x2x20x20xf32> to vector<2x2x1x20xf32>
    %37 = vector.shape_cast %36 : vector<2x2x1x20xf32> to vector<2x2x20xf32>
    %c0_28 = arith.constant 0 : index
    %c0_29 = arith.constant 0 : index
    %c265 = arith.constant 265 : index
    %38 = vector.load %arg26[%c0_28, %c0_29, %c265] : memref<2x2x484xf32, #tpu.memory_space<vmem>>, vector<2x2x20xf32>
    tpu.vector_store %arg26[%c0_28, %c0_29, %c265], %37 {strides = array<i32>} : memref<2x2x484xf32, #tpu.memory_space<vmem>>, vector<2x2x20xf32>,
    %39 = vector.extract_strided_slice %2 {offsets = [0, 0, 12, 0], sizes = [2, 2, 1, 20], strides = [1, 1, 1, 1]} : vector<2x2x20x20xf32> to vector<2x2x1x20xf32>
    %40 = vector.shape_cast %39 : vector<2x2x1x20xf32> to vector<2x2x20xf32>
    %c0_30 = arith.constant 0 : index
    %c0_31 = arith.constant 0 : index
    %c287 = arith.constant 287 : index
    %41 = vector.load %arg26[%c0_30, %c0_31, %c287] : memref<2x2x484xf32, #tpu.memory_space<vmem>>, vector<2x2x20xf32>
    tpu.vector_store %arg26[%c0_30, %c0_31, %c287], %40 {strides = array<i32>} : memref<2x2x484xf32, #tpu.memory_space<vmem>>, vector<2x2x20xf32>,
    %42 = vector.extract_strided_slice %2 {offsets = [0, 0, 13, 0], sizes = [2, 2, 1, 20], strides = [1, 1, 1, 1]} : vector<2x2x20x20xf32> to vector<2x2x1x20xf32>
    %43 = vector.shape_cast %42 : vector<2x2x1x20xf32> to vector<2x2x20xf32>
    %c0_32 = arith.constant 0 : index
    %c0_33 = arith.constant 0 : index
    %c309 = arith.constant 309 : index
    %44 = vector.load %arg26[%c0_32, %c0_33, %c309] : memref<2x2x484xf32, #tpu.memory_space<vmem>>, vector<2x2x20xf32>
    tpu.vector_store %arg26[%c0_32, %c0_33, %c309], %43 {strides = array<i32>} : memref<2x2x484xf32, #tpu.memory_space<vmem>>, vector<2x2x20xf32>,
    %45 = vector.extract_strided_slice %2 {offsets = [0, 0, 14, 0], sizes = [2, 2, 1, 20], strides = [1, 1, 1, 1]} : vector<2x2x20x20xf32> to vector<2x2x1x20xf32>
    %46 = vector.shape_cast %45 : vector<2x2x1x20xf32> to vector<2x2x20xf32>
    %c0_34 = arith.constant 0 : index
    %c0_35 = arith.constant 0 : index
    %c331 = arith.constant 331 : index
    %47 = vector.load %arg26[%c0_34, %c0_35, %c331] : memref<2x2x484xf32, #tpu.memory_space<vmem>>, vector<2x2x20xf32>
    tpu.vector_store %arg26[%c0_34, %c0_35, %c331], %46 {strides = array<i32>} : memref<2x2x484xf32, #tpu.memory_space<vmem>>, vector<2x2x20xf32>,
    %48 = vector.extract_strided_slice %2 {offsets = [0, 0, 15, 0], sizes = [2, 2, 1, 20], strides = [1, 1, 1, 1]} : vector<2x2x20x20xf32> to vector<2x2x1x20xf32>
    %49 = vector.shape_cast %48 : vector<2x2x1x20xf32> to vector<2x2x20xf32>
    %c0_36 = arith.constant 0 : index
    %c0_37 = arith.constant 0 : index
    %c353 = arith.constant 353 : index
    %50 = vector.load %arg26[%c0_36, %c0_37, %c353] : memref<2x2x484xf32, #tpu.memory_space<vmem>>, vector<2x2x20xf32>
    tpu.vector_store %arg26[%c0_36, %c0_37, %c353], %49 {strides = array<i32>} : memref<2x2x484xf32, #tpu.memory_space<vmem>>, vector<2x2x20xf32>,
    %51 = vector.extract_strided_slice %2 {offsets = [0, 0, 16, 0], sizes = [2, 2, 1, 20], strides = [1, 1, 1, 1]} : vector<2x2x20x20xf32> to vector<2x2x1x20xf32>
    %52 = vector.shape_cast %51 : vector<2x2x1x20xf32> to vector<2x2x20xf32>
    %c0_38 = arith.constant 0 : index
    %c0_39 = arith.constant 0 : index
    %c375 = arith.constant 375 : index
    %53 = vector.load %arg26[%c0_38, %c0_39, %c375] : memref<2x2x484xf32, #tpu.memory_space<vmem>>, vector<2x2x20xf32>
    tpu.vector_store %arg26[%c0_38, %c0_39, %c375], %52 {strides = array<i32>} : memref<2x2x484xf32, #tpu.memory_space<vmem>>, vector<2x2x20xf32>,
    %54 = vector.extract_strided_slice %2 {offsets = [0, 0, 17, 0], sizes = [2, 2, 1, 20], strides = [1, 1, 1, 1]} : vector<2x2x20x20xf32> to vector<2x2x1x20xf32>
    %55 = vector.shape_cast %54 : vector<2x2x1x20xf32> to vector<2x2x20xf32>
    %c0_40 = arith.constant 0 : index
    %c0_41 = arith.constant 0 : index
    %c397 = arith.constant 397 : index
    %56 = vector.load %arg26[%c0_40, %c0_41, %c397] : memref<2x2x484xf32, #tpu.memory_space<vmem>>, vector<2x2x20xf32>
    tpu.vector_store %arg26[%c0_40, %c0_41, %c397], %55 {strides = array<i32>} : memref<2x2x484xf32, #tpu.memory_space<vmem>>, vector<2x2x20xf32>,
    %57 = vector.extract_strided_slice %2 {offsets = [0, 0, 18, 0], sizes = [2, 2, 1, 20], strides = [1, 1, 1, 1]} : vector<2x2x20x20xf32> to vector<2x2x1x20xf32>
    %58 = vector.shape_cast %57 : vector<2x2x1x20xf32> to vector<2x2x20xf32>
    %c0_42 = arith.constant 0 : index
    %c0_43 = arith.constant 0 : index
    %c419 = arith.constant 419 : index
    %59 = vector.load %arg26[%c0_42, %c0_43, %c419] : memref<2x2x484xf32, #tpu.memory_space<vmem>>, vector<2x2x20xf32>
    tpu.vector_store %arg26[%c0_42, %c0_43, %c419], %58 {strides = array<i32>} : memref<2x2x484xf32, #tpu.memory_space<vmem>>, vector<2x2x20xf32>,
    %60 = vector.extract_strided_slice %2 {offsets = [0, 0, 19, 0], sizes = [2, 2, 1, 20], strides = [1, 1, 1, 1]} : vector<2x2x20x20xf32> to vector<2x2x1x20xf32>
    %61 = vector.shape_cast %60 : vector<2x2x1x20xf32> to vector<2x2x20xf32>
    %c0_44 = arith.constant 0 : index
    %c0_45 = arith.constant 0 : index
    %c441 = arith.constant 441 : index
    %62 = vector.load %arg26[%c0_44, %c0_45, %c441] : memref<2x2x484xf32, #tpu.memory_space<vmem>>, vector<2x2x20xf32>
    tpu.vector_store %arg26[%c0_44, %c0_45, %c441], %61 {strides = array<i32>} : memref<2x2x484xf32, #tpu.memory_space<vmem>>, vector<2x2x20xf32>,
    %c0_46 = arith.constant 0 : index
    %c0_47 = arith.constant 0 : index
    %c0_48 = arith.constant 0 : index
    %63 = vector.load %arg4[%c0_46, %c0_47, %c0_48] : memref<9x8x2xf32, #tpu.memory_space<vmem>>, vector<9x8x2xf32>
    %c0_49 = arith.constant 0 : index
    %c0_50 = arith.constant 0 : index
    %64 = vector.load %arg5[%c0_49, %c0_50] : memref<8x1xf32, #tpu.memory_space<vmem>>, vector<8x1xf32>
    %c0_51 = arith.constant 0 : index
    %c0_52 = arith.constant 0 : index
    %c0_53 = arith.constant 0 : index
    %65 = vector.load %arg6[%c0_51, %c0_52, %c0_53] : memref<9x8x8xf32, #tpu.memory_space<vmem>>, vector<9x8x8xf32>
    %c0_54 = arith.constant 0 : index
    %c0_55 = arith.constant 0 : index
    %66 = vector.load %arg7[%c0_54, %c0_55] : memref<8x1xf32, #tpu.memory_space<vmem>>, vector<8x1xf32>
    %cst_56 = arith.constant 0.000000e+00 : f32
    %67 = vector.broadcast %cst_56 : f32 to vector<2x8x484xf32>
    %c0_57 = arith.constant 0 : index
    %c0_58 = arith.constant 0 : index
    %c0_59 = arith.constant 0 : index
    %68 = vector.load %arg27[%c0_57, %c0_58, %c0_59] : memref<2x8x484xf32, #tpu.memory_space<vmem>>, vector<2x8x484xf32>
    tpu.vector_store %arg27[%c0_57, %c0_58, %c0_59], %67 {strides = array<i32>} : memref<2x8x484xf32, #tpu.memory_space<vmem>>, vector<2x8x484xf32>,
    %c0_60 = arith.constant 0 : index
    %c0_61 = arith.constant 0 : index
    %c0_62 = arith.constant 0 : index
    %69 = vector.load %arg26[%c0_60, %c0_61, %c0_62] : memref<2x2x484xf32, #tpu.memory_space<vmem>>, vector<2x2x484xf32>
    %70 = vector.extract_strided_slice %69 {offsets = [0, 0, 0], sizes = [1, 2, 484], strides = [1, 1, 1]} : vector<2x2x484xf32> to vector<1x2x484xf32>
    %71 = vector.shape_cast %70 : vector<1x2x484xf32> to vector<2x484xf32>
    %cst_63 = arith.constant 0.000000e+00 : f32
    %72 = vector.broadcast %cst_63 : f32 to vector<8x438xf32>
    %73 = vector.extract_strided_slice %63 {offsets = [0, 0, 0], sizes = [1, 8, 2], strides = [1, 1, 1]} : vector<9x8x2xf32> to vector<1x8x2xf32>
    %74 = vector.shape_cast %73 : vector<1x8x2xf32> to vector<8x2xf32>
    %75 = vector.extract_strided_slice %71 {offsets = [0, 0], sizes = [2, 438], strides = [1, 1]} : vector<2x484xf32> to vector<2x438xf32>
    %cst_64 = arith.constant dense<0.000000e+00> : vector<8x438xf32>
    %76 = tpu.matmul %74, %75, %cst_64 {dimension_numbers = #tpu.dot_dimension_numbers<[1], [0], [0], [1], [0, 0, 1, 1], [], []>} : vector<8x2xf32>, vector<2x438xf32>, vector<8x438xf32> -> vector<8x438xf32>
    %77 = arith.addf %72, %76 : vector<8x438xf32>
    %78 = vector.extract_strided_slice %63 {offsets = [1, 0, 0], sizes = [1, 8, 2], strides = [1, 1, 1]} : vector<9x8x2xf32> to vector<1x8x2xf32>
    %79 = vector.shape_cast %78 : vector<1x8x2xf32> to vector<8x2xf32>
    %80 = vector.extract_strided_slice %71 {offsets = [0, 1], sizes = [2, 438], strides = [1, 1]} : vector<2x484xf32> to vector<2x438xf32>
    %cst_65 = arith.constant dense<0.000000e+00> : vector<8x438xf32>
    %81 = tpu.matmul %79, %80, %cst_65 {dimension_numbers = #tpu.dot_dimension_numbers<[1], [0], [0], [1], [0, 0, 1, 1], [], []>} : vector<8x2xf32>, vector<2x438xf32>, vector<8x438xf32> -> vector<8x438xf32>
    %82 = arith.addf %77, %81 : vector<8x438xf32>
    %83 = vector.extract_strided_slice %63 {offsets = [2, 0, 0], sizes = [1, 8, 2], strides = [1, 1, 1]} : vector<9x8x2xf32> to vector<1x8x2xf32>
    %84 = vector.shape_cast %83 : vector<1x8x2xf32> to vector<8x2xf32>
    %85 = vector.extract_strided_slice %71 {offsets = [0, 2], sizes = [2, 438], strides = [1, 1]} : vector<2x484xf32> to vector<2x438xf32>
    %cst_66 = arith.constant dense<0.000000e+00> : vector<8x438xf32>
    %86 = tpu.matmul %84, %85, %cst_66 {dimension_numbers = #tpu.dot_dimension_numbers<[1], [0], [0], [1], [0, 0, 1, 1], [], []>} : vector<8x2xf32>, vector<2x438xf32>, vector<8x438xf32> -> vector<8x438xf32>
    %87 = arith.addf %82, %86 : vector<8x438xf32>
    %88 = vector.extract_strided_slice %63 {offsets = [3, 0, 0], sizes = [1, 8, 2], strides = [1, 1, 1]} : vector<9x8x2xf32> to vector<1x8x2xf32>
    %89 = vector.shape_cast %88 : vector<1x8x2xf32> to vector<8x2xf32>
    %90 = vector.extract_strided_slice %71 {offsets = [0, 22], sizes = [2, 438], strides = [1, 1]} : vector<2x484xf32> to vector<2x438xf32>
    %cst_67 = arith.constant dense<0.000000e+00> : vector<8x438xf32>
    %91 = tpu.matmul %89, %90, %cst_67 {dimension_numbers = #tpu.dot_dimension_numbers<[1], [0], [0], [1], [0, 0, 1, 1], [], []>} : vector<8x2xf32>, vector<2x438xf32>, vector<8x438xf32> -> vector<8x438xf32>
    %92 = arith.addf %87, %91 : vector<8x438xf32>
    %93 = vector.extract_strided_slice %63 {offsets = [4, 0, 0], sizes = [1, 8, 2], strides = [1, 1, 1]} : vector<9x8x2xf32> to vector<1x8x2xf32>
    %94 = vector.shape_cast %93 : vector<1x8x2xf32> to vector<8x2xf32>
    %95 = vector.extract_strided_slice %71 {offsets = [0, 23], sizes = [2, 438], strides = [1, 1]} : vector<2x484xf32> to vector<2x438xf32>
    %cst_68 = arith.constant dense<0.000000e+00> : vector<8x438xf32>
    %96 = tpu.matmul %94, %95, %cst_68 {dimension_numbers = #tpu.dot_dimension_numbers<[1], [0], [0], [1], [0, 0, 1, 1], [], []>} : vector<8x2xf32>, vector<2x438xf32>, vector<8x438xf32> -> vector<8x438xf32>
    %97 = arith.addf %92, %96 : vector<8x438xf32>
    %98 = vector.extract_strided_slice %63 {offsets = [5, 0, 0], sizes = [1, 8, 2], strides = [1, 1, 1]} : vector<9x8x2xf32> to vector<1x8x2xf32>
    %99 = vector.shape_cast %98 : vector<1x8x2xf32> to vector<8x2xf32>
    %100 = vector.extract_strided_slice %71 {offsets = [0, 24], sizes = [2, 438], strides = [1, 1]} : vector<2x484xf32> to vector<2x438xf32>
    %cst_69 = arith.constant dense<0.000000e+00> : vector<8x438xf32>
    %101 = tpu.matmul %99, %100, %cst_69 {dimension_numbers = #tpu.dot_dimension_numbers<[1], [0], [0], [1], [0, 0, 1, 1], [], []>} : vector<8x2xf32>, vector<2x438xf32>, vector<8x438xf32> -> vector<8x438xf32>
    %102 = arith.addf %97, %101 : vector<8x438xf32>
    %103 = vector.extract_strided_slice %63 {offsets = [6, 0, 0], sizes = [1, 8, 2], strides = [1, 1, 1]} : vector<9x8x2xf32> to vector<1x8x2xf32>
    %104 = vector.shape_cast %103 : vector<1x8x2xf32> to vector<8x2xf32>
    %105 = vector.extract_strided_slice %71 {offsets = [0, 44], sizes = [2, 438], strides = [1, 1]} : vector<2x484xf32> to vector<2x438xf32>
    %cst_70 = arith.constant dense<0.000000e+00> : vector<8x438xf32>
    %106 = tpu.matmul %104, %105, %cst_70 {dimension_numbers = #tpu.dot_dimension_numbers<[1], [0], [0], [1], [0, 0, 1, 1], [], []>} : vector<8x2xf32>, vector<2x438xf32>, vector<8x438xf32> -> vector<8x438xf32>
    %107 = arith.addf %102, %106 : vector<8x438xf32>
    %108 = vector.extract_strided_slice %63 {offsets = [7, 0, 0], sizes = [1, 8, 2], strides = [1, 1, 1]} : vector<9x8x2xf32> to vector<1x8x2xf32>
    %109 = vector.shape_cast %108 : vector<1x8x2xf32> to vector<8x2xf32>
    %110 = vector.extract_strided_slice %71 {offsets = [0, 45], sizes = [2, 438], strides = [1, 1]} : vector<2x484xf32> to vector<2x438xf32>
    %cst_71 = arith.constant dense<0.000000e+00> : vector<8x438xf32>
    %111 = tpu.matmul %109, %110, %cst_71 {dimension_numbers = #tpu.dot_dimension_numbers<[1], [0], [0], [1], [0, 0, 1, 1], [], []>} : vector<8x2xf32>, vector<2x438xf32>, vector<8x438xf32> -> vector<8x438xf32>
    %112 = arith.addf %107, %111 : vector<8x438xf32>
    %113 = vector.extract_strided_slice %63 {offsets = [8, 0, 0], sizes = [1, 8, 2], strides = [1, 1, 1]} : vector<9x8x2xf32> to vector<1x8x2xf32>
    %114 = vector.shape_cast %113 : vector<1x8x2xf32> to vector<8x2xf32>
    %115 = vector.extract_strided_slice %71 {offsets = [0, 46], sizes = [2, 438], strides = [1, 1]} : vector<2x484xf32> to vector<2x438xf32>
    %cst_72 = arith.constant dense<0.000000e+00> : vector<8x438xf32>
    %116 = tpu.matmul %114, %115, %cst_72 {dimension_numbers = #tpu.dot_dimension_numbers<[1], [0], [0], [1], [0, 0, 1, 1], [], []>} : vector<8x2xf32>, vector<2x438xf32>, vector<8x438xf32> -> vector<8x438xf32>
    %117 = arith.addf %112, %116 : vector<8x438xf32>
    %118 = vector.broadcast %64 : vector<8x1xf32> to vector<8x438xf32>
    %119 = arith.addf %117, %118 : vector<8x438xf32>
    %cst_73 = arith.constant 0.000000e+00 : f32
    %120 = vector.broadcast %cst_73 : f32 to vector<8x438xf32>
    %121 = arith.maximumf %119, %120 : vector<8x438xf32>
    %122 = vector.extract_strided_slice %121 {offsets = [0, 0], sizes = [8, 20], strides = [1, 1]} : vector<8x438xf32> to vector<8x20xf32>
    %c0_74 = arith.constant 0 : index
    %c0_75 = arith.constant 0 : index
    %c23_76 = arith.constant 23 : index
    %123 = vector.load %arg27[%c0_74, %c0_75, %c23_76] : memref<2x8x484xf32, #tpu.memory_space<vmem>>, vector<1x8x20xf32>
    %124 = vector.shape_cast %123 : vector<1x8x20xf32> to vector<8x20xf32>
    %125 = vector.shape_cast %122 : vector<8x20xf32> to vector<1x8x20xf32>
    tpu.vector_store %arg27[%c0_74, %c0_75, %c23_76], %125 {strides = array<i32>} : memref<2x8x484xf32, #tpu.memory_space<vmem>>, vector<1x8x20xf32>,
    %126 = vector.extract_strided_slice %121 {offsets = [0, 22], sizes = [8, 20], strides = [1, 1]} : vector<8x438xf32> to vector<8x20xf32>
    %c0_77 = arith.constant 0 : index
    %c0_78 = arith.constant 0 : index
    %c45_79 = arith.constant 45 : index
    %127 = vector.load %arg27[%c0_77, %c0_78, %c45_79] : memref<2x8x484xf32, #tpu.memory_space<vmem>>, vector<1x8x20xf32>
    %128 = vector.shape_cast %127 : vector<1x8x20xf32> to vector<8x20xf32>
    %129 = vector.shape_cast %126 : vector<8x20xf32> to vector<1x8x20xf32>
    tpu.vector_store %arg27[%c0_77, %c0_78, %c45_79], %129 {strides = array<i32>} : memref<2x8x484xf32, #tpu.memory_space<vmem>>, vector<1x8x20xf32>,
    %130 = vector.extract_strided_slice %121 {offsets = [0, 44], sizes = [8, 20], strides = [1, 1]} : vector<8x438xf32> to vector<8x20xf32>
    %c0_80 = arith.constant 0 : index
    %c0_81 = arith.constant 0 : index
    %c67_82 = arith.constant 67 : index
    %131 = vector.load %arg27[%c0_80, %c0_81, %c67_82] : memref<2x8x484xf32, #tpu.memory_space<vmem>>, vector<1x8x20xf32>
    %132 = vector.shape_cast %131 : vector<1x8x20xf32> to vector<8x20xf32>
    %133 = vector.shape_cast %130 : vector<8x20xf32> to vector<1x8x20xf32>
    tpu.vector_store %arg27[%c0_80, %c0_81, %c67_82], %133 {strides = array<i32>} : memref<2x8x484xf32, #tpu.memory_space<vmem>>, vector<1x8x20xf32>,
    %134 = vector.extract_strided_slice %121 {offsets = [0, 66], sizes = [8, 20], strides = [1, 1]} : vector<8x438xf32> to vector<8x20xf32>
    %c0_83 = arith.constant 0 : index
    %c0_84 = arith.constant 0 : index
    %c89_85 = arith.constant 89 : index
    %135 = vector.load %arg27[%c0_83, %c0_84, %c89_85] : memref<2x8x484xf32, #tpu.memory_space<vmem>>, vector<1x8x20xf32>
    %136 = vector.shape_cast %135 : vector<1x8x20xf32> to vector<8x20xf32>
    %137 = vector.shape_cast %134 : vector<8x20xf32> to vector<1x8x20xf32>
    tpu.vector_store %arg27[%c0_83, %c0_84, %c89_85], %137 {strides = array<i32>} : memref<2x8x484xf32, #tpu.memory_space<vmem>>, vector<1x8x20xf32>,
    %138 = vector.extract_strided_slice %121 {offsets = [0, 88], sizes = [8, 20], strides = [1, 1]} : vector<8x438xf32> to vector<8x20xf32>
    %c0_86 = arith.constant 0 : index
    %c0_87 = arith.constant 0 : index
    %c111_88 = arith.constant 111 : index
    %139 = vector.load %arg27[%c0_86, %c0_87, %c111_88] : memref<2x8x484xf32, #tpu.memory_space<vmem>>, vector<1x8x20xf32>
    %140 = vector.shape_cast %139 : vector<1x8x20xf32> to vector<8x20xf32>
    %141 = vector.shape_cast %138 : vector<8x20xf32> to vector<1x8x20xf32>
    tpu.vector_store %arg27[%c0_86, %c0_87, %c111_88], %141 {strides = array<i32>} : memref<2x8x484xf32, #tpu.memory_space<vmem>>, vector<1x8x20xf32>,
    %142 = vector.extract_strided_slice %121 {offsets = [0, 110], sizes = [8, 20], strides = [1, 1]} : vector<8x438xf32> to vector<8x20xf32>
    %c0_89 = arith.constant 0 : index
    %c0_90 = arith.constant 0 : index
    %c133_91 = arith.constant 133 : index
    %143 = vector.load %arg27[%c0_89, %c0_90, %c133_91] : memref<2x8x484xf32, #tpu.memory_space<vmem>>, vector<1x8x20xf32>
    %144 = vector.shape_cast %143 : vector<1x8x20xf32> to vector<8x20xf32>
    %145 = vector.shape_cast %142 : vector<8x20xf32> to vector<1x8x20xf32>
    tpu.vector_store %arg27[%c0_89, %c0_90, %c133_91], %145 {strides = array<i32>} : memref<2x8x484xf32, #tpu.memory_space<vmem>>, vector<1x8x20xf32>,
    %146 = vector.extract_strided_slice %121 {offsets = [0, 132], sizes = [8, 20], strides = [1, 1]} : vector<8x438xf32> to vector<8x20xf32>
    %c0_92 = arith.constant 0 : index
    %c0_93 = arith.constant 0 : index
    %c155_94 = arith.constant 155 : index
    %147 = vector.load %arg27[%c0_92, %c0_93, %c155_94] : memref<2x8x484xf32, #tpu.memory_space<vmem>>, vector<1x8x20xf32>
    %148 = vector.shape_cast %147 : vector<1x8x20xf32> to vector<8x20xf32>
    %149 = vector.shape_cast %146 : vector<8x20xf32> to vector<1x8x20xf32>
    tpu.vector_store %arg27[%c0_92, %c0_93, %c155_94], %149 {strides = array<i32>} : memref<2x8x484xf32, #tpu.memory_space<vmem>>, vector<1x8x20xf32>,
    %150 = vector.extract_strided_slice %121 {offsets = [0, 154], sizes = [8, 20], strides = [1, 1]} : vector<8x438xf32> to vector<8x20xf32>
    %c0_95 = arith.constant 0 : index
    %c0_96 = arith.constant 0 : index
    %c177_97 = arith.constant 177 : index
    %151 = vector.load %arg27[%c0_95, %c0_96, %c177_97] : memref<2x8x484xf32, #tpu.memory_space<vmem>>, vector<1x8x20xf32>
    %152 = vector.shape_cast %151 : vector<1x8x20xf32> to vector<8x20xf32>
    %153 = vector.shape_cast %150 : vector<8x20xf32> to vector<1x8x20xf32>
    tpu.vector_store %arg27[%c0_95, %c0_96, %c177_97], %153 {strides = array<i32>} : memref<2x8x484xf32, #tpu.memory_space<vmem>>, vector<1x8x20xf32>,
    %154 = vector.extract_strided_slice %121 {offsets = [0, 176], sizes = [8, 20], strides = [1, 1]} : vector<8x438xf32> to vector<8x20xf32>
    %c0_98 = arith.constant 0 : index
    %c0_99 = arith.constant 0 : index
    %c199_100 = arith.constant 199 : index
    %155 = vector.load %arg27[%c0_98, %c0_99, %c199_100] : memref<2x8x484xf32, #tpu.memory_space<vmem>>, vector<1x8x20xf32>
    %156 = vector.shape_cast %155 : vector<1x8x20xf32> to vector<8x20xf32>
    %157 = vector.shape_cast %154 : vector<8x20xf32> to vector<1x8x20xf32>
    tpu.vector_store %arg27[%c0_98, %c0_99, %c199_100], %157 {strides = array<i32>} : memref<2x8x484xf32, #tpu.memory_space<vmem>>, vector<1x8x20xf32>,
    %158 = vector.extract_strided_slice %121 {offsets = [0, 198], sizes = [8, 20], strides = [1, 1]} : vector<8x438xf32> to vector<8x20xf32>
    %c0_101 = arith.constant 0 : index
    %c0_102 = arith.constant 0 : index
    %c221_103 = arith.constant 221 : index
    %159 = vector.load %arg27[%c0_101, %c0_102, %c221_103] : memref<2x8x484xf32, #tpu.memory_space<vmem>>, vector<1x8x20xf32>
    %160 = vector.shape_cast %159 : vector<1x8x20xf32> to vector<8x20xf32>
    %161 = vector.shape_cast %158 : vector<8x20xf32> to vector<1x8x20xf32>
    tpu.vector_store %arg27[%c0_101, %c0_102, %c221_103], %161 {strides = array<i32>} : memref<2x8x484xf32, #tpu.memory_space<vmem>>, vector<1x8x20xf32>,
    %162 = vector.extract_strided_slice %121 {offsets = [0, 220], sizes = [8, 20], strides = [1, 1]} : vector<8x438xf32> to vector<8x20xf32>
    %c0_104 = arith.constant 0 : index
    %c0_105 = arith.constant 0 : index
    %c243_106 = arith.constant 243 : index
    %163 = vector.load %arg27[%c0_104, %c0_105, %c243_106] : memref<2x8x484xf32, #tpu.memory_space<vmem>>, vector<1x8x20xf32>
    %164 = vector.shape_cast %163 : vector<1x8x20xf32> to vector<8x20xf32>
    %165 = vector.shape_cast %162 : vector<8x20xf32> to vector<1x8x20xf32>
    tpu.vector_store %arg27[%c0_104, %c0_105, %c243_106], %165 {strides = array<i32>} : memref<2x8x484xf32, #tpu.memory_space<vmem>>, vector<1x8x20xf32>,
    %166 = vector.extract_strided_slice %121 {offsets = [0, 242], sizes = [8, 20], strides = [1, 1]} : vector<8x438xf32> to vector<8x20xf32>
    %c0_107 = arith.constant 0 : index
    %c0_108 = arith.constant 0 : index
    %c265_109 = arith.constant 265 : index
    %167 = vector.load %arg27[%c0_107, %c0_108, %c265_109] : memref<2x8x484xf32, #tpu.memory_space<vmem>>, vector<1x8x20xf32>
    %168 = vector.shape_cast %167 : vector<1x8x20xf32> to vector<8x20xf32>
    %169 = vector.shape_cast %166 : vector<8x20xf32> to vector<1x8x20xf32>
    tpu.vector_store %arg27[%c0_107, %c0_108, %c265_109], %169 {strides = array<i32>} : memref<2x8x484xf32, #tpu.memory_space<vmem>>, vector<1x8x20xf32>,
    %170 = vector.extract_strided_slice %121 {offsets = [0, 264], sizes = [8, 20], strides = [1, 1]} : vector<8x438xf32> to vector<8x20xf32>
    %c0_110 = arith.constant 0 : index
    %c0_111 = arith.constant 0 : index
    %c287_112 = arith.constant 287 : index
    %171 = vector.load %arg27[%c0_110, %c0_111, %c287_112] : memref<2x8x484xf32, #tpu.memory_space<vmem>>, vector<1x8x20xf32>
    %172 = vector.shape_cast %171 : vector<1x8x20xf32> to vector<8x20xf32>
    %173 = vector.shape_cast %170 : vector<8x20xf32> to vector<1x8x20xf32>
    tpu.vector_store %arg27[%c0_110, %c0_111, %c287_112], %173 {strides = array<i32>} : memref<2x8x484xf32, #tpu.memory_space<vmem>>, vector<1x8x20xf32>,
    %174 = vector.extract_strided_slice %121 {offsets = [0, 286], sizes = [8, 20], strides = [1, 1]} : vector<8x438xf32> to vector<8x20xf32>
    %c0_113 = arith.constant 0 : index
    %c0_114 = arith.constant 0 : index
    %c309_115 = arith.constant 309 : index
    %175 = vector.load %arg27[%c0_113, %c0_114, %c309_115] : memref<2x8x484xf32, #tpu.memory_space<vmem>>, vector<1x8x20xf32>
    %176 = vector.shape_cast %175 : vector<1x8x20xf32> to vector<8x20xf32>
    %177 = vector.shape_cast %174 : vector<8x20xf32> to vector<1x8x20xf32>
    tpu.vector_store %arg27[%c0_113, %c0_114, %c309_115], %177 {strides = array<i32>} : memref<2x8x484xf32, #tpu.memory_space<vmem>>, vector<1x8x20xf32>,
    %178 = vector.extract_strided_slice %121 {offsets = [0, 308], sizes = [8, 20], strides = [1, 1]} : vector<8x438xf32> to vector<8x20xf32>
    %c0_116 = arith.constant 0 : index
    %c0_117 = arith.constant 0 : index
    %c331_118 = arith.constant 331 : index
    %179 = vector.load %arg27[%c0_116, %c0_117, %c331_118] : memref<2x8x484xf32, #tpu.memory_space<vmem>>, vector<1x8x20xf32>
    %180 = vector.shape_cast %179 : vector<1x8x20xf32> to vector<8x20xf32>
    %181 = vector.shape_cast %178 : vector<8x20xf32> to vector<1x8x20xf32>
    tpu.vector_store %arg27[%c0_116, %c0_117, %c331_118], %181 {strides = array<i32>} : memref<2x8x484xf32, #tpu.memory_space<vmem>>, vector<1x8x20xf32>,
    %182 = vector.extract_strided_slice %121 {offsets = [0, 330], sizes = [8, 20], strides = [1, 1]} : vector<8x438xf32> to vector<8x20xf32>
    %c0_119 = arith.constant 0 : index
    %c0_120 = arith.constant 0 : index
    %c353_121 = arith.constant 353 : index
    %183 = vector.load %arg27[%c0_119, %c0_120, %c353_121] : memref<2x8x484xf32, #tpu.memory_space<vmem>>, vector<1x8x20xf32>
    %184 = vector.shape_cast %183 : vector<1x8x20xf32> to vector<8x20xf32>
    %185 = vector.shape_cast %182 : vector<8x20xf32> to vector<1x8x20xf32>
    tpu.vector_store %arg27[%c0_119, %c0_120, %c353_121], %185 {strides = array<i32>} : memref<2x8x484xf32, #tpu.memory_space<vmem>>, vector<1x8x20xf32>,
    %186 = vector.extract_strided_slice %121 {offsets = [0, 352], sizes = [8, 20], strides = [1, 1]} : vector<8x438xf32> to vector<8x20xf32>
    %c0_122 = arith.constant 0 : index
    %c0_123 = arith.constant 0 : index
    %c375_124 = arith.constant 375 : index
    %187 = vector.load %arg27[%c0_122, %c0_123, %c375_124] : memref<2x8x484xf32, #tpu.memory_space<vmem>>, vector<1x8x20xf32>
    %188 = vector.shape_cast %187 : vector<1x8x20xf32> to vector<8x20xf32>
    %189 = vector.shape_cast %186 : vector<8x20xf32> to vector<1x8x20xf32>
    tpu.vector_store %arg27[%c0_122, %c0_123, %c375_124], %189 {strides = array<i32>} : memref<2x8x484xf32, #tpu.memory_space<vmem>>, vector<1x8x20xf32>,
    %190 = vector.extract_strided_slice %121 {offsets = [0, 374], sizes = [8, 20], strides = [1, 1]} : vector<8x438xf32> to vector<8x20xf32>
    %c0_125 = arith.constant 0 : index
    %c0_126 = arith.constant 0 : index
    %c397_127 = arith.constant 397 : index
    %191 = vector.load %arg27[%c0_125, %c0_126, %c397_127] : memref<2x8x484xf32, #tpu.memory_space<vmem>>, vector<1x8x20xf32>
    %192 = vector.shape_cast %191 : vector<1x8x20xf32> to vector<8x20xf32>
    %193 = vector.shape_cast %190 : vector<8x20xf32> to vector<1x8x20xf32>
    tpu.vector_store %arg27[%c0_125, %c0_126, %c397_127], %193 {strides = array<i32>} : memref<2x8x484xf32, #tpu.memory_space<vmem>>, vector<1x8x20xf32>,
    %194 = vector.extract_strided_slice %121 {offsets = [0, 396], sizes = [8, 20], strides = [1, 1]} : vector<8x438xf32> to vector<8x20xf32>
    %c0_128 = arith.constant 0 : index
    %c0_129 = arith.constant 0 : index
    %c419_130 = arith.constant 419 : index
    %195 = vector.load %arg27[%c0_128, %c0_129, %c419_130] : memref<2x8x484xf32, #tpu.memory_space<vmem>>, vector<1x8x20xf32>
    %196 = vector.shape_cast %195 : vector<1x8x20xf32> to vector<8x20xf32>
    %197 = vector.shape_cast %194 : vector<8x20xf32> to vector<1x8x20xf32>
    tpu.vector_store %arg27[%c0_128, %c0_129, %c419_130], %197 {strides = array<i32>} : memref<2x8x484xf32, #tpu.memory_space<vmem>>, vector<1x8x20xf32>,
    %198 = vector.extract_strided_slice %121 {offsets = [0, 418], sizes = [8, 20], strides = [1, 1]} : vector<8x438xf32> to vector<8x20xf32>
    %c0_131 = arith.constant 0 : index
    %c0_132 = arith.constant 0 : index
    %c441_133 = arith.constant 441 : index
    %199 = vector.load %arg27[%c0_131, %c0_132, %c441_133] : memref<2x8x484xf32, #tpu.memory_space<vmem>>, vector<1x8x20xf32>
    %200 = vector.shape_cast %199 : vector<1x8x20xf32> to vector<8x20xf32>
    %201 = vector.shape_cast %198 : vector<8x20xf32> to vector<1x8x20xf32>
    tpu.vector_store %arg27[%c0_131, %c0_132, %c441_133], %201 {strides = array<i32>} : memref<2x8x484xf32, #tpu.memory_space<vmem>>, vector<1x8x20xf32>,
    %202 = vector.extract_strided_slice %69 {offsets = [1, 0, 0], sizes = [1, 2, 484], strides = [1, 1, 1]} : vector<2x2x484xf32> to vector<1x2x484xf32>
    %203 = vector.shape_cast %202 : vector<1x2x484xf32> to vector<2x484xf32>
    %cst_134 = arith.constant 0.000000e+00 : f32
    %204 = vector.broadcast %cst_134 : f32 to vector<8x438xf32>
    %205 = vector.extract_strided_slice %63 {offsets = [0, 0, 0], sizes = [1, 8, 2], strides = [1, 1, 1]} : vector<9x8x2xf32> to vector<1x8x2xf32>
    %206 = vector.shape_cast %205 : vector<1x8x2xf32> to vector<8x2xf32>
    %207 = vector.extract_strided_slice %203 {offsets = [0, 0], sizes = [2, 438], strides = [1, 1]} : vector<2x484xf32> to vector<2x438xf32>
    %cst_135 = arith.constant dense<0.000000e+00> : vector<8x438xf32>
    %208 = tpu.matmul %206, %207, %cst_135 {dimension_numbers = #tpu.dot_dimension_numbers<[1], [0], [0], [1], [0, 0, 1, 1], [], []>} : vector<8x2xf32>, vector<2x438xf32>, vector<8x438xf32> -> vector<8x438xf32>
    %209 = arith.addf %204, %208 : vector<8x438xf32>
    %210 = vector.extract_strided_slice %63 {offsets = [1, 0, 0], sizes = [1, 8, 2], strides = [1, 1, 1]} : vector<9x8x2xf32> to vector<1x8x2xf32>
    %211 = vector.shape_cast %210 : vector<1x8x2xf32> to vector<8x2xf32>
    %212 = vector.extract_strided_slice %203 {offsets = [0, 1], sizes = [2, 438], strides = [1, 1]} : vector<2x484xf32> to vector<2x438xf32>
    %cst_136 = arith.constant dense<0.000000e+00> : vector<8x438xf32>
    %213 = tpu.matmul %211, %212, %cst_136 {dimension_numbers = #tpu.dot_dimension_numbers<[1], [0], [0], [1], [0, 0, 1, 1], [], []>} : vector<8x2xf32>, vector<2x438xf32>, vector<8x438xf32> -> vector<8x438xf32>
    %214 = arith.addf %209, %213 : vector<8x438xf32>
    %215 = vector.extract_strided_slice %63 {offsets = [2, 0, 0], sizes = [1, 8, 2], strides = [1, 1, 1]} : vector<9x8x2xf32> to vector<1x8x2xf32>
    %216 = vector.shape_cast %215 : vector<1x8x2xf32> to vector<8x2xf32>
    %217 = vector.extract_strided_slice %203 {offsets = [0, 2], sizes = [2, 438], strides = [1, 1]} : vector<2x484xf32> to vector<2x438xf32>
    %cst_137 = arith.constant dense<0.000000e+00> : vector<8x438xf32>
    %218 = tpu.matmul %216, %217, %cst_137 {dimension_numbers = #tpu.dot_dimension_numbers<[1], [0], [0], [1], [0, 0, 1, 1], [], []>} : vector<8x2xf32>, vector<2x438xf32>, vector<8x438xf32> -> vector<8x438xf32>
    %219 = arith.addf %214, %218 : vector<8x438xf32>
    %220 = vector.extract_strided_slice %63 {offsets = [3, 0, 0], sizes = [1, 8, 2], strides = [1, 1, 1]} : vector<9x8x2xf32> to vector<1x8x2xf32>
    %221 = vector.shape_cast %220 : vector<1x8x2xf32> to vector<8x2xf32>
    %222 = vector.extract_strided_slice %203 {offsets = [0, 22], sizes = [2, 438], strides = [1, 1]} : vector<2x484xf32> to vector<2x438xf32>
    %cst_138 = arith.constant dense<0.000000e+00> : vector<8x438xf32>
    %223 = tpu.matmul %221, %222, %cst_138 {dimension_numbers = #tpu.dot_dimension_numbers<[1], [0], [0], [1], [0, 0, 1, 1], [], []>} : vector<8x2xf32>, vector<2x438xf32>, vector<8x438xf32> -> vector<8x438xf32>
    %224 = arith.addf %219, %223 : vector<8x438xf32>
    %225 = vector.extract_strided_slice %63 {offsets = [4, 0, 0], sizes = [1, 8, 2], strides = [1, 1, 1]} : vector<9x8x2xf32> to vector<1x8x2xf32>
    %226 = vector.shape_cast %225 : vector<1x8x2xf32> to vector<8x2xf32>
    %227 = vector.extract_strided_slice %203 {offsets = [0, 23], sizes = [2, 438], strides = [1, 1]} : vector<2x484xf32> to vector<2x438xf32>
    %cst_139 = arith.constant dense<0.000000e+00> : vector<8x438xf32>
    %228 = tpu.matmul %226, %227, %cst_139 {dimension_numbers = #tpu.dot_dimension_numbers<[1], [0], [0], [1], [0, 0, 1, 1], [], []>} : vector<8x2xf32>, vector<2x438xf32>, vector<8x438xf32> -> vector<8x438xf32>
    %229 = arith.addf %224, %228 : vector<8x438xf32>
    %230 = vector.extract_strided_slice %63 {offsets = [5, 0, 0], sizes = [1, 8, 2], strides = [1, 1, 1]} : vector<9x8x2xf32> to vector<1x8x2xf32>
    %231 = vector.shape_cast %230 : vector<1x8x2xf32> to vector<8x2xf32>
    %232 = vector.extract_strided_slice %203 {offsets = [0, 24], sizes = [2, 438], strides = [1, 1]} : vector<2x484xf32> to vector<2x438xf32>
    %cst_140 = arith.constant dense<0.000000e+00> : vector<8x438xf32>
    %233 = tpu.matmul %231, %232, %cst_140 {dimension_numbers = #tpu.dot_dimension_numbers<[1], [0], [0], [1], [0, 0, 1, 1], [], []>} : vector<8x2xf32>, vector<2x438xf32>, vector<8x438xf32> -> vector<8x438xf32>
    %234 = arith.addf %229, %233 : vector<8x438xf32>
    %235 = vector.extract_strided_slice %63 {offsets = [6, 0, 0], sizes = [1, 8, 2], strides = [1, 1, 1]} : vector<9x8x2xf32> to vector<1x8x2xf32>
    %236 = vector.shape_cast %235 : vector<1x8x2xf32> to vector<8x2xf32>
    %237 = vector.extract_strided_slice %203 {offsets = [0, 44], sizes = [2, 438], strides = [1, 1]} : vector<2x484xf32> to vector<2x438xf32>
    %cst_141 = arith.constant dense<0.000000e+00> : vector<8x438xf32>
    %238 = tpu.matmul %236, %237, %cst_141 {dimension_numbers = #tpu.dot_dimension_numbers<[1], [0], [0], [1], [0, 0, 1, 1], [], []>} : vector<8x2xf32>, vector<2x438xf32>, vector<8x438xf32> -> vector<8x438xf32>
    %239 = arith.addf %234, %238 : vector<8x438xf32>
    %240 = vector.extract_strided_slice %63 {offsets = [7, 0, 0], sizes = [1, 8, 2], strides = [1, 1, 1]} : vector<9x8x2xf32> to vector<1x8x2xf32>
    %241 = vector.shape_cast %240 : vector<1x8x2xf32> to vector<8x2xf32>
    %242 = vector.extract_strided_slice %203 {offsets = [0, 45], sizes = [2, 438], strides = [1, 1]} : vector<2x484xf32> to vector<2x438xf32>
    %cst_142 = arith.constant dense<0.000000e+00> : vector<8x438xf32>
    %243 = tpu.matmul %241, %242, %cst_142 {dimension_numbers = #tpu.dot_dimension_numbers<[1], [0], [0], [1], [0, 0, 1, 1], [], []>} : vector<8x2xf32>, vector<2x438xf32>, vector<8x438xf32> -> vector<8x438xf32>
    %244 = arith.addf %239, %243 : vector<8x438xf32>
    %245 = vector.extract_strided_slice %63 {offsets = [8, 0, 0], sizes = [1, 8, 2], strides = [1, 1, 1]} : vector<9x8x2xf32> to vector<1x8x2xf32>
    %246 = vector.shape_cast %245 : vector<1x8x2xf32> to vector<8x2xf32>
    %247 = vector.extract_strided_slice %203 {offsets = [0, 46], sizes = [2, 438], strides = [1, 1]} : vector<2x484xf32> to vector<2x438xf32>
    %cst_143 = arith.constant dense<0.000000e+00> : vector<8x438xf32>
    %248 = tpu.matmul %246, %247, %cst_143 {dimension_numbers = #tpu.dot_dimension_numbers<[1], [0], [0], [1], [0, 0, 1, 1], [], []>} : vector<8x2xf32>, vector<2x438xf32>, vector<8x438xf32> -> vector<8x438xf32>
    %249 = arith.addf %244, %248 : vector<8x438xf32>
    %250 = vector.broadcast %64 : vector<8x1xf32> to vector<8x438xf32>
    %251 = arith.addf %249, %250 : vector<8x438xf32>
    %cst_144 = arith.constant 0.000000e+00 : f32
    %252 = vector.broadcast %cst_144 : f32 to vector<8x438xf32>
    %253 = arith.maximumf %251, %252 : vector<8x438xf32>
    %254 = vector.extract_strided_slice %253 {offsets = [0, 0], sizes = [8, 20], strides = [1, 1]} : vector<8x438xf32> to vector<8x20xf32>
    %c1 = arith.constant 1 : index
    %c0_145 = arith.constant 0 : index
    %c23_146 = arith.constant 23 : index
    %255 = vector.load %arg27[%c1, %c0_145, %c23_146] : memref<2x8x484xf32, #tpu.memory_space<vmem>>, vector<1x8x20xf32>
    %256 = vector.shape_cast %255 : vector<1x8x20xf32> to vector<8x20xf32>
    %257 = vector.shape_cast %254 : vector<8x20xf32> to vector<1x8x20xf32>
    tpu.vector_store %arg27[%c1, %c0_145, %c23_146], %257 {strides = array<i32>} : memref<2x8x484xf32, #tpu.memory_space<vmem>>, vector<1x8x20xf32>,
    %258 = vector.extract_strided_slice %253 {offsets = [0, 22], sizes = [8, 20], strides = [1, 1]} : vector<8x438xf32> to vector<8x20xf32>
    %c1_147 = arith.constant 1 : index
    %c0_148 = arith.constant 0 : index
    %c45_149 = arith.constant 45 : index
    %259 = vector.load %arg27[%c1_147, %c0_148, %c45_149] : memref<2x8x484xf32, #tpu.memory_space<vmem>>, vector<1x8x20xf32>
    %260 = vector.shape_cast %259 : vector<1x8x20xf32> to vector<8x20xf32>
    %261 = vector.shape_cast %258 : vector<8x20xf32> to vector<1x8x20xf32>
    tpu.vector_store %arg27[%c1_147, %c0_148, %c45_149], %261 {strides = array<i32>} : memref<2x8x484xf32, #tpu.memory_space<vmem>>, vector<1x8x20xf32>,
    %262 = vector.extract_strided_slice %253 {offsets = [0, 44], sizes = [8, 20], strides = [1, 1]} : vector<8x438xf32> to vector<8x20xf32>
    %c1_150 = arith.constant 1 : index
    %c0_151 = arith.constant 0 : index
    %c67_152 = arith.constant 67 : index
    %263 = vector.load %arg27[%c1_150, %c0_151, %c67_152] : memref<2x8x484xf32, #tpu.memory_space<vmem>>, vector<1x8x20xf32>
    %264 = vector.shape_cast %263 : vector<1x8x20xf32> to vector<8x20xf32>
    %265 = vector.shape_cast %262 : vector<8x20xf32> to vector<1x8x20xf32>
    tpu.vector_store %arg27[%c1_150, %c0_151, %c67_152], %265 {strides = array<i32>} : memref<2x8x484xf32, #tpu.memory_space<vmem>>, vector<1x8x20xf32>,
    %266 = vector.extract_strided_slice %253 {offsets = [0, 66], sizes = [8, 20], strides = [1, 1]} : vector<8x438xf32> to vector<8x20xf32>
    %c1_153 = arith.constant 1 : index
    %c0_154 = arith.constant 0 : index
    %c89_155 = arith.constant 89 : index
    %267 = vector.load %arg27[%c1_153, %c0_154, %c89_155] : memref<2x8x484xf32, #tpu.memory_space<vmem>>, vector<1x8x20xf32>
    %268 = vector.shape_cast %267 : vector<1x8x20xf32> to vector<8x20xf32>
    %269 = vector.shape_cast %266 : vector<8x20xf32> to vector<1x8x20xf32>
    tpu.vector_store %arg27[%c1_153, %c0_154, %c89_155], %269 {strides = array<i32>} : memref<2x8x484xf32, #tpu.memory_space<vmem>>, vector<1x8x20xf32>,
    %270 = vector.extract_strided_slice %253 {offsets = [0, 88], sizes = [8, 20], strides = [1, 1]} : vector<8x438xf32> to vector<8x20xf32>
    %c1_156 = arith.constant 1 : index
    %c0_157 = arith.constant 0 : index
    %c111_158 = arith.constant 111 : index
    %271 = vector.load %arg27[%c1_156, %c0_157, %c111_158] : memref<2x8x484xf32, #tpu.memory_space<vmem>>, vector<1x8x20xf32>
    %272 = vector.shape_cast %271 : vector<1x8x20xf32> to vector<8x20xf32>
    %273 = vector.shape_cast %270 : vector<8x20xf32> to vector<1x8x20xf32>
    tpu.vector_store %arg27[%c1_156, %c0_157, %c111_158], %273 {strides = array<i32>} : memref<2x8x484xf32, #tpu.memory_space<vmem>>, vector<1x8x20xf32>,
    %274 = vector.extract_strided_slice %253 {offsets = [0, 110], sizes = [8, 20], strides = [1, 1]} : vector<8x438xf32> to vector<8x20xf32>
    %c1_159 = arith.constant 1 : index
    %c0_160 = arith.constant 0 : index
    %c133_161 = arith.constant 133 : index
    %275 = vector.load %arg27[%c1_159, %c0_160, %c133_161] : memref<2x8x484xf32, #tpu.memory_space<vmem>>, vector<1x8x20xf32>
    %276 = vector.shape_cast %275 : vector<1x8x20xf32> to vector<8x20xf32>
    %277 = vector.shape_cast %274 : vector<8x20xf32> to vector<1x8x20xf32>
    tpu.vector_store %arg27[%c1_159, %c0_160, %c133_161], %277 {strides = array<i32>} : memref<2x8x484xf32, #tpu.memory_space<vmem>>, vector<1x8x20xf32>,
    %278 = vector.extract_strided_slice %253 {offsets = [0, 132], sizes = [8, 20], strides = [1, 1]} : vector<8x438xf32> to vector<8x20xf32>
    %c1_162 = arith.constant 1 : index
    %c0_163 = arith.constant 0 : index
    %c155_164 = arith.constant 155 : index
    %279 = vector.load %arg27[%c1_162, %c0_163, %c155_164] : memref<2x8x484xf32, #tpu.memory_space<vmem>>, vector<1x8x20xf32>
    %280 = vector.shape_cast %279 : vector<1x8x20xf32> to vector<8x20xf32>
    %281 = vector.shape_cast %278 : vector<8x20xf32> to vector<1x8x20xf32>
    tpu.vector_store %arg27[%c1_162, %c0_163, %c155_164], %281 {strides = array<i32>} : memref<2x8x484xf32, #tpu.memory_space<vmem>>, vector<1x8x20xf32>,
    %282 = vector.extract_strided_slice %253 {offsets = [0, 154], sizes = [8, 20], strides = [1, 1]} : vector<8x438xf32> to vector<8x20xf32>
    %c1_165 = arith.constant 1 : index
    %c0_166 = arith.constant 0 : index
    %c177_167 = arith.constant 177 : index
    %283 = vector.load %arg27[%c1_165, %c0_166, %c177_167] : memref<2x8x484xf32, #tpu.memory_space<vmem>>, vector<1x8x20xf32>
    %284 = vector.shape_cast %283 : vector<1x8x20xf32> to vector<8x20xf32>
    %285 = vector.shape_cast %282 : vector<8x20xf32> to vector<1x8x20xf32>
    tpu.vector_store %arg27[%c1_165, %c0_166, %c177_167], %285 {strides = array<i32>} : memref<2x8x484xf32, #tpu.memory_space<vmem>>, vector<1x8x20xf32>,
    %286 = vector.extract_strided_slice %253 {offsets = [0, 176], sizes = [8, 20], strides = [1, 1]} : vector<8x438xf32> to vector<8x20xf32>
    %c1_168 = arith.constant 1 : index
    %c0_169 = arith.constant 0 : index
    %c199_170 = arith.constant 199 : index
    %287 = vector.load %arg27[%c1_168, %c0_169, %c199_170] : memref<2x8x484xf32, #tpu.memory_space<vmem>>, vector<1x8x20xf32>
    %288 = vector.shape_cast %287 : vector<1x8x20xf32> to vector<8x20xf32>
    %289 = vector.shape_cast %286 : vector<8x20xf32> to vector<1x8x20xf32>
    tpu.vector_store %arg27[%c1_168, %c0_169, %c199_170], %289 {strides = array<i32>} : memref<2x8x484xf32, #tpu.memory_space<vmem>>, vector<1x8x20xf32>,
    %290 = vector.extract_strided_slice %253 {offsets = [0, 198], sizes = [8, 20], strides = [1, 1]} : vector<8x438xf32> to vector<8x20xf32>
    %c1_171 = arith.constant 1 : index
    %c0_172 = arith.constant 0 : index
    %c221_173 = arith.constant 221 : index
    %291 = vector.load %arg27[%c1_171, %c0_172, %c221_173] : memref<2x8x484xf32, #tpu.memory_space<vmem>>, vector<1x8x20xf32>
    %292 = vector.shape_cast %291 : vector<1x8x20xf32> to vector<8x20xf32>
    %293 = vector.shape_cast %290 : vector<8x20xf32> to vector<1x8x20xf32>
    tpu.vector_store %arg27[%c1_171, %c0_172, %c221_173], %293 {strides = array<i32>} : memref<2x8x484xf32, #tpu.memory_space<vmem>>, vector<1x8x20xf32>,
    %294 = vector.extract_strided_slice %253 {offsets = [0, 220], sizes = [8, 20], strides = [1, 1]} : vector<8x438xf32> to vector<8x20xf32>
    %c1_174 = arith.constant 1 : index
    %c0_175 = arith.constant 0 : index
    %c243_176 = arith.constant 243 : index
    %295 = vector.load %arg27[%c1_174, %c0_175, %c243_176] : memref<2x8x484xf32, #tpu.memory_space<vmem>>, vector<1x8x20xf32>
    %296 = vector.shape_cast %295 : vector<1x8x20xf32> to vector<8x20xf32>
    %297 = vector.shape_cast %294 : vector<8x20xf32> to vector<1x8x20xf32>
    tpu.vector_store %arg27[%c1_174, %c0_175, %c243_176], %297 {strides = array<i32>} : memref<2x8x484xf32, #tpu.memory_space<vmem>>, vector<1x8x20xf32>,
    %298 = vector.extract_strided_slice %253 {offsets = [0, 242], sizes = [8, 20], strides = [1, 1]} : vector<8x438xf32> to vector<8x20xf32>
    %c1_177 = arith.constant 1 : index
    %c0_178 = arith.constant 0 : index
    %c265_179 = arith.constant 265 : index
    %299 = vector.load %arg27[%c1_177, %c0_178, %c265_179] : memref<2x8x484xf32, #tpu.memory_space<vmem>>, vector<1x8x20xf32>
    %300 = vector.shape_cast %299 : vector<1x8x20xf32> to vector<8x20xf32>
    %301 = vector.shape_cast %298 : vector<8x20xf32> to vector<1x8x20xf32>
    tpu.vector_store %arg27[%c1_177, %c0_178, %c265_179], %301 {strides = array<i32>} : memref<2x8x484xf32, #tpu.memory_space<vmem>>, vector<1x8x20xf32>,
    %302 = vector.extract_strided_slice %253 {offsets = [0, 264], sizes = [8, 20], strides = [1, 1]} : vector<8x438xf32> to vector<8x20xf32>
    %c1_180 = arith.constant 1 : index
    %c0_181 = arith.constant 0 : index
    %c287_182 = arith.constant 287 : index
    %303 = vector.load %arg27[%c1_180, %c0_181, %c287_182] : memref<2x8x484xf32, #tpu.memory_space<vmem>>, vector<1x8x20xf32>
    %304 = vector.shape_cast %303 : vector<1x8x20xf32> to vector<8x20xf32>
    %305 = vector.shape_cast %302 : vector<8x20xf32> to vector<1x8x20xf32>
    tpu.vector_store %arg27[%c1_180, %c0_181, %c287_182], %305 {strides = array<i32>} : memref<2x8x484xf32, #tpu.memory_space<vmem>>, vector<1x8x20xf32>,
    %306 = vector.extract_strided_slice %253 {offsets = [0, 286], sizes = [8, 20], strides = [1, 1]} : vector<8x438xf32> to vector<8x20xf32>
    %c1_183 = arith.constant 1 : index
    %c0_184 = arith.constant 0 : index
    %c309_185 = arith.constant 309 : index
    %307 = vector.load %arg27[%c1_183, %c0_184, %c309_185] : memref<2x8x484xf32, #tpu.memory_space<vmem>>, vector<1x8x20xf32>
    %308 = vector.shape_cast %307 : vector<1x8x20xf32> to vector<8x20xf32>
    %309 = vector.shape_cast %306 : vector<8x20xf32> to vector<1x8x20xf32>
    tpu.vector_store %arg27[%c1_183, %c0_184, %c309_185], %309 {strides = array<i32>} : memref<2x8x484xf32, #tpu.memory_space<vmem>>, vector<1x8x20xf32>,
    %310 = vector.extract_strided_slice %253 {offsets = [0, 308], sizes = [8, 20], strides = [1, 1]} : vector<8x438xf32> to vector<8x20xf32>
    %c1_186 = arith.constant 1 : index
    %c0_187 = arith.constant 0 : index
    %c331_188 = arith.constant 331 : index
    %311 = vector.load %arg27[%c1_186, %c0_187, %c331_188] : memref<2x8x484xf32, #tpu.memory_space<vmem>>, vector<1x8x20xf32>
    %312 = vector.shape_cast %311 : vector<1x8x20xf32> to vector<8x20xf32>
    %313 = vector.shape_cast %310 : vector<8x20xf32> to vector<1x8x20xf32>
    tpu.vector_store %arg27[%c1_186, %c0_187, %c331_188], %313 {strides = array<i32>} : memref<2x8x484xf32, #tpu.memory_space<vmem>>, vector<1x8x20xf32>,
    %314 = vector.extract_strided_slice %253 {offsets = [0, 330], sizes = [8, 20], strides = [1, 1]} : vector<8x438xf32> to vector<8x20xf32>
    %c1_189 = arith.constant 1 : index
    %c0_190 = arith.constant 0 : index
    %c353_191 = arith.constant 353 : index
    %315 = vector.load %arg27[%c1_189, %c0_190, %c353_191] : memref<2x8x484xf32, #tpu.memory_space<vmem>>, vector<1x8x20xf32>
    %316 = vector.shape_cast %315 : vector<1x8x20xf32> to vector<8x20xf32>
    %317 = vector.shape_cast %314 : vector<8x20xf32> to vector<1x8x20xf32>
    tpu.vector_store %arg27[%c1_189, %c0_190, %c353_191], %317 {strides = array<i32>} : memref<2x8x484xf32, #tpu.memory_space<vmem>>, vector<1x8x20xf32>,
    %318 = vector.extract_strided_slice %253 {offsets = [0, 352], sizes = [8, 20], strides = [1, 1]} : vector<8x438xf32> to vector<8x20xf32>
    %c1_192 = arith.constant 1 : index
    %c0_193 = arith.constant 0 : index
    %c375_194 = arith.constant 375 : index
    %319 = vector.load %arg27[%c1_192, %c0_193, %c375_194] : memref<2x8x484xf32, #tpu.memory_space<vmem>>, vector<1x8x20xf32>
    %320 = vector.shape_cast %319 : vector<1x8x20xf32> to vector<8x20xf32>
    %321 = vector.shape_cast %318 : vector<8x20xf32> to vector<1x8x20xf32>
    tpu.vector_store %arg27[%c1_192, %c0_193, %c375_194], %321 {strides = array<i32>} : memref<2x8x484xf32, #tpu.memory_space<vmem>>, vector<1x8x20xf32>,
    %322 = vector.extract_strided_slice %253 {offsets = [0, 374], sizes = [8, 20], strides = [1, 1]} : vector<8x438xf32> to vector<8x20xf32>
    %c1_195 = arith.constant 1 : index
    %c0_196 = arith.constant 0 : index
    %c397_197 = arith.constant 397 : index
    %323 = vector.load %arg27[%c1_195, %c0_196, %c397_197] : memref<2x8x484xf32, #tpu.memory_space<vmem>>, vector<1x8x20xf32>
    %324 = vector.shape_cast %323 : vector<1x8x20xf32> to vector<8x20xf32>
    %325 = vector.shape_cast %322 : vector<8x20xf32> to vector<1x8x20xf32>
    tpu.vector_store %arg27[%c1_195, %c0_196, %c397_197], %325 {strides = array<i32>} : memref<2x8x484xf32, #tpu.memory_space<vmem>>, vector<1x8x20xf32>,
    %326 = vector.extract_strided_slice %253 {offsets = [0, 396], sizes = [8, 20], strides = [1, 1]} : vector<8x438xf32> to vector<8x20xf32>
    %c1_198 = arith.constant 1 : index
    %c0_199 = arith.constant 0 : index
    %c419_200 = arith.constant 419 : index
    %327 = vector.load %arg27[%c1_198, %c0_199, %c419_200] : memref<2x8x484xf32, #tpu.memory_space<vmem>>, vector<1x8x20xf32>
    %328 = vector.shape_cast %327 : vector<1x8x20xf32> to vector<8x20xf32>
    %329 = vector.shape_cast %326 : vector<8x20xf32> to vector<1x8x20xf32>
    tpu.vector_store %arg27[%c1_198, %c0_199, %c419_200], %329 {strides = array<i32>} : memref<2x8x484xf32, #tpu.memory_space<vmem>>, vector<1x8x20xf32>,
    %330 = vector.extract_strided_slice %253 {offsets = [0, 418], sizes = [8, 20], strides = [1, 1]} : vector<8x438xf32> to vector<8x20xf32>
    %c1_201 = arith.constant 1 : index
    %c0_202 = arith.constant 0 : index
    %c441_203 = arith.constant 441 : index
    %331 = vector.load %arg27[%c1_201, %c0_202, %c441_203] : memref<2x8x484xf32, #tpu.memory_space<vmem>>, vector<1x8x20xf32>
    %332 = vector.shape_cast %331 : vector<1x8x20xf32> to vector<8x20xf32>
    %333 = vector.shape_cast %330 : vector<8x20xf32> to vector<1x8x20xf32>
    tpu.vector_store %arg27[%c1_201, %c0_202, %c441_203], %333 {strides = array<i32>} : memref<2x8x484xf32, #tpu.memory_space<vmem>>, vector<1x8x20xf32>,
    %c0_204 = arith.constant 0 : index
    %c0_205 = arith.constant 0 : index
    %c0_206 = arith.constant 0 : index
    %334 = vector.load %arg27[%c0_204, %c0_205, %c0_206] : memref<2x8x484xf32, #tpu.memory_space<vmem>>, vector<2x8x484xf32>
    %335 = vector.extract_strided_slice %334 {offsets = [0, 0, 0], sizes = [1, 8, 484], strides = [1, 1, 1]} : vector<2x8x484xf32> to vector<1x8x484xf32>
    %336 = vector.shape_cast %335 : vector<1x8x484xf32> to vector<8x484xf32>
    %cst_207 = arith.constant 0.000000e+00 : f32
    %337 = vector.broadcast %cst_207 : f32 to vector<8x438xf32>
    %338 = vector.extract_strided_slice %65 {offsets = [0, 0, 0], sizes = [1, 8, 8], strides = [1, 1, 1]} : vector<9x8x8xf32> to vector<1x8x8xf32>
    %339 = vector.shape_cast %338 : vector<1x8x8xf32> to vector<8x8xf32>
    %340 = vector.extract_strided_slice %336 {offsets = [0, 0], sizes = [8, 438], strides = [1, 1]} : vector<8x484xf32> to vector<8x438xf32>
    %cst_208 = arith.constant dense<0.000000e+00> : vector<8x438xf32>
    %341 = tpu.matmul %339, %340, %cst_208 {dimension_numbers = #tpu.dot_dimension_numbers<[1], [0], [0], [1], [0, 0, 1, 1], [], []>} : vector<8x8xf32>, vector<8x438xf32>, vector<8x438xf32> -> vector<8x438xf32>
    %342 = arith.addf %337, %341 : vector<8x438xf32>
    %343 = vector.extract_strided_slice %65 {offsets = [1, 0, 0], sizes = [1, 8, 8], strides = [1, 1, 1]} : vector<9x8x8xf32> to vector<1x8x8xf32>
    %344 = vector.shape_cast %343 : vector<1x8x8xf32> to vector<8x8xf32>
    %345 = vector.extract_strided_slice %336 {offsets = [0, 1], sizes = [8, 438], strides = [1, 1]} : vector<8x484xf32> to vector<8x438xf32>
    %cst_209 = arith.constant dense<0.000000e+00> : vector<8x438xf32>
    %346 = tpu.matmul %344, %345, %cst_209 {dimension_numbers = #tpu.dot_dimension_numbers<[1], [0], [0], [1], [0, 0, 1, 1], [], []>} : vector<8x8xf32>, vector<8x438xf32>, vector<8x438xf32> -> vector<8x438xf32>
    %347 = arith.addf %342, %346 : vector<8x438xf32>
    %348 = vector.extract_strided_slice %65 {offsets = [2, 0, 0], sizes = [1, 8, 8], strides = [1, 1, 1]} : vector<9x8x8xf32> to vector<1x8x8xf32>
    %349 = vector.shape_cast %348 : vector<1x8x8xf32> to vector<8x8xf32>
    %350 = vector.extract_strided_slice %336 {offsets = [0, 2], sizes = [8, 438], strides = [1, 1]} : vector<8x484xf32> to vector<8x438xf32>
    %cst_210 = arith.constant dense<0.000000e+00> : vector<8x438xf32>
    %351 = tpu.matmul %349, %350, %cst_210 {dimension_numbers = #tpu.dot_dimension_numbers<[1], [0], [0], [1], [0, 0, 1, 1], [], []>} : vector<8x8xf32>, vector<8x438xf32>, vector<8x438xf32> -> vector<8x438xf32>
    %352 = arith.addf %347, %351 : vector<8x438xf32>
    %353 = vector.extract_strided_slice %65 {offsets = [3, 0, 0], sizes = [1, 8, 8], strides = [1, 1, 1]} : vector<9x8x8xf32> to vector<1x8x8xf32>
    %354 = vector.shape_cast %353 : vector<1x8x8xf32> to vector<8x8xf32>
    %355 = vector.extract_strided_slice %336 {offsets = [0, 22], sizes = [8, 438], strides = [1, 1]} : vector<8x484xf32> to vector<8x438xf32>
    %cst_211 = arith.constant dense<0.000000e+00> : vector<8x438xf32>
    %356 = tpu.matmul %354, %355, %cst_211 {dimension_numbers = #tpu.dot_dimension_numbers<[1], [0], [0], [1], [0, 0, 1, 1], [], []>} : vector<8x8xf32>, vector<8x438xf32>, vector<8x438xf32> -> vector<8x438xf32>
    %357 = arith.addf %352, %356 : vector<8x438xf32>
    %358 = vector.extract_strided_slice %65 {offsets = [4, 0, 0], sizes = [1, 8, 8], strides = [1, 1, 1]} : vector<9x8x8xf32> to vector<1x8x8xf32>
    %359 = vector.shape_cast %358 : vector<1x8x8xf32> to vector<8x8xf32>
    %360 = vector.extract_strided_slice %336 {offsets = [0, 23], sizes = [8, 438], strides = [1, 1]} : vector<8x484xf32> to vector<8x438xf32>
    %cst_212 = arith.constant dense<0.000000e+00> : vector<8x438xf32>
    %361 = tpu.matmul %359, %360, %cst_212 {dimension_numbers = #tpu.dot_dimension_numbers<[1], [0], [0], [1], [0, 0, 1, 1], [], []>} : vector<8x8xf32>, vector<8x438xf32>, vector<8x438xf32> -> vector<8x438xf32>
    %362 = arith.addf %357, %361 : vector<8x438xf32>
    %363 = vector.extract_strided_slice %65 {offsets = [5, 0, 0], sizes = [1, 8, 8], strides = [1, 1, 1]} : vector<9x8x8xf32> to vector<1x8x8xf32>
    %364 = vector.shape_cast %363 : vector<1x8x8xf32> to vector<8x8xf32>
    %365 = vector.extract_strided_slice %336 {offsets = [0, 24], sizes = [8, 438], strides = [1, 1]} : vector<8x484xf32> to vector<8x438xf32>
    %cst_213 = arith.constant dense<0.000000e+00> : vector<8x438xf32>
    %366 = tpu.matmul %364, %365, %cst_213 {dimension_numbers = #tpu.dot_dimension_numbers<[1], [0], [0], [1], [0, 0, 1, 1], [], []>} : vector<8x8xf32>, vector<8x438xf32>, vector<8x438xf32> -> vector<8x438xf32>
    %367 = arith.addf %362, %366 : vector<8x438xf32>
    %368 = vector.extract_strided_slice %65 {offsets = [6, 0, 0], sizes = [1, 8, 8], strides = [1, 1, 1]} : vector<9x8x8xf32> to vector<1x8x8xf32>
    %369 = vector.shape_cast %368 : vector<1x8x8xf32> to vector<8x8xf32>
    %370 = vector.extract_strided_slice %336 {offsets = [0, 44], sizes = [8, 438], strides = [1, 1]} : vector<8x484xf32> to vector<8x438xf32>
    %cst_214 = arith.constant dense<0.000000e+00> : vector<8x438xf32>
    %371 = tpu.matmul %369, %370, %cst_214 {dimension_numbers = #tpu.dot_dimension_numbers<[1], [0], [0], [1], [0, 0, 1, 1], [], []>} : vector<8x8xf32>, vector<8x438xf32>, vector<8x438xf32> -> vector<8x438xf32>
    %372 = arith.addf %367, %371 : vector<8x438xf32>
    %373 = vector.extract_strided_slice %65 {offsets = [7, 0, 0], sizes = [1, 8, 8], strides = [1, 1, 1]} : vector<9x8x8xf32> to vector<1x8x8xf32>
    %374 = vector.shape_cast %373 : vector<1x8x8xf32> to vector<8x8xf32>
    %375 = vector.extract_strided_slice %336 {offsets = [0, 45], sizes = [8, 438], strides = [1, 1]} : vector<8x484xf32> to vector<8x438xf32>
    %cst_215 = arith.constant dense<0.000000e+00> : vector<8x438xf32>
    %376 = tpu.matmul %374, %375, %cst_215 {dimension_numbers = #tpu.dot_dimension_numbers<[1], [0], [0], [1], [0, 0, 1, 1], [], []>} : vector<8x8xf32>, vector<8x438xf32>, vector<8x438xf32> -> vector<8x438xf32>
    %377 = arith.addf %372, %376 : vector<8x438xf32>
    %378 = vector.extract_strided_slice %65 {offsets = [8, 0, 0], sizes = [1, 8, 8], strides = [1, 1, 1]} : vector<9x8x8xf32> to vector<1x8x8xf32>
    %379 = vector.shape_cast %378 : vector<1x8x8xf32> to vector<8x8xf32>
    %380 = vector.extract_strided_slice %336 {offsets = [0, 46], sizes = [8, 438], strides = [1, 1]} : vector<8x484xf32> to vector<8x438xf32>
    %cst_216 = arith.constant dense<0.000000e+00> : vector<8x438xf32>
    %381 = tpu.matmul %379, %380, %cst_216 {dimension_numbers = #tpu.dot_dimension_numbers<[1], [0], [0], [1], [0, 0, 1, 1], [], []>} : vector<8x8xf32>, vector<8x438xf32>, vector<8x438xf32> -> vector<8x438xf32>
    %382 = arith.addf %377, %381 : vector<8x438xf32>
    %383 = vector.broadcast %66 : vector<8x1xf32> to vector<8x438xf32>
    %384 = arith.addf %382, %383 : vector<8x438xf32>
    %cst_217 = arith.constant 0.000000e+00 : f32
    %385 = vector.broadcast %cst_217 : f32 to vector<8x438xf32>
    %386 = arith.maximumf %384, %385 : vector<8x438xf32>
    %cst_218 = arith.constant 0.000000e+00 : f32
    %387 = vector.broadcast %cst_218 : f32 to vector<8x369xf32>
    %388 = vector.extract_strided_slice %386 {offsets = [0, 0], sizes = [8, 369], strides = [1, 1]} : vector<8x438xf32> to vector<8x369xf32>
    %389 = arith.addf %387, %388 : vector<8x369xf32>
    %390 = vector.extract_strided_slice %386 {offsets = [0, 1], sizes = [8, 369], strides = [1, 1]} : vector<8x438xf32> to vector<8x369xf32>
    %391 = arith.addf %389, %390 : vector<8x369xf32>
    %392 = vector.extract_strided_slice %386 {offsets = [0, 2], sizes = [8, 369], strides = [1, 1]} : vector<8x438xf32> to vector<8x369xf32>
    %393 = arith.addf %391, %392 : vector<8x369xf32>
    %394 = vector.extract_strided_slice %386 {offsets = [0, 3], sizes = [8, 369], strides = [1, 1]} : vector<8x438xf32> to vector<8x369xf32>
    %395 = arith.addf %393, %394 : vector<8x369xf32>
    %396 = vector.extract_strided_slice %386 {offsets = [0, 22], sizes = [8, 369], strides = [1, 1]} : vector<8x438xf32> to vector<8x369xf32>
    %397 = arith.addf %395, %396 : vector<8x369xf32>
    %398 = vector.extract_strided_slice %386 {offsets = [0, 23], sizes = [8, 369], strides = [1, 1]} : vector<8x438xf32> to vector<8x369xf32>
    %399 = arith.addf %397, %398 : vector<8x369xf32>
    %400 = vector.extract_strided_slice %386 {offsets = [0, 24], sizes = [8, 369], strides = [1, 1]} : vector<8x438xf32> to vector<8x369xf32>
    %401 = arith.addf %399, %400 : vector<8x369xf32>
    %402 = vector.extract_strided_slice %386 {offsets = [0, 25], sizes = [8, 369], strides = [1, 1]} : vector<8x438xf32> to vector<8x369xf32>
    %403 = arith.addf %401, %402 : vector<8x369xf32>
    %404 = vector.extract_strided_slice %386 {offsets = [0, 44], sizes = [8, 369], strides = [1, 1]} : vector<8x438xf32> to vector<8x369xf32>
    %405 = arith.addf %403, %404 : vector<8x369xf32>
    %406 = vector.extract_strided_slice %386 {offsets = [0, 45], sizes = [8, 369], strides = [1, 1]} : vector<8x438xf32> to vector<8x369xf32>
    %407 = arith.addf %405, %406 : vector<8x369xf32>
    %408 = vector.extract_strided_slice %386 {offsets = [0, 46], sizes = [8, 369], strides = [1, 1]} : vector<8x438xf32> to vector<8x369xf32>
    %409 = arith.addf %407, %408 : vector<8x369xf32>
    %410 = vector.extract_strided_slice %386 {offsets = [0, 47], sizes = [8, 369], strides = [1, 1]} : vector<8x438xf32> to vector<8x369xf32>
    %411 = arith.addf %409, %410 : vector<8x369xf32>
    %412 = vector.extract_strided_slice %386 {offsets = [0, 66], sizes = [8, 369], strides = [1, 1]} : vector<8x438xf32> to vector<8x369xf32>
    %413 = arith.addf %411, %412 : vector<8x369xf32>
    %414 = vector.extract_strided_slice %386 {offsets = [0, 67], sizes = [8, 369], strides = [1, 1]} : vector<8x438xf32> to vector<8x369xf32>
    %415 = arith.addf %413, %414 : vector<8x369xf32>
    %416 = vector.extract_strided_slice %386 {offsets = [0, 68], sizes = [8, 369], strides = [1, 1]} : vector<8x438xf32> to vector<8x369xf32>
    %417 = arith.addf %415, %416 : vector<8x369xf32>
    %418 = vector.extract_strided_slice %386 {offsets = [0, 69], sizes = [8, 369], strides = [1, 1]} : vector<8x438xf32> to vector<8x369xf32>
    %419 = arith.addf %417, %418 : vector<8x369xf32>
    %420 = vector.extract_strided_slice %334 {offsets = [1, 0, 0], sizes = [1, 8, 484], strides = [1, 1, 1]} : vector<2x8x484xf32> to vector<1x8x484xf32>
    %421 = vector.shape_cast %420 : vector<1x8x484xf32> to vector<8x484xf32>
    %cst_219 = arith.constant 0.000000e+00 : f32
    %422 = vector.broadcast %cst_219 : f32 to vector<8x438xf32>
    %423 = vector.extract_strided_slice %65 {offsets = [0, 0, 0], sizes = [1, 8, 8], strides = [1, 1, 1]} : vector<9x8x8xf32> to vector<1x8x8xf32>
    %424 = vector.shape_cast %423 : vector<1x8x8xf32> to vector<8x8xf32>
    %425 = vector.extract_strided_slice %421 {offsets = [0, 0], sizes = [8, 438], strides = [1, 1]} : vector<8x484xf32> to vector<8x438xf32>
    %cst_220 = arith.constant dense<0.000000e+00> : vector<8x438xf32>
    %426 = tpu.matmul %424, %425, %cst_220 {dimension_numbers = #tpu.dot_dimension_numbers<[1], [0], [0], [1], [0, 0, 1, 1], [], []>} : vector<8x8xf32>, vector<8x438xf32>, vector<8x438xf32> -> vector<8x438xf32>
    %427 = arith.addf %422, %426 : vector<8x438xf32>
    %428 = vector.extract_strided_slice %65 {offsets = [1, 0, 0], sizes = [1, 8, 8], strides = [1, 1, 1]} : vector<9x8x8xf32> to vector<1x8x8xf32>
    %429 = vector.shape_cast %428 : vector<1x8x8xf32> to vector<8x8xf32>
    %430 = vector.extract_strided_slice %421 {offsets = [0, 1], sizes = [8, 438], strides = [1, 1]} : vector<8x484xf32> to vector<8x438xf32>
    %cst_221 = arith.constant dense<0.000000e+00> : vector<8x438xf32>
    %431 = tpu.matmul %429, %430, %cst_221 {dimension_numbers = #tpu.dot_dimension_numbers<[1], [0], [0], [1], [0, 0, 1, 1], [], []>} : vector<8x8xf32>, vector<8x438xf32>, vector<8x438xf32> -> vector<8x438xf32>
    %432 = arith.addf %427, %431 : vector<8x438xf32>
    %433 = vector.extract_strided_slice %65 {offsets = [2, 0, 0], sizes = [1, 8, 8], strides = [1, 1, 1]} : vector<9x8x8xf32> to vector<1x8x8xf32>
    %434 = vector.shape_cast %433 : vector<1x8x8xf32> to vector<8x8xf32>
    %435 = vector.extract_strided_slice %421 {offsets = [0, 2], sizes = [8, 438], strides = [1, 1]} : vector<8x484xf32> to vector<8x438xf32>
    %cst_222 = arith.constant dense<0.000000e+00> : vector<8x438xf32>
    %436 = tpu.matmul %434, %435, %cst_222 {dimension_numbers = #tpu.dot_dimension_numbers<[1], [0], [0], [1], [0, 0, 1, 1], [], []>} : vector<8x8xf32>, vector<8x438xf32>, vector<8x438xf32> -> vector<8x438xf32>
    %437 = arith.addf %432, %436 : vector<8x438xf32>
    %438 = vector.extract_strided_slice %65 {offsets = [3, 0, 0], sizes = [1, 8, 8], strides = [1, 1, 1]} : vector<9x8x8xf32> to vector<1x8x8xf32>
    %439 = vector.shape_cast %438 : vector<1x8x8xf32> to vector<8x8xf32>
    %440 = vector.extract_strided_slice %421 {offsets = [0, 22], sizes = [8, 438], strides = [1, 1]} : vector<8x484xf32> to vector<8x438xf32>
    %cst_223 = arith.constant dense<0.000000e+00> : vector<8x438xf32>
    %441 = tpu.matmul %439, %440, %cst_223 {dimension_numbers = #tpu.dot_dimension_numbers<[1], [0], [0], [1], [0, 0, 1, 1], [], []>} : vector<8x8xf32>, vector<8x438xf32>, vector<8x438xf32> -> vector<8x438xf32>
    %442 = arith.addf %437, %441 : vector<8x438xf32>
    %443 = vector.extract_strided_slice %65 {offsets = [4, 0, 0], sizes = [1, 8, 8], strides = [1, 1, 1]} : vector<9x8x8xf32> to vector<1x8x8xf32>
    %444 = vector.shape_cast %443 : vector<1x8x8xf32> to vector<8x8xf32>
    %445 = vector.extract_strided_slice %421 {offsets = [0, 23], sizes = [8, 438], strides = [1, 1]} : vector<8x484xf32> to vector<8x438xf32>
    %cst_224 = arith.constant dense<0.000000e+00> : vector<8x438xf32>
    %446 = tpu.matmul %444, %445, %cst_224 {dimension_numbers = #tpu.dot_dimension_numbers<[1], [0], [0], [1], [0, 0, 1, 1], [], []>} : vector<8x8xf32>, vector<8x438xf32>, vector<8x438xf32> -> vector<8x438xf32>
    %447 = arith.addf %442, %446 : vector<8x438xf32>
    %448 = vector.extract_strided_slice %65 {offsets = [5, 0, 0], sizes = [1, 8, 8], strides = [1, 1, 1]} : vector<9x8x8xf32> to vector<1x8x8xf32>
    %449 = vector.shape_cast %448 : vector<1x8x8xf32> to vector<8x8xf32>
    %450 = vector.extract_strided_slice %421 {offsets = [0, 24], sizes = [8, 438], strides = [1, 1]} : vector<8x484xf32> to vector<8x438xf32>
    %cst_225 = arith.constant dense<0.000000e+00> : vector<8x438xf32>
    %451 = tpu.matmul %449, %450, %cst_225 {dimension_numbers = #tpu.dot_dimension_numbers<[1], [0], [0], [1], [0, 0, 1, 1], [], []>} : vector<8x8xf32>, vector<8x438xf32>, vector<8x438xf32> -> vector<8x438xf32>
    %452 = arith.addf %447, %451 : vector<8x438xf32>
    %453 = vector.extract_strided_slice %65 {offsets = [6, 0, 0], sizes = [1, 8, 8], strides = [1, 1, 1]} : vector<9x8x8xf32> to vector<1x8x8xf32>
    %454 = vector.shape_cast %453 : vector<1x8x8xf32> to vector<8x8xf32>
    %455 = vector.extract_strided_slice %421 {offsets = [0, 44], sizes = [8, 438], strides = [1, 1]} : vector<8x484xf32> to vector<8x438xf32>
    %cst_226 = arith.constant dense<0.000000e+00> : vector<8x438xf32>
    %456 = tpu.matmul %454, %455, %cst_226 {dimension_numbers = #tpu.dot_dimension_numbers<[1], [0], [0], [1], [0, 0, 1, 1], [], []>} : vector<8x8xf32>, vector<8x438xf32>, vector<8x438xf32> -> vector<8x438xf32>
    %457 = arith.addf %452, %456 : vector<8x438xf32>
    %458 = vector.extract_strided_slice %65 {offsets = [7, 0, 0], sizes = [1, 8, 8], strides = [1, 1, 1]} : vector<9x8x8xf32> to vector<1x8x8xf32>
    %459 = vector.shape_cast %458 : vector<1x8x8xf32> to vector<8x8xf32>
    %460 = vector.extract_strided_slice %421 {offsets = [0, 45], sizes = [8, 438], strides = [1, 1]} : vector<8x484xf32> to vector<8x438xf32>
    %cst_227 = arith.constant dense<0.000000e+00> : vector<8x438xf32>
    %461 = tpu.matmul %459, %460, %cst_227 {dimension_numbers = #tpu.dot_dimension_numbers<[1], [0], [0], [1], [0, 0, 1, 1], [], []>} : vector<8x8xf32>, vector<8x438xf32>, vector<8x438xf32> -> vector<8x438xf32>
    %462 = arith.addf %457, %461 : vector<8x438xf32>
    %463 = vector.extract_strided_slice %65 {offsets = [8, 0, 0], sizes = [1, 8, 8], strides = [1, 1, 1]} : vector<9x8x8xf32> to vector<1x8x8xf32>
    %464 = vector.shape_cast %463 : vector<1x8x8xf32> to vector<8x8xf32>
    %465 = vector.extract_strided_slice %421 {offsets = [0, 46], sizes = [8, 438], strides = [1, 1]} : vector<8x484xf32> to vector<8x438xf32>
    %cst_228 = arith.constant dense<0.000000e+00> : vector<8x438xf32>
    %466 = tpu.matmul %464, %465, %cst_228 {dimension_numbers = #tpu.dot_dimension_numbers<[1], [0], [0], [1], [0, 0, 1, 1], [], []>} : vector<8x8xf32>, vector<8x438xf32>, vector<8x438xf32> -> vector<8x438xf32>
    %467 = arith.addf %462, %466 : vector<8x438xf32>
    %468 = vector.broadcast %66 : vector<8x1xf32> to vector<8x438xf32>
    %469 = arith.addf %467, %468 : vector<8x438xf32>
    %cst_229 = arith.constant 0.000000e+00 : f32
    %470 = vector.broadcast %cst_229 : f32 to vector<8x438xf32>
    %471 = arith.maximumf %469, %470 : vector<8x438xf32>
    %cst_230 = arith.constant 0.000000e+00 : f32
    %472 = vector.broadcast %cst_230 : f32 to vector<8x369xf32>
    %473 = vector.extract_strided_slice %471 {offsets = [0, 0], sizes = [8, 369], strides = [1, 1]} : vector<8x438xf32> to vector<8x369xf32>
    %474 = arith.addf %472, %473 : vector<8x369xf32>
    %475 = vector.extract_strided_slice %471 {offsets = [0, 1], sizes = [8, 369], strides = [1, 1]} : vector<8x438xf32> to vector<8x369xf32>
    %476 = arith.addf %474, %475 : vector<8x369xf32>
    %477 = vector.extract_strided_slice %471 {offsets = [0, 2], sizes = [8, 369], strides = [1, 1]} : vector<8x438xf32> to vector<8x369xf32>
    %478 = arith.addf %476, %477 : vector<8x369xf32>
    %479 = vector.extract_strided_slice %471 {offsets = [0, 3], sizes = [8, 369], strides = [1, 1]} : vector<8x438xf32> to vector<8x369xf32>
    %480 = arith.addf %478, %479 : vector<8x369xf32>
    %481 = vector.extract_strided_slice %471 {offsets = [0, 22], sizes = [8, 369], strides = [1, 1]} : vector<8x438xf32> to vector<8x369xf32>
    %482 = arith.addf %480, %481 : vector<8x369xf32>
    %483 = vector.extract_strided_slice %471 {offsets = [0, 23], sizes = [8, 369], strides = [1, 1]} : vector<8x438xf32> to vector<8x369xf32>
    %484 = arith.addf %482, %483 : vector<8x369xf32>
    %485 = vector.extract_strided_slice %471 {offsets = [0, 24], sizes = [8, 369], strides = [1, 1]} : vector<8x438xf32> to vector<8x369xf32>
    %486 = arith.addf %484, %485 : vector<8x369xf32>
    %487 = vector.extract_strided_slice %471 {offsets = [0, 25], sizes = [8, 369], strides = [1, 1]} : vector<8x438xf32> to vector<8x369xf32>
    %488 = arith.addf %486, %487 : vector<8x369xf32>
    %489 = vector.extract_strided_slice %471 {offsets = [0, 44], sizes = [8, 369], strides = [1, 1]} : vector<8x438xf32> to vector<8x369xf32>
    %490 = arith.addf %488, %489 : vector<8x369xf32>
    %491 = vector.extract_strided_slice %471 {offsets = [0, 45], sizes = [8, 369], strides = [1, 1]} : vector<8x438xf32> to vector<8x369xf32>
    %492 = arith.addf %490, %491 : vector<8x369xf32>
    %493 = vector.extract_strided_slice %471 {offsets = [0, 46], sizes = [8, 369], strides = [1, 1]} : vector<8x438xf32> to vector<8x369xf32>
    %494 = arith.addf %492, %493 : vector<8x369xf32>
    %495 = vector.extract_strided_slice %471 {offsets = [0, 47], sizes = [8, 369], strides = [1, 1]} : vector<8x438xf32> to vector<8x369xf32>
    %496 = arith.addf %494, %495 : vector<8x369xf32>
    %497 = vector.extract_strided_slice %471 {offsets = [0, 66], sizes = [8, 369], strides = [1, 1]} : vector<8x438xf32> to vector<8x369xf32>
    %498 = arith.addf %496, %497 : vector<8x369xf32>
    %499 = vector.extract_strided_slice %471 {offsets = [0, 67], sizes = [8, 369], strides = [1, 1]} : vector<8x438xf32> to vector<8x369xf32>
    %500 = arith.addf %498, %499 : vector<8x369xf32>
    %501 = vector.extract_strided_slice %471 {offsets = [0, 68], sizes = [8, 369], strides = [1, 1]} : vector<8x438xf32> to vector<8x369xf32>
    %502 = arith.addf %500, %501 : vector<8x369xf32>
    %503 = vector.extract_strided_slice %471 {offsets = [0, 69], sizes = [8, 369], strides = [1, 1]} : vector<8x438xf32> to vector<8x369xf32>
    %504 = arith.addf %502, %503 : vector<8x369xf32>
    %505 = tpu.concatenate %419, %504 in 0 : vector<8x369xf32>, vector<8x369xf32> -> vector<16x369xf32>
    %c0_231 = arith.constant 0 : index
    %c0_232 = arith.constant 0 : index
    %506 = vector.load %arg8[%c0_231, %c0_232] : memref<369x25xf32, #tpu.memory_space<vmem>>, vector<369x25xf32>
    %cst_233 = arith.constant dense<0.000000e+00> : vector<16x25xf32>
    %507 = tpu.matmul %505, %506, %cst_233 {dimension_numbers = #tpu.dot_dimension_numbers<[1], [0], [0], [1], [0, 0, 1, 1], [], []>} : vector<16x369xf32>, vector<369x25xf32>, vector<16x25xf32> -> vector<16x25xf32>
    %508 = vector.extract_strided_slice %507 {offsets = [0, 0], sizes = [1, 25], strides = [1, 1]} : vector<16x25xf32> to vector<1x25xf32>
    %509 = vector.extract_strided_slice %507 {offsets = [1, 0], sizes = [1, 25], strides = [1, 1]} : vector<16x25xf32> to vector<1x25xf32>
    %510 = vector.extract_strided_slice %507 {offsets = [2, 0], sizes = [1, 25], strides = [1, 1]} : vector<16x25xf32> to vector<1x25xf32>
    %511 = vector.extract_strided_slice %507 {offsets = [3, 0], sizes = [1, 25], strides = [1, 1]} : vector<16x25xf32> to vector<1x25xf32>
    %512 = vector.extract_strided_slice %507 {offsets = [4, 0], sizes = [1, 25], strides = [1, 1]} : vector<16x25xf32> to vector<1x25xf32>
    %513 = vector.extract_strided_slice %507 {offsets = [5, 0], sizes = [1, 25], strides = [1, 1]} : vector<16x25xf32> to vector<1x25xf32>
    %514 = vector.extract_strided_slice %507 {offsets = [6, 0], sizes = [1, 25], strides = [1, 1]} : vector<16x25xf32> to vector<1x25xf32>
    %515 = vector.extract_strided_slice %507 {offsets = [7, 0], sizes = [1, 25], strides = [1, 1]} : vector<16x25xf32> to vector<1x25xf32>
    %516 = tpu.concatenate %508, %509, %510, %511, %512, %513, %514, %515 in 1 : vector<1x25xf32>, vector<1x25xf32>, vector<1x25xf32>, vector<1x25xf32>, vector<1x25xf32>, vector<1x25xf32>, vector<1x25xf32>, vector<1x25xf32> -> vector<1x200xf32>
    %517 = vector.extract_strided_slice %507 {offsets = [8, 0], sizes = [1, 25], strides = [1, 1]} : vector<16x25xf32> to vector<1x25xf32>
    %518 = vector.extract_strided_slice %507 {offsets = [9, 0], sizes = [1, 25], strides = [1, 1]} : vector<16x25xf32> to vector<1x25xf32>
    %519 = vector.extract_strided_slice %507 {offsets = [10, 0], sizes = [1, 25], strides = [1, 1]} : vector<16x25xf32> to vector<1x25xf32>
    %520 = vector.extract_strided_slice %507 {offsets = [11, 0], sizes = [1, 25], strides = [1, 1]} : vector<16x25xf32> to vector<1x25xf32>
    %521 = vector.extract_strided_slice %507 {offsets = [12, 0], sizes = [1, 25], strides = [1, 1]} : vector<16x25xf32> to vector<1x25xf32>
    %522 = vector.extract_strided_slice %507 {offsets = [13, 0], sizes = [1, 25], strides = [1, 1]} : vector<16x25xf32> to vector<1x25xf32>
    %523 = vector.extract_strided_slice %507 {offsets = [14, 0], sizes = [1, 25], strides = [1, 1]} : vector<16x25xf32> to vector<1x25xf32>
    %524 = vector.extract_strided_slice %507 {offsets = [15, 0], sizes = [1, 25], strides = [1, 1]} : vector<16x25xf32> to vector<1x25xf32>
    %525 = tpu.concatenate %517, %518, %519, %520, %521, %522, %523, %524 in 1 : vector<1x25xf32>, vector<1x25xf32>, vector<1x25xf32>, vector<1x25xf32>, vector<1x25xf32>, vector<1x25xf32>, vector<1x25xf32>, vector<1x25xf32> -> vector<1x200xf32>
    %526 = tpu.concatenate %516, %525 in 0 : vector<1x200xf32>, vector<1x200xf32> -> vector<2x200xf32>
    %c0_234 = arith.constant 0 : index
    %c0_235 = arith.constant 0 : index
    %527 = vector.load %arg9[%c0_234, %c0_235] : memref<200x32xf32, #tpu.memory_space<vmem>>, vector<200x32xf32>
    %cst_236 = arith.constant dense<0.000000e+00> : vector<2x32xf32>
    %528 = tpu.matmul %526, %527, %cst_236 {dimension_numbers = #tpu.dot_dimension_numbers<[1], [0], [0], [1], [0, 0, 1, 1], [], []>} : vector<2x200xf32>, vector<200x32xf32>, vector<2x32xf32> -> vector<2x32xf32>
    %c0_237 = arith.constant 0 : index
    %c0_238 = arith.constant 0 : index
    %529 = vector.load %arg10[%c0_237, %c0_238] : memref<1x32xf32, #tpu.memory_space<vmem>>, vector<1x32xf32>
    %530 = vector.broadcast %529 : vector<1x32xf32> to vector<2x32xf32>
    %531 = arith.addf %528, %530 : vector<2x32xf32>
    %c0_239 = arith.constant 0 : index
    %c0_240 = arith.constant 0 : index
    %532 = vector.load %arg2[%c0_239, %c0_240] : memref<2x400xf32, #tpu.memory_space<vmem>>, vector<2x400xf32>
    %c0_241 = arith.constant 0 : index
    %c0_242 = arith.constant 0 : index
    %533 = vector.load %arg11[%c0_241, %c0_242] : memref<32x384xf32, #tpu.memory_space<vmem>>, vector<32x384xf32>
    %cst_243 = arith.constant dense<0.000000e+00> : vector<2x384xf32>
    %534 = tpu.matmul %531, %533, %cst_243 {dimension_numbers = #tpu.dot_dimension_numbers<[1], [0], [0], [1], [0, 0, 1, 1], [], []>} : vector<2x32xf32>, vector<32x384xf32>, vector<2x384xf32> -> vector<2x384xf32>
    %c0_244 = arith.constant 0 : index
    %c0_245 = arith.constant 0 : index
    %535 = vector.load %arg12[%c0_244, %c0_245] : memref<400x384xf32, #tpu.memory_space<vmem>>, vector<400x384xf32>
    %cst_246 = arith.constant dense<0.000000e+00> : vector<2x384xf32>
    %536 = tpu.matmul %532, %535, %cst_246 {dimension_numbers = #tpu.dot_dimension_numbers<[1], [0], [0], [1], [0, 0, 1, 1], [], []>} : vector<2x400xf32>, vector<400x384xf32>, vector<2x384xf32> -> vector<2x384xf32>
    %537 = arith.addf %534, %536 : vector<2x384xf32>
    %c0_247 = arith.constant 0 : index
    %c0_248 = arith.constant 0 : index
    %538 = vector.load %arg13[%c0_247, %c0_248] : memref<1x384xf32, #tpu.memory_space<vmem>>, vector<1x384xf32>
    %539 = vector.broadcast %538 : vector<1x384xf32> to vector<2x384xf32>
    %540 = arith.addf %537, %539 : vector<2x384xf32>
    %cst_249 = arith.constant 0.000000e+00 : f32
    %541 = vector.broadcast %cst_249 : f32 to vector<2x384xf32>
    %542 = arith.maximumf %540, %541 : vector<2x384xf32>
    %c0_250 = arith.constant 0 : index
    %c0_251 = arith.constant 0 : index
    %543 = vector.load %arg14[%c0_250, %c0_251] : memref<384x96xf32, #tpu.memory_space<vmem>>, vector<384x96xf32>
    %cst_252 = arith.constant dense<0.000000e+00> : vector<2x96xf32>
    %544 = tpu.matmul %542, %543, %cst_252 {dimension_numbers = #tpu.dot_dimension_numbers<[1], [0], [0], [1], [0, 0, 1, 1], [], []>} : vector<2x384xf32>, vector<384x96xf32>, vector<2x96xf32> -> vector<2x96xf32>
    %c0_253 = arith.constant 0 : index
    %c0_254 = arith.constant 0 : index
    %545 = vector.load %arg15[%c0_253, %c0_254] : memref<1x96xf32, #tpu.memory_space<vmem>>, vector<1x96xf32>
    %546 = vector.broadcast %545 : vector<1x96xf32> to vector<2x96xf32>
    %547 = arith.addf %544, %546 : vector<2x96xf32>
    %c0_255 = arith.constant 0 : index
    %c0_256 = arith.constant 0 : index
    %548 = vector.load %arg16[%c0_255, %c0_256] : memref<384x96xf32, #tpu.memory_space<vmem>>, vector<384x96xf32>
    %cst_257 = arith.constant dense<0.000000e+00> : vector<2x96xf32>
    %549 = tpu.matmul %542, %548, %cst_257 {dimension_numbers = #tpu.dot_dimension_numbers<[1], [0], [0], [1], [0, 0, 1, 1], [], []>} : vector<2x384xf32>, vector<384x96xf32>, vector<2x96xf32> -> vector<2x96xf32>
    %c0_258 = arith.constant 0 : index
    %c0_259 = arith.constant 0 : index
    %550 = vector.load %arg17[%c0_258, %c0_259] : memref<1x96xf32, #tpu.memory_space<vmem>>, vector<1x96xf32>
    %551 = vector.broadcast %550 : vector<1x96xf32> to vector<2x96xf32>
    %552 = arith.addf %549, %551 : vector<2x96xf32>
    %c0_260 = arith.constant 0 : index
    %c0_261 = arith.constant 0 : index
    %553 = vector.load %arg3[%c0_260, %c0_261] : memref<2x96xf32, #tpu.memory_space<vmem>>, vector<2x96xf32>
    %cst_262 = arith.constant 5.000000e-01 : f32
    %554 = vector.broadcast %cst_262 : f32 to vector<2x96xf32>
    %555 = arith.mulf %554, %552 : vector<2x96xf32>
    %556 = math.exp %555 : vector<2x96xf32>
    %557 = arith.mulf %553, %556 : vector<2x96xf32>
    %558 = arith.addf %547, %557 : vector<2x96xf32>
    %c0_263 = arith.constant 0 : index
    %c0_264 = arith.constant 0 : index
    %559 = vector.load %arg18[%c0_263, %c0_264] : memref<96x384xf32, #tpu.memory_space<vmem>>, vector<96x384xf32>
    %cst_265 = arith.constant dense<0.000000e+00> : vector<2x384xf32>
    %560 = tpu.matmul %558, %559, %cst_265 {dimension_numbers = #tpu.dot_dimension_numbers<[1], [0], [0], [1], [0, 0, 1, 1], [], []>} : vector<2x96xf32>, vector<96x384xf32>, vector<2x384xf32> -> vector<2x384xf32>
    %c0_266 = arith.constant 0 : index
    %c0_267 = arith.constant 0 : index
    %561 = vector.load %arg19[%c0_266, %c0_267] : memref<1x384xf32, #tpu.memory_space<vmem>>, vector<1x384xf32>
    %562 = vector.broadcast %561 : vector<1x384xf32> to vector<2x384xf32>
    %563 = arith.addf %560, %562 : vector<2x384xf32>
    %cst_268 = arith.constant 0.000000e+00 : f32
    %564 = vector.broadcast %cst_268 : f32 to vector<2x384xf32>
    %565 = arith.maximumf %563, %564 : vector<2x384xf32>
    %c0_269 = arith.constant 0 : index
    %c0_270 = arith.constant 0 : index
    %566 = vector.load %arg20[%c0_269, %c0_270] : memref<384x12xf32, #tpu.memory_space<vmem>>, vector<384x12xf32>
    %cst_271 = arith.constant dense<0.000000e+00> : vector<2x12xf32>
    %567 = tpu.matmul %565, %566, %cst_271 {dimension_numbers = #tpu.dot_dimension_numbers<[1], [0], [0], [1], [0, 0, 1, 1], [], []>} : vector<2x384xf32>, vector<384x12xf32>, vector<2x12xf32> -> vector<2x12xf32>
    %c0_272 = arith.constant 0 : index
    %c0_273 = arith.constant 0 : index
    %568 = vector.load %arg21[%c0_272, %c0_273] : memref<1x12xf32, #tpu.memory_space<vmem>>, vector<1x12xf32>
    %569 = vector.broadcast %568 : vector<1x12xf32> to vector<2x12xf32>
    %570 = arith.addf %567, %569 : vector<2x12xf32>
    %c0_274 = arith.constant 0 : index
    %c0_275 = arith.constant 0 : index
    %571 = vector.load %arg22[%c0_274, %c0_275] : memref<2x12xf32, #tpu.memory_space<vmem>>, vector<2x12xf32>
    tpu.vector_store %arg22[%c0_274, %c0_275], %570 {strides = array<i32>} : memref<2x12xf32, #tpu.memory_space<vmem>>, vector<2x12xf32>,
    %c0_276 = arith.constant 0 : index
    %c0_277 = arith.constant 0 : index
    %572 = vector.load %arg23[%c0_276, %c0_277] : memref<2x96xf32, #tpu.memory_space<vmem>>, vector<2x96xf32>
    tpu.vector_store %arg23[%c0_276, %c0_277], %547 {strides = array<i32>} : memref<2x96xf32, #tpu.memory_space<vmem>>, vector<2x96xf32>,
    %c0_278 = arith.constant 0 : index
    %c0_279 = arith.constant 0 : index
    %573 = vector.load %arg24[%c0_278, %c0_279] : memref<2x96xf32, #tpu.memory_space<vmem>>, vector<2x96xf32>
    tpu.vector_store %arg24[%c0_278, %c0_279], %552 {strides = array<i32>} : memref<2x96xf32, #tpu.memory_space<vmem>>, vector<2x96xf32>,
    %c0_280 = arith.constant 0 : index
    %c0_281 = arith.constant 0 : index
    %574 = vector.load %arg25[%c0_280, %c0_281] : memref<2x32xf32, #tpu.memory_space<vmem>>, vector<2x32xf32>
    tpu.vector_store %arg25[%c0_280, %c0_281], %531 {strides = array<i32>} : memref<2x32xf32, #tpu.memory_space<vmem>>, vector<2x32xf32>,
    return
  }
  func.func @transform_0(%arg0: i32) -> (i32, i32, i32, i32) {
    %c0_i32 = arith.constant 0 : i32
    %c0_i32_0 = arith.constant 0 : i32
    %c0_i32_1 = arith.constant 0 : i32
    %c0_i32_2 = arith.constant 0 : i32
    %c0_i32_3 = arith.constant 0 : i32
    return %c0_i32, %c0_i32_0, %c0_i32_1, %c0_i32_2 : i32, i32, i32, i32
  }
  func.func @transform_1(%arg0: i32) -> (i32, i32) {
    %c0_i32 = arith.constant 0 : i32
    %c0_i32_0 = arith.constant 0 : i32
    %c0_i32_1 = arith.constant 0 : i32
    return %c0_i32, %c0_i32_0 : i32, i32
  }
  func.func @transform_2(%arg0: i32) -> (i32, i32) {
    %c0_i32 = arith.constant 0 : i32
    %c0_i32_0 = arith.constant 0 : i32
    %c0_i32_1 = arith.constant 0 : i32
    return %c0_i32, %c0_i32_0 : i32, i32
  }
  func.func @transform_3(%arg0: i32) -> (i32, i32, i32) {
    %c0_i32 = arith.constant 0 : i32
    %c0_i32_0 = arith.constant 0 : i32
    %c0_i32_1 = arith.constant 0 : i32
    %c0_i32_2 = arith.constant 0 : i32
    return %c0_i32, %c0_i32_0, %c0_i32_1 : i32, i32, i32
  }
  func.func @transform_4(%arg0: i32) -> (i32, i32) {
    %c0_i32 = arith.constant 0 : i32
    %c0_i32_0 = arith.constant 0 : i32
    %c0_i32_1 = arith.constant 0 : i32
    return %c0_i32, %c0_i32_0 : i32, i32
  }
  func.func @transform_5(%arg0: i32) -> (i32, i32, i32) {
    %c0_i32 = arith.constant 0 : i32
    %c0_i32_0 = arith.constant 0 : i32
    %c0_i32_1 = arith.constant 0 : i32
    %c0_i32_2 = arith.constant 0 : i32
    return %c0_i32, %c0_i32_0, %c0_i32_1 : i32, i32, i32
  }
  func.func @transform_6(%arg0: i32) -> (i32, i32) {
    %c0_i32 = arith.constant 0 : i32
    %c0_i32_0 = arith.constant 0 : i32
    %c0_i32_1 = arith.constant 0 : i32
    return %c0_i32, %c0_i32_0 : i32, i32
  }
  func.func @transform_7(%arg0: i32) -> (i32, i32) {
    %c0_i32 = arith.constant 0 : i32
    %c0_i32_0 = arith.constant 0 : i32
    %c0_i32_1 = arith.constant 0 : i32
    return %c0_i32, %c0_i32_0 : i32, i32
  }
  func.func @transform_8(%arg0: i32) -> (i32, i32) {
    %c0_i32 = arith.constant 0 : i32
    %c0_i32_0 = arith.constant 0 : i32
    %c0_i32_1 = arith.constant 0 : i32
    return %c0_i32, %c0_i32_0 : i32, i32
  }
  func.func @transform_9(%arg0: i32) -> (i32, i32) {
    %c0_i32 = arith.constant 0 : i32
    %c0_i32_0 = arith.constant 0 : i32
    %c0_i32_1 = arith.constant 0 : i32
    return %c0_i32, %c0_i32_0 : i32, i32
  }
  func.func @transform_10(%arg0: i32) -> (i32, i32) {
    %c0_i32 = arith.constant 0 : i32
    %c0_i32_0 = arith.constant 0 : i32
    %c0_i32_1 = arith.constant 0 : i32
    return %c0_i32, %c0_i32_0 : i32, i32
  }
  func.func @transform_11(%arg0: i32) -> (i32, i32) {
    %c0_i32 = arith.constant 0 : i32
    %c0_i32_0 = arith.constant 0 : i32
    %c0_i32_1 = arith.constant 0 : i32
    return %c0_i32, %c0_i32_0 : i32, i32
  }
  func.func @transform_12(%arg0: i32) -> (i32, i32) {
    %c0_i32 = arith.constant 0 : i32
    %c0_i32_0 = arith.constant 0 : i32
    %c0_i32_1 = arith.constant 0 : i32
    return %c0_i32, %c0_i32_0 : i32, i32
  }
  func.func @transform_13(%arg0: i32) -> (i32, i32) {
    %c0_i32 = arith.constant 0 : i32
    %c0_i32_0 = arith.constant 0 : i32
    %c0_i32_1 = arith.constant 0 : i32
    return %c0_i32, %c0_i32_0 : i32, i32
  }
  func.func @transform_14(%arg0: i32) -> (i32, i32) {
    %c0_i32 = arith.constant 0 : i32
    %c0_i32_0 = arith.constant 0 : i32
    %c0_i32_1 = arith.constant 0 : i32
    return %c0_i32, %c0_i32_0 : i32, i32
  }
  func.func @transform_15(%arg0: i32) -> (i32, i32) {
    %c0_i32 = arith.constant 0 : i32
    %c0_i32_0 = arith.constant 0 : i32
    %c0_i32_1 = arith.constant 0 : i32
    return %c0_i32, %c0_i32_0 : i32, i32
  }
  func.func @transform_16(%arg0: i32) -> (i32, i32) {
    %c0_i32 = arith.constant 0 : i32
    %c0_i32_0 = arith.constant 0 : i32
    %c0_i32_1 = arith.constant 0 : i32
    return %c0_i32, %c0_i32_0 : i32, i32
  }
  func.func @transform_17(%arg0: i32) -> (i32, i32) {
    %c0_i32 = arith.constant 0 : i32
    %c0_i32_0 = arith.constant 0 : i32
    %c0_i32_1 = arith.constant 0 : i32
    return %c0_i32, %c0_i32_0 : i32, i32
  }
  func.func @transform_18(%arg0: i32) -> (i32, i32) {
    %c0_i32 = arith.constant 0 : i32
    %c0_i32_0 = arith.constant 0 : i32
    %c0_i32_1 = arith.constant 0 : i32
    return %c0_i32, %c0_i32_0 : i32, i32
  }
  func.func @transform_19(%arg0: i32) -> (i32, i32) {
    %c0_i32 = arith.constant 0 : i32
    %c0_i32_0 = arith.constant 0 : i32
    %c0_i32_1 = arith.constant 0 : i32
    return %c0_i32, %c0_i32_0 : i32, i32
  }
  func.func @transform_20(%arg0: i32) -> (i32, i32) {
    %c0_i32 = arith.constant 0 : i32
    %c0_i32_0 = arith.constant 0 : i32
    %c0_i32_1 = arith.constant 0 : i32
    return %c0_i32, %c0_i32_0 : i32, i32
  }
  func.func @transform_21(%arg0: i32) -> (i32, i32) {
    %c0_i32 = arith.constant 0 : i32
    %c0_i32_0 = arith.constant 0 : i32
    %c0_i32_1 = arith.constant 0 : i32
    return %c0_i32, %c0_i32_0 : i32, i32
  }
  func.func @transform_22(%arg0: i32) -> (i32, i32) {
    %c0_i32 = arith.constant 0 : i32
    %c0_i32_0 = arith.constant 0 : i32
    %c0_i32_1 = arith.constant 0 : i32
    return %c0_i32, %c0_i32_0 : i32, i32
  }
  func.func @transform_23(%arg0: i32) -> (i32, i32) {
    %c0_i32 = arith.constant 0 : i32
    %c0_i32_0 = arith.constant 0 : i32
    %c0_i32_1 = arith.constant 0 : i32
    return %c0_i32, %c0_i32_0 : i32, i32
  }
  func.func @transform_24(%arg0: i32) -> (i32, i32) {
    %c0_i32 = arith.constant 0 : i32
    %c0_i32_0 = arith.constant 0 : i32
    %c0_i32_1 = arith.constant 0 : i32
    return %c0_i32, %c0_i32_0 : i32, i32
  }
}

</mosaic_0001>

<llo_original>
// kernel: tpu_custom_call.1
$region0: #{tpu_custom_call.1}
  #allocation0 [shape = 'u32[]', space=smem, size = 0x4, offset = 0x4, fixed_abs, tag = 'smem constant byte address 0x4 - core index']
  #allocation1 [shape = 'u32[144,128]{1,0:T(1,128)}', space=vmem, size = 0x12000, scoped, tag = 'internal scratch']
  #allocation2 [shape = 'f32[2,2,484]{2,1,0:T(2,128)}', space=vmem, size = 0x2000, scoped, tag = 'scratch operand']
  #allocation3 [shape = 'f32[2,8,484]{2,1,0:T(8,128)}', space=vmem, size = 0x8000, scoped, tag = 'scratch operand']
  %s0 = inlined_call_operand.vmem [shape: f32[2,2,20,20], index: 0, kind: input, shape index: {}]
  %s1 = inlined_call_operand.vmem [shape: f32[2,400], index: 1, kind: input, shape index: {}]
  %s2 = inlined_call_operand.vmem [shape: f32[2,96], index: 2, kind: input, shape index: {}]
  %s3 = inlined_call_operand.vmem [shape: f32[9,8,2], index: 3, kind: input, shape index: {}]
  %s4 = inlined_call_operand.vmem [shape: f32[8,1], index: 4, kind: input, shape index: {}]
  %s5 = inlined_call_operand.vmem [shape: f32[9,8,8], index: 5, kind: input, shape index: {}]
  %s6 = inlined_call_operand.vmem [shape: f32[8,1], index: 6, kind: input, shape index: {}]
  %s7 = inlined_call_operand.vmem [shape: f32[369,25], index: 7, kind: input, shape index: {}]
  %s8 = inlined_call_operand.vmem [shape: f32[200,32], index: 8, kind: input, shape index: {}]
  %s9 = inlined_call_operand.vmem [shape: f32[1,32], index: 9, kind: input, shape index: {}]
  %s10 = inlined_call_operand.vmem [shape: f32[32,384], index: 10, kind: input, shape index: {}]
  %s11 = inlined_call_operand.vmem [shape: f32[400,384], index: 11, kind: input, shape index: {}]
  %s12 = inlined_call_operand.vmem [shape: f32[1,384], index: 12, kind: input, shape index: {}]
  %s13 = inlined_call_operand.vmem [shape: f32[384,96], index: 13, kind: input, shape index: {}]
  %s14 = inlined_call_operand.vmem [shape: f32[1,96], index: 14, kind: input, shape index: {}]
  %s15 = inlined_call_operand.vmem [shape: f32[384,96], index: 15, kind: input, shape index: {}]
  %s16 = inlined_call_operand.vmem [shape: f32[1,96], index: 16, kind: input, shape index: {}]
  %s17 = inlined_call_operand.vmem [shape: f32[96,384], index: 17, kind: input, shape index: {}]
  %s18 = inlined_call_operand.vmem [shape: f32[1,384], index: 18, kind: input, shape index: {}]
  %s19 = inlined_call_operand.vmem [shape: f32[384,12], index: 19, kind: input, shape index: {}]
  %s20 = inlined_call_operand.vmem [shape: f32[1,12], index: 20, kind: input, shape index: {}]
  %s21 = inlined_call_operand.hbm [shape: f32[2,12], index: 21, kind: output, shape index: {0}]
  %s22 = inlined_call_operand.hbm [shape: f32[2,96], index: 22, kind: output, shape index: {1}]
  %s23 = inlined_call_operand.hbm [shape: f32[2,96], index: 23, kind: output, shape index: {2}]
  %s24 = inlined_call_operand.hbm [shape: f32[2,32], index: 24, kind: output, shape index: {3}]
  %25 = xla_tuple %s21, %s22, %s23, %s24
  %s26 = sld [smem:[#allocation0]]
  $region118: #{tpu_custom_call.1} parent=0
    _
  %s28 = ssub.s32 1, %s26
  %s29 = scalar_select 0, %s28, %s26
  $region1: #{tpu_custom_call.1} parent=0
    #allocation4 [shape = 'u8[1024]{0}', space=vmem, size = 0x400, scoped, tag = 'output window, operand 0, single buffered']
    #allocation5 [shape = 's32[1]{0}', space=sflag, size = 0x4, scoped, tag = 'scoped memory for tpu_custom_call.1']
    #allocation6 [shape = 'u8[1024]{0}', space=vmem, size = 0x400, scoped, tag = 'output window, operand 1, single buffered']
    #allocation7 [shape = 's32[1]{0}', space=sflag, size = 0x4, scoped, tag = 'scoped memory for tpu_custom_call.1']
    #allocation8 [shape = 'u8[1024]{0}', space=vmem, size = 0x400, scoped, tag = 'output window, operand 2, single buffered']
    #allocation9 [shape = 'u8[1024]{0}', space=vmem, size = 0x400, scoped, tag = 'output window, operand 3, single buffered']
    #allocation10 [shape = 's32[1]{0}', space=sflag, size = 0x4, scoped, tag = 'scoped memory for tpu_custom_call.1']
    %30 = vsyncpa [#allocation5], 0
    %31 = vsyncpa [#allocation7], 0
    %32 = vsyncpa [#allocation10], 0
    // Predicated region
    $region2: #{tpu_custom_call.1} parent=1 // pred_check
      _
    $region3: #{tpu_custom_call.1} parent=1 // pred_check_branch
      %34 = sbr.rel (0) target = $region5
    $region4: #{tpu_custom_call.1} parent=1 // pred_region
      _
    $region5: #{tpu_custom_call.1} parent=1 // pred_fallthru
      _
    // Predicated region
    $region6: #{tpu_custom_call.1} parent=1 // pred_check
      _
    $region7: #{tpu_custom_call.1} parent=1 // pred_check_branch
      %36 = sbr.rel (0) target = $region9
    $region8: #{tpu_custom_call.1} parent=1 // pred_region
      _
    $region9: #{tpu_custom_call.1} parent=1 // pred_fallthru
      _
    // Predicated region
    $region10: #{tpu_custom_call.1} parent=1 // pred_check
      _
    $region11: #{tpu_custom_call.1} parent=1 // pred_check_branch
      %38 = sbr.rel (0) target = $region13
    $region12: #{tpu_custom_call.1} parent=1 // pred_region
      _
    $region13: #{tpu_custom_call.1} parent=1 // pred_fallthru
      _
    // Predicated region
    $region14: #{tpu_custom_call.1} parent=1 // pred_check
      _
    $region15: #{tpu_custom_call.1} parent=1 // pred_check_branch
      %40 = sbr.rel (0) target = $region17
    $region16: #{tpu_custom_call.1} parent=1 // pred_region
      _
    $region17: #{tpu_custom_call.1} parent=1 // pred_fallthru
      _
    // Predicated region
    $region18: #{tpu_custom_call.1} parent=1 // pred_check
      _
    $region19: #{tpu_custom_call.1} parent=1 // pred_check_branch
      %42 = sbr.rel (0) target = $region21
    $region20: #{tpu_custom_call.1} parent=1 // pred_region
      _
    $region21: #{tpu_custom_call.1} parent=1 // pred_fallthru
      _
    // Predicated region
    $region22: #{tpu_custom_call.1} parent=1 // pred_check
      _
    $region23: #{tpu_custom_call.1} parent=1 // pred_check_branch
      %44 = sbr.rel (0) target = $region25
    $region24: #{tpu_custom_call.1} parent=1 // pred_region
      _
    $region25: #{tpu_custom_call.1} parent=1 // pred_fallthru
      _
    // Predicated region
    $region26: #{tpu_custom_call.1} parent=1 // pred_check
      _
    $region27: #{tpu_custom_call.1} parent=1 // pred_check_branch
      %46 = sbr.rel (0) target = $region29
    $region28: #{tpu_custom_call.1} parent=1 // pred_region
      _
    $region29: #{tpu_custom_call.1} parent=1 // pred_fallthru
      _
    // Predicated region
    $region30: #{tpu_custom_call.1} parent=1 // pred_check
      _
    $region31: #{tpu_custom_call.1} parent=1 // pred_check_branch
      %48 = sbr.rel (0) target = $region33
    $region32: #{tpu_custom_call.1} parent=1 // pred_region
      _
    $region33: #{tpu_custom_call.1} parent=1 // pred_fallthru
      _
    // Predicated region
    $region34: #{tpu_custom_call.1} parent=1 // pred_check
      _
    $region35: #{tpu_custom_call.1} parent=1 // pred_check_branch
      %50 = sbr.rel (0) target = $region37
    $region36: #{tpu_custom_call.1} parent=1 // pred_region
      _
    $region37: #{tpu_custom_call.1} parent=1 // pred_fallthru
      _
    // Predicated region
    $region38: #{tpu_custom_call.1} parent=1 // pred_check
      _
    $region39: #{tpu_custom_call.1} parent=1 // pred_check_branch
      %52 = sbr.rel (0) target = $region41
    $region40: #{tpu_custom_call.1} parent=1 // pred_region
      _
    $region41: #{tpu_custom_call.1} parent=1 // pred_fallthru
      _
    // Predicated region
    $region42: #{tpu_custom_call.1} parent=1 // pred_check
      _
    $region43: #{tpu_custom_call.1} parent=1 // pred_check_branch
      %54 = sbr.rel (0) target = $region45
    $region44: #{tpu_custom_call.1} parent=1 // pred_region
      _
    $region45: #{tpu_custom_call.1} parent=1 // pred_fallthru
      _
    // Predicated region
    $region46: #{tpu_custom_call.1} parent=1 // pred_check
      _
    $region47: #{tpu_custom_call.1} parent=1 // pred_check_branch
      %56 = sbr.rel (0) target = $region49
    $region48: #{tpu_custom_call.1} parent=1 // pred_region
      _
    $region49: #{tpu_custom_call.1} parent=1 // pred_fallthru
      _
    // Predicated region
    $region50: #{tpu_custom_call.1} parent=1 // pred_check
      _
    $region51: #{tpu_custom_call.1} parent=1 // pred_check_branch
      %58 = sbr.rel (0) target = $region53
    $region52: #{tpu_custom_call.1} parent=1 // pred_region
      _
    $region53: #{tpu_custom_call.1} parent=1 // pred_fallthru
      _
    // Predicated region
    $region54: #{tpu_custom_call.1} parent=1 // pred_check
      _
    $region55: #{tpu_custom_call.1} parent=1 // pred_check_branch
      %60 = sbr.rel (0) target = $region57
    $region56: #{tpu_custom_call.1} parent=1 // pred_region
      _
    $region57: #{tpu_custom_call.1} parent=1 // pred_fallthru
      _
    // Predicated region
    $region58: #{tpu_custom_call.1} parent=1 // pred_check
      _
    $region59: #{tpu_custom_call.1} parent=1 // pred_check_branch
      %62 = sbr.rel (0) target = $region61
    $region60: #{tpu_custom_call.1} parent=1 // pred_region
      _
    $region61: #{tpu_custom_call.1} parent=1 // pred_fallthru
      _
    // Predicated region
    $region62: #{tpu_custom_call.1} parent=1 // pred_check
      _
    $region63: #{tpu_custom_call.1} parent=1 // pred_check_branch
      %64 = sbr.rel (0) target = $region65
    $region64: #{tpu_custom_call.1} parent=1 // pred_region
      _
    $region65: #{tpu_custom_call.1} parent=1 // pred_fallthru
      _
    // Predicated region
    $region66: #{tpu_custom_call.1} parent=1 // pred_check
      _
    $region67: #{tpu_custom_call.1} parent=1 // pred_check_branch
      %66 = sbr.rel (0) target = $region69
    $region68: #{tpu_custom_call.1} parent=1 // pred_region
      _
    $region69: #{tpu_custom_call.1} parent=1 // pred_fallthru
      _
    // Predicated region
    $region70: #{tpu_custom_call.1} parent=1 // pred_check
      _
    $region71: #{tpu_custom_call.1} parent=1 // pred_check_branch
      %68 = sbr.rel (0) target = $region73
    $region72: #{tpu_custom_call.1} parent=1 // pred_region
      _
    $region73: #{tpu_custom_call.1} parent=1 // pred_fallthru
      _
    // Predicated region
    $region74: #{tpu_custom_call.1} parent=1 // pred_check
      _
    $region75: #{tpu_custom_call.1} parent=1 // pred_check_branch
      %70 = sbr.rel (0) target = $region77
    $region76: #{tpu_custom_call.1} parent=1 // pred_region
      _
    $region77: #{tpu_custom_call.1} parent=1 // pred_fallthru
      _
    // Predicated region
    $region78: #{tpu_custom_call.1} parent=1 // pred_check
      _
    $region79: #{tpu_custom_call.1} parent=1 // pred_check_branch
      %72 = sbr.rel (0) target = $region81
    $region80: #{tpu_custom_call.1} parent=1 // pred_region
      _
    $region81: #{tpu_custom_call.1} parent=1 // pred_fallthru
      _
    // Predicated region
    $region82: #{tpu_custom_call.1} parent=1 // pred_check
      _
    $region83: #{tpu_custom_call.1} parent=1 // pred_check_branch
      %74 = sbr.rel (0) target = $region85
    $region84: #{tpu_custom_call.1} parent=1 // pred_region
      _
    $region85: #{tpu_custom_call.1} parent=1 // pred_fallthru
      _
    %vm75 = vcmask 1041408
    %vm76 = vcmask 1043458
    %vm77 = vmor %vm76, %vm75
    %vm78 = vcmask 1045508
    %vm79 = vmor %vm78, %vm77
    %vm80 = vcmask 818182
    %vm81 = vmor %vm80, %vm79
    %82 = vst.msk [vmem:[#allocation2] sm:$0xff] %vm81, 0.0
    %83 = vst.msk [vmem:[#allocation2 + $0x8] sm:$0xff] %vm81, 0.0
    %v84 = vld [vmem:[%s0] sm:$0xff]
    %v85 = vld [vmem:[%s0 + $0x8] sm:$0xff]
    %v86 = vld [vmem:[%s0 + $0x10] sm:$0xf]
    %v87 = vld [vmem:[%s0 + $0x18] sm:$0xff]
    %v88 = vld [vmem:[%s0 + $0x20] sm:$0xff]
    %v89 = vld [vmem:[%s0 + $0x28] sm:$0xf]
    %v90 = vld [vmem:[%s0 + $0x30] sm:$0xff]
    %v91 = vld [vmem:[%s0 + $0x38] sm:$0xff]
    %v92 = vld [vmem:[%s0 + $0x40] sm:$0xf]
    %v93 = vld [vmem:[%s0 + $0x48] sm:$0xff]
    %v94 = vld [vmem:[%s0 + $0x50] sm:$0xff]
    %v95 = vld [vmem:[%s0 + $0x58] sm:$0xf]
    %v101 = vunpack.c.l.s4 1983009808
    %v102 = vunpack.c.0.s8 %v101
    %v103 = vlaneseq
    %v104 = vshrl.u32 %v103, 7
    %v105 = vsub.s32 %v102, %v104
    %v106 = vrot.slane %v84, %v105
    %v108 = vunpack.c.l.s4 1983009808
    %v109 = vunpack.c.0.s8 %v108
    %v110 = vlaneseq
    %v111 = vshrl.u32 %v110, 7
    %v112 = vsub.s32 %v109, %v111
    %v113 = vrot.slane %v87, %v112
    %v115 = vunpack.c.l.s4 1983009808
    %v116 = vunpack.c.0.s8 %v115
    %v117 = vlaneseq
    %v118 = vshrl.u32 %v117, 7
    %v119 = vsub.s32 %v116, %v118
    %v120 = vrot.slane %v90, %v119
    %v122 = vunpack.c.l.s4 1983009808
    %v123 = vunpack.c.0.s8 %v122
    %v124 = vlaneseq
    %v125 = vshrl.u32 %v124, 7
    %v126 = vsub.s32 %v123, %v125
    %v127 = vrot.slane %v93, %v126
    %vm128 = vcmask 1044484
    %v129 = vsel %vm128, %v106, %v106
    %vm130 = vcmask 1046534
    %v131 = vsel %vm130, %v106, %v129
    %v132 = vrot.slane %v113, 7
    %vm133 = vcmask 1041409
    %v134 = vsel %vm133, %v132, %v131
    %vm135 = vcmask 1043459
    %v136 = vsel %vm135, %v132, %v134
    %vm137 = vcmask 1045509
    %v138 = vsel %vm137, %v132, %v136
    %vm139 = vcmask 1047559
    %v140 = vsel %vm139, %v132, %v138
    %v141 = vsel %vm128, %v120, %v120
    %v142 = vsel %vm130, %v120, %v141
    %v143 = vrot.slane %v127, 7
    %v144 = vsel %vm133, %v143, %v142
    %v145 = vsel %vm135, %v143, %v144
    %v146 = vsel %vm137, %v143, %v145
    %v147 = vsel %vm139, %v143, %v146
    %148 = vrot.lane.b32.xlu0 %v140, 23
    %v149 = vpop.permute.xlu0 %148
    %150 = vrot.lane.b32.xlu0 %v147, 23
    %v151 = vpop.permute.xlu0 %150
    %vm154 = vcmask 345272
    %155 = vst.msk [vmem:[#allocation2] sm:$0x3] %vm154, %v149
    %156 = vst.msk [vmem:[#allocation2 + $0x8] sm:$0x3] %vm154, %v151
    %v157 = vrot.slane %v106, 1
    %v158 = vsel %vm128, %v157, %v157
    %v159 = vsel %vm130, %v157, %v158
    %v160 = vsel %vm133, %v113, %v159
    %v161 = vsel %vm135, %v113, %v160
    %v162 = vsel %vm137, %v113, %v161
    %v163 = vsel %vm139, %v113, %v162
    %v164 = vrot.slane %v120, 1
    %v165 = vsel %vm128, %v164, %v164
    %v166 = vsel %vm130, %v164, %v165
    %v167 = vsel %vm133, %v127, %v166
    %v168 = vsel %vm135, %v127, %v167
    %v169 = vsel %vm137, %v127, %v168
    %v170 = vsel %vm139, %v127, %v169
    %171 = vrot.lane.b32.xlu0 %v163, 45
    %v172 = vpop.permute.xlu0 %171
    %173 = vrot.lane.b32.xlu0 %v170, 45
    %v174 = vpop.permute.xlu0 %173
    %vm177 = vcmask 525672
    %178 = vst.msk [vmem:[#allocation2] sm:$0x3] %vm177, %v172
    %179 = vst.msk [vmem:[#allocation2 + $0x8] sm:$0x3] %vm177, %v174
    %v180 = vcombine.high %v106, %v106
    %v181 = vcombine.high %v113, %v113
    %v182 = vcombine.high %v120, %v120
    %v183 = vcombine.high %v127, %v127
    %v184 = vsel %vm128, %v180, %v180
    %v185 = vsel %vm130, %v180, %v184
    %v186 = vrot.slane %v181, 7
    %v187 = vsel %vm133, %v186, %v185
    %v188 = vsel %vm135, %v186, %v187
    %v189 = vsel %vm137, %v186, %v188
    %v190 = vsel %vm139, %v186, %v189
    %v191 = vsel %vm128, %v182, %v182
    %v192 = vsel %vm130, %v182, %v191
    %v193 = vrot.slane %v183, 7
    %v194 = vsel %vm133, %v193, %v192
    %v195 = vsel %vm135, %v193, %v194
    %v196 = vsel %vm137, %v193, %v195
    %v197 = vsel %vm139, %v193, %v196
    %198 = vrot.lane.b32.xlu0 %v190, 67
    %v199 = vpop.permute.xlu0 %198
    %200 = vrot.lane.b32.xlu0 %v197, 67
    %v201 = vpop.permute.xlu0 %200
    %vm204 = vcmask 706072
    %205 = vst.msk [vmem:[#allocation2] sm:$0x3] %vm204, %v199
    %206 = vst.msk [vmem:[#allocation2 + $0x8] sm:$0x3] %vm204, %v201
    %v207 = vrot.slane %v180, 1
    %v208 = vsel %vm128, %v207, %v207
    %v209 = vsel %vm130, %v207, %v208
    %v210 = vsel %vm133, %v181, %v209
    %v211 = vsel %vm135, %v181, %v210
    %v212 = vsel %vm137, %v181, %v211
    %v213 = vsel %vm139, %v181, %v212
    %v214 = vrot.slane %v182, 1
    %v215 = vsel %vm128, %v214, %v214
    %v216 = vsel %vm130, %v214, %v215
    %v217 = vsel %vm133, %v183, %v216
    %v218 = vsel %vm135, %v183, %v217
    %v219 = vsel %vm137, %v183, %v218
    %v220 = vsel %vm139, %v183, %v219
    %221 = vrot.lane.b32.xlu0 %v213, 89
    %v222 = vpop.permute.xlu0 %221
    %223 = vrot.lane.b32.xlu0 %v220, 89
    %v224 = vpop.permute.xlu0 %223
    %vm227 = vcmask 886472
    %228 = vst.msk [vmem:[#allocation2] sm:$0x3] %vm227, %v222
    %229 = vst.msk [vmem:[#allocation2 + $0x8] sm:$0x3] %vm227, %v224
    %v230 = vcombine.high %v84, %v84
    %v232 = vunpack.c.l.s4 1983009808
    %v233 = vunpack.c.0.s8 %v232
    %v234 = vlaneseq
    %v235 = vshrl.u32 %v234, 7
    %v236 = vsub.s32 %v233, %v235
    %v237 = vrot.slane %v230, %v236
    %v238 = vcombine.high %v87, %v87
    %v240 = vunpack.c.l.s4 1983009808
    %v241 = vunpack.c.0.s8 %v240
    %v242 = vlaneseq
    %v243 = vshrl.u32 %v242, 7
    %v244 = vsub.s32 %v241, %v243
    %v245 = vrot.slane %v238, %v244
    %v246 = vcombine.high %v90, %v90
    %v248 = vunpack.c.l.s4 1983009808
    %v249 = vunpack.c.0.s8 %v248
    %v250 = vlaneseq
    %v251 = vshrl.u32 %v250, 7
    %v252 = vsub.s32 %v249, %v251
    %v253 = vrot.slane %v246, %v252
    %v254 = vcombine.high %v93, %v93
    %v256 = vunpack.c.l.s4 1983009808
    %v257 = vunpack.c.0.s8 %v256
    %v258 = vlaneseq
    %v259 = vshrl.u32 %v258, 7
    %v260 = vsub.s32 %v257, %v259
    %v261 = vrot.slane %v254, %v260
    %v262 = vsel %vm128, %v237, %v237
    %v263 = vsel %vm130, %v237, %v262
    %v264 = vrot.slane %v245, 7
    %v265 = vsel %vm133, %v264, %v263
    %v266 = vsel %vm135, %v264, %v265
    %v267 = vsel %vm137, %v264, %v266
    %v268 = vsel %vm139, %v264, %v267
    %v269 = vsel %vm128, %v253, %v253
    %v270 = vsel %vm130, %v253, %v269
    %v271 = vrot.slane %v261, 7
    %v272 = vsel %vm133, %v271, %v270
    %v273 = vsel %vm135, %v271, %v272
    %v274 = vsel %vm137, %v271, %v273
    %v275 = vsel %vm139, %v271, %v274
    %276 = vrot.lane.b32.xlu0 %v268, 111
    %v277 = vpop.permute.xlu0 %276
    %278 = vrot.lane.b32.xlu0 %v275, 111
    %v279 = vpop.permute.xlu0 %278
    %v280 = vrot.slane %v277, 6
    %v281 = vrot.slane %v279, 6
    %vm282 = vcmask 908288
    %v283 = vsel %vm282, %v280, %v277
    %v284 = vsel %vm282, %v281, %v279
    %vm287 = vcmask 1042296
    %vm288 = vcmask 19458
    %vm289 = vmor %vm288, %vm287
    %290 = vst.msk [vmem:[#allocation2] sm:$0xf] %vm289, %v283
    %291 = vst.msk [vmem:[#allocation2 + $0x8] sm:$0xf] %vm289, %v284
    %v292 = vrot.slane %v237, 1
    %v293 = vsel %vm128, %v292, %v292
    %v294 = vsel %vm130, %v292, %v293
    %v295 = vsel %vm133, %v245, %v294
    %v296 = vsel %vm135, %v245, %v295
    %v297 = vsel %vm137, %v245, %v296
    %v298 = vsel %vm139, %v245, %v297
    %v299 = vrot.slane %v253, 1
    %v300 = vsel %vm128, %v299, %v299
    %v301 = vsel %vm130, %v299, %v300
    %v302 = vsel %vm133, %v261, %v301
    %v303 = vsel %vm135, %v261, %v302
    %v304 = vsel %vm137, %v261, %v303
    %v305 = vsel %vm139, %v261, %v304
    %306 = vrot.lane.b32.xlu0 %v298, 5
    %v307 = vpop.permute.xlu0 %306
    %308 = vrot.lane.b32.xlu0 %v305, 5
    %v309 = vpop.permute.xlu0 %308
    %vm312 = vcmask 197672
    %313 = vst.msk [vmem:[#allocation2 + $0x2] sm:$0x3] %vm312, %v307
    %314 = vst.msk [vmem:[#allocation2 + $0xa] sm:$0x3] %vm312, %v309
    %v315 = vcombine.high %v237, %v237
    %v316 = vcombine.high %v245, %v245
    %v317 = vcombine.high %v253, %v253
    %v318 = vcombine.high %v261, %v261
    %v319 = vsel %vm128, %v315, %v315
    %v320 = vsel %vm130, %v315, %v319
    %v321 = vrot.slane %v316, 7
    %v322 = vsel %vm133, %v321, %v320
    %v323 = vsel %vm135, %v321, %v322
    %v324 = vsel %vm137, %v321, %v323
    %v325 = vsel %vm139, %v321, %v324
    %v326 = vsel %vm128, %v317, %v317
    %v327 = vsel %vm130, %v317, %v326
    %v328 = vrot.slane %v318, 7
    %v329 = vsel %vm133, %v328, %v327
    %v330 = vsel %vm135, %v328, %v329
    %v331 = vsel %vm137, %v328, %v330
    %v332 = vsel %vm139, %v328, %v331
    %333 = vrot.lane.b32.xlu0 %v325, 27
    %v334 = vpop.permute.xlu0 %333
    %335 = vrot.lane.b32.xlu0 %v332, 27
    %v336 = vpop.permute.xlu0 %335
    %vm339 = vcmask 378072
    %340 = vst.msk [vmem:[#allocation2 + $0x2] sm:$0x3] %vm339, %v334
    %341 = vst.msk [vmem:[#allocation2 + $0xa] sm:$0x3] %vm339, %v336
    %v342 = vrot.slane %v315, 1
    %v343 = vsel %vm128, %v342, %v342
    %v344 = vsel %vm130, %v342, %v343
    %v345 = vsel %vm133, %v316, %v344
    %v346 = vsel %vm135, %v316, %v345
    %v347 = vsel %vm137, %v316, %v346
    %v348 = vsel %vm139, %v316, %v347
    %v349 = vrot.slane %v317, 1
    %v350 = vsel %vm128, %v349, %v349
    %v351 = vsel %vm130, %v349, %v350
    %v352 = vsel %vm133, %v318, %v351
    %v353 = vsel %vm135, %v318, %v352
    %v354 = vsel %vm137, %v318, %v353
    %v355 = vsel %vm139, %v318, %v354
    %356 = vrot.lane.b32.xlu0 %v348, 49
    %v357 = vpop.permute.xlu0 %356
    %358 = vrot.lane.b32.xlu0 %v355, 49
    %v359 = vpop.permute.xlu0 %358
    %vm362 = vcmask 558472
    %363 = vst.msk [vmem:[#allocation2 + $0x2] sm:$0x3] %vm362, %v357
    %364 = vst.msk [vmem:[#allocation2 + $0xa] sm:$0x3] %vm362, %v359
    %v370 = vunpack.c.l.s4 1983009808
    %v371 = vunpack.c.0.s8 %v370
    %v372 = vlaneseq
    %v373 = vshrl.u32 %v372, 7
    %v374 = vsub.s32 %v371, %v373
    %v375 = vrot.slane %v85, %v374
    %v377 = vunpack.c.l.s4 1983009808
    %v378 = vunpack.c.0.s8 %v377
    %v379 = vlaneseq
    %v380 = vshrl.u32 %v379, 7
    %v381 = vsub.s32 %v378, %v380
    %v382 = vrot.slane %v88, %v381
    %v384 = vunpack.c.l.s4 1983009808
    %v385 = vunpack.c.0.s8 %v384
    %v386 = vlaneseq
    %v387 = vshrl.u32 %v386, 7
    %v388 = vsub.s32 %v385, %v387
    %v389 = vrot.slane %v91, %v388
    %v391 = vunpack.c.l.s4 1983009808
    %v392 = vunpack.c.0.s8 %v391
    %v393 = vlaneseq
    %v394 = vshrl.u32 %v393, 7
    %v395 = vsub.s32 %v392, %v394
    %v396 = vrot.slane %v94, %v395
    %v397 = vsel %vm128, %v375, %v375
    %v398 = vsel %vm130, %v375, %v397
    %v399 = vrot.slane %v382, 7
    %v400 = vsel %vm133, %v399, %v398
    %v401 = vsel %vm135, %v399, %v400
    %v402 = vsel %vm137, %v399, %v401
    %v403 = vsel %vm139, %v399, %v402
    %v404 = vsel %vm128, %v389, %v389
    %v405 = vsel %vm130, %v389, %v404
    %v406 = vrot.slane %v396, 7
    %v407 = vsel %vm133, %v406, %v405
    %v408 = vsel %vm135, %v406, %v407
    %v409 = vsel %vm137, %v406, %v408
    %v410 = vsel %vm139, %v406, %v409
    %411 = vrot.lane.b32.xlu0 %v403, 71
    %v412 = vpop.permute.xlu0 %411
    %413 = vrot.lane.b32.xlu0 %v410, 71
    %v414 = vpop.permute.xlu0 %413
    %vm417 = vcmask 738872
    %418 = vst.msk [vmem:[#allocation2 + $0x2] sm:$0x3] %vm417, %v412
    %419 = vst.msk [vmem:[#allocation2 + $0xa] sm:$0x3] %vm417, %v414
    %v420 = vrot.slane %v375, 1
    %v421 = vsel %vm128, %v420, %v420
    %v422 = vsel %vm130, %v420, %v421
    %v423 = vsel %vm133, %v382, %v422
    %v424 = vsel %vm135, %v382, %v423
    %v425 = vsel %vm137, %v382, %v424
    %v426 = vsel %vm139, %v382, %v425
    %v427 = vrot.slane %v389, 1
    %v428 = vsel %vm128, %v427, %v427
    %v429 = vsel %vm130, %v427, %v428
    %v430 = vsel %vm133, %v396, %v429
    %v431 = vsel %vm135, %v396, %v430
    %v432 = vsel %vm137, %v396, %v431
    %v433 = vsel %vm139, %v396, %v432
    %434 = vrot.lane.b32.xlu0 %v426, 93
    %v435 = vpop.permute.xlu0 %434
    %436 = vrot.lane.b32.xlu0 %v433, 93
    %v437 = vpop.permute.xlu0 %436
    %vm440 = vcmask 919272
    %441 = vst.msk [vmem:[#allocation2 + $0x2] sm:$0x3] %vm440, %v435
    %442 = vst.msk [vmem:[#allocation2 + $0xa] sm:$0x3] %vm440, %v437
    %v443 = vcombine.high %v375, %v375
    %v444 = vcombine.high %v382, %v382
    %v445 = vcombine.high %v389, %v389
    %v446 = vcombine.high %v396, %v396
    %v447 = vsel %vm128, %v443, %v443
    %v448 = vsel %vm130, %v443, %v447
    %v449 = vrot.slane %v444, 7
    %v450 = vsel %vm133, %v449, %v448
    %v451 = vsel %vm135, %v449, %v450
    %v452 = vsel %vm137, %v449, %v451
    %v453 = vsel %vm139, %v449, %v452
    %v454 = vsel %vm128, %v445, %v445
    %v455 = vsel %vm130, %v445, %v454
    %v456 = vrot.slane %v446, 7
    %v457 = vsel %vm133, %v456, %v455
    %v458 = vsel %vm135, %v456, %v457
    %v459 = vsel %vm137, %v456, %v458
    %v460 = vsel %vm139, %v456, %v459
    %461 = vrot.lane.b32.xlu0 %v453, 115
    %v462 = vpop.permute.xlu0 %461
    %463 = vrot.lane.b32.xlu0 %v460, 115
    %v464 = vpop.permute.xlu0 %463
    %v465 = vrot.slane %v462, 6
    %v466 = vrot.slane %v464, 6
    %vm467 = vcmask 941056
    %v468 = vsel %vm467, %v465, %v462
    %v469 = vsel %vm467, %v466, %v464
    %vm472 = vcmask 1042328
    %vm473 = vcmask 52226
    %vm474 = vmor %vm473, %vm472
    %475 = vst.msk [vmem:[#allocation2 + $0x2] sm:$0xf] %vm474, %v468
    %476 = vst.msk [vmem:[#allocation2 + $0xa] sm:$0xf] %vm474, %v469
    %v477 = vrot.slane %v443, 1
    %v478 = vsel %vm128, %v477, %v477
    %v479 = vsel %vm130, %v477, %v478
    %v480 = vsel %vm133, %v444, %v479
    %v481 = vsel %vm135, %v444, %v480
    %v482 = vsel %vm137, %v444, %v481
    %v483 = vsel %vm139, %v444, %v482
    %v484 = vrot.slane %v445, 1
    %v485 = vsel %vm128, %v484, %v484
    %v486 = vsel %vm130, %v484, %v485
    %v487 = vsel %vm133, %v446, %v486
    %v488 = vsel %vm135, %v446, %v487
    %v489 = vsel %vm137, %v446, %v488
    %v490 = vsel %vm139, %v446, %v489
    %491 = vrot.lane.b32.xlu0 %v483, 9
    %v492 = vpop.permute.xlu0 %491
    %493 = vrot.lane.b32.xlu0 %v490, 9
    %v494 = vpop.permute.xlu0 %493
    %vm497 = vcmask 230472
    %498 = vst.msk [vmem:[#allocation2 + $0x4] sm:$0x3] %vm497, %v492
    %499 = vst.msk [vmem:[#allocation2 + $0xc] sm:$0x3] %vm497, %v494
    %v500 = vcombine.high %v85, %v85
    %v502 = vunpack.c.l.s4 1983009808
    %v503 = vunpack.c.0.s8 %v502
    %v504 = vlaneseq
    %v505 = vshrl.u32 %v504, 7
    %v506 = vsub.s32 %v503, %v505
    %v507 = vrot.slane %v500, %v506
    %v508 = vcombine.high %v88, %v88
    %v510 = vunpack.c.l.s4 1983009808
    %v511 = vunpack.c.0.s8 %v510
    %v512 = vlaneseq
    %v513 = vshrl.u32 %v512, 7
    %v514 = vsub.s32 %v511, %v513
    %v515 = vrot.slane %v508, %v514
    %v516 = vcombine.high %v91, %v91
    %v518 = vunpack.c.l.s4 1983009808
    %v519 = vunpack.c.0.s8 %v518
    %v520 = vlaneseq
    %v521 = vshrl.u32 %v520, 7
    %v522 = vsub.s32 %v519, %v521
    %v523 = vrot.slane %v516, %v522
    %v524 = vcombine.high %v94, %v94
    %v526 = vunpack.c.l.s4 1983009808
    %v527 = vunpack.c.0.s8 %v526
    %v528 = vlaneseq
    %v529 = vshrl.u32 %v528, 7
    %v530 = vsub.s32 %v527, %v529
    %v531 = vrot.slane %v524, %v530
    %v532 = vsel %vm128, %v507, %v507
    %v533 = vsel %vm130, %v507, %v532
    %v534 = vrot.slane %v515, 7
    %v535 = vsel %vm133, %v534, %v533
    %v536 = vsel %vm135, %v534, %v535
    %v537 = vsel %vm137, %v534, %v536
    %v538 = vsel %vm139, %v534, %v537
    %v539 = vsel %vm128, %v523, %v523
    %v540 = vsel %vm130, %v523, %v539
    %v541 = vrot.slane %v531, 7
    %v542 = vsel %vm133, %v541, %v540
    %v543 = vsel %vm135, %v541, %v542
    %v544 = vsel %vm137, %v541, %v543
    %v545 = vsel %vm139, %v541, %v544
    %546 = vrot.lane.b32.xlu0 %v538, 31
    %v547 = vpop.permute.xlu0 %546
    %548 = vrot.lane.b32.xlu0 %v545, 31
    %v549 = vpop.permute.xlu0 %548
    %vm552 = vcmask 410872
    %553 = vst.msk [vmem:[#allocation2 + $0x4] sm:$0x3] %vm552, %v547
    %554 = vst.msk [vmem:[#allocation2 + $0xc] sm:$0x3] %vm552, %v549
    %v555 = vrot.slane %v507, 1
    %v556 = vsel %vm128, %v555, %v555
    %v557 = vsel %vm130, %v555, %v556
    %v558 = vsel %vm133, %v515, %v557
    %v559 = vsel %vm135, %v515, %v558
    %v560 = vsel %vm137, %v515, %v559
    %v561 = vsel %vm139, %v515, %v560
    %v562 = vrot.slane %v523, 1
    %v563 = vsel %vm128, %v562, %v562
    %v564 = vsel %vm130, %v562, %v563
    %v565 = vsel %vm133, %v531, %v564
    %v566 = vsel %vm135, %v531, %v565
    %v567 = vsel %vm137, %v531, %v566
    %v568 = vsel %vm139, %v531, %v567
    %569 = vrot.lane.b32.xlu0 %v561, 53
    %v570 = vpop.permute.xlu0 %569
    %571 = vrot.lane.b32.xlu0 %v568, 53
    %v572 = vpop.permute.xlu0 %571
    %vm575 = vcmask 591272
    %576 = vst.msk [vmem:[#allocation2 + $0x4] sm:$0x3] %vm575, %v570
    %577 = vst.msk [vmem:[#allocation2 + $0xc] sm:$0x3] %vm575, %v572
    %v578 = vcombine.high %v507, %v507
    %v579 = vcombine.high %v515, %v515
    %v580 = vcombine.high %v523, %v523
    %v581 = vcombine.high %v531, %v531
    %v582 = vsel %vm128, %v578, %v578
    %v583 = vsel %vm130, %v578, %v582
    %v584 = vrot.slane %v579, 7
    %v585 = vsel %vm133, %v584, %v583
    %v586 = vsel %vm135, %v584, %v585
    %v587 = vsel %vm137, %v584, %v586
    %v588 = vsel %vm139, %v584, %v587
    %v589 = vsel %vm128, %v580, %v580
    %v590 = vsel %vm130, %v580, %v589
    %v591 = vrot.slane %v581, 7
    %v592 = vsel %vm133, %v591, %v590
    %v593 = vsel %vm135, %v591, %v592
    %v594 = vsel %vm137, %v591, %v593
    %v595 = vsel %vm139, %v591, %v594
    %596 = vrot.lane.b32.xlu0 %v588, 75
    %v597 = vpop.permute.xlu0 %596
    %598 = vrot.lane.b32.xlu0 %v595, 75
    %v599 = vpop.permute.xlu0 %598
    %vm602 = vcmask 771672
    %603 = vst.msk [vmem:[#allocation2 + $0x4] sm:$0x3] %vm602, %v597
    %604 = vst.msk [vmem:[#allocation2 + $0xc] sm:$0x3] %vm602, %v599
    %v605 = vrot.slane %v578, 1
    %v606 = vsel %vm128, %v605, %v605
    %v607 = vsel %vm130, %v605, %v606
    %v608 = vsel %vm133, %v579, %v607
    %v609 = vsel %vm135, %v579, %v608
    %v610 = vsel %vm137, %v579, %v609
    %v611 = vsel %vm139, %v579, %v610
    %v612 = vrot.slane %v580, 1
    %v613 = vsel %vm128, %v612, %v612
    %v614 = vsel %vm130, %v612, %v613
    %v615 = vsel %vm133, %v581, %v614
    %v616 = vsel %vm135, %v581, %v615
    %v617 = vsel %vm137, %v581, %v616
    %v618 = vsel %vm139, %v581, %v617
    %619 = vrot.lane.b32.xlu0 %v611, 97
    %v620 = vpop.permute.xlu0 %619
    %621 = vrot.lane.b32.xlu0 %v618, 97
    %v622 = vpop.permute.xlu0 %621
    %vm625 = vcmask 952072
    %626 = vst.msk [vmem:[#allocation2 + $0x4] sm:$0x3] %vm625, %v620
    %627 = vst.msk [vmem:[#allocation2 + $0xc] sm:$0x3] %vm625, %v622
    %v633 = vunpack.c.l.s4 1983009808
    %v634 = vunpack.c.0.s8 %v633
    %v635 = vlaneseq
    %v636 = vshrl.u32 %v635, 7
    %v637 = vsub.s32 %v634, %v636
    %v638 = vrot.slane %v86, %v637
    %v640 = vunpack.c.l.s4 1983009808
    %v641 = vunpack.c.0.s8 %v640
    %v642 = vlaneseq
    %v643 = vshrl.u32 %v642, 7
    %v644 = vsub.s32 %v641, %v643
    %v645 = vrot.slane %v89, %v644
    %v647 = vunpack.c.l.s4 1983009808
    %v648 = vunpack.c.0.s8 %v647
    %v649 = vlaneseq
    %v650 = vshrl.u32 %v649, 7
    %v651 = vsub.s32 %v648, %v650
    %v652 = vrot.slane %v92, %v651
    %v654 = vunpack.c.l.s4 1983009808
    %v655 = vunpack.c.0.s8 %v654
    %v656 = vlaneseq
    %v657 = vshrl.u32 %v656, 7
    %v658 = vsub.s32 %v655, %v657
    %v659 = vrot.slane %v95, %v658
    %v660 = vsel %vm128, %v638, %v638
    %v661 = vsel %vm130, %v638, %v660
    %v662 = vrot.slane %v645, 7
    %v663 = vsel %vm133, %v662, %v661
    %v664 = vsel %vm135, %v662, %v663
    %v665 = vsel %vm137, %v662, %v664
    %v666 = vsel %vm139, %v662, %v665
    %v667 = vsel %vm128, %v652, %v652
    %v668 = vsel %vm130, %v652, %v667
    %v669 = vrot.slane %v659, 7
    %v670 = vsel %vm133, %v669, %v668
    %v671 = vsel %vm135, %v669, %v670
    %v672 = vsel %vm137, %v669, %v671
    %v673 = vsel %vm139, %v669, %v672
    %674 = vrot.lane.b32.xlu0 %v666, 119
    %v675 = vpop.permute.xlu0 %674
    %676 = vrot.lane.b32.xlu0 %v673, 119
    %v677 = vpop.permute.xlu0 %676
    %v678 = vrot.slane %v675, 6
    %v679 = vrot.slane %v677, 6
    %vm680 = vcmask 973824
    %v681 = vsel %vm680, %v678, %v675
    %v682 = vsel %vm680, %v679, %v677
    %vm685 = vcmask 1042360
    %vm686 = vcmask 84994
    %vm687 = vmor %vm686, %vm685
    %688 = vst.msk [vmem:[#allocation2 + $0x4] sm:$0xf] %vm687, %v681
    %689 = vst.msk [vmem:[#allocation2 + $0xc] sm:$0xf] %vm687, %v682
    %v690 = vrot.slane %v638, 1
    %v691 = vsel %vm128, %v690, %v690
    %v692 = vsel %vm130, %v690, %v691
    %v693 = vsel %vm133, %v645, %v692
    %v694 = vsel %vm135, %v645, %v693
    %v695 = vsel %vm137, %v645, %v694
    %v696 = vsel %vm139, %v645, %v695
    %v697 = vrot.slane %v652, 1
    %v698 = vsel %vm128, %v697, %v697
    %v699 = vsel %vm130, %v697, %v698
    %v700 = vsel %vm133, %v659, %v699
    %v701 = vsel %vm135, %v659, %v700
    %v702 = vsel %vm137, %v659, %v701
    %v703 = vsel %vm139, %v659, %v702
    %704 = vrot.lane.b32.xlu0 %v696, 13
    %v705 = vpop.permute.xlu0 %704
    %706 = vrot.lane.b32.xlu0 %v703, 13
    %v707 = vpop.permute.xlu0 %706
    %vm710 = vcmask 263272
    %711 = vst.msk [vmem:[#allocation2 + $0x6] sm:$0x3] %vm710, %v705
    %712 = vst.msk [vmem:[#allocation2 + $0xe] sm:$0x3] %vm710, %v707
    %v713 = vcombine.high %v638, %v638
    %v714 = vcombine.high %v645, %v645
    %v715 = vcombine.high %v652, %v652
    %v716 = vcombine.high %v659, %v659
    %v717 = vsel %vm128, %v713, %v713
    %v718 = vsel %vm130, %v713, %v717
    %v719 = vrot.slane %v714, 7
    %v720 = vsel %vm133, %v719, %v718
    %v721 = vsel %vm135, %v719, %v720
    %v722 = vsel %vm137, %v719, %v721
    %v723 = vsel %vm139, %v719, %v722
    %v724 = vsel %vm128, %v715, %v715
    %v725 = vsel %vm130, %v715, %v724
    %v726 = vrot.slane %v716, 7
    %v727 = vsel %vm133, %v726, %v725
    %v728 = vsel %vm135, %v726, %v727
    %v729 = vsel %vm137, %v726, %v728
    %v730 = vsel %vm139, %v726, %v729
    %731 = vrot.lane.b32.xlu0 %v723, 35
    %v732 = vpop.permute.xlu0 %731
    %733 = vrot.lane.b32.xlu0 %v730, 35
    %v734 = vpop.permute.xlu0 %733
    %vm737 = vcmask 443672
    %738 = vst.msk [vmem:[#allocation2 + $0x6] sm:$0x3] %vm737, %v732
    %739 = vst.msk [vmem:[#allocation2 + $0xe] sm:$0x3] %vm737, %v734
    %v740 = vrot.slane %v713, 1
    %v741 = vsel %vm128, %v740, %v740
    %v742 = vsel %vm130, %v740, %v741
    %v743 = vsel %vm133, %v714, %v742
    %v744 = vsel %vm135, %v714, %v743
    %v745 = vsel %vm137, %v714, %v744
    %v746 = vsel %vm139, %v714, %v745
    %v747 = vrot.slane %v715, 1
    %v748 = vsel %vm128, %v747, %v747
    %v749 = vsel %vm130, %v747, %v748
    %v750 = vsel %vm133, %v716, %v749
    %v751 = vsel %vm135, %v716, %v750
    %v752 = vsel %vm137, %v716, %v751
    %v753 = vsel %vm139, %v716, %v752
    %754 = vrot.lane.b32.xlu0 %v746, 57
    %v755 = vpop.permute.xlu0 %754
    %756 = vrot.lane.b32.xlu0 %v753, 57
    %v757 = vpop.permute.xlu0 %756
    %vm760 = vcmask 624072
    %761 = vst.msk [vmem:[#allocation2 + $0x6] sm:$0x3] %vm760, %v755
    %762 = vst.msk [vmem:[#allocation2 + $0xe] sm:$0x3] %vm760, %v757
    %v763 = vld [vmem:[%s3] sm:$0xff]
    %v764 = vld [vmem:[%s3 + $0x8] sm:$0xff]
    %v765 = vld [vmem:[%s3 + $0x10] sm:$0xff]
    %v766 = vld [vmem:[%s3 + $0x18] sm:$0xff]
    %v767 = vld [vmem:[%s3 + $0x20] sm:$0xff]
    %v768 = vld [vmem:[%s3 + $0x28] sm:$0xff]
    %v769 = vld [vmem:[%s3 + $0x30] sm:$0xff]
    %v770 = vld [vmem:[%s3 + $0x38] sm:$0xff]
    %v771 = vld [vmem:[%s3 + $0x40] sm:$0xff]
    %v772 = vld [vmem:[%s4] sm:$0xff]
    %v773 = vld [vmem:[%s5] sm:$0xff]
    %v774 = vld [vmem:[%s5 + $0x8] sm:$0xff]
    %v775 = vld [vmem:[%s5 + $0x10] sm:$0xff]
    %v776 = vld [vmem:[%s5 + $0x18] sm:$0xff]
    %v777 = vld [vmem:[%s5 + $0x20] sm:$0xff]
    %v778 = vld [vmem:[%s5 + $0x28] sm:$0xff]
    %v779 = vld [vmem:[%s5 + $0x30] sm:$0xff]
    %v780 = vld [vmem:[%s5 + $0x38] sm:$0xff]
    %v781 = vld [vmem:[%s5 + $0x40] sm:$0xff]
    %v782 = vld [vmem:[%s6] sm:$0xff]
    %783 = vst [vmem:[#allocation3] sm:$0xff] 0.0
    %784 = vst [vmem:[#allocation3 + $0x8] sm:$0xff] 0.0
    %785 = vst [vmem:[#allocation3 + $0x10] sm:$0xff] 0.0
    %vm786 = vcmask 818176
    %787 = vst.msk [vmem:[#allocation3 + $0x18] sm:$0xff] %vm786, 0.0
    %788 = vst [vmem:[#allocation3 + $0x20] sm:$0xff] 0.0
    %789 = vst [vmem:[#allocation3 + $0x28] sm:$0xff] 0.0
    %790 = vst [vmem:[#allocation3 + $0x30] sm:$0xff] 0.0
    %791 = vst.msk [vmem:[#allocation3 + $0x38] sm:$0xff] %vm786, 0.0
    %v792 = vld [vmem:[#allocation2] sm:$0xff]
    %v793 = vld [vmem:[#allocation2 + $0x8] sm:$0xff]
    %v795 = vcombine.high %v792, %v792
    %v797 = vunpack.c.l.s4 1983009808
    %v798 = vunpack.c.0.s8 %v797
    %v799 = vlaneseq
    %v800 = vshrl.u32 %v799, 7
    %v801 = vsub.s32 %v798, %v800
    %v802 = vrot.slane %v792, %v801
    %v804 = vunpack.c.l.s4 1983009808
    %v805 = vunpack.c.0.s8 %v804
    %v806 = vlaneseq
    %v807 = vshrl.u32 %v806, 7
    %v808 = vsub.s32 %v805, %v807
    %v809 = vrot.slane %v795, %v808
    %v810 = vcombine.high %v802, %v802
    %v811 = vcombine.high %v809, %v809
    %812 = vrot.lane.b32.xlu0 %v802, 127
    %v813 = vpop.permute.xlu0 %812
    %814 = vrot.lane.b32.xlu0 %v810, 127
    %v815 = vpop.permute.xlu0 %814
    %816 = vrot.lane.b32.xlu0 %v809, 127
    %v817 = vpop.permute.xlu0 %816
    %818 = vrot.lane.b32.xlu0 %v811, 127
    %v819 = vpop.permute.xlu0 %818
    %vm820 = vcmask 1039360
    %v821 = vsel %vm820, %v813, %v815
    %v822 = vsel %vm820, %v815, %v817
    %v823 = vsel %vm820, %v817, %v819
    %vm824 = vcmask 15360
    %v826 = vsel %vm824, %v764, 0
    %v828 = vsel %vm75, %v821, 0
    %v830 = vsel %vm75, %v822, 0
    %v832 = vsel %vm75, %v823, 0
    %v834 = vsel %vm75, %v819, 0
    %836 = vmatprep.subr.mxu0 %v830
    %837 = vmatpush1.msra.mxu0 %v828
    %838 = vmatprep.subr.mxu0 0.0
    %839 = vmatpush1.msra.mxu0 0.0
    %840 = vmatprep.subr.mxu0 0.0
    %841 = vmatpush1.msra.mxu0 0.0
    %842 = vmatprep.subr.mxu0 0.0
    %843 = vmatpush1.msra.mxu0 0.0
    %844 = vmatprep.subr.mxu0 0.0
    %845 = vmatpush1.msra.mxu0 0.0
    %846 = vmatprep.subr.mxu0 0.0
    %847 = vmatpush1.msra.mxu0 0.0
    %848 = vmatprep.subr.mxu0 0.0
    %849 = vmatpush1.msra.mxu0 0.0
    %850 = vmatprep.subr.mxu0 0.0
    %851 = vmatpush1.msra.mxu0 0.0
    %852 = vmatprep.subr.mxu0 0.0
    %853 = vmatpush1.msra.mxu0 0.0
    %854 = vmatprep.subr.mxu0 0.0
    %855 = vmatpush1.msra.mxu0 0.0
    %856 = vmatprep.subr.mxu0 0.0
    %857 = vmatpush1.msra.mxu0 0.0
    %858 = vmatprep.subr.mxu0 0.0
    %859 = vmatpush1.msra.mxu0 0.0
    %860 = vmatprep.subr.mxu0 0.0
    %861 = vmatpush1.msra.mxu0 0.0
    %862 = vmatprep.subr.mxu0 0.0
    %863 = vmatpush1.msra.mxu0 0.0
    %864 = vmatprep.subr.mxu0 0.0
    %865 = vmatpush1.msra.mxu0 0.0
    %866 = vmatprep.subr.mxu0 0.0
    %867 = vmatpush1.msra.mxu0 0.0
    %868 = vmatprep.subr.mxu0 0.0
    %869 = vmatpush1.msra.mxu0 0.0
    %870 = vmatprep.subr.mxu0 0.0
    %871 = vmatpush1.msra.mxu0 0.0
    %872 = vmatprep.subr.mxu0 0.0
    %873 = vmatpush1.msra.mxu0 0.0
    %874 = vmatprep.subr.mxu0 0.0
    %875 = vmatpush1.msra.mxu0 0.0
    %876 = vmatprep.subr.mxu0 0.0
    %877 = vmatpush1.msra.mxu0 0.0
    %878 = vmatprep.subr.mxu0 0.0
    %879 = vmatpush1.msra.mxu0 0.0
    %880 = vmatprep.subr.mxu0 0.0
    %881 = vmatpush1.msra.mxu0 0.0
    %882 = vmatprep.subr.mxu0 0.0
    %883 = vmatpush1.msra.mxu0 0.0
    %884 = vmatprep.subr.mxu0 0.0
    %885 = vmatpush1.msra.mxu0 0.0
    %886 = vmatprep.subr.mxu0 0.0
    %887 = vmatpush1.msra.mxu0 0.0
    %888 = vmatprep.subr.mxu0 0.0
    %889 = vmatpush1.msra.mxu0 0.0
    %890 = vmatprep.subr.mxu0 0.0
    %891 = vmatpush1.msra.mxu0 0.0
    %892 = vmatprep.subr.mxu0 0.0
    %893 = vmatpush1.msra.mxu0 0.0
    %894 = vmatprep.subr.mxu0 0.0
    %895 = vmatpush1.msra.mxu0 0.0
    %896 = vmatprep.subr.mxu0 0.0
    %897 = vmatpush1.msra.mxu0 0.0
    %898 = vmatprep.subr.mxu0 0.0
    %899 = vmatpush1.msra.mxu0 0.0
    %900 = vmatprep.mubr.f32.mxu0 0.0
    %901 = vmatmul.mubr.f32.gmra.mrb[0].mxu0 %v826
    %v902 = vpop.f32.mrb[0].mxu0
    %v903 = vadd.f32 0.0, %v902
    %v904 = vpop.f32.mrb[0].mxu0
    %v905 = vadd.f32 0.0, %v904
    %906 = vdwg.mxu0
    %907 = vmatprep.subr.mxu0 %v834
    %908 = vmatpush1.msra.mxu0 %v832
    %909 = vmatprep.subr.mxu0 0.0
    %910 = vmatpush1.msra.mxu0 0.0
    %911 = vmatprep.subr.mxu0 0.0
    %912 = vmatpush1.msra.mxu0 0.0
    %913 = vmatprep.subr.mxu0 0.0
    %914 = vmatpush1.msra.mxu0 0.0
    %915 = vmatprep.subr.mxu0 0.0
    %916 = vmatpush1.msra.mxu0 0.0
    %917 = vmatprep.subr.mxu0 0.0
    %918 = vmatpush1.msra.mxu0 0.0
    %919 = vmatprep.subr.mxu0 0.0
    %920 = vmatpush1.msra.mxu0 0.0
    %921 = vmatprep.subr.mxu0 0.0
    %922 = vmatpush1.msra.mxu0 0.0
    %923 = vmatprep.subr.mxu0 0.0
    %924 = vmatpush1.msra.mxu0 0.0
    %925 = vmatprep.subr.mxu0 0.0
    %926 = vmatpush1.msra.mxu0 0.0
    %927 = vmatprep.subr.mxu0 0.0
    %928 = vmatpush1.msra.mxu0 0.0
    %929 = vmatprep.subr.mxu0 0.0
    %930 = vmatpush1.msra.mxu0 0.0
    %931 = vmatprep.subr.mxu0 0.0
    %932 = vmatpush1.msra.mxu0 0.0
    %933 = vmatprep.subr.mxu0 0.0
    %934 = vmatpush1.msra.mxu0 0.0
    %935 = vmatprep.subr.mxu0 0.0
    %936 = vmatpush1.msra.mxu0 0.0
    %937 = vmatprep.subr.mxu0 0.0
    %938 = vmatpush1.msra.mxu0 0.0
    %939 = vmatprep.subr.mxu0 0.0
    %940 = vmatpush1.msra.mxu0 0.0
    %941 = vmatprep.subr.mxu0 0.0
    %942 = vmatpush1.msra.mxu0 0.0
    %943 = vmatprep.subr.mxu0 0.0
    %944 = vmatpush1.msra.mxu0 0.0
    %945 = vmatprep.subr.mxu0 0.0
    %946 = vmatpush1.msra.mxu0 0.0
    %947 = vmatprep.subr.mxu0 0.0
    %948 = vmatpush1.msra.mxu0 0.0
    %949 = vmatprep.subr.mxu0 0.0
    %950 = vmatpush1.msra.mxu0 0.0
    %951 = vmatprep.subr.mxu0 0.0
    %952 = vmatpush1.msra.mxu0 0.0
    %953 = vmatprep.subr.mxu0 0.0
    %954 = vmatpush1.msra.mxu0 0.0
    %955 = vmatprep.subr.mxu0 0.0
    %956 = vmatpush1.msra.mxu0 0.0
    %957 = vmatprep.subr.mxu0 0.0
    %958 = vmatpush1.msra.mxu0 0.0
    %959 = vmatprep.subr.mxu0 0.0
    %960 = vmatpush1.msra.mxu0 0.0
    %961 = vmatprep.subr.mxu0 0.0
    %962 = vmatpush1.msra.mxu0 0.0
    %963 = vmatprep.subr.mxu0 0.0
    %964 = vmatpush1.msra.mxu0 0.0
    %965 = vmatprep.subr.mxu0 0.0
    %966 = vmatpush1.msra.mxu0 0.0
    %967 = vmatprep.subr.mxu0 0.0
    %968 = vmatpush1.msra.mxu0 0.0
    %969 = vmatprep.subr.mxu0 0.0
    %970 = vmatpush1.msra.mxu0 0.0
    %971 = vmatprep.mubr.f32.mxu0 0.0
    %972 = vmatmul.mubr.f32.gmra.mrb[0].mxu0 %v826
    %v973 = vpop.f32.mrb[0].mxu0
    %v974 = vadd.f32 0.0, %v973
    %v975 = vpop.f32.mrb[0].mxu0
    %v976 = vadd.f32 0.0, %v975
    %977 = vdwg.mxu0
    %v979 = vsel %vm824, %v763, 0
    %v981 = vsel %vm75, %v802, 0
    %v983 = vsel %vm75, %v810, 0
    %v985 = vsel %vm75, %v809, 0
    %v987 = vsel %vm75, %v811, 0
    %989 = vmatprep.subr.mxu0 %v983
    %990 = vmatpush1.msra.mxu0 %v981
    %991 = vmatprep.subr.mxu0 0.0
    %992 = vmatpush1.msra.mxu0 0.0
    %993 = vmatprep.subr.mxu0 0.0
    %994 = vmatpush1.msra.mxu0 0.0
    %995 = vmatprep.subr.mxu0 0.0
    %996 = vmatpush1.msra.mxu0 0.0
    %997 = vmatprep.subr.mxu0 0.0
    %998 = vmatpush1.msra.mxu0 0.0
    %999 = vmatprep.subr.mxu0 0.0
    %1000 = vmatpush1.msra.mxu0 0.0
    %1001 = vmatprep.subr.mxu0 0.0
    %1002 = vmatpush1.msra.mxu0 0.0
    %1003 = vmatprep.subr.mxu0 0.0
    %1004 = vmatpush1.msra.mxu0 0.0
    %1005 = vmatprep.subr.mxu0 0.0
    %1006 = vmatpush1.msra.mxu0 0.0
    %1007 = vmatprep.subr.mxu0 0.0
    %1008 = vmatpush1.msra.mxu0 0.0
    %1009 = vmatprep.subr.mxu0 0.0
    %1010 = vmatpush1.msra.mxu0 0.0
    %1011 = vmatprep.subr.mxu0 0.0
    %1012 = vmatpush1.msra.mxu0 0.0
    %1013 = vmatprep.subr.mxu0 0.0
    %1014 = vmatpush1.msra.mxu0 0.0
    %1015 = vmatprep.subr.mxu0 0.0
    %1016 = vmatpush1.msra.mxu0 0.0
    %1017 = vmatprep.subr.mxu0 0.0
    %1018 = vmatpush1.msra.mxu0 0.0
    %1019 = vmatprep.subr.mxu0 0.0
    %1020 = vmatpush1.msra.mxu0 0.0
    %1021 = vmatprep.subr.mxu0 0.0
    %1022 = vmatpush1.msra.mxu0 0.0
    %1023 = vmatprep.subr.mxu0 0.0
    %1024 = vmatpush1.msra.mxu0 0.0
    %1025 = vmatprep.subr.mxu0 0.0
    %1026 = vmatpush1.msra.mxu0 0.0
    %1027 = vmatprep.subr.mxu0 0.0
    %1028 = vmatpush1.msra.mxu0 0.0
    %1029 = vmatprep.subr.mxu0 0.0
    %1030 = vmatpush1.msra.mxu0 0.0
    %1031 = vmatprep.subr.mxu0 0.0
    %1032 = vmatpush1.msra.mxu0 0.0
    %1033 = vmatprep.subr.mxu0 0.0
    %1034 = vmatpush1.msra.mxu0 0.0
    %1035 = vmatprep.subr.mxu0 0.0
    %1036 = vmatpush1.msra.mxu0 0.0
    %1037 = vmatprep.subr.mxu0 0.0
    %1038 = vmatpush1.msra.mxu0 0.0
    %1039 = vmatprep.subr.mxu0 0.0
    %1040 = vmatpush1.msra.mxu0 0.0
    %1041 = vmatprep.subr.mxu0 0.0
    %1042 = vmatpush1.msra.mxu0 0.0
    %1043 = vmatprep.subr.mxu0 0.0
    %1044 = vmatpush1.msra.mxu0 0.0
    %1045 = vmatprep.subr.mxu0 0.0
    %1046 = vmatpush1.msra.mxu0 0.0
    %1047 = vmatprep.subr.mxu0 0.0
    %1048 = vmatpush1.msra.mxu0 0.0
    %1049 = vmatprep.subr.mxu0 0.0
    %1050 = vmatpush1.msra.mxu0 0.0
    %1051 = vmatprep.subr.mxu0 0.0
    %1052 = vmatpush1.msra.mxu0 0.0
    %1053 = vmatprep.mubr.f32.mxu0 0.0
    %1054 = vmatmul.mubr.f32.gmra.mrb[0].mxu0 %v979
    %v1055 = vpop.f32.mrb[0].mxu0
    %v1056 = vadd.f32 %v903, %v1055
    %v1057 = vpop.f32.mrb[0].mxu0
    %v1058 = vadd.f32 %v905, %v1057
    %1059 = vdwg.mxu0
    %1060 = vmatprep.subr.mxu0 %v987
    %1061 = vmatpush1.msra.mxu0 %v985
    %1062 = vmatprep.subr.mxu0 0.0
    %1063 = vmatpush1.msra.mxu0 0.0
    %1064 = vmatprep.subr.mxu0 0.0
    %1065 = vmatpush1.msra.mxu0 0.0
    %1066 = vmatprep.subr.mxu0 0.0
    %1067 = vmatpush1.msra.mxu0 0.0
    %1068 = vmatprep.subr.mxu0 0.0
    %1069 = vmatpush1.msra.mxu0 0.0
    %1070 = vmatprep.subr.mxu0 0.0
    %1071 = vmatpush1.msra.mxu0 0.0
    %1072 = vmatprep.subr.mxu0 0.0
    %1073 = vmatpush1.msra.mxu0 0.0
    %1074 = vmatprep.subr.mxu0 0.0
    %1075 = vmatpush1.msra.mxu0 0.0
    %1076 = vmatprep.subr.mxu0 0.0
    %1077 = vmatpush1.msra.mxu0 0.0
    %1078 = vmatprep.subr.mxu0 0.0
    %1079 = vmatpush1.msra.mxu0 0.0
    %1080 = vmatprep.subr.mxu0 0.0
    %1081 = vmatpush1.msra.mxu0 0.0
    %1082 = vmatprep.subr.mxu0 0.0
    %1083 = vmatpush1.msra.mxu0 0.0
    %1084 = vmatprep.subr.mxu0 0.0
    %1085 = vmatpush1.msra.mxu0 0.0
    %1086 = vmatprep.subr.mxu0 0.0
    %1087 = vmatpush1.msra.mxu0 0.0
    %1088 = vmatprep.subr.mxu0 0.0
    %1089 = vmatpush1.msra.mxu0 0.0
    %1090 = vmatprep.subr.mxu0 0.0
    %1091 = vmatpush1.msra.mxu0 0.0
    %1092 = vmatprep.subr.mxu0 0.0
    %1093 = vmatpush1.msra.mxu0 0.0
    %1094 = vmatprep.subr.mxu0 0.0
    %1095 = vmatpush1.msra.mxu0 0.0
    %1096 = vmatprep.subr.mxu0 0.0
    %1097 = vmatpush1.msra.mxu0 0.0
    %1098 = vmatprep.subr.mxu0 0.0
    %1099 = vmatpush1.msra.mxu0 0.0
    %1100 = vmatprep.subr.mxu0 0.0
    %1101 = vmatpush1.msra.mxu0 0.0
    %1102 = vmatprep.subr.mxu0 0.0
    %1103 = vmatpush1.msra.mxu0 0.0
    %1104 = vmatprep.subr.mxu0 0.0
    %1105 = vmatpush1.msra.mxu0 0.0
    %1106 = vmatprep.subr.mxu0 0.0
    %1107 = vmatpush1.msra.mxu0 0.0
    %1108 = vmatprep.subr.mxu0 0.0
    %1109 = vmatpush1.msra.mxu0 0.0
    %1110 = vmatprep.subr.mxu0 0.0
    %1111 = vmatpush1.msra.mxu0 0.0
    %1112 = vmatprep.subr.mxu0 0.0
    %1113 = vmatpush1.msra.mxu0 0.0
    %1114 = vmatprep.subr.mxu0 0.0
    %1115 = vmatpush1.msra.mxu0 0.0
    %1116 = vmatprep.subr.mxu0 0.0
    %1117 = vmatpush1.msra.mxu0 0.0
    %1118 = vmatprep.subr.mxu0 0.0
    %1119 = vmatpush1.msra.mxu0 0.0
    %1120 = vmatprep.subr.mxu0 0.0
    %1121 = vmatpush1.msra.mxu0 0.0
    %1122 = vmatprep.subr.mxu0 0.0
    %1123 = vmatpush1.msra.mxu0 0.0
    %1124 = vmatprep.mubr.f32.mxu0 0.0
    %1125 = vmatmul.mubr.f32.gmra.mrb[0].mxu0 %v979
    %v1126 = vpop.f32.mrb[0].mxu0
    %v1127 = vadd.f32 %v974, %v1126
    %v1128 = vpop.f32.mrb[0].mxu0
    %v1129 = vadd.f32 %v976, %v1128
    %1130 = vdwg.mxu0
    %1131 = vrot.lane.b32.xlu0 %v802, 126
    %v1132 = vpop.permute.xlu0 %1131
    %1133 = vrot.lane.b32.xlu0 %v810, 126
    %v1134 = vpop.permute.xlu0 %1133
    %1135 = vrot.lane.b32.xlu0 %v809, 126
    %v1136 = vpop.permute.xlu0 %1135
    %1137 = vrot.lane.b32.xlu0 %v811, 126
    %v1138 = vpop.permute.xlu0 %1137
    %vm1139 = vcmask 1031168
    %v1140 = vsel %vm1139, %v1132, %v1134
    %v1141 = vsel %vm1139, %v1134, %v1136
    %v1142 = vsel %vm1139, %v1136, %v1138
    %v1144 = vsel %vm824, %v765, 0
    %v1146 = vsel %vm75, %v1140, 0
    %v1148 = vsel %vm75, %v1141, 0
    %v1150 = vsel %vm75, %v1142, 0
    %v1152 = vsel %vm75, %v1138, 0
    %1154 = vmatprep.subr.mxu0 %v1148
    %1155 = vmatpush1.msra.mxu0 %v1146
    %1156 = vmatprep.subr.mxu0 0.0
    %1157 = vmatpush1.msra.mxu0 0.0
    %1158 = vmatprep.subr.mxu0 0.0
    %1159 = vmatpush1.msra.mxu0 0.0
    %1160 = vmatprep.subr.mxu0 0.0
    %1161 = vmatpush1.msra.mxu0 0.0
    %1162 = vmatprep.subr.mxu0 0.0
    %1163 = vmatpush1.msra.mxu0 0.0
    %1164 = vmatprep.subr.mxu0 0.0
    %1165 = vmatpush1.msra.mxu0 0.0
    %1166 = vmatprep.subr.mxu0 0.0
    %1167 = vmatpush1.msra.mxu0 0.0
    %1168 = vmatprep.subr.mxu0 0.0
    %1169 = vmatpush1.msra.mxu0 0.0
    %1170 = vmatprep.subr.mxu0 0.0
    %1171 = vmatpush1.msra.mxu0 0.0
    %1172 = vmatprep.subr.mxu0 0.0
    %1173 = vmatpush1.msra.mxu0 0.0
    %1174 = vmatprep.subr.mxu0 0.0
    %1175 = vmatpush1.msra.mxu0 0.0
    %1176 = vmatprep.subr.mxu0 0.0
    %1177 = vmatpush1.msra.mxu0 0.0
    %1178 = vmatprep.subr.mxu0 0.0
    %1179 = vmatpush1.msra.mxu0 0.0
    %1180 = vmatprep.subr.mxu0 0.0
    %1181 = vmatpush1.msra.mxu0 0.0
    %1182 = vmatprep.subr.mxu0 0.0
    %1183 = vmatpush1.msra.mxu0 0.0
    %1184 = vmatprep.subr.mxu0 0.0
    %1185 = vmatpush1.msra.mxu0 0.0
    %1186 = vmatprep.subr.mxu0 0.0
    %1187 = vmatpush1.msra.mxu0 0.0
    %1188 = vmatprep.subr.mxu0 0.0
    %1189 = vmatpush1.msra.mxu0 0.0
    %1190 = vmatprep.subr.mxu0 0.0
    %1191 = vmatpush1.msra.mxu0 0.0
    %1192 = vmatprep.subr.mxu0 0.0
    %1193 = vmatpush1.msra.mxu0 0.0
    %1194 = vmatprep.subr.mxu0 0.0
    %1195 = vmatpush1.msra.mxu0 0.0
    %1196 = vmatprep.subr.mxu0 0.0
    %1197 = vmatpush1.msra.mxu0 0.0
    %1198 = vmatprep.subr.mxu0 0.0
    %1199 = vmatpush1.msra.mxu0 0.0
    %1200 = vmatprep.subr.mxu0 0.0
    %1201 = vmatpush1.msra.mxu0 0.0
    %1202 = vmatprep.subr.mxu0 0.0
    %1203 = vmatpush1.msra.mxu0 0.0
    %1204 = vmatprep.subr.mxu0 0.0
    %1205 = vmatpush1.msra.mxu0 0.0
    %1206 = vmatprep.subr.mxu0 0.0
    %1207 = vmatpush1.msra.mxu0 0.0
    %1208 = vmatprep.subr.mxu0 0.0
    %1209 = vmatpush1.msra.mxu0 0.0
    %1210 = vmatprep.subr.mxu0 0.0
    %1211 = vmatpush1.msra.mxu0 0.0
    %1212 = vmatprep.subr.mxu0 0.0
    %1213 = vmatpush1.msra.mxu0 0.0
    %1214 = vmatprep.subr.mxu0 0.0
    %1215 = vmatpush1.msra.mxu0 0.0
    %1216 = vmatprep.subr.mxu0 0.0
    %1217 = vmatpush1.msra.mxu0 0.0
    %1218 = vmatprep.mubr.f32.mxu0 0.0
    %1219 = vmatmul.mubr.f32.gmra.mrb[0].mxu0 %v1144
    %v1220 = vpop.f32.mrb[0].mxu0
    %v1221 = vadd.f32 0.0, %v1220
    %v1222 = vpop.f32.mrb[0].mxu0
    %v1223 = vadd.f32 0.0, %v1222
    %1224 = vdwg.mxu0
    %1225 = vmatprep.subr.mxu0 %v1152
    %1226 = vmatpush1.msra.mxu0 %v1150
    %1227 = vmatprep.subr.mxu0 0.0
    %1228 = vmatpush1.msra.mxu0 0.0
    %1229 = vmatprep.subr.mxu0 0.0
    %1230 = vmatpush1.msra.mxu0 0.0
    %1231 = vmatprep.subr.mxu0 0.0
    %1232 = vmatpush1.msra.mxu0 0.0
    %1233 = vmatprep.subr.mxu0 0.0
    %1234 = vmatpush1.msra.mxu0 0.0
    %1235 = vmatprep.subr.mxu0 0.0
    %1236 = vmatpush1.msra.mxu0 0.0
    %1237 = vmatprep.subr.mxu0 0.0
    %1238 = vmatpush1.msra.mxu0 0.0
    %1239 = vmatprep.subr.mxu0 0.0
    %1240 = vmatpush1.msra.mxu0 0.0
    %1241 = vmatprep.subr.mxu0 0.0
    %1242 = vmatpush1.msra.mxu0 0.0
    %1243 = vmatprep.subr.mxu0 0.0
    %1244 = vmatpush1.msra.mxu0 0.0
    %1245 = vmatprep.subr.mxu0 0.0
    %1246 = vmatpush1.msra.mxu0 0.0
    %1247 = vmatprep.subr.mxu0 0.0
    %1248 = vmatpush1.msra.mxu0 0.0
    %1249 = vmatprep.subr.mxu0 0.0
    %1250 = vmatpush1.msra.mxu0 0.0
    %1251 = vmatprep.subr.mxu0 0.0
    %1252 = vmatpush1.msra.mxu0 0.0
    %1253 = vmatprep.subr.mxu0 0.0
    %1254 = vmatpush1.msra.mxu0 0.0
    %1255 = vmatprep.subr.mxu0 0.0
    %1256 = vmatpush1.msra.mxu0 0.0
    %1257 = vmatprep.subr.mxu0 0.0
    %1258 = vmatpush1.msra.mxu0 0.0
    %1259 = vmatprep.subr.mxu0 0.0
    %1260 = vmatpush1.msra.mxu0 0.0
    %1261 = vmatprep.subr.mxu0 0.0
    %1262 = vmatpush1.msra.mxu0 0.0
    %1263 = vmatprep.subr.mxu0 0.0
    %1264 = vmatpush1.msra.mxu0 0.0
    %1265 = vmatprep.subr.mxu0 0.0
    %1266 = vmatpush1.msra.mxu0 0.0
    %1267 = vmatprep.subr.mxu0 0.0
    %1268 = vmatpush1.msra.mxu0 0.0
    %1269 = vmatprep.subr.mxu0 0.0
    %1270 = vmatpush1.msra.mxu0 0.0
    %1271 = vmatprep.subr.mxu0 0.0
    %1272 = vmatpush1.msra.mxu0 0.0
    %1273 = vmatprep.subr.mxu0 0.0
    %1274 = vmatpush1.msra.mxu0 0.0
    %1275 = vmatprep.subr.mxu0 0.0
    %1276 = vmatpush1.msra.mxu0 0.0
    %1277 = vmatprep.subr.mxu0 0.0
    %1278 = vmatpush1.msra.mxu0 0.0
    %1279 = vmatprep.subr.mxu0 0.0
    %1280 = vmatpush1.msra.mxu0 0.0
    %1281 = vmatprep.subr.mxu0 0.0
    %1282 = vmatpush1.msra.mxu0 0.0
    %1283 = vmatprep.subr.mxu0 0.0
    %1284 = vmatpush1.msra.mxu0 0.0
    %1285 = vmatprep.subr.mxu0 0.0
    %1286 = vmatpush1.msra.mxu0 0.0
    %1287 = vmatprep.subr.mxu0 0.0
    %1288 = vmatpush1.msra.mxu0 0.0
    %1289 = vmatprep.mubr.f32.mxu0 0.0
    %1290 = vmatmul.mubr.f32.gmra.mrb[0].mxu0 %v1144
    %v1291 = vpop.f32.mrb[0].mxu0
    %v1292 = vadd.f32 0.0, %v1291
    %v1293 = vpop.f32.mrb[0].mxu0
    %v1294 = vadd.f32 0.0, %v1293
    %1295 = vdwg.mxu0
    %v1296 = vadd.f32 %v1056, %v1221
    %v1297 = vadd.f32 %v1058, %v1223
    %v1298 = vadd.f32 %v1127, %v1292
    %v1299 = vadd.f32 %v1129, %v1294
    %1300 = vrot.lane.b32.xlu0 %v802, 106
    %v1301 = vpop.permute.xlu0 %1300
    %1302 = vrot.lane.b32.xlu0 %v810, 106
    %v1303 = vpop.permute.xlu0 %1302
    %1304 = vrot.lane.b32.xlu0 %v809, 106
    %v1305 = vpop.permute.xlu0 %1304
    %1306 = vrot.lane.b32.xlu0 %v811, 106
    %v1307 = vpop.permute.xlu0 %1306
    %vm1308 = vcmask 867328
    %v1309 = vsel %vm1308, %v1301, %v1303
    %v1310 = vsel %vm1308, %v1303, %v1305
    %v1311 = vsel %vm1308, %v1305, %v1307
    %v1313 = vsel %vm824, %v766, 0
    %v1315 = vsel %vm75, %v1309, 0
    %v1317 = vsel %vm75, %v1310, 0
    %v1319 = vsel %vm75, %v1311, 0
    %v1321 = vsel %vm75, %v1307, 0
    %1323 = vmatprep.subr.mxu0 %v1317
    %1324 = vmatpush1.msra.mxu0 %v1315
    %1325 = vmatprep.subr.mxu0 0.0
    %1326 = vmatpush1.msra.mxu0 0.0
    %1327 = vmatprep.subr.mxu0 0.0
    %1328 = vmatpush1.msra.mxu0 0.0
    %1329 = vmatprep.subr.mxu0 0.0
    %1330 = vmatpush1.msra.mxu0 0.0
    %1331 = vmatprep.subr.mxu0 0.0
    %1332 = vmatpush1.msra.mxu0 0.0
    %1333 = vmatprep.subr.mxu0 0.0
    %1334 = vmatpush1.msra.mxu0 0.0
    %1335 = vmatprep.subr.mxu0 0.0
    %1336 = vmatpush1.msra.mxu0 0.0
    %1337 = vmatprep.subr.mxu0 0.0
    %1338 = vmatpush1.msra.mxu0 0.0
    %1339 = vmatprep.subr.mxu0 0.0
    %1340 = vmatpush1.msra.mxu0 0.0
    %1341 = vmatprep.subr.mxu0 0.0
    %1342 = vmatpush1.msra.mxu0 0.0
    %1343 = vmatprep.subr.mxu0 0.0
    %1344 = vmatpush1.msra.mxu0 0.0
    %1345 = vmatprep.subr.mxu0 0.0
    %1346 = vmatpush1.msra.mxu0 0.0
    %1347 = vmatprep.subr.mxu0 0.0
    %1348 = vmatpush1.msra.mxu0 0.0
    %1349 = vmatprep.subr.mxu0 0.0
    %1350 = vmatpush1.msra.mxu0 0.0
    %1351 = vmatprep.subr.mxu0 0.0
    %1352 = vmatpush1.msra.mxu0 0.0
    %1353 = vmatprep.subr.mxu0 0.0
    %1354 = vmatpush1.msra.mxu0 0.0
    %1355 = vmatprep.subr.mxu0 0.0
    %1356 = vmatpush1.msra.mxu0 0.0
    %1357 = vmatprep.subr.mxu0 0.0
    %1358 = vmatpush1.msra.mxu0 0.0
    %1359 = vmatprep.subr.mxu0 0.0
    %1360 = vmatpush1.msra.mxu0 0.0
    %1361 = vmatprep.subr.mxu0 0.0
    %1362 = vmatpush1.msra.mxu0 0.0
    %1363 = vmatprep.subr.mxu0 0.0
    %1364 = vmatpush1.msra.mxu0 0.0
    %1365 = vmatprep.subr.mxu0 0.0
    %1366 = vmatpush1.msra.mxu0 0.0
    %1367 = vmatprep.subr.mxu0 0.0
    %1368 = vmatpush1.msra.mxu0 0.0
    %1369 = vmatprep.subr.mxu0 0.0
    %1370 = vmatpush1.msra.mxu0 0.0
    %1371 = vmatprep.subr.mxu0 0.0
    %1372 = vmatpush1.msra.mxu0 0.0
    %1373 = vmatprep.subr.mxu0 0.0
    %1374 = vmatpush1.msra.mxu0 0.0
    %1375 = vmatprep.subr.mxu0 0.0
    %1376 = vmatpush1.msra.mxu0 0.0
    %1377 = vmatprep.subr.mxu0 0.0
    %1378 = vmatpush1.msra.mxu0 0.0
    %1379 = vmatprep.subr.mxu0 0.0
    %1380 = vmatpush1.msra.mxu0 0.0
    %1381 = vmatprep.subr.mxu0 0.0
    %1382 = vmatpush1.msra.mxu0 0.0
    %1383 = vmatprep.subr.mxu0 0.0
    %1384 = vmatpush1.msra.mxu0 0.0
    %1385 = vmatprep.subr.mxu0 0.0
    %1386 = vmatpush1.msra.mxu0 0.0
    %1387 = vmatprep.mubr.f32.mxu0 0.0
    %1388 = vmatmul.mubr.f32.gmra.mrb[0].mxu0 %v1313
    %v1389 = vpop.f32.mrb[0].mxu0
    %v1390 = vadd.f32 0.0, %v1389
    %v1391 = vpop.f32.mrb[0].mxu0
    %v1392 = vadd.f32 0.0, %v1391
    %1393 = vdwg.mxu0
    %1394 = vmatprep.subr.mxu0 %v1321
    %1395 = vmatpush1.msra.mxu0 %v1319
    %1396 = vmatprep.subr.mxu0 0.0
    %1397 = vmatpush1.msra.mxu0 0.0
    %1398 = vmatprep.subr.mxu0 0.0
    %1399 = vmatpush1.msra.mxu0 0.0
    %1400 = vmatprep.subr.mxu0 0.0
    %1401 = vmatpush1.msra.mxu0 0.0
    %1402 = vmatprep.subr.mxu0 0.0
    %1403 = vmatpush1.msra.mxu0 0.0
    %1404 = vmatprep.subr.mxu0 0.0
    %1405 = vmatpush1.msra.mxu0 0.0
    %1406 = vmatprep.subr.mxu0 0.0
    %1407 = vmatpush1.msra.mxu0 0.0
    %1408 = vmatprep.subr.mxu0 0.0
    %1409 = vmatpush1.msra.mxu0 0.0
    %1410 = vmatprep.subr.mxu0 0.0
    %1411 = vmatpush1.msra.mxu0 0.0
    %1412 = vmatprep.subr.mxu0 0.0
    %1413 = vmatpush1.msra.mxu0 0.0
    %1414 = vmatprep.subr.mxu0 0.0
    %1415 = vmatpush1.msra.mxu0 0.0
    %1416 = vmatprep.subr.mxu0 0.0
    %1417 = vmatpush1.msra.mxu0 0.0
    %1418 = vmatprep.subr.mxu0 0.0
    %1419 = vmatpush1.msra.mxu0 0.0
    %1420 = vmatprep.subr.mxu0 0.0
    %1421 = vmatpush1.msra.mxu0 0.0
    %1422 = vmatprep.subr.mxu0 0.0
    %1423 = vmatpush1.msra.mxu0 0.0
    %1424 = vmatprep.subr.mxu0 0.0
    %1425 = vmatpush1.msra.mxu0 0.0
    %1426 = vmatprep.subr.mxu0 0.0
    %1427 = vmatpush1.msra.mxu0 0.0
    %1428 = vmatprep.subr.mxu0 0.0
    %1429 = vmatpush1.msra.mxu0 0.0
    %1430 = vmatprep.subr.mxu0 0.0
    %1431 = vmatpush1.msra.mxu0 0.0
    %1432 = vmatprep.subr.mxu0 0.0
    %1433 = vmatpush1.msra.mxu0 0.0
    %1434 = vmatprep.subr.mxu0 0.0
    %1435 = vmatpush1.msra.mxu0 0.0
    %1436 = vmatprep.subr.mxu0 0.0
    %1437 = vmatpush1.msra.mxu0 0.0
    %1438 = vmatprep.subr.mxu0 0.0
    %1439 = vmatpush1.msra.mxu0 0.0
    %1440 = vmatprep.subr.mxu0 0.0
    %1441 = vmatpush1.msra.mxu0 0.0
    %1442 = vmatprep.subr.mxu0 0.0
    %1443 = vmatpush1.msra.mxu0 0.0
    %1444 = vmatprep.subr.mxu0 0.0
    %1445 = vmatpush1.msra.mxu0 0.0
    %1446 = vmatprep.subr.mxu0 0.0
    %1447 = vmatpush1.msra.mxu0 0.0
    %1448 = vmatprep.subr.mxu0 0.0
    %1449 = vmatpush1.msra.mxu0 0.0
    %1450 = vmatprep.subr.mxu0 0.0
    %1451 = vmatpush1.msra.mxu0 0.0
    %1452 = vmatprep.subr.mxu0 0.0
    %1453 = vmatpush1.msra.mxu0 0.0
    %1454 = vmatprep.subr.mxu0 0.0
    %1455 = vmatpush1.msra.mxu0 0.0
    %1456 = vmatprep.subr.mxu0 0.0
    %1457 = vmatpush1.msra.mxu0 0.0
    %1458 = vmatprep.mubr.f32.mxu0 0.0
    %1459 = vmatmul.mubr.f32.gmra.mrb[0].mxu0 %v1313
    %v1460 = vpop.f32.mrb[0].mxu0
    %v1461 = vadd.f32 0.0, %v1460
    %v1462 = vpop.f32.mrb[0].mxu0
    %v1463 = vadd.f32 0.0, %v1462
    %1464 = vdwg.mxu0
    %v1465 = vadd.f32 %v1296, %v1390
    %v1466 = vadd.f32 %v1297, %v1392
    %v1467 = vadd.f32 %v1298, %v1461
    %v1468 = vadd.f32 %v1299, %v1463
    %1469 = vrot.lane.b32.xlu0 %v802, 105
    %v1470 = vpop.permute.xlu0 %1469
    %1471 = vrot.lane.b32.xlu0 %v810, 105
    %v1472 = vpop.permute.xlu0 %1471
    %1473 = vrot.lane.b32.xlu0 %v809, 105
    %v1474 = vpop.permute.xlu0 %1473
    %1475 = vrot.lane.b32.xlu0 %v811, 105
    %v1476 = vpop.permute.xlu0 %1475
    %vm1477 = vcmask 859136
    %v1478 = vsel %vm1477, %v1470, %v1472
    %v1479 = vsel %vm1477, %v1472, %v1474
    %v1480 = vsel %vm1477, %v1474, %v1476
    %v1482 = vsel %vm824, %v767, 0
    %v1484 = vsel %vm75, %v1478, 0
    %v1486 = vsel %vm75, %v1479, 0
    %v1488 = vsel %vm75, %v1480, 0
    %v1490 = vsel %vm75, %v1476, 0
    %1492 = vmatprep.subr.mxu0 %v1486
    %1493 = vmatpush1.msra.mxu0 %v1484
    %1494 = vmatprep.subr.mxu0 0.0
    %1495 = vmatpush1.msra.mxu0 0.0
    %1496 = vmatprep.subr.mxu0 0.0
    %1497 = vmatpush1.msra.mxu0 0.0
    %1498 = vmatprep.subr.mxu0 0.0
    %1499 = vmatpush1.msra.mxu0 0.0
    %1500 = vmatprep.subr.mxu0 0.0
    %1501 = vmatpush1.msra.mxu0 0.0
    %1502 = vmatprep.subr.mxu0 0.0
    %1503 = vmatpush1.msra.mxu0 0.0
    %1504 = vmatprep.subr.mxu0 0.0
    %1505 = vmatpush1.msra.mxu0 0.0
    %1506 = vmatprep.subr.mxu0 0.0
    %1507 = vmatpush1.msra.mxu0 0.0
    %1508 = vmatprep.subr.mxu0 0.0
    %1509 = vmatpush1.msra.mxu0 0.0
    %1510 = vmatprep.subr.mxu0 0.0
    %1511 = vmatpush1.msra.mxu0 0.0
    %1512 = vmatprep.subr.mxu0 0.0
    %1513 = vmatpush1.msra.mxu0 0.0
    %1514 = vmatprep.subr.mxu0 0.0
    %1515 = vmatpush1.msra.mxu0 0.0
    %1516 = vmatprep.subr.mxu0 0.0
    %1517 = vmatpush1.msra.mxu0 0.0
    %1518 = vmatprep.subr.mxu0 0.0
    %1519 = vmatpush1.msra.mxu0 0.0
    %1520 = vmatprep.subr.mxu0 0.0
    %1521 = vmatpush1.msra.mxu0 0.0
    %1522 = vmatprep.subr.mxu0 0.0
    %1523 = vmatpush1.msra.mxu0 0.0
    %1524 = vmatprep.subr.mxu0 0.0
    %1525 = vmatpush1.msra.mxu0 0.0
    %1526 = vmatprep.subr.mxu0 0.0
    %1527 = vmatpush1.msra.mxu0 0.0
    %1528 = vmatprep.subr.mxu0 0.0
    %1529 = vmatpush1.msra.mxu0 0.0
    %1530 = vmatprep.subr.mxu0 0.0
    %1531 = vmatpush1.msra.mxu0 0.0
    %1532 = vmatprep.subr.mxu0 0.0
    %1533 = vmatpush1.msra.mxu0 0.0
    %1534 = vmatprep.subr.mxu0 0.0
    %1535 = vmatpush1.msra.mxu0 0.0
    %1536 = vmatprep.subr.mxu0 0.0
    %1537 = vmatpush1.msra.mxu0 0.0
    %1538 = vmatprep.subr.mxu0 0.0
    %1539 = vmatpush1.msra.mxu0 0.0
    %1540 = vmatprep.subr.mxu0 0.0
    %1541 = vmatpush1.msra.mxu0 0.0
    %1542 = vmatprep.subr.mxu0 0.0
    %1543 = vmatpush1.msra.mxu0 0.0
    %1544 = vmatprep.subr.mxu0 0.0
    %1545 = vmatpush1.msra.mxu0 0.0
    %1546 = vmatprep.subr.mxu0 0.0
    %1547 = vmatpush1.msra.mxu0 0.0
    %1548 = vmatprep.subr.mxu0 0.0
    %1549 = vmatpush1.msra.mxu0 0.0
    %1550 = vmatprep.subr.mxu0 0.0
    %1551 = vmatpush1.msra.mxu0 0.0
    %1552 = vmatprep.subr.mxu0 0.0
    %1553 = vmatpush1.msra.mxu0 0.0
    %1554 = vmatprep.subr.mxu0 0.0
    %1555 = vmatpush1.msra.mxu0 0.0
    %1556 = vmatprep.mubr.f32.mxu0 0.0
    %1557 = vmatmul.mubr.f32.gmra.mrb[0].mxu0 %v1482
    %v1558 = vpop.f32.mrb[0].mxu0
    %v1559 = vadd.f32 0.0, %v1558
    %v1560 = vpop.f32.mrb[0].mxu0
    %v1561 = vadd.f32 0.0, %v1560
    %1562 = vdwg.mxu0
    %1563 = vmatprep.subr.mxu0 %v1490
    %1564 = vmatpush1.msra.mxu0 %v1488
    %1565 = vmatprep.subr.mxu0 0.0
    %1566 = vmatpush1.msra.mxu0 0.0
    %1567 = vmatprep.subr.mxu0 0.0
    %1568 = vmatpush1.msra.mxu0 0.0
    %1569 = vmatprep.subr.mxu0 0.0
    %1570 = vmatpush1.msra.mxu0 0.0
    %1571 = vmatprep.subr.mxu0 0.0
    %1572 = vmatpush1.msra.mxu0 0.0
    %1573 = vmatprep.subr.mxu0 0.0
    %1574 = vmatpush1.msra.mxu0 0.0
    %1575 = vmatprep.subr.mxu0 0.0
    %1576 = vmatpush1.msra.mxu0 0.0
    %1577 = vmatprep.subr.mxu0 0.0
    %1578 = vmatpush1.msra.mxu0 0.0
    %1579 = vmatprep.subr.mxu0 0.0
    %1580 = vmatpush1.msra.mxu0 0.0
    %1581 = vmatprep.subr.mxu0 0.0
    %1582 = vmatpush1.msra.mxu0 0.0
    %1583 = vmatprep.subr.mxu0 0.0
    %1584 = vmatpush1.msra.mxu0 0.0
    %1585 = vmatprep.subr.mxu0 0.0
    %1586 = vmatpush1.msra.mxu0 0.0
    %1587 = vmatprep.subr.mxu0 0.0
    %1588 = vmatpush1.msra.mxu0 0.0
    %1589 = vmatprep.subr.mxu0 0.0
    %1590 = vmatpush1.msra.mxu0 0.0
    %1591 = vmatprep.subr.mxu0 0.0
    %1592 = vmatpush1.msra.mxu0 0.0
    %1593 = vmatprep.subr.mxu0 0.0
    %1594 = vmatpush1.msra.mxu0 0.0
    %1595 = vmatprep.subr.mxu0 0.0
    %1596 = vmatpush1.msra.mxu0 0.0
    %1597 = vmatprep.subr.mxu0 0.0
    %1598 = vmatpush1.msra.mxu0 0.0
    %1599 = vmatprep.subr.mxu0 0.0
    %1600 = vmatpush1.msra.mxu0 0.0
    %1601 = vmatprep.subr.mxu0 0.0
    %1602 = vmatpush1.msra.mxu0 0.0
    %1603 = vmatprep.subr.mxu0 0.0
    %1604 = vmatpush1.msra.mxu0 0.0
    %1605 = vmatprep.subr.mxu0 0.0
    %1606 = vmatpush1.msra.mxu0 0.0
    %1607 = vmatprep.subr.mxu0 0.0
    %1608 = vmatpush1.msra.mxu0 0.0
    %1609 = vmatprep.subr.mxu0 0.0
    %1610 = vmatpush1.msra.mxu0 0.0
    %1611 = vmatprep.subr.mxu0 0.0
    %1612 = vmatpush1.msra.mxu0 0.0
    %1613 = vmatprep.subr.mxu0 0.0
    %1614 = vmatpush1.msra.mxu0 0.0
    %1615 = vmatprep.subr.mxu0 0.0
    %1616 = vmatpush1.msra.mxu0 0.0
    %1617 = vmatprep.subr.mxu0 0.0
    %1618 = vmatpush1.msra.mxu0 0.0
    %1619 = vmatprep.subr.mxu0 0.0
    %1620 = vmatpush1.msra.mxu0 0.0
    %1621 = vmatprep.subr.mxu0 0.0
    %1622 = vmatpush1.msra.mxu0 0.0
    %1623 = vmatprep.subr.mxu0 0.0
    %1624 = vmatpush1.msra.mxu0 0.0
    %1625 = vmatprep.subr.mxu0 0.0
    %1626 = vmatpush1.msra.mxu0 0.0
    %1627 = vmatprep.mubr.f32.mxu0 0.0
    %1628 = vmatmul.mubr.f32.gmra.mrb[0].mxu0 %v1482
    %v1629 = vpop.f32.mrb[0].mxu0
    %v1630 = vadd.f32 0.0, %v1629
    %v1631 = vpop.f32.mrb[0].mxu0
    %v1632 = vadd.f32 0.0, %v1631
    %1633 = vdwg.mxu0
    %v1634 = vadd.f32 %v1465, %v1559
    %v1635 = vadd.f32 %v1466, %v1561
    %v1636 = vadd.f32 %v1467, %v1630
    %v1637 = vadd.f32 %v1468, %v1632
    %1638 = vrot.lane.b32.xlu0 %v802, 104
    %v1639 = vpop.permute.xlu0 %1638
    %1640 = vrot.lane.b32.xlu0 %v810, 104
    %v1641 = vpop.permute.xlu0 %1640
    %1642 = vrot.lane.b32.xlu0 %v809, 104
    %v1643 = vpop.permute.xlu0 %1642
    %1644 = vrot.lane.b32.xlu0 %v811, 104
    %v1645 = vpop.permute.xlu0 %1644
    %vm1646 = vcmask 850944
    %v1647 = vsel %vm1646, %v1639, %v1641
    %v1648 = vsel %vm1646, %v1641, %v1643
    %v1649 = vsel %vm1646, %v1643, %v1645
    %v1651 = vsel %vm824, %v768, 0
    %v1653 = vsel %vm75, %v1647, 0
    %v1655 = vsel %vm75, %v1648, 0
    %v1657 = vsel %vm75, %v1649, 0
    %v1659 = vsel %vm75, %v1645, 0
    %1661 = vmatprep.subr.mxu0 %v1655
    %1662 = vmatpush1.msra.mxu0 %v1653
    %1663 = vmatprep.subr.mxu0 0.0
    %1664 = vmatpush1.msra.mxu0 0.0
    %1665 = vmatprep.subr.mxu0 0.0
    %1666 = vmatpush1.msra.mxu0 0.0
    %1667 = vmatprep.subr.mxu0 0.0
    %1668 = vmatpush1.msra.mxu0 0.0
    %1669 = vmatprep.subr.mxu0 0.0
    %1670 = vmatpush1.msra.mxu0 0.0
    %1671 = vmatprep.subr.mxu0 0.0
    %1672 = vmatpush1.msra.mxu0 0.0
    %1673 = vmatprep.subr.mxu0 0.0
    %1674 = vmatpush1.msra.mxu0 0.0
    %1675 = vmatprep.subr.mxu0 0.0
    %1676 = vmatpush1.msra.mxu0 0.0
    %1677 = vmatprep.subr.mxu0 0.0
    %1678 = vmatpush1.msra.mxu0 0.0
    %1679 = vmatprep.subr.mxu0 0.0
    %1680 = vmatpush1.msra.mxu0 0.0
    %1681 = vmatprep.subr.mxu0 0.0
    %1682 = vmatpush1.msra.mxu0 0.0
    %1683 = vmatprep.subr.mxu0 0.0
    %1684 = vmatpush1.msra.mxu0 0.0
    %1685 = vmatprep.subr.mxu0 0.0
    %1686 = vmatpush1.msra.mxu0 0.0
    %1687 = vmatprep.subr.mxu0 0.0
    %1688 = vmatpush1.msra.mxu0 0.0
    %1689 = vmatprep.subr.mxu0 0.0
    %1690 = vmatpush1.msra.mxu0 0.0
    %1691 = vmatprep.subr.mxu0 0.0
    %1692 = vmatpush1.msra.mxu0 0.0
    %1693 = vmatprep.subr.mxu0 0.0
    %1694 = vmatpush1.msra.mxu0 0.0
    %1695 = vmatprep.subr.mxu0 0.0
    %1696 = vmatpush1.msra.mxu0 0.0
    %1697 = vmatprep.subr.mxu0 0.0
    %1698 = vmatpush1.msra.mxu0 0.0
    %1699 = vmatprep.subr.mxu0 0.0
    %1700 = vmatpush1.msra.mxu0 0.0
    %1701 = vmatprep.subr.mxu0 0.0
    %1702 = vmatpush1.msra.mxu0 0.0
    %1703 = vmatprep.subr.mxu0 0.0
    %1704 = vmatpush1.msra.mxu0 0.0
    %1705 = vmatprep.subr.mxu0 0.0
    %1706 = vmatpush1.msra.mxu0 0.0
    %1707 = vmatprep.subr.mxu0 0.0
    %1708 = vmatpush1.msra.mxu0 0.0
    %1709 = vmatprep.subr.mxu0 0.0
    %1710 = vmatpush1.msra.mxu0 0.0
    %1711 = vmatprep.subr.mxu0 0.0
    %1712 = vmatpush1.msra.mxu0 0.0
    %1713 = vmatprep.subr.mxu0 0.0
    %1714 = vmatpush1.msra.mxu0 0.0
    %1715 = vmatprep.subr.mxu0 0.0
    %1716 = vmatpush1.msra.mxu0 0.0
    %1717 = vmatprep.subr.mxu0 0.0
    %1718 = vmatpush1.msra.mxu0 0.0
    %1719 = vmatprep.subr.mxu0 0.0
    %1720 = vmatpush1.msra.mxu0 0.0
    %1721 = vmatprep.subr.mxu0 0.0
    %1722 = vmatpush1.msra.mxu0 0.0
    %1723 = vmatprep.subr.mxu0 0.0
    %1724 = vmatpush1.msra.mxu0 0.0
    %1725 = vmatprep.mubr.f32.mxu0 0.0
    %1726 = vmatmul.mubr.f32.gmra.mrb[0].mxu0 %v1651
    %v1727 = vpop.f32.mrb[0].mxu0
    %v1728 = vadd.f32 0.0, %v1727
    %v1729 = vpop.f32.mrb[0].mxu0
    %v1730 = vadd.f32 0.0, %v1729
    %1731 = vdwg.mxu0
    %1732 = vmatprep.subr.mxu0 %v1659
    %1733 = vmatpush1.msra.mxu0 %v1657
    %1734 = vmatprep.subr.mxu0 0.0
    %1735 = vmatpush1.msra.mxu0 0.0
    %1736 = vmatprep.subr.mxu0 0.0
    %1737 = vmatpush1.msra.mxu0 0.0
    %1738 = vmatprep.subr.mxu0 0.0
    %1739 = vmatpush1.msra.mxu0 0.0
    %1740 = vmatprep.subr.mxu0 0.0
    %1741 = vmatpush1.msra.mxu0 0.0
    %1742 = vmatprep.subr.mxu0 0.0
    %1743 = vmatpush1.msra.mxu0 0.0
    %1744 = vmatprep.subr.mxu0 0.0
    %1745 = vmatpush1.msra.mxu0 0.0
    %1746 = vmatprep.subr.mxu0 0.0
    %1747 = vmatpush1.msra.mxu0 0.0
    %1748 = vmatprep.subr.mxu0 0.0
    %1749 = vmatpush1.msra.mxu0 0.0
    %1750 = vmatprep.subr.mxu0 0.0
    %1751 = vmatpush1.msra.mxu0 0.0
    %1752 = vmatprep.subr.mxu0 0.0
    %1753 = vmatpush1.msra.mxu0 0.0
    %1754 = vmatprep.subr.mxu0 0.0
    %1755 = vmatpush1.msra.mxu0 0.0
    %1756 = vmatprep.subr.mxu0 0.0
    %1757 = vmatpush1.msra.mxu0 0.0
    %1758 = vmatprep.subr.mxu0 0.0
    %1759 = vmatpush1.msra.mxu0 0.0
    %1760 = vmatprep.subr.mxu0 0.0
    %1761 = vmatpush1.msra.mxu0 0.0
    %1762 = vmatprep.subr.mxu0 0.0
    %1763 = vmatpush1.msra.mxu0 0.0
    %1764 = vmatprep.subr.mxu0 0.0
    %1765 = vmatpush1.msra.mxu0 0.0
    %1766 = vmatprep.subr.mxu0 0.0
    %1767 = vmatpush1.msra.mxu0 0.0
    %1768 = vmatprep.subr.mxu0 0.0
    %1769 = vmatpush1.msra.mxu0 0.0
    %1770 = vmatprep.subr.mxu0 0.0
    %1771 = vmatpush1.msra.mxu0 0.0
    %1772 = vmatprep.subr.mxu0 0.0
    %1773 = vmatpush1.msra.mxu0 0.0
    %1774 = vmatprep.subr.mxu0 0.0
    %1775 = vmatpush1.msra.mxu0 0.0
    %1776 = vmatprep.subr.mxu0 0.0
    %1777 = vmatpush1.msra.mxu0 0.0
    %1778 = vmatprep.subr.mxu0 0.0
    %1779 = vmatpush1.msra.mxu0 0.0
    %1780 = vmatprep.subr.mxu0 0.0
    %1781 = vmatpush1.msra.mxu0 0.0
    %1782 = vmatprep.subr.mxu0 0.0
    %1783 = vmatpush1.msra.mxu0 0.0
    %1784 = vmatprep.subr.mxu0 0.0
    %1785 = vmatpush1.msra.mxu0 0.0
    %1786 = vmatprep.subr.mxu0 0.0
    %1787 = vmatpush1.msra.mxu0 0.0
    %1788 = vmatprep.subr.mxu0 0.0
    %1789 = vmatpush1.msra.mxu0 0.0
    %1790 = vmatprep.subr.mxu0 0.0
    %1791 = vmatpush1.msra.mxu0 0.0
    %1792 = vmatprep.subr.mxu0 0.0
    %1793 = vmatpush1.msra.mxu0 0.0
    %1794 = vmatprep.subr.mxu0 0.0
    %1795 = vmatpush1.msra.mxu0 0.0
    %1796 = vmatprep.mubr.f32.mxu0 0.0
    %1797 = vmatmul.mubr.f32.gmra.mrb[0].mxu0 %v1651
    %v1798 = vpop.f32.mrb[0].mxu0
    %v1799 = vadd.f32 0.0, %v1798
    %v1800 = vpop.f32.mrb[0].mxu0
    %v1801 = vadd.f32 0.0, %v1800
    %1802 = vdwg.mxu0
    %v1803 = vadd.f32 %v1634, %v1728
    %v1804 = vadd.f32 %v1635, %v1730
    %v1805 = vadd.f32 %v1636, %v1799
    %v1806 = vadd.f32 %v1637, %v1801
    %1807 = vrot.lane.b32.xlu0 %v802, 84
    %v1808 = vpop.permute.xlu0 %1807
    %1809 = vrot.lane.b32.xlu0 %v810, 84
    %v1810 = vpop.permute.xlu0 %1809
    %1811 = vrot.lane.b32.xlu0 %v809, 84
    %v1812 = vpop.permute.xlu0 %1811
    %1813 = vrot.lane.b32.xlu0 %v811, 84
    %v1814 = vpop.permute.xlu0 %1813
    %vm1815 = vcmask 687104
    %v1816 = vsel %vm1815, %v1808, %v1810
    %v1817 = vsel %vm1815, %v1810, %v1812
    %v1818 = vsel %vm1815, %v1812, %v1814
    %v1820 = vsel %vm824, %v769, 0
    %v1822 = vsel %vm75, %v1816, 0
    %v1824 = vsel %vm75, %v1817, 0
    %v1826 = vsel %vm75, %v1818, 0
    %v1828 = vsel %vm75, %v1814, 0
    %1830 = vmatprep.subr.mxu0 %v1824
    %1831 = vmatpush1.msra.mxu0 %v1822
    %1832 = vmatprep.subr.mxu0 0.0
    %1833 = vmatpush1.msra.mxu0 0.0
    %1834 = vmatprep.subr.mxu0 0.0
    %1835 = vmatpush1.msra.mxu0 0.0
    %1836 = vmatprep.subr.mxu0 0.0
    %1837 = vmatpush1.msra.mxu0 0.0
    %1838 = vmatprep.subr.mxu0 0.0
    %1839 = vmatpush1.msra.mxu0 0.0
    %1840 = vmatprep.subr.mxu0 0.0
    %1841 = vmatpush1.msra.mxu0 0.0
    %1842 = vmatprep.subr.mxu0 0.0
    %1843 = vmatpush1.msra.mxu0 0.0
    %1844 = vmatprep.subr.mxu0 0.0
    %1845 = vmatpush1.msra.mxu0 0.0
    %1846 = vmatprep.subr.mxu0 0.0
    %1847 = vmatpush1.msra.mxu0 0.0
    %1848 = vmatprep.subr.mxu0 0.0
    %1849 = vmatpush1.msra.mxu0 0.0
    %1850 = vmatprep.subr.mxu0 0.0
    %1851 = vmatpush1.msra.mxu0 0.0
    %1852 = vmatprep.subr.mxu0 0.0
    %1853 = vmatpush1.msra.mxu0 0.0
    %1854 = vmatprep.subr.mxu0 0.0
    %1855 = vmatpush1.msra.mxu0 0.0
    %1856 = vmatprep.subr.mxu0 0.0
    %1857 = vmatpush1.msra.mxu0 0.0
    %1858 = vmatprep.subr.mxu0 0.0
    %1859 = vmatpush1.msra.mxu0 0.0
    %1860 = vmatprep.subr.mxu0 0.0
    %1861 = vmatpush1.msra.mxu0 0.0
    %1862 = vmatprep.subr.mxu0 0.0
    %1863 = vmatpush1.msra.mxu0 0.0
    %1864 = vmatprep.subr.mxu0 0.0
    %1865 = vmatpush1.msra.mxu0 0.0
    %1866 = vmatprep.subr.mxu0 0.0
    %1867 = vmatpush1.msra.mxu0 0.0
    %1868 = vmatprep.subr.mxu0 0.0
    %1869 = vmatpush1.msra.mxu0 0.0
    %1870 = vmatprep.subr.mxu0 0.0
    %1871 = vmatpush1.msra.mxu0 0.0
    %1872 = vmatprep.subr.mxu0 0.0
    %1873 = vmatpush1.msra.mxu0 0.0
    %1874 = vmatprep.subr.mxu0 0.0
    %1875 = vmatpush1.msra.mxu0 0.0
    %1876 = vmatprep.subr.mxu0 0.0
    %1877 = vmatpush1.msra.mxu0 0.0
    %1878 = vmatprep.subr.mxu0 0.0
    %1879 = vmatpush1.msra.mxu0 0.0
    %1880 = vmatprep.subr.mxu0 0.0
    %1881 = vmatpush1.msra.mxu0 0.0
    %1882 = vmatprep.subr.mxu0 0.0
    %1883 = vmatpush1.msra.mxu0 0.0
    %1884 = vmatprep.subr.mxu0 0.0
    %1885 = vmatpush1.msra.mxu0 0.0
    %1886 = vmatprep.subr.mxu0 0.0
    %1887 = vmatpush1.msra.mxu0 0.0
    %1888 = vmatprep.subr.mxu0 0.0
    %1889 = vmatpush1.msra.mxu0 0.0
    %1890 = vmatprep.subr.mxu0 0.0
    %1891 = vmatpush1.msra.mxu0 0.0
    %1892 = vmatprep.subr.mxu0 0.0
    %1893 = vmatpush1.msra.mxu0 0.0
    %1894 = vmatprep.mubr.f32.mxu0 0.0
    %1895 = vmatmul.mubr.f32.gmra.mrb[0].mxu0 %v1820
    %v1896 = vpop.f32.mrb[0].mxu0
    %v1897 = vadd.f32 0.0, %v1896
    %v1898 = vpop.f32.mrb[0].mxu0
    %v1899 = vadd.f32 0.0, %v1898
    %1900 = vdwg.mxu0
    %1901 = vmatprep.subr.mxu0 %v1828
    %1902 = vmatpush1.msra.mxu0 %v1826
    %1903 = vmatprep.subr.mxu0 0.0
    %1904 = vmatpush1.msra.mxu0 0.0
    %1905 = vmatprep.subr.mxu0 0.0
    %1906 = vmatpush1.msra.mxu0 0.0
    %1907 = vmatprep.subr.mxu0 0.0
    %1908 = vmatpush1.msra.mxu0 0.0
    %1909 = vmatprep.subr.mxu0 0.0
    %1910 = vmatpush1.msra.mxu0 0.0
    %1911 = vmatprep.subr.mxu0 0.0
    %1912 = vmatpush1.msra.mxu0 0.0
    %1913 = vmatprep.subr.mxu0 0.0
    %1914 = vmatpush1.msra.mxu0 0.0
    %1915 = vmatprep.subr.mxu0 0.0
    %1916 = vmatpush1.msra.mxu0 0.0
    %1917 = vmatprep.subr.mxu0 0.0
    %1918 = vmatpush1.msra.mxu0 0.0
    %1919 = vmatprep.subr.mxu0 0.0
    %1920 = vmatpush1.msra.mxu0 0.0
    %1921 = vmatprep.subr.mxu0 0.0
    %1922 = vmatpush1.msra.mxu0 0.0
    %1923 = vmatprep.subr.mxu0 0.0
    %1924 = vmatpush1.msra.mxu0 0.0
    %1925 = vmatprep.subr.mxu0 0.0
    %1926 = vmatpush1.msra.mxu0 0.0
    %1927 = vmatprep.subr.mxu0 0.0
    %1928 = vmatpush1.msra.mxu0 0.0
    %1929 = vmatprep.subr.mxu0 0.0
    %1930 = vmatpush1.msra.mxu0 0.0
    %1931 = vmatprep.subr.mxu0 0.0
    %1932 = vmatpush1.msra.mxu0 0.0
    %1933 = vmatprep.subr.mxu0 0.0
    %1934 = vmatpush1.msra.mxu0 0.0
    %1935 = vmatprep.subr.mxu0 0.0
    %1936 = vmatpush1.msra.mxu0 0.0
    %1937 = vmatprep.subr.mxu0 0.0
    %1938 = vmatpush1.msra.mxu0 0.0
    %1939 = vmatprep.subr.mxu0 0.0
    %1940 = vmatpush1.msra.mxu0 0.0
    %1941 = vmatprep.subr.mxu0 0.0
    %1942 = vmatpush1.msra.mxu0 0.0
    %1943 = vmatprep.subr.mxu0 0.0
    %1944 = vmatpush1.msra.mxu0 0.0
    %1945 = vmatprep.subr.mxu0 0.0
    %1946 = vmatpush1.msra.mxu0 0.0
    %1947 = vmatprep.subr.mxu0 0.0
    %1948 = vmatpush1.msra.mxu0 0.0
    %1949 = vmatprep.subr.mxu0 0.0
    %1950 = vmatpush1.msra.mxu0 0.0
    %1951 = vmatprep.subr.mxu0 0.0
    %1952 = vmatpush1.msra.mxu0 0.0
    %1953 = vmatprep.subr.mxu0 0.0
    %1954 = vmatpush1.msra.mxu0 0.0
    %1955 = vmatprep.subr.mxu0 0.0
    %1956 = vmatpush1.msra.mxu0 0.0
    %1957 = vmatprep.subr.mxu0 0.0
    %1958 = vmatpush1.msra.mxu0 0.0
    %1959 = vmatprep.subr.mxu0 0.0
    %1960 = vmatpush1.msra.mxu0 0.0
    %1961 = vmatprep.subr.mxu0 0.0
    %1962 = vmatpush1.msra.mxu0 0.0
    %1963 = vmatprep.subr.mxu0 0.0
    %1964 = vmatpush1.msra.mxu0 0.0
    %1965 = vmatprep.mubr.f32.mxu0 0.0
    %1966 = vmatmul.mubr.f32.gmra.mrb[0].mxu0 %v1820
    %v1967 = vpop.f32.mrb[0].mxu0
    %v1968 = vadd.f32 0.0, %v1967
    %v1969 = vpop.f32.mrb[0].mxu0
    %v1970 = vadd.f32 0.0, %v1969
    %1971 = vdwg.mxu0
    %v1972 = vadd.f32 %v1803, %v1897
    %v1973 = vadd.f32 %v1804, %v1899
    %v1974 = vadd.f32 %v1805, %v1968
    %v1975 = vadd.f32 %v1806, %v1970
    %1976 = vrot.lane.b32.xlu0 %v802, 83
    %v1977 = vpop.permute.xlu0 %1976
    %1978 = vrot.lane.b32.xlu0 %v810, 83
    %v1979 = vpop.permute.xlu0 %1978
    %1980 = vrot.lane.b32.xlu0 %v809, 83
    %v1981 = vpop.permute.xlu0 %1980
    %1982 = vrot.lane.b32.xlu0 %v811, 83
    %v1983 = vpop.permute.xlu0 %1982
    %vm1984 = vcmask 678912
    %v1985 = vsel %vm1984, %v1977, %v1979
    %v1986 = vsel %vm1984, %v1979, %v1981
    %v1987 = vsel %vm1984, %v1981, %v1983
    %v1989 = vsel %vm824, %v770, 0
    %v1991 = vsel %vm75, %v1985, 0
    %v1993 = vsel %vm75, %v1986, 0
    %v1995 = vsel %vm75, %v1987, 0
    %v1997 = vsel %vm75, %v1983, 0
    %1999 = vmatprep.subr.mxu0 %v1993
    %2000 = vmatpush1.msra.mxu0 %v1991
    %2001 = vmatprep.subr.mxu0 0.0
    %2002 = vmatpush1.msra.mxu0 0.0
    %2003 = vmatprep.subr.mxu0 0.0
    %2004 = vmatpush1.msra.mxu0 0.0
    %2005 = vmatprep.subr.mxu0 0.0
    %2006 = vmatpush1.msra.mxu0 0.0
    %2007 = vmatprep.subr.mxu0 0.0
    %2008 = vmatpush1.msra.mxu0 0.0
    %2009 = vmatprep.subr.mxu0 0.0
    %2010 = vmatpush1.msra.mxu0 0.0
    %2011 = vmatprep.subr.mxu0 0.0
    %2012 = vmatpush1.msra.mxu0 0.0
    %2013 = vmatprep.subr.mxu0 0.0
    %2014 = vmatpush1.msra.mxu0 0.0
    %2015 = vmatprep.subr.mxu0 0.0
    %2016 = vmatpush1.msra.mxu0 0.0
    %2017 = vmatprep.subr.mxu0 0.0
    %2018 = vmatpush1.msra.mxu0 0.0
    %2019 = vmatprep.subr.mxu0 0.0
    %2020 = vmatpush1.msra.mxu0 0.0
    %2021 = vmatprep.subr.mxu0 0.0
    %2022 = vmatpush1.msra.mxu0 0.0
    %2023 = vmatprep.subr.mxu0 0.0
    %2024 = vmatpush1.msra.mxu0 0.0
    %2025 = vmatprep.subr.mxu0 0.0
    %2026 = vmatpush1.msra.mxu0 0.0
    %2027 = vmatprep.subr.mxu0 0.0
    %2028 = vmatpush1.msra.mxu0 0.0
    %2029 = vmatprep.subr.mxu0 0.0
    %2030 = vmatpush1.msra.mxu0 0.0
    %2031 = vmatprep.subr.mxu0 0.0
    %2032 = vmatpush1.msra.mxu0 0.0
    %2033 = vmatprep.subr.mxu0 0.0
    %2034 = vmatpush1.msra.mxu0 0.0
    %2035 = vmatprep.subr.mxu0 0.0
    %2036 = vmatpush1.msra.mxu0 0.0
    %2037 = vmatprep.subr.mxu0 0.0
    %2038 = vmatpush1.msra.mxu0 0.0
    %2039 = vmatprep.subr.mxu0 0.0
    %2040 = vmatpush1.msra.mxu0 0.0
    %2041 = vmatprep.subr.mxu0 0.0
    %2042 = vmatpush1.msra.mxu0 0.0
    %2043 = vmatprep.subr.mxu0 0.0
    %2044 = vmatpush1.msra.mxu0 0.0
    %2045 = vmatprep.subr.mxu0 0.0
    %2046 = vmatpush1.msra.mxu0 0.0
    %2047 = vmatprep.subr.mxu0 0.0
    %2048 = vmatpush1.msra.mxu0 0.0
    %2049 = vmatprep.subr.mxu0 0.0
    %2050 = vmatpush1.msra.mxu0 0.0
    %2051 = vmatprep.subr.mxu0 0.0
    %2052 = vmatpush1.msra.mxu0 0.0
    %2053 = vmatprep.subr.mxu0 0.0
    %2054 = vmatpush1.msra.mxu0 0.0
    %2055 = vmatprep.subr.mxu0 0.0
    %2056 = vmatpush1.msra.mxu0 0.0
    %2057 = vmatprep.subr.mxu0 0.0
    %2058 = vmatpush1.msra.mxu0 0.0
    %2059 = vmatprep.subr.mxu0 0.0
    %2060 = vmatpush1.msra.mxu0 0.0
    %2061 = vmatprep.subr.mxu0 0.0
    %2062 = vmatpush1.msra.mxu0 0.0
    %2063 = vmatprep.mubr.f32.mxu0 0.0
    %2064 = vmatmul.mubr.f32.gmra.mrb[0].mxu0 %v1989
    %v2065 = vpop.f32.mrb[0].mxu0
    %v2066 = vadd.f32 0.0, %v2065
    %v2067 = vpop.f32.mrb[0].mxu0
    %v2068 = vadd.f32 0.0, %v2067
    %2069 = vdwg.mxu0
    %2070 = vmatprep.subr.mxu0 %v1997
    %2071 = vmatpush1.msra.mxu0 %v1995
    %2072 = vmatprep.subr.mxu0 0.0
    %2073 = vmatpush1.msra.mxu0 0.0
    %2074 = vmatprep.subr.mxu0 0.0
    %2075 = vmatpush1.msra.mxu0 0.0
    %2076 = vmatprep.subr.mxu0 0.0
    %2077 = vmatpush1.msra.mxu0 0.0
    %2078 = vmatprep.subr.mxu0 0.0
    %2079 = vmatpush1.msra.mxu0 0.0
    %2080 = vmatprep.subr.mxu0 0.0
    %2081 = vmatpush1.msra.mxu0 0.0
    %2082 = vmatprep.subr.mxu0 0.0
    %2083 = vmatpush1.msra.mxu0 0.0
    %2084 = vmatprep.subr.mxu0 0.0
    %2085 = vmatpush1.msra.mxu0 0.0
    %2086 = vmatprep.subr.mxu0 0.0
    %2087 = vmatpush1.msra.mxu0 0.0
    %2088 = vmatprep.subr.mxu0 0.0
    %2089 = vmatpush1.msra.mxu0 0.0
    %2090 = vmatprep.subr.mxu0 0.0
    %2091 = vmatpush1.msra.mxu0 0.0
    %2092 = vmatprep.subr.mxu0 0.0
    %2093 = vmatpush1.msra.mxu0 0.0
    %2094 = vmatprep.subr.mxu0 0.0
    %2095 = vmatpush1.msra.mxu0 0.0
    %2096 = vmatprep.subr.mxu0 0.0
    %2097 = vmatpush1.msra.mxu0 0.0
    %2098 = vmatprep.subr.mxu0 0.0
    %2099 = vmatpush1.msra.mxu0 0.0
    %2100 = vmatprep.subr.mxu0 0.0
    %2101 = vmatpush1.msra.mxu0 0.0
    %2102 = vmatprep.subr.mxu0 0.0
    %2103 = vmatpush1.msra.mxu0 0.0
    %2104 = vmatprep.subr.mxu0 0.0
    %2105 = vmatpush1.msra.mxu0 0.0
    %2106 = vmatprep.subr.mxu0 0.0
    %2107 = vmatpush1.msra.mxu0 0.0
    %2108 = vmatprep.subr.mxu0 0.0
    %2109 = vmatpush1.msra.mxu0 0.0
    %2110 = vmatprep.subr.mxu0 0.0
    %2111 = vmatpush1.msra.mxu0 0.0
    %2112 = vmatprep.subr.mxu0 0.0
    %2113 = vmatpush1.msra.mxu0 0.0
    %2114 = vmatprep.subr.mxu0 0.0
    %2115 = vmatpush1.msra.mxu0 0.0
    %2116 = vmatprep.subr.mxu0 0.0
    %2117 = vmatpush1.msra.mxu0 0.0
    %2118 = vmatprep.subr.mxu0 0.0
    %2119 = vmatpush1.msra.mxu0 0.0
    %2120 = vmatprep.subr.mxu0 0.0
    %2121 = vmatpush1.msra.mxu0 0.0
    %2122 = vmatprep.subr.mxu0 0.0
    %2123 = vmatpush1.msra.mxu0 0.0
    %2124 = vmatprep.subr.mxu0 0.0
    %2125 = vmatpush1.msra.mxu0 0.0
    %2126 = vmatprep.subr.mxu0 0.0
    %2127 = vmatpush1.msra.mxu0 0.0
    %2128 = vmatprep.subr.mxu0 0.0
    %2129 = vmatpush1.msra.mxu0 0.0
    %2130 = vmatprep.subr.mxu0 0.0
    %2131 = vmatpush1.msra.mxu0 0.0
    %2132 = vmatprep.subr.mxu0 0.0
    %2133 = vmatpush1.msra.mxu0 0.0
    %2134 = vmatprep.mubr.f32.mxu0 0.0
    %2135 = vmatmul.mubr.f32.gmra.mrb[0].mxu0 %v1989
    %v2136 = vpop.f32.mrb[0].mxu0
    %v2137 = vadd.f32 0.0, %v2136
    %v2138 = vpop.f32.mrb[0].mxu0
    %v2139 = vadd.f32 0.0, %v2138
    %2140 = vdwg.mxu0
    %v2141 = vadd.f32 %v1972, %v2066
    %v2142 = vadd.f32 %v1973, %v2068
    %v2143 = vadd.f32 %v1974, %v2137
    %v2144 = vadd.f32 %v1975, %v2139
    %2145 = vrot.lane.b32.xlu0 %v802, 82
    %v2146 = vpop.permute.xlu0 %2145
    %2147 = vrot.lane.b32.xlu0 %v810, 82
    %v2148 = vpop.permute.xlu0 %2147
    %2149 = vrot.lane.b32.xlu0 %v809, 82
    %v2150 = vpop.permute.xlu0 %2149
    %2151 = vrot.lane.b32.xlu0 %v811, 82
    %v2152 = vpop.permute.xlu0 %2151
    %vm2153 = vcmask 670720
    %v2154 = vsel %vm2153, %v2146, %v2148
    %v2155 = vsel %vm2153, %v2148, %v2150
    %v2156 = vsel %vm2153, %v2150, %v2152
    %v2158 = vsel %vm824, %v771, 0
    %v2160 = vsel %vm75, %v2154, 0
    %v2162 = vsel %vm75, %v2155, 0
    %v2164 = vsel %vm75, %v2156, 0
    %v2166 = vsel %vm75, %v2152, 0
    %2168 = vmatprep.subr.mxu0 %v2162
    %2169 = vmatpush1.msra.mxu0 %v2160
    %2170 = vmatprep.subr.mxu0 0.0
    %2171 = vmatpush1.msra.mxu0 0.0
    %2172 = vmatprep.subr.mxu0 0.0
    %2173 = vmatpush1.msra.mxu0 0.0
    %2174 = vmatprep.subr.mxu0 0.0
    %2175 = vmatpush1.msra.mxu0 0.0
    %2176 = vmatprep.subr.mxu0 0.0
    %2177 = vmatpush1.msra.mxu0 0.0
    %2178 = vmatprep.subr.mxu0 0.0
    %2179 = vmatpush1.msra.mxu0 0.0
    %2180 = vmatprep.subr.mxu0 0.0
    %2181 = vmatpush1.msra.mxu0 0.0
    %2182 = vmatprep.subr.mxu0 0.0
    %2183 = vmatpush1.msra.mxu0 0.0
    %2184 = vmatprep.subr.mxu0 0.0
    %2185 = vmatpush1.msra.mxu0 0.0
    %2186 = vmatprep.subr.mxu0 0.0
    %2187 = vmatpush1.msra.mxu0 0.0
    %2188 = vmatprep.subr.mxu0 0.0
    %2189 = vmatpush1.msra.mxu0 0.0
    %2190 = vmatprep.subr.mxu0 0.0
    %2191 = vmatpush1.msra.mxu0 0.0
    %2192 = vmatprep.subr.mxu0 0.0
    %2193 = vmatpush1.msra.mxu0 0.0
    %2194 = vmatprep.subr.mxu0 0.0
    %2195 = vmatpush1.msra.mxu0 0.0
    %2196 = vmatprep.subr.mxu0 0.0
    %2197 = vmatpush1.msra.mxu0 0.0
    %2198 = vmatprep.subr.mxu0 0.0
    %2199 = vmatpush1.msra.mxu0 0.0
    %2200 = vmatprep.subr.mxu0 0.0
    %2201 = vmatpush1.msra.mxu0 0.0
    %2202 = vmatprep.subr.mxu0 0.0
    %2203 = vmatpush1.msra.mxu0 0.0
    %2204 = vmatprep.subr.mxu0 0.0
    %2205 = vmatpush1.msra.mxu0 0.0
    %2206 = vmatprep.subr.mxu0 0.0
    %2207 = vmatpush1.msra.mxu0 0.0
    %2208 = vmatprep.subr.mxu0 0.0
    %2209 = vmatpush1.msra.mxu0 0.0
    %2210 = vmatprep.subr.mxu0 0.0
    %2211 = vmatpush1.msra.mxu0 0.0
    %2212 = vmatprep.subr.mxu0 0.0
    %2213 = vmatpush1.msra.mxu0 0.0
    %2214 = vmatprep.subr.mxu0 0.0
    %2215 = vmatpush1.msra.mxu0 0.0
    %2216 = vmatprep.subr.mxu0 0.0
    %2217 = vmatpush1.msra.mxu0 0.0
    %2218 = vmatprep.subr.mxu0 0.0
    %2219 = vmatpush1.msra.mxu0 0.0
    %2220 = vmatprep.subr.mxu0 0.0
    %2221 = vmatpush1.msra.mxu0 0.0
    %2222 = vmatprep.subr.mxu0 0.0
    %2223 = vmatpush1.msra.mxu0 0.0
    %2224 = vmatprep.subr.mxu0 0.0
    %2225 = vmatpush1.msra.mxu0 0.0
    %2226 = vmatprep.subr.mxu0 0.0
    %2227 = vmatpush1.msra.mxu0 0.0
    %2228 = vmatprep.subr.mxu0 0.0
    %2229 = vmatpush1.msra.mxu0 0.0
    %2230 = vmatprep.subr.mxu0 0.0
    %2231 = vmatpush1.msra.mxu0 0.0
    %2232 = vmatprep.mubr.f32.mxu0 0.0
    %2233 = vmatmul.mubr.f32.gmra.mrb[0].mxu0 %v2158
    %v2234 = vpop.f32.mrb[0].mxu0
    %v2235 = vadd.f32 0.0, %v2234
    %v2236 = vpop.f32.mrb[0].mxu0
    %v2237 = vadd.f32 0.0, %v2236
    %2238 = vdwg.mxu0
    %2239 = vmatprep.subr.mxu0 %v2166
    %2240 = vmatpush1.msra.mxu0 %v2164
    %2241 = vmatprep.subr.mxu0 0.0
    %2242 = vmatpush1.msra.mxu0 0.0
    %2243 = vmatprep.subr.mxu0 0.0
    %2244 = vmatpush1.msra.mxu0 0.0
    %2245 = vmatprep.subr.mxu0 0.0
    %2246 = vmatpush1.msra.mxu0 0.0
    %2247 = vmatprep.subr.mxu0 0.0
    %2248 = vmatpush1.msra.mxu0 0.0
    %2249 = vmatprep.subr.mxu0 0.0
    %2250 = vmatpush1.msra.mxu0 0.0
    %2251 = vmatprep.subr.mxu0 0.0
    %2252 = vmatpush1.msra.mxu0 0.0
    %2253 = vmatprep.subr.mxu0 0.0
    %2254 = vmatpush1.msra.mxu0 0.0
    %2255 = vmatprep.subr.mxu0 0.0
    %2256 = vmatpush1.msra.mxu0 0.0
    %2257 = vmatprep.subr.mxu0 0.0
    %2258 = vmatpush1.msra.mxu0 0.0
    %2259 = vmatprep.subr.mxu0 0.0
    %2260 = vmatpush1.msra.mxu0 0.0
    %2261 = vmatprep.subr.mxu0 0.0
    %2262 = vmatpush1.msra.mxu0 0.0
    %2263 = vmatprep.subr.mxu0 0.0
    %2264 = vmatpush1.msra.mxu0 0.0
    %2265 = vmatprep.subr.mxu0 0.0
    %2266 = vmatpush1.msra.mxu0 0.0
    %2267 = vmatprep.subr.mxu0 0.0
    %2268 = vmatpush1.msra.mxu0 0.0
    %2269 = vmatprep.subr.mxu0 0.0
    %2270 = vmatpush1.msra.mxu0 0.0
    %2271 = vmatprep.subr.mxu0 0.0
    %2272 = vmatpush1.msra.mxu0 0.0
    %2273 = vmatprep.subr.mxu0 0.0
    %2274 = vmatpush1.msra.mxu0 0.0
    %2275 = vmatprep.subr.mxu0 0.0
    %2276 = vmatpush1.msra.mxu0 0.0
    %2277 = vmatprep.subr.mxu0 0.0
    %2278 = vmatpush1.msra.mxu0 0.0
    %2279 = vmatprep.subr.mxu0 0.0
    %2280 = vmatpush1.msra.mxu0 0.0
    %2281 = vmatprep.subr.mxu0 0.0
    %2282 = vmatpush1.msra.mxu0 0.0
    %2283 = vmatprep.subr.mxu0 0.0
    %2284 = vmatpush1.msra.mxu0 0.0
    %2285 = vmatprep.subr.mxu0 0.0
    %2286 = vmatpush1.msra.mxu0 0.0
    %2287 = vmatprep.subr.mxu0 0.0
    %2288 = vmatpush1.msra.mxu0 0.0
    %2289 = vmatprep.subr.mxu0 0.0
    %2290 = vmatpush1.msra.mxu0 0.0
    %2291 = vmatprep.subr.mxu0 0.0
    %2292 = vmatpush1.msra.mxu0 0.0
    %2293 = vmatprep.subr.mxu0 0.0
    %2294 = vmatpush1.msra.mxu0 0.0
    %2295 = vmatprep.subr.mxu0 0.0
    %2296 = vmatpush1.msra.mxu0 0.0
    %2297 = vmatprep.subr.mxu0 0.0
    %2298 = vmatpush1.msra.mxu0 0.0
    %2299 = vmatprep.subr.mxu0 0.0
    %2300 = vmatpush1.msra.mxu0 0.0
    %2301 = vmatprep.subr.mxu0 0.0
    %2302 = vmatpush1.msra.mxu0 0.0
    %2303 = vmatprep.mubr.f32.mxu0 0.0
    %2304 = vmatmul.mubr.f32.gmra.mrb[0].mxu0 %v2158
    %v2305 = vpop.f32.mrb[0].mxu0
    %v2306 = vadd.f32 0.0, %v2305
    %v2307 = vpop.f32.mrb[0].mxu0
    %v2308 = vadd.f32 0.0, %v2307
    %2309 = vdwg.mxu0
    %v2310 = vadd.f32 %v2141, %v2235
    %v2311 = vadd.f32 %v2142, %v2237
    %v2312 = vadd.f32 %v2143, %v2306
    %v2313 = vadd.f32 %v2144, %v2308
    %2315 = vset.pattern.permute.xlu0 0
    %2316 = vperm.xlu0 %2315, %v772
    %v2317 = vpop.permute.xlu0 %2316
    %v2319 = vadd.f32 %v2310, %v2317
    %v2320 = vadd.f32 %v2311, %v2317
    %v2321 = vadd.f32 %v2312, %v2317
    %v2322 = vadd.f32 %v2313, %v2317
    %v2323 = vmax.f32 %v2319, 0.0
    %v2324 = vmax.f32 %v2320, 0.0
    %v2325 = vmax.f32 %v2321, 0.0
    %v2326 = vmax.f32 %v2322, 0.0
    %2328 = vrot.lane.b32.xlu0 %v2323, 23
    %v2329 = vpop.permute.xlu0 %2328
    %vm2331 = vcmask 351416
    %2332 = vst.msk [vmem:[#allocation3] sm:$0xff] %vm2331, %v2329
    %vm2333 = vcmask 531816
    %2334 = vst.msk [vmem:[#allocation3] sm:$0xff] %vm2333, %v2329
    %vm2335 = vcmask 712216
    %2336 = vst.msk [vmem:[#allocation3] sm:$0xff] %vm2335, %v2329
    %vm2337 = vcmask 892616
    %2338 = vst.msk [vmem:[#allocation3] sm:$0xff] %vm2337, %v2329
    %vm2339 = vcmask 1048440
    %2340 = vst.msk [vmem:[#allocation3] sm:$0xff] %vm2339, %v2329
    %vm2341 = vcmask 23552
    %2342 = vst.msk [vmem:[#allocation3 + $0x8] sm:$0xff] %vm2341, %v2329
    %2344 = vrot.lane.b32.xlu0 %v2324, 23
    %v2345 = vpop.permute.xlu0 %2344
    %vm2346 = vcmask 187392
    %v2347 = vsel %vm2346, %v2329, %v2345
    %vm2349 = vcmask 203816
    %2350 = vst.msk [vmem:[#allocation3 + $0x8] sm:$0xff] %vm2349, %v2347
    %vm2352 = vcmask 384216
    %2353 = vst.msk [vmem:[#allocation3 + $0x8] sm:$0xff] %vm2352, %v2345
    %vm2354 = vcmask 564616
    %2355 = vst.msk [vmem:[#allocation3 + $0x8] sm:$0xff] %vm2354, %v2345
    %vm2356 = vcmask 745016
    %2357 = vst.msk [vmem:[#allocation3 + $0x8] sm:$0xff] %vm2356, %v2345
    %vm2358 = vcmask 925416
    %2359 = vst.msk [vmem:[#allocation3 + $0x8] sm:$0xff] %vm2358, %v2345
    %vm2360 = vcmask 1048472
    %2361 = vst.msk [vmem:[#allocation3 + $0x8] sm:$0xff] %vm2360, %v2345
    %vm2362 = vcmask 56320
    %2363 = vst.msk [vmem:[#allocation3 + $0x10] sm:$0xff] %vm2362, %v2345
    %2365 = vrot.lane.b32.xlu0 %v2325, 23
    %v2366 = vpop.permute.xlu0 %2365
    %v2367 = vsel %vm2346, %v2345, %v2366
    %vm2369 = vcmask 236616
    %2370 = vst.msk [vmem:[#allocation3 + $0x10] sm:$0xff] %vm2369, %v2367
    %vm2372 = vcmask 417016
    %2373 = vst.msk [vmem:[#allocation3 + $0x10] sm:$0xff] %vm2372, %v2366
    %vm2374 = vcmask 597416
    %2375 = vst.msk [vmem:[#allocation3 + $0x10] sm:$0xff] %vm2374, %v2366
    %vm2376 = vcmask 777816
    %2377 = vst.msk [vmem:[#allocation3 + $0x10] sm:$0xff] %vm2376, %v2366
    %vm2378 = vcmask 958216
    %2379 = vst.msk [vmem:[#allocation3 + $0x10] sm:$0xff] %vm2378, %v2366
    %vm2380 = vcmask 1048504
    %2381 = vst.msk [vmem:[#allocation3 + $0x10] sm:$0xff] %vm2380, %v2366
    %vm2382 = vcmask 89088
    %2383 = vst.msk [vmem:[#allocation3 + $0x18] sm:$0xff] %vm2382, %v2366
    %2385 = vrot.lane.b32.xlu0 %v2326, 23
    %v2386 = vpop.permute.xlu0 %2385
    %v2387 = vsel %vm2346, %v2366, %v2386
    %vm2389 = vcmask 269416
    %2390 = vst.msk [vmem:[#allocation3 + $0x18] sm:$0xff] %vm2389, %v2387
    %vm2392 = vcmask 449816
    %2393 = vst.msk [vmem:[#allocation3 + $0x18] sm:$0xff] %vm2392, %v2386
    %vm2394 = vcmask 630216
    %2395 = vst.msk [vmem:[#allocation3 + $0x18] sm:$0xff] %vm2394, %v2386
    %v2397 = vcombine.high %v793, %v793
    %v2399 = vunpack.c.l.s4 1983009808
    %v2400 = vunpack.c.0.s8 %v2399
    %v2401 = vlaneseq
    %v2402 = vshrl.u32 %v2401, 7
    %v2403 = vsub.s32 %v2400, %v2402
    %v2404 = vrot.slane %v793, %v2403
    %v2406 = vunpack.c.l.s4 1983009808
    %v2407 = vunpack.c.0.s8 %v2406
    %v2408 = vlaneseq
    %v2409 = vshrl.u32 %v2408, 7
    %v2410 = vsub.s32 %v2407, %v2409
    %v2411 = vrot.slane %v2397, %v2410
    %v2412 = vcombine.high %v2404, %v2404
    %v2413 = vcombine.high %v2411, %v2411
    %2414 = vrot.lane.b32.xlu0 %v2404, 127
    %v2415 = vpop.permute.xlu0 %2414
    %2416 = vrot.lane.b32.xlu0 %v2412, 127
    %v2417 = vpop.permute.xlu0 %2416
    %2418 = vrot.lane.b32.xlu0 %v2411, 127
    %v2419 = vpop.permute.xlu0 %2418
    %2420 = vrot.lane.b32.xlu0 %v2413, 127
    %v2421 = vpop.permute.xlu0 %2420
    %v2422 = vsel %vm820, %v2415, %v2417
    %v2423 = vsel %vm820, %v2417, %v2419
    %v2424 = vsel %vm820, %v2419, %v2421
    %v2425 = vsel %vm75, %v2422, 0
    %v2427 = vsel %vm75, %v2423, 0
    %v2429 = vsel %vm75, %v2424, 0
    %v2431 = vsel %vm75, %v2421, 0
    %2433 = vmatprep.subr.mxu0 %v2427
    %2434 = vmatpush1.msra.mxu0 %v2425
    %2435 = vmatprep.subr.mxu0 0.0
    %2436 = vmatpush1.msra.mxu0 0.0
    %2437 = vmatprep.subr.mxu0 0.0
    %2438 = vmatpush1.msra.mxu0 0.0
    %2439 = vmatprep.subr.mxu0 0.0
    %2440 = vmatpush1.msra.mxu0 0.0
    %2441 = vmatprep.subr.mxu0 0.0
    %2442 = vmatpush1.msra.mxu0 0.0
    %2443 = vmatprep.subr.mxu0 0.0
    %2444 = vmatpush1.msra.mxu0 0.0
    %2445 = vmatprep.subr.mxu0 0.0
    %2446 = vmatpush1.msra.mxu0 0.0
    %2447 = vmatprep.subr.mxu0 0.0
    %2448 = vmatpush1.msra.mxu0 0.0
    %2449 = vmatprep.subr.mxu0 0.0
    %2450 = vmatpush1.msra.mxu0 0.0
    %2451 = vmatprep.subr.mxu0 0.0
    %2452 = vmatpush1.msra.mxu0 0.0
    %2453 = vmatprep.subr.mxu0 0.0
    %2454 = vmatpush1.msra.mxu0 0.0
    %2455 = vmatprep.subr.mxu0 0.0
    %2456 = vmatpush1.msra.mxu0 0.0
    %2457 = vmatprep.subr.mxu0 0.0
    %2458 = vmatpush1.msra.mxu0 0.0
    %2459 = vmatprep.subr.mxu0 0.0
    %2460 = vmatpush1.msra.mxu0 0.0
    %2461 = vmatprep.subr.mxu0 0.0
    %2462 = vmatpush1.msra.mxu0 0.0
    %2463 = vmatprep.subr.mxu0 0.0
    %2464 = vmatpush1.msra.mxu0 0.0
    %2465 = vmatprep.subr.mxu0 0.0
    %2466 = vmatpush1.msra.mxu0 0.0
    %2467 = vmatprep.subr.mxu0 0.0
    %2468 = vmatpush1.msra.mxu0 0.0
    %2469 = vmatprep.subr.mxu0 0.0
    %2470 = vmatpush1.msra.mxu0 0.0
    %2471 = vmatprep.subr.mxu0 0.0
    %2472 = vmatpush1.msra.mxu0 0.0
    %2473 = vmatprep.subr.mxu0 0.0
    %2474 = vmatpush1.msra.mxu0 0.0
    %2475 = vmatprep.subr.mxu0 0.0
    %2476 = vmatpush1.msra.mxu0 0.0
    %2477 = vmatprep.subr.mxu0 0.0
    %2478 = vmatpush1.msra.mxu0 0.0
    %2479 = vmatprep.subr.mxu0 0.0
    %2480 = vmatpush1.msra.mxu0 0.0
    %2481 = vmatprep.subr.mxu0 0.0
    %2482 = vmatpush1.msra.mxu0 0.0
    %2483 = vmatprep.subr.mxu0 0.0
    %2484 = vmatpush1.msra.mxu0 0.0
    %2485 = vmatprep.subr.mxu0 0.0
    %2486 = vmatpush1.msra.mxu0 0.0
    %2487 = vmatprep.subr.mxu0 0.0
    %2488 = vmatpush1.msra.mxu0 0.0
    %2489 = vmatprep.subr.mxu0 0.0
    %2490 = vmatpush1.msra.mxu0 0.0
    %2491 = vmatprep.subr.mxu0 0.0
    %2492 = vmatpush1.msra.mxu0 0.0
    %2493 = vmatprep.subr.mxu0 0.0
    %2494 = vmatpush1.msra.mxu0 0.0
    %2495 = vmatprep.subr.mxu0 0.0
    %2496 = vmatpush1.msra.mxu0 0.0
    %2497 = vmatprep.mubr.f32.mxu0 0.0
    %2498 = vmatmul.mubr.f32.gmra.mrb[0].mxu0 %v826
    %v2499 = vpop.f32.mrb[0].mxu0
    %v2500 = vadd.f32 0.0, %v2499
    %v2501 = vpop.f32.mrb[0].mxu0
    %v2502 = vadd.f32 0.0, %v2501
    %2503 = vdwg.mxu0
    %2504 = vmatprep.subr.mxu0 %v2431
    %2505 = vmatpush1.msra.mxu0 %v2429
    %2506 = vmatprep.subr.mxu0 0.0
    %2507 = vmatpush1.msra.mxu0 0.0
    %2508 = vmatprep.subr.mxu0 0.0
    %2509 = vmatpush1.msra.mxu0 0.0
    %2510 = vmatprep.subr.mxu0 0.0
    %2511 = vmatpush1.msra.mxu0 0.0
    %2512 = vmatprep.subr.mxu0 0.0
    %2513 = vmatpush1.msra.mxu0 0.0
    %2514 = vmatprep.subr.mxu0 0.0
    %2515 = vmatpush1.msra.mxu0 0.0
    %2516 = vmatprep.subr.mxu0 0.0
    %2517 = vmatpush1.msra.mxu0 0.0
    %2518 = vmatprep.subr.mxu0 0.0
    %2519 = vmatpush1.msra.mxu0 0.0
    %2520 = vmatprep.subr.mxu0 0.0
    %2521 = vmatpush1.msra.mxu0 0.0
    %2522 = vmatprep.subr.mxu0 0.0
    %2523 = vmatpush1.msra.mxu0 0.0
    %2524 = vmatprep.subr.mxu0 0.0
    %2525 = vmatpush1.msra.mxu0 0.0
    %2526 = vmatprep.subr.mxu0 0.0
    %2527 = vmatpush1.msra.mxu0 0.0
    %2528 = vmatprep.subr.mxu0 0.0
    %2529 = vmatpush1.msra.mxu0 0.0
    %2530 = vmatprep.subr.mxu0 0.0
    %2531 = vmatpush1.msra.mxu0 0.0
    %2532 = vmatprep.subr.mxu0 0.0
    %2533 = vmatpush1.msra.mxu0 0.0
    %2534 = vmatprep.subr.mxu0 0.0
    %2535 = vmatpush1.msra.mxu0 0.0
    %2536 = vmatprep.subr.mxu0 0.0
    %2537 = vmatpush1.msra.mxu0 0.0
    %2538 = vmatprep.subr.mxu0 0.0
    %2539 = vmatpush1.msra.mxu0 0.0
    %2540 = vmatprep.subr.mxu0 0.0
    %2541 = vmatpush1.msra.mxu0 0.0
    %2542 = vmatprep.subr.mxu0 0.0
    %2543 = vmatpush1.msra.mxu0 0.0
    %2544 = vmatprep.subr.mxu0 0.0
    %2545 = vmatpush1.msra.mxu0 0.0
    %2546 = vmatprep.subr.mxu0 0.0
    %2547 = vmatpush1.msra.mxu0 0.0
    %2548 = vmatprep.subr.mxu0 0.0
    %2549 = vmatpush1.msra.mxu0 0.0
    %2550 = vmatprep.subr.mxu0 0.0
    %2551 = vmatpush1.msra.mxu0 0.0
    %2552 = vmatprep.subr.mxu0 0.0
    %2553 = vmatpush1.msra.mxu0 0.0
    %2554 = vmatprep.subr.mxu0 0.0
    %2555 = vmatpush1.msra.mxu0 0.0
    %2556 = vmatprep.subr.mxu0 0.0
    %2557 = vmatpush1.msra.mxu0 0.0
    %2558 = vmatprep.subr.mxu0 0.0
    %2559 = vmatpush1.msra.mxu0 0.0
    %2560 = vmatprep.subr.mxu0 0.0
    %2561 = vmatpush1.msra.mxu0 0.0
    %2562 = vmatprep.subr.mxu0 0.0
    %2563 = vmatpush1.msra.mxu0 0.0
    %2564 = vmatprep.subr.mxu0 0.0
    %2565 = vmatpush1.msra.mxu0 0.0
    %2566 = vmatprep.subr.mxu0 0.0
    %2567 = vmatpush1.msra.mxu0 0.0
    %2568 = vmatprep.mubr.f32.mxu0 0.0
    %2569 = vmatmul.mubr.f32.gmra.mrb[0].mxu0 %v826
    %v2570 = vpop.f32.mrb[0].mxu0
    %v2571 = vadd.f32 0.0, %v2570
    %v2572 = vpop.f32.mrb[0].mxu0
    %v2573 = vadd.f32 0.0, %v2572
    %2574 = vdwg.mxu0
    %v2575 = vsel %vm75, %v2404, 0
    %v2577 = vsel %vm75, %v2412, 0
    %v2579 = vsel %vm75, %v2411, 0
    %v2581 = vsel %vm75, %v2413, 0
    %2583 = vmatprep.subr.mxu0 %v2577
    %2584 = vmatpush1.msra.mxu0 %v2575
    %2585 = vmatprep.subr.mxu0 0.0
    %2586 = vmatpush1.msra.mxu0 0.0
    %2587 = vmatprep.subr.mxu0 0.0
    %2588 = vmatpush1.msra.mxu0 0.0
    %2589 = vmatprep.subr.mxu0 0.0
    %2590 = vmatpush1.msra.mxu0 0.0
    %2591 = vmatprep.subr.mxu0 0.0
    %2592 = vmatpush1.msra.mxu0 0.0
    %2593 = vmatprep.subr.mxu0 0.0
    %2594 = vmatpush1.msra.mxu0 0.0
    %2595 = vmatprep.subr.mxu0 0.0
    %2596 = vmatpush1.msra.mxu0 0.0
    %2597 = vmatprep.subr.mxu0 0.0
    %2598 = vmatpush1.msra.mxu0 0.0
    %2599 = vmatprep.subr.mxu0 0.0
    %2600 = vmatpush1.msra.mxu0 0.0
    %2601 = vmatprep.subr.mxu0 0.0
    %2602 = vmatpush1.msra.mxu0 0.0
    %2603 = vmatprep.subr.mxu0 0.0
    %2604 = vmatpush1.msra.mxu0 0.0
    %2605 = vmatprep.subr.mxu0 0.0
    %2606 = vmatpush1.msra.mxu0 0.0
    %2607 = vmatprep.subr.mxu0 0.0
    %2608 = vmatpush1.msra.mxu0 0.0
    %2609 = vmatprep.subr.mxu0 0.0
    %2610 = vmatpush1.msra.mxu0 0.0
    %2611 = vmatprep.subr.mxu0 0.0
    %2612 = vmatpush1.msra.mxu0 0.0
    %2613 = vmatprep.subr.mxu0 0.0
    %2614 = vmatpush1.msra.mxu0 0.0
    %2615 = vmatprep.subr.mxu0 0.0
    %2616 = vmatpush1.msra.mxu0 0.0
    %2617 = vmatprep.subr.mxu0 0.0
    %2618 = vmatpush1.msra.mxu0 0.0
    %2619 = vmatprep.subr.mxu0 0.0
    %2620 = vmatpush1.msra.mxu0 0.0
    %2621 = vmatprep.subr.mxu0 0.0
    %2622 = vmatpush1.msra.mxu0 0.0
    %2623 = vmatprep.subr.mxu0 0.0
    %2624 = vmatpush1.msra.mxu0 0.0
    %2625 = vmatprep.subr.mxu0 0.0
    %2626 = vmatpush1.msra.mxu0 0.0
    %2627 = vmatprep.subr.mxu0 0.0
    %2628 = vmatpush1.msra.mxu0 0.0
    %2629 = vmatprep.subr.mxu0 0.0
    %2630 = vmatpush1.msra.mxu0 0.0
    %2631 = vmatprep.subr.mxu0 0.0
    %2632 = vmatpush1.msra.mxu0 0.0
    %2633 = vmatprep.subr.mxu0 0.0
    %2634 = vmatpush1.msra.mxu0 0.0
    %2635 = vmatprep.subr.mxu0 0.0
    %2636 = vmatpush1.msra.mxu0 0.0
    %2637 = vmatprep.subr.mxu0 0.0
    %2638 = vmatpush1.msra.mxu0 0.0
    %2639 = vmatprep.subr.mxu0 0.0
    %2640 = vmatpush1.msra.mxu0 0.0
    %2641 = vmatprep.subr.mxu0 0.0
    %2642 = vmatpush1.msra.mxu0 0.0
    %2643 = vmatprep.subr.mxu0 0.0
    %2644 = vmatpush1.msra.mxu0 0.0
    %2645 = vmatprep.subr.mxu0 0.0
    %2646 = vmatpush1.msra.mxu0 0.0
    %2647 = vmatprep.mubr.f32.mxu0 0.0
    %2648 = vmatmul.mubr.f32.gmra.mrb[0].mxu0 %v979
    %v2649 = vpop.f32.mrb[0].mxu0
    %v2650 = vadd.f32 %v2500, %v2649
    %v2651 = vpop.f32.mrb[0].mxu0
    %v2652 = vadd.f32 %v2502, %v2651
    %2653 = vdwg.mxu0
    %2654 = vmatprep.subr.mxu0 %v2581
    %2655 = vmatpush1.msra.mxu0 %v2579
    %2656 = vmatprep.subr.mxu0 0.0
    %2657 = vmatpush1.msra.mxu0 0.0
    %2658 = vmatprep.subr.mxu0 0.0
    %2659 = vmatpush1.msra.mxu0 0.0
    %2660 = vmatprep.subr.mxu0 0.0
    %2661 = vmatpush1.msra.mxu0 0.0
    %2662 = vmatprep.subr.mxu0 0.0
    %2663 = vmatpush1.msra.mxu0 0.0
    %2664 = vmatprep.subr.mxu0 0.0
    %2665 = vmatpush1.msra.mxu0 0.0
    %2666 = vmatprep.subr.mxu0 0.0
    %2667 = vmatpush1.msra.mxu0 0.0
    %2668 = vmatprep.subr.mxu0 0.0
    %2669 = vmatpush1.msra.mxu0 0.0
    %2670 = vmatprep.subr.mxu0 0.0
    %2671 = vmatpush1.msra.mxu0 0.0
    %2672 = vmatprep.subr.mxu0 0.0
    %2673 = vmatpush1.msra.mxu0 0.0
    %2674 = vmatprep.subr.mxu0 0.0
    %2675 = vmatpush1.msra.mxu0 0.0
    %2676 = vmatprep.subr.mxu0 0.0
    %2677 = vmatpush1.msra.mxu0 0.0
    %2678 = vmatprep.subr.mxu0 0.0
    %2679 = vmatpush1.msra.mxu0 0.0
    %2680 = vmatprep.subr.mxu0 0.0
    %2681 = vmatpush1.msra.mxu0 0.0
    %2682 = vmatprep.subr.mxu0 0.0
    %2683 = vmatpush1.msra.mxu0 0.0
    %2684 = vmatprep.subr.mxu0 0.0
    %2685 = vmatpush1.msra.mxu0 0.0
    %2686 = vmatprep.subr.mxu0 0.0
    %2687 = vmatpush1.msra.mxu0 0.0
    %2688 = vmatprep.subr.mxu0 0.0
    %2689 = vmatpush1.msra.mxu0 0.0
    %2690 = vmatprep.subr.mxu0 0.0
    %2691 = vmatpush1.msra.mxu0 0.0
    %2692 = vmatprep.subr.mxu0 0.0
    %2693 = vmatpush1.msra.mxu0 0.0
    %2694 = vmatprep.subr.mxu0 0.0
    %2695 = vmatpush1.msra.mxu0 0.0
    %2696 = vmatprep.subr.mxu0 0.0
    %2697 = vmatpush1.msra.mxu0 0.0
    %2698 = vmatprep.subr.mxu0 0.0
    %2699 = vmatpush1.msra.mxu0 0.0
    %2700 = vmatprep.subr.mxu0 0.0
    %2701 = vmatpush1.msra.mxu0 0.0
    %2702 = vmatprep.subr.mxu0 0.0
    %2703 = vmatpush1.msra.mxu0 0.0
    %2704 = vmatprep.subr.mxu0 0.0
    %2705 = vmatpush1.msra.mxu0 0.0
    %2706 = vmatprep.subr.mxu0 0.0
    %2707 = vmatpush1.msra.mxu0 0.0
    %2708 = vmatprep.subr.mxu0 0.0
    %2709 = vmatpush1.msra.mxu0 0.0
    %2710 = vmatprep.subr.mxu0 0.0
    %2711 = vmatpush1.msra.mxu0 0.0
    %2712 = vmatprep.subr.mxu0 0.0
    %2713 = vmatpush1.msra.mxu0 0.0
    %2714 = vmatprep.subr.mxu0 0.0
    %2715 = vmatpush1.msra.mxu0 0.0
    %2716 = vmatprep.subr.mxu0 0.0
    %2717 = vmatpush1.msra.mxu0 0.0
    %2718 = vmatprep.mubr.f32.mxu0 0.0
    %2719 = vmatmul.mubr.f32.gmra.mrb[0].mxu0 %v979
    %v2720 = vpop.f32.mrb[0].mxu0
    %v2721 = vadd.f32 %v2571, %v2720
    %v2722 = vpop.f32.mrb[0].mxu0
    %v2723 = vadd.f32 %v2573, %v2722
    %2724 = vdwg.mxu0
    %2725 = vrot.lane.b32.xlu0 %v2404, 126
    %v2726 = vpop.permute.xlu0 %2725
    %2727 = vrot.lane.b32.xlu0 %v2412, 126
    %v2728 = vpop.permute.xlu0 %2727
    %2729 = vrot.lane.b32.xlu0 %v2411, 126
    %v2730 = vpop.permute.xlu0 %2729
    %2731 = vrot.lane.b32.xlu0 %v2413, 126
    %v2732 = vpop.permute.xlu0 %2731
    %v2733 = vsel %vm1139, %v2726, %v2728
    %v2734 = vsel %vm1139, %v2728, %v2730
    %v2735 = vsel %vm1139, %v2730, %v2732
    %v2736 = vsel %vm75, %v2733, 0
    %v2738 = vsel %vm75, %v2734, 0
    %v2740 = vsel %vm75, %v2735, 0
    %v2742 = vsel %vm75, %v2732, 0
    %2744 = vmatprep.subr.mxu0 %v2738
    %2745 = vmatpush1.msra.mxu0 %v2736
    %2746 = vmatprep.subr.mxu0 0.0
    %2747 = vmatpush1.msra.mxu0 0.0
    %2748 = vmatprep.subr.mxu0 0.0
    %2749 = vmatpush1.msra.mxu0 0.0
    %2750 = vmatprep.subr.mxu0 0.0
    %2751 = vmatpush1.msra.mxu0 0.0
    %2752 = vmatprep.subr.mxu0 0.0
    %2753 = vmatpush1.msra.mxu0 0.0
    %2754 = vmatprep.subr.mxu0 0.0
    %2755 = vmatpush1.msra.mxu0 0.0
    %2756 = vmatprep.subr.mxu0 0.0
    %2757 = vmatpush1.msra.mxu0 0.0
    %2758 = vmatprep.subr.mxu0 0.0
    %2759 = vmatpush1.msra.mxu0 0.0
    %2760 = vmatprep.subr.mxu0 0.0
    %2761 = vmatpush1.msra.mxu0 0.0
    %2762 = vmatprep.subr.mxu0 0.0
    %2763 = vmatpush1.msra.mxu0 0.0
    %2764 = vmatprep.subr.mxu0 0.0
    %2765 = vmatpush1.msra.mxu0 0.0
    %2766 = vmatprep.subr.mxu0 0.0
    %2767 = vmatpush1.msra.mxu0 0.0
    %2768 = vmatprep.subr.mxu0 0.0
    %2769 = vmatpush1.msra.mxu0 0.0
    %2770 = vmatprep.subr.mxu0 0.0
    %2771 = vmatpush1.msra.mxu0 0.0
    %2772 = vmatprep.subr.mxu0 0.0
    %2773 = vmatpush1.msra.mxu0 0.0
    %2774 = vmatprep.subr.mxu0 0.0
    %2775 = vmatpush1.msra.mxu0 0.0
    %2776 = vmatprep.subr.mxu0 0.0
    %2777 = vmatpush1.msra.mxu0 0.0
    %2778 = vmatprep.subr.mxu0 0.0
    %2779 = vmatpush1.msra.mxu0 0.0
    %2780 = vmatprep.subr.mxu0 0.0
    %2781 = vmatpush1.msra.mxu0 0.0
    %2782 = vmatprep.subr.mxu0 0.0
    %2783 = vmatpush1.msra.mxu0 0.0
    %2784 = vmatprep.subr.mxu0 0.0
    %2785 = vmatpush1.msra.mxu0 0.0
    %2786 = vmatprep.subr.mxu0 0.0
    %2787 = vmatpush1.msra.mxu0 0.0
    %2788 = vmatprep.subr.mxu0 0.0
    %2789 = vmatpush1.msra.mxu0 0.0
    %2790 = vmatprep.subr.mxu0 0.0
    %2791 = vmatpush1.msra.mxu0 0.0
    %2792 = vmatprep.subr.mxu0 0.0
    %2793 = vmatpush1.msra.mxu0 0.0
    %2794 = vmatprep.subr.mxu0 0.0
    %2795 = vmatpush1.msra.mxu0 0.0
    %2796 = vmatprep.subr.mxu0 0.0
    %2797 = vmatpush1.msra.mxu0 0.0
    %2798 = vmatprep.subr.mxu0 0.0
    %2799 = vmatpush1.msra.mxu0 0.0
    %2800 = vmatprep.subr.mxu0 0.0
    %2801 = vmatpush1.msra.mxu0 0.0
    %2802 = vmatprep.subr.mxu0 0.0
    %2803 = vmatpush1.msra.mxu0 0.0
    %2804 = vmatprep.subr.mxu0 0.0
    %2805 = vmatpush1.msra.mxu0 0.0
    %2806 = vmatprep.subr.mxu0 0.0
    %2807 = vmatpush1.msra.mxu0 0.0
    %2808 = vmatprep.mubr.f32.mxu0 0.0
    %2809 = vmatmul.mubr.f32.gmra.mrb[0].mxu0 %v1144
    %v2810 = vpop.f32.mrb[0].mxu0
    %v2811 = vadd.f32 0.0, %v2810
    %v2812 = vpop.f32.mrb[0].mxu0
    %v2813 = vadd.f32 0.0, %v2812
    %2814 = vdwg.mxu0
    %2815 = vmatprep.subr.mxu0 %v2742
    %2816 = vmatpush1.msra.mxu0 %v2740
    %2817 = vmatprep.subr.mxu0 0.0
    %2818 = vmatpush1.msra.mxu0 0.0
    %2819 = vmatprep.subr.mxu0 0.0
    %2820 = vmatpush1.msra.mxu0 0.0
    %2821 = vmatprep.subr.mxu0 0.0
    %2822 = vmatpush1.msra.mxu0 0.0
    %2823 = vmatprep.subr.mxu0 0.0
    %2824 = vmatpush1.msra.mxu0 0.0
    %2825 = vmatprep.subr.mxu0 0.0
    %2826 = vmatpush1.msra.mxu0 0.0
    %2827 = vmatprep.subr.mxu0 0.0
    %2828 = vmatpush1.msra.mxu0 0.0
    %2829 = vmatprep.subr.mxu0 0.0
    %2830 = vmatpush1.msra.mxu0 0.0
    %2831 = vmatprep.subr.mxu0 0.0
    %2832 = vmatpush1.msra.mxu0 0.0
    %2833 = vmatprep.subr.mxu0 0.0
    %2834 = vmatpush1.msra.mxu0 0.0
    %2835 = vmatprep.subr.mxu0 0.0
    %2836 = vmatpush1.msra.mxu0 0.0
    %2837 = vmatprep.subr.mxu0 0.0
    %2838 = vmatpush1.msra.mxu0 0.0
    %2839 = vmatprep.subr.mxu0 0.0
    %2840 = vmatpush1.msra.mxu0 0.0
    %2841 = vmatprep.subr.mxu0 0.0
    %2842 = vmatpush1.msra.mxu0 0.0
    %2843 = vmatprep.subr.mxu0 0.0
    %2844 = vmatpush1.msra.mxu0 0.0
    %2845 = vmatprep.subr.mxu0 0.0
    %2846 = vmatpush1.msra.mxu0 0.0
    %2847 = vmatprep.subr.mxu0 0.0
    %2848 = vmatpush1.msra.mxu0 0.0
    %2849 = vmatprep.subr.mxu0 0.0
    %2850 = vmatpush1.msra.mxu0 0.0
    %2851 = vmatprep.subr.mxu0 0.0
    %2852 = vmatpush1.msra.mxu0 0.0
    %2853 = vmatprep.subr.mxu0 0.0
    %2854 = vmatpush1.msra.mxu0 0.0
    %2855 = vmatprep.subr.mxu0 0.0
    %2856 = vmatpush1.msra.mxu0 0.0
    %2857 = vmatprep.subr.mxu0 0.0
    %2858 = vmatpush1.msra.mxu0 0.0
    %2859 = vmatprep.subr.mxu0 0.0
    %2860 = vmatpush1.msra.mxu0 0.0
    %2861 = vmatprep.subr.mxu0 0.0
    %2862 = vmatpush1.msra.mxu0 0.0
    %2863 = vmatprep.subr.mxu0 0.0
    %2864 = vmatpush1.msra.mxu0 0.0
    %2865 = vmatprep.subr.mxu0 0.0
    %2866 = vmatpush1.msra.mxu0 0.0
    %2867 = vmatprep.subr.mxu0 0.0
    %2868 = vmatpush1.msra.mxu0 0.0
    %2869 = vmatprep.subr.mxu0 0.0
    %2870 = vmatpush1.msra.mxu0 0.0
    %2871 = vmatprep.subr.mxu0 0.0
    %2872 = vmatpush1.msra.mxu0 0.0
    %2873 = vmatprep.subr.mxu0 0.0
    %2874 = vmatpush1.msra.mxu0 0.0
    %2875 = vmatprep.subr.mxu0 0.0
    %2876 = vmatpush1.msra.mxu0 0.0
    %2877 = vmatprep.subr.mxu0 0.0
    %2878 = vmatpush1.msra.mxu0 0.0
    %2879 = vmatprep.mubr.f32.mxu0 0.0
    %2880 = vmatmul.mubr.f32.gmra.mrb[0].mxu0 %v1144
    %v2881 = vpop.f32.mrb[0].mxu0
    %v2882 = vadd.f32 0.0, %v2881
    %v2883 = vpop.f32.mrb[0].mxu0
    %v2884 = vadd.f32 0.0, %v2883
    %2885 = vdwg.mxu0
    %v2886 = vadd.f32 %v2650, %v2811
    %v2887 = vadd.f32 %v2652, %v2813
    %v2888 = vadd.f32 %v2721, %v2882
    %v2889 = vadd.f32 %v2723, %v2884
    %2890 = vrot.lane.b32.xlu0 %v2404, 106
    %v2891 = vpop.permute.xlu0 %2890
    %2892 = vrot.lane.b32.xlu0 %v2412, 106
    %v2893 = vpop.permute.xlu0 %2892
    %2894 = vrot.lane.b32.xlu0 %v2411, 106
    %v2895 = vpop.permute.xlu0 %2894
    %2896 = vrot.lane.b32.xlu0 %v2413, 106
    %v2897 = vpop.permute.xlu0 %2896
    %v2898 = vsel %vm1308, %v2891, %v2893
    %v2899 = vsel %vm1308, %v2893, %v2895
    %v2900 = vsel %vm1308, %v2895, %v2897
    %v2901 = vsel %vm75, %v2898, 0
    %v2903 = vsel %vm75, %v2899, 0
    %v2905 = vsel %vm75, %v2900, 0
    %v2907 = vsel %vm75, %v2897, 0
    %2909 = vmatprep.subr.mxu0 %v2903
    %2910 = vmatpush1.msra.mxu0 %v2901
    %2911 = vmatprep.subr.mxu0 0.0
    %2912 = vmatpush1.msra.mxu0 0.0
    %2913 = vmatprep.subr.mxu0 0.0
    %2914 = vmatpush1.msra.mxu0 0.0
    %2915 = vmatprep.subr.mxu0 0.0
    %2916 = vmatpush1.msra.mxu0 0.0
    %2917 = vmatprep.subr.mxu0 0.0
    %2918 = vmatpush1.msra.mxu0 0.0
    %2919 = vmatprep.subr.mxu0 0.0
    %2920 = vmatpush1.msra.mxu0 0.0
    %2921 = vmatprep.subr.mxu0 0.0
    %2922 = vmatpush1.msra.mxu0 0.0
    %2923 = vmatprep.subr.mxu0 0.0
    %2924 = vmatpush1.msra.mxu0 0.0
    %2925 = vmatprep.subr.mxu0 0.0
    %2926 = vmatpush1.msra.mxu0 0.0
    %2927 = vmatprep.subr.mxu0 0.0
    %2928 = vmatpush1.msra.mxu0 0.0
    %2929 = vmatprep.subr.mxu0 0.0
    %2930 = vmatpush1.msra.mxu0 0.0
    %2931 = vmatprep.subr.mxu0 0.0
    %2932 = vmatpush1.msra.mxu0 0.0
    %2933 = vmatprep.subr.mxu0 0.0
    %2934 = vmatpush1.msra.mxu0 0.0
    %2935 = vmatprep.subr.mxu0 0.0
    %2936 = vmatpush1.msra.mxu0 0.0
    %2937 = vmatprep.subr.mxu0 0.0
    %2938 = vmatpush1.msra.mxu0 0.0
    %2939 = vmatprep.subr.mxu0 0.0
    %2940 = vmatpush1.msra.mxu0 0.0
    %2941 = vmatprep.subr.mxu0 0.0
    %2942 = vmatpush1.msra.mxu0 0.0
    %2943 = vmatprep.subr.mxu0 0.0
    %2944 = vmatpush1.msra.mxu0 0.0
    %2945 = vmatprep.subr.mxu0 0.0
    %2946 = vmatpush1.msra.mxu0 0.0
    %2947 = vmatprep.subr.mxu0 0.0
    %2948 = vmatpush1.msra.mxu0 0.0
    %2949 = vmatprep.subr.mxu0 0.0
    %2950 = vmatpush1.msra.mxu0 0.0
    %2951 = vmatprep.subr.mxu0 0.0
    %2952 = vmatpush1.msra.mxu0 0.0
    %2953 = vmatprep.subr.mxu0 0.0
    %2954 = vmatpush1.msra.mxu0 0.0
    %2955 = vmatprep.subr.mxu0 0.0
    %2956 = vmatpush1.msra.mxu0 0.0
    %2957 = vmatprep.subr.mxu0 0.0
    %2958 = vmatpush1.msra.mxu0 0.0
    %2959 = vmatprep.subr.mxu0 0.0
    %2960 = vmatpush1.msra.mxu0 0.0
    %2961 = vmatprep.subr.mxu0 0.0
    %2962 = vmatpush1.msra.mxu0 0.0
    %2963 = vmatprep.subr.mxu0 0.0
    %2964 = vmatpush1.msra.mxu0 0.0
    %2965 = vmatprep.subr.mxu0 0.0
    %2966 = vmatpush1.msra.mxu0 0.0
    %2967 = vmatprep.subr.mxu0 0.0
    %2968 = vmatpush1.msra.mxu0 0.0
    %2969 = vmatprep.subr.mxu0 0.0
    %2970 = vmatpush1.msra.mxu0 0.0
    %2971 = vmatprep.subr.mxu0 0.0
    %2972 = vmatpush1.msra.mxu0 0.0
    %2973 = vmatprep.mubr.f32.mxu0 0.0
    %2974 = vmatmul.mubr.f32.gmra.mrb[0].mxu0 %v1313
    %v2975 = vpop.f32.mrb[0].mxu0
    %v2976 = vadd.f32 0.0, %v2975
    %v2977 = vpop.f32.mrb[0].mxu0
    %v2978 = vadd.f32 0.0, %v2977
    %2979 = vdwg.mxu0
    %2980 = vmatprep.subr.mxu0 %v2907
    %2981 = vmatpush1.msra.mxu0 %v2905
    %2982 = vmatprep.subr.mxu0 0.0
    %2983 = vmatpush1.msra.mxu0 0.0
    %2984 = vmatprep.subr.mxu0 0.0
    %2985 = vmatpush1.msra.mxu0 0.0
    %2986 = vmatprep.subr.mxu0 0.0
    %2987 = vmatpush1.msra.mxu0 0.0
    %2988 = vmatprep.subr.mxu0 0.0
    %2989 = vmatpush1.msra.mxu0 0.0
    %2990 = vmatprep.subr.mxu0 0.0
    %2991 = vmatpush1.msra.mxu0 0.0
    %2992 = vmatprep.subr.mxu0 0.0
    %2993 = vmatpush1.msra.mxu0 0.0
    %2994 = vmatprep.subr.mxu0 0.0
    %2995 = vmatpush1.msra.mxu0 0.0
    %2996 = vmatprep.subr.mxu0 0.0
    %2997 = vmatpush1.msra.mxu0 0.0
    %2998 = vmatprep.subr.mxu0 0.0
    %2999 = vmatpush1.msra.mxu0 0.0
    %3000 = vmatprep.subr.mxu0 0.0
    %3001 = vmatpush1.msra.mxu0 0.0
    %3002 = vmatprep.subr.mxu0 0.0
    %3003 = vmatpush1.msra.mxu0 0.0
    %3004 = vmatprep.subr.mxu0 0.0
    %3005 = vmatpush1.msra.mxu0 0.0
    %3006 = vmatprep.subr.mxu0 0.0
    %3007 = vmatpush1.msra.mxu0 0.0
    %3008 = vmatprep.subr.mxu0 0.0
    %3009 = vmatpush1.msra.mxu0 0.0
    %3010 = vmatprep.subr.mxu0 0.0
    %3011 = vmatpush1.msra.mxu0 0.0
    %3012 = vmatprep.subr.mxu0 0.0
    %3013 = vmatpush1.msra.mxu0 0.0
    %3014 = vmatprep.subr.mxu0 0.0
    %3015 = vmatpush1.msra.mxu0 0.0
    %3016 = vmatprep.subr.mxu0 0.0
    %3017 = vmatpush1.msra.mxu0 0.0
    %3018 = vmatprep.subr.mxu0 0.0
    %3019 = vmatpush1.msra.mxu0 0.0
    %3020 = vmatprep.subr.mxu0 0.0
    %3021 = vmatpush1.msra.mxu0 0.0
    %3022 = vmatprep.subr.mxu0 0.0
    %3023 = vmatpush1.msra.mxu0 0.0
    %3024 = vmatprep.subr.mxu0 0.0
    %3025 = vmatpush1.msra.mxu0 0.0
    %3026 = vmatprep.subr.mxu0 0.0
    %3027 = vmatpush1.msra.mxu0 0.0
    %3028 = vmatprep.subr.mxu0 0.0
    %3029 = vmatpush1.msra.mxu0 0.0
    %3030 = vmatprep.subr.mxu0 0.0
    %3031 = vmatpush1.msra.mxu0 0.0
    %3032 = vmatprep.subr.mxu0 0.0
    %3033 = vmatpush1.msra.mxu0 0.0
    %3034 = vmatprep.subr.mxu0 0.0
    %3035 = vmatpush1.msra.mxu0 0.0
    %3036 = vmatprep.subr.mxu0 0.0
    %3037 = vmatpush1.msra.mxu0 0.0
    %3038 = vmatprep.subr.mxu0 0.0
    %3039 = vmatpush1.msra.mxu0 0.0
    %3040 = vmatprep.subr.mxu0 0.0
    %3041 = vmatpush1.msra.mxu0 0.0
    %3042 = vmatprep.subr.mxu0 0.0
    %3043 = vmatpush1.msra.mxu0 0.0
    %3044 = vmatprep.mubr.f32.mxu0 0.0
    %3045 = vmatmul.mubr.f32.gmra.mrb[0].mxu0 %v1313
    %v3046 = vpop.f32.mrb[0].mxu0
    %v3047 = vadd.f32 0.0, %v3046
    %v3048 = vpop.f32.mrb[0].mxu0
    %v3049 = vadd.f32 0.0, %v3048
    %3050 = vdwg.mxu0
    %v3051 = vadd.f32 %v2886, %v2976
    %v3052 = vadd.f32 %v2887, %v2978
    %v3053 = vadd.f32 %v2888, %v3047
    %v3054 = vadd.f32 %v2889, %v3049
    %3055 = vrot.lane.b32.xlu0 %v2404, 105
    %v3056 = vpop.permute.xlu0 %3055
    %3057 = vrot.lane.b32.xlu0 %v2412, 105
    %v3058 = vpop.permute.xlu0 %3057
    %3059 = vrot.lane.b32.xlu0 %v2411, 105
    %v3060 = vpop.permute.xlu0 %3059
    %3061 = vrot.lane.b32.xlu0 %v2413, 105
    %v3062 = vpop.permute.xlu0 %3061
    %v3063 = vsel %vm1477, %v3056, %v3058
    %v3064 = vsel %vm1477, %v3058, %v3060
    %v3065 = vsel %vm1477, %v3060, %v3062
    %v3066 = vsel %vm75, %v3063, 0
    %v3068 = vsel %vm75, %v3064, 0
    %v3070 = vsel %vm75, %v3065, 0
    %v3072 = vsel %vm75, %v3062, 0
    %3074 = vmatprep.subr.mxu0 %v3068
    %3075 = vmatpush1.msra.mxu0 %v3066
    %3076 = vmatprep.subr.mxu0 0.0
    %3077 = vmatpush1.msra.mxu0 0.0
    %3078 = vmatprep.subr.mxu0 0.0
    %3079 = vmatpush1.msra.mxu0 0.0
    %3080 = vmatprep.subr.mxu0 0.0
    %3081 = vmatpush1.msra.mxu0 0.0
    %3082 = vmatprep.subr.mxu0 0.0
    %3083 = vmatpush1.msra.mxu0 0.0
    %3084 = vmatprep.subr.mxu0 0.0
    %3085 = vmatpush1.msra.mxu0 0.0
    %3086 = vmatprep.subr.mxu0 0.0
    %3087 = vmatpush1.msra.mxu0 0.0
    %3088 = vmatprep.subr.mxu0 0.0
    %3089 = vmatpush1.msra.mxu0 0.0
    %3090 = vmatprep.subr.mxu0 0.0
    %3091 = vmatpush1.msra.mxu0 0.0
    %3092 = vmatprep.subr.mxu0 0.0
    %3093 = vmatpush1.msra.mxu0 0.0
    %3094 = vmatprep.subr.mxu0 0.0
    %3095 = vmatpush1.msra.mxu0 0.0
    %3096 = vmatprep.subr.mxu0 0.0
    %3097 = vmatpush1.msra.mxu0 0.0
    %3098 = vmatprep.subr.mxu0 0.0
    %3099 = vmatpush1.msra.mxu0 0.0
    %3100 = vmatprep.subr.mxu0 0.0
    %3101 = vmatpush1.msra.mxu0 0.0
    %3102 = vmatprep.subr.mxu0 0.0
    %3103 = vmatpush1.msra.mxu0 0.0
    %3104 = vmatprep.subr.mxu0 0.0
    %3105 = vmatpush1.msra.mxu0 0.0
    %3106 = vmatprep.subr.mxu0 0.0
    %3107 = vmatpush1.msra.mxu0 0.0
    %3108 = vmatprep.subr.mxu0 0.0
    %3109 = vmatpush1.msra.mxu0 0.0
    %3110 = vmatprep.subr.mxu0 0.0
    %3111 = vmatpush1.msra.mxu0 0.0
    %3112 = vmatprep.subr.mxu0 0.0
    %3113 = vmatpush1.msra.mxu0 0.0
    %3114 = vmatprep.subr.mxu0 0.0
    %3115 = vmatpush1.msra.mxu0 0.0
    %3116 = vmatprep.subr.mxu0 0.0
    %3117 = vmatpush1.msra.mxu0 0.0
    %3118 = vmatprep.subr.mxu0 0.0
    %3119 = vmatpush1.msra.mxu0 0.0
    %3120 = vmatprep.subr.mxu0 0.0
    %3121 = vmatpush1.msra.mxu0 0.0
    %3122 = vmatprep.subr.mxu0 0.0
    %3123 = vmatpush1.msra.mxu0 0.0
    %3124 = vmatprep.subr.mxu0 0.0
    %3125 = vmatpush1.msra.mxu0 0.0
    %3126 = vmatprep.subr.mxu0 0.0
    %3127 = vmatpush1.msra.mxu0 0.0
    %3128 = vmatprep.subr.mxu0 0.0
    %3129 = vmatpush1.msra.mxu0 0.0
    %3130 = vmatprep.subr.mxu0 0.0
    %3131 = vmatpush1.msra.mxu0 0.0
    %3132 = vmatprep.subr.mxu0 0.0
    %3133 = vmatpush1.msra.mxu0 0.0
    %3134 = vmatprep.subr.mxu0 0.0
    %3135 = vmatpush1.msra.mxu0 0.0
    %3136 = vmatprep.subr.mxu0 0.0
    %3137 = vmatpush1.msra.mxu0 0.0
    %3138 = vmatprep.mubr.f32.mxu0 0.0
    %3139 = vmatmul.mubr.f32.gmra.mrb[0].mxu0 %v1482
    %v3140 = vpop.f32.mrb[0].mxu0
    %v3141 = vadd.f32 0.0, %v3140
    %v3142 = vpop.f32.mrb[0].mxu0
    %v3143 = vadd.f32 0.0, %v3142
    %3144 = vdwg.mxu0
    %3145 = vmatprep.subr.mxu0 %v3072
    %3146 = vmatpush1.msra.mxu0 %v3070
    %3147 = vmatprep.subr.mxu0 0.0
    %3148 = vmatpush1.msra.mxu0 0.0
    %3149 = vmatprep.subr.mxu0 0.0
    %3150 = vmatpush1.msra.mxu0 0.0
    %3151 = vmatprep.subr.mxu0 0.0
    %3152 = vmatpush1.msra.mxu0 0.0
    %3153 = vmatprep.subr.mxu0 0.0
    %3154 = vmatpush1.msra.mxu0 0.0
    %3155 = vmatprep.subr.mxu0 0.0
    %3156 = vmatpush1.msra.mxu0 0.0
    %3157 = vmatprep.subr.mxu0 0.0
    %3158 = vmatpush1.msra.mxu0 0.0
    %3159 = vmatprep.subr.mxu0 0.0
    %3160 = vmatpush1.msra.mxu0 0.0
    %3161 = vmatprep.subr.mxu0 0.0
    %3162 = vmatpush1.msra.mxu0 0.0
    %3163 = vmatprep.subr.mxu0 0.0
    %3164 = vmatpush1.msra.mxu0 0.0
    %3165 = vmatprep.subr.mxu0 0.0
    %3166 = vmatpush1.msra.mxu0 0.0
    %3167 = vmatprep.subr.mxu0 0.0
    %3168 = vmatpush1.msra.mxu0 0.0
    %3169 = vmatprep.subr.mxu0 0.0
    %3170 = vmatpush1.msra.mxu0 0.0
    %3171 = vmatprep.subr.mxu0 0.0
    %3172 = vmatpush1.msra.mxu0 0.0
    %3173 = vmatprep.subr.mxu0 0.0
    %3174 = vmatpush1.msra.mxu0 0.0
    %3175 = vmatprep.subr.mxu0 0.0
    %3176 = vmatpush1.msra.mxu0 0.0
    %3177 = vmatprep.subr.mxu0 0.0
    %3178 = vmatpush1.msra.mxu0 0.0
    %3179 = vmatprep.subr.mxu0 0.0
    %3180 = vmatpush1.msra.mxu0 0.0
    %3181 = vmatprep.subr.mxu0 0.0
    %3182 = vmatpush1.msra.mxu0 0.0
    %3183 = vmatprep.subr.mxu0 0.0
    %3184 = vmatpush1.msra.mxu0 0.0
    %3185 = vmatprep.subr.mxu0 0.0
    %3186 = vmatpush1.msra.mxu0 0.0
    %3187 = vmatprep.subr.mxu0 0.0
    %3188 = vmatpush1.msra.mxu0 0.0
    %3189 = vmatprep.subr.mxu0 0.0
    %3190 = vmatpush1.msra.mxu0 0.0
    %3191 = vmatprep.subr.mxu0 0.0
    %3192 = vmatpush1.msra.mxu0 0.0
    %3193 = vmatprep.subr.mxu0 0.0
    %3194 = vmatpush1.msra.mxu0 0.0
    %3195 = vmatprep.subr.mxu0 0.0
    %3196 = vmatpush1.msra.mxu0 0.0
    %3197 = vmatprep.subr.mxu0 0.0
    %3198 = vmatpush1.msra.mxu0 0.0
    %3199 = vmatprep.subr.mxu0 0.0
    %3200 = vmatpush1.msra.mxu0 0.0
    %3201 = vmatprep.subr.mxu0 0.0
    %3202 = vmatpush1.msra.mxu0 0.0
    %3203 = vmatprep.subr.mxu0 0.0
    %3204 = vmatpush1.msra.mxu0 0.0
    %3205 = vmatprep.subr.mxu0 0.0
    %3206 = vmatpush1.msra.mxu0 0.0
    %3207 = vmatprep.subr.mxu0 0.0
    %3208 = vmatpush1.msra.mxu0 0.0
    %3209 = vmatprep.mubr.f32.mxu0 0.0
    %3210 = vmatmul.mubr.f32.gmra.mrb[0].mxu0 %v1482
    %v3211 = vpop.f32.mrb[0].mxu0
    %v3212 = vadd.f32 0.0, %v3211
    %v3213 = vpop.f32.mrb[0].mxu0
    %v3214 = vadd.f32 0.0, %v3213
    %3215 = vdwg.mxu0
    %v3216 = vadd.f32 %v3051, %v3141
    %v3217 = vadd.f32 %v3052, %v3143
    %v3218 = vadd.f32 %v3053, %v3212
    %v3219 = vadd.f32 %v3054, %v3214
    %3220 = vrot.lane.b32.xlu0 %v2404, 104
    %v3221 = vpop.permute.xlu0 %3220
    %3222 = vrot.lane.b32.xlu0 %v2412, 104
    %v3223 = vpop.permute.xlu0 %3222
    %3224 = vrot.lane.b32.xlu0 %v2411, 104
    %v3225 = vpop.permute.xlu0 %3224
    %3226 = vrot.lane.b32.xlu0 %v2413, 104
    %v3227 = vpop.permute.xlu0 %3226
    %v3228 = vsel %vm1646, %v3221, %v3223
    %v3229 = vsel %vm1646, %v3223, %v3225
    %v3230 = vsel %vm1646, %v3225, %v3227
    %v3231 = vsel %vm75, %v3228, 0
    %v3233 = vsel %vm75, %v3229, 0
    %v3235 = vsel %vm75, %v3230, 0
    %v3237 = vsel %vm75, %v3227, 0
    %3239 = vmatprep.subr.mxu0 %v3233
    %3240 = vmatpush1.msra.mxu0 %v3231
    %3241 = vmatprep.subr.mxu0 0.0
    %3242 = vmatpush1.msra.mxu0 0.0
    %3243 = vmatprep.subr.mxu0 0.0
    %3244 = vmatpush1.msra.mxu0 0.0
    %3245 = vmatprep.subr.mxu0 0.0
    %3246 = vmatpush1.msra.mxu0 0.0
    %3247 = vmatprep.subr.mxu0 0.0
    %3248 = vmatpush1.msra.mxu0 0.0
    %3249 = vmatprep.subr.mxu0 0.0
    %3250 = vmatpush1.msra.mxu0 0.0
    %3251 = vmatprep.subr.mxu0 0.0
    %3252 = vmatpush1.msra.mxu0 0.0
    %3253 = vmatprep.subr.mxu0 0.0
    %3254 = vmatpush1.msra.mxu0 0.0
    %3255 = vmatprep.subr.mxu0 0.0
    %3256 = vmatpush1.msra.mxu0 0.0
    %3257 = vmatprep.subr.mxu0 0.0
    %3258 = vmatpush1.msra.mxu0 0.0
    %3259 = vmatprep.subr.mxu0 0.0
    %3260 = vmatpush1.msra.mxu0 0.0
    %3261 = vmatprep.subr.mxu0 0.0
    %3262 = vmatpush1.msra.mxu0 0.0
    %3263 = vmatprep.subr.mxu0 0.0
    %3264 = vmatpush1.msra.mxu0 0.0
    %3265 = vmatprep.subr.mxu0 0.0
    %3266 = vmatpush1.msra.mxu0 0.0
    %3267 = vmatprep.subr.mxu0 0.0
    %3268 = vmatpush1.msra.mxu0 0.0
    %3269 = vmatprep.subr.mxu0 0.0
    %3270 = vmatpush1.msra.mxu0 0.0
    %3271 = vmatprep.subr.mxu0 0.0
    %3272 = vmatpush1.msra.mxu0 0.0
    %3273 = vmatprep.subr.mxu0 0.0
    %3274 = vmatpush1.msra.mxu0 0.0
    %3275 = vmatprep.subr.mxu0 0.0
    %3276 = vmatpush1.msra.mxu0 0.0
    %3277 = vmatprep.subr.mxu0 0.0
    %3278 = vmatpush1.msra.mxu0 0.0
    %3279 = vmatprep.subr.mxu0 0.0
    %3280 = vmatpush1.msra.mxu0 0.0
    %3281 = vmatprep.subr.mxu0 0.0
    %3282 = vmatpush1.msra.mxu0 0.0
    %3283 = vmatprep.subr.mxu0 0.0
    %3284 = vmatpush1.msra.mxu0 0.0
    %3285 = vmatprep.subr.mxu0 0.0
    %3286 = vmatpush1.msra.mxu0 0.0
    %3287 = vmatprep.subr.mxu0 0.0
    %3288 = vmatpush1.msra.mxu0 0.0
    %3289 = vmatprep.subr.mxu0 0.0
    %3290 = vmatpush1.msra.mxu0 0.0
    %3291 = vmatprep.subr.mxu0 0.0
    %3292 = vmatpush1.msra.mxu0 0.0
    %3293 = vmatprep.subr.mxu0 0.0
    %3294 = vmatpush1.msra.mxu0 0.0
    %3295 = vmatprep.subr.mxu0 0.0
    %3296 = vmatpush1.msra.mxu0 0.0
    %3297 = vmatprep.subr.mxu0 0.0
    %3298 = vmatpush1.msra.mxu0 0.0
    %3299 = vmatprep.subr.mxu0 0.0
    %3300 = vmatpush1.msra.mxu0 0.0
    %3301 = vmatprep.subr.mxu0 0.0
    %3302 = vmatpush1.msra.mxu0 0.0
    %3303 = vmatprep.mubr.f32.mxu0 0.0
    %3304 = vmatmul.mubr.f32.gmra.mrb[0].mxu0 %v1651
    %v3305 = vpop.f32.mrb[0].mxu0
    %v3306 = vadd.f32 0.0, %v3305
    %v3307 = vpop.f32.mrb[0].mxu0
    %v3308 = vadd.f32 0.0, %v3307
    %3309 = vdwg.mxu0
    %3310 = vmatprep.subr.mxu0 %v3237
    %3311 = vmatpush1.msra.mxu0 %v3235
    %3312 = vmatprep.subr.mxu0 0.0
    %3313 = vmatpush1.msra.mxu0 0.0
    %3314 = vmatprep.subr.mxu0 0.0
    %3315 = vmatpush1.msra.mxu0 0.0
    %3316 = vmatprep.subr.mxu0 0.0
    %3317 = vmatpush1.msra.mxu0 0.0
    %3318 = vmatprep.subr.mxu0 0.0
    %3319 = vmatpush1.msra.mxu0 0.0
    %3320 = vmatprep.subr.mxu0 0.0
    %3321 = vmatpush1.msra.mxu0 0.0
    %3322 = vmatprep.subr.mxu0 0.0
    %3323 = vmatpush1.msra.mxu0 0.0
    %3324 = vmatprep.subr.mxu0 0.0
    %3325 = vmatpush1.msra.mxu0 0.0
    %3326 = vmatprep.subr.mxu0 0.0
    %3327 = vmatpush1.msra.mxu0 0.0
    %3328 = vmatprep.subr.mxu0 0.0
    %3329 = vmatpush1.msra.mxu0 0.0
    %3330 = vmatprep.subr.mxu0 0.0
    %3331 = vmatpush1.msra.mxu0 0.0
    %3332 = vmatprep.subr.mxu0 0.0
    %3333 = vmatpush1.msra.mxu0 0.0
    %3334 = vmatprep.subr.mxu0 0.0
    %3335 = vmatpush1.msra.mxu0 0.0
    %3336 = vmatprep.subr.mxu0 0.0
    %3337 = vmatpush1.msra.mxu0 0.0
    %3338 = vmatprep.subr.mxu0 0.0
    %3339 = vmatpush1.msra.mxu0 0.0
    %3340 = vmatprep.subr.mxu0 0.0
    %3341 = vmatpush1.msra.mxu0 0.0
    %3342 = vmatprep.subr.mxu0 0.0
    %3343 = vmatpush1.msra.mxu0 0.0
    %3344 = vmatprep.subr.mxu0 0.0
    %3345 = vmatpush1.msra.mxu0 0.0
    %3346 = vmatprep.subr.mxu0 0.0
    %3347 = vmatpush1.msra.mxu0 0.0
    %3348 = vmatprep.subr.mxu0 0.0
    %3349 = vmatpush1.msra.mxu0 0.0
    %3350 = vmatprep.subr.mxu0 0.0
    %3351 = vmatpush1.msra.mxu0 0.0
    %3352 = vmatprep.subr.mxu0 0.0
    %3353 = vmatpush1.msra.mxu0 0.0
    %3354 = vmatprep.subr.mxu0 0.0
    %3355 = vmatpush1.msra.mxu0 0.0
    %3356 = vmatprep.subr.mxu0 0.0
    %3357 = vmatpush1.msra.mxu0 0.0
    %3358 = vmatprep.subr.mxu0 0.0
    %3359 = vmatpush1.msra.mxu0 0.0
    %3360 = vmatprep.subr.mxu0 0.0
    %3361 = vmatpush1.msra.mxu0 0.0
    %3362 = vmatprep.subr.mxu0 0.0
    %3363 = vmatpush1.msra.mxu0 0.0
    %3364 = vmatprep.subr.mxu0 0.0
    %3365 = vmatpush1.msra.mxu0 0.0
    %3366 = vmatprep.subr.mxu0 0.0
    %3367 = vmatpush1.msra.mxu0 0.0
    %3368 = vmatprep.subr.mxu0 0.0
    %3369 = vmatpush1.msra.mxu0 0.0
    %3370 = vmatprep.subr.mxu0 0.0
    %3371 = vmatpush1.msra.mxu0 0.0
    %3372 = vmatprep.subr.mxu0 0.0
    %3373 = vmatpush1.msra.mxu0 0.0
    %3374 = vmatprep.mubr.f32.mxu0 0.0
    %3375 = vmatmul.mubr.f32.gmra.mrb[0].mxu0 %v1651
    %v3376 = vpop.f32.mrb[0].mxu0
    %v3377 = vadd.f32 0.0, %v3376
    %v3378 = vpop.f32.mrb[0].mxu0
    %v3379 = vadd.f32 0.0, %v3378
    %3380 = vdwg.mxu0
    %v3381 = vadd.f32 %v3216, %v3306
    %v3382 = vadd.f32 %v3217, %v3308
    %v3383 = vadd.f32 %v3218, %v3377
    %v3384 = vadd.f32 %v3219, %v3379
    %3385 = vrot.lane.b32.xlu0 %v2404, 84
    %v3386 = vpop.permute.xlu0 %3385
    %3387 = vrot.lane.b32.xlu0 %v2412, 84
    %v3388 = vpop.permute.xlu0 %3387
    %3389 = vrot.lane.b32.xlu0 %v2411, 84
    %v3390 = vpop.permute.xlu0 %3389
    %3391 = vrot.lane.b32.xlu0 %v2413, 84
    %v3392 = vpop.permute.xlu0 %3391
    %v3393 = vsel %vm1815, %v3386, %v3388
    %v3394 = vsel %vm1815, %v3388, %v3390
    %v3395 = vsel %vm1815, %v3390, %v3392
    %v3396 = vsel %vm75, %v3393, 0
    %v3398 = vsel %vm75, %v3394, 0
    %v3400 = vsel %vm75, %v3395, 0
    %v3402 = vsel %vm75, %v3392, 0
    %3404 = vmatprep.subr.mxu0 %v3398
    %3405 = vmatpush1.msra.mxu0 %v3396
    %3406 = vmatprep.subr.mxu0 0.0
    %3407 = vmatpush1.msra.mxu0 0.0
    %3408 = vmatprep.subr.mxu0 0.0
    %3409 = vmatpush1.msra.mxu0 0.0
    %3410 = vmatprep.subr.mxu0 0.0
    %3411 = vmatpush1.msra.mxu0 0.0
    %3412 = vmatprep.subr.mxu0 0.0
    %3413 = vmatpush1.msra.mxu0 0.0
    %3414 = vmatprep.subr.mxu0 0.0
    %3415 = vmatpush1.msra.mxu0 0.0
    %3416 = vmatprep.subr.mxu0 0.0
    %3417 = vmatpush1.msra.mxu0 0.0
    %3418 = vmatprep.subr.mxu0 0.0
    %3419 = vmatpush1.msra.mxu0 0.0
    %3420 = vmatprep.subr.mxu0 0.0
    %3421 = vmatpush1.msra.mxu0 0.0
    %3422 = vmatprep.subr.mxu0 0.0
    %3423 = vmatpush1.msra.mxu0 0.0
    %3424 = vmatprep.subr.mxu0 0.0
    %3425 = vmatpush1.msra.mxu0 0.0
    %3426 = vmatprep.subr.mxu0 0.0
    %3427 = vmatpush1.msra.mxu0 0.0
    %3428 = vmatprep.subr.mxu0 0.0
    %3429 = vmatpush1.msra.mxu0 0.0
    %3430 = vmatprep.subr.mxu0 0.0
    %3431 = vmatpush1.msra.mxu0 0.0
    %3432 = vmatprep.subr.mxu0 0.0
    %3433 = vmatpush1.msra.mxu0 0.0
    %3434 = vmatprep.subr.mxu0 0.0
    %3435 = vmatpush1.msra.mxu0 0.0
    %3436 = vmatprep.subr.mxu0 0.0
    %3437 = vmatpush1.msra.mxu0 0.0
    %3438 = vmatprep.subr.mxu0 0.0
    %3439 = vmatpush1.msra.mxu0 0.0
    %3440 = vmatprep.subr.mxu0 0.0
    %3441 = vmatpush1.msra.mxu0 0.0
    %3442 = vmatprep.subr.mxu0 0.0
    %3443 = vmatpush1.msra.mxu0 0.0
    %3444 = vmatprep.subr.mxu0 0.0
    %3445 = vmatpush1.msra.mxu0 0.0
    %3446 = vmatprep.subr.mxu0 0.0
    %3447 = vmatpush1.msra.mxu0 0.0
    %3448 = vmatprep.subr.mxu0 0.0
    %3449 = vmatpush1.msra.mxu0 0.0
    %3450 = vmatprep.subr.mxu0 0.0
    %3451 = vmatpush1.msra.mxu0 0.0
    %3452 = vmatprep.subr.mxu0 0.0
    %3453 = vmatpush1.msra.mxu0 0.0
    %3454 = vmatprep.subr.mxu0 0.0
    %3455 = vmatpush1.msra.mxu0 0.0
    %3456 = vmatprep.subr.mxu0 0.0
    %3457 = vmatpush1.msra.mxu0 0.0
    %3458 = vmatprep.subr.mxu0 0.0
    %3459 = vmatpush1.msra.mxu0 0.0
    %3460 = vmatprep.subr.mxu0 0.0
    %3461 = vmatpush1.msra.mxu0 0.0
    %3462 = vmatprep.subr.mxu0 0.0
    %3463 = vmatpush1.msra.mxu0 0.0
    %3464 = vmatprep.subr.mxu0 0.0
    %3465 = vmatpush1.msra.mxu0 0.0
    %3466 = vmatprep.subr.mxu0 0.0
    %3467 = vmatpush1.msra.mxu0 0.0
    %3468 = vmatprep.mubr.f32.mxu0 0.0
    %3469 = vmatmul.mubr.f32.gmra.mrb[0].mxu0 %v1820
    %v3470 = vpop.f32.mrb[0].mxu0
    %v3471 = vadd.f32 0.0, %v3470
    %v3472 = vpop.f32.mrb[0].mxu0
    %v3473 = vadd.f32 0.0, %v3472
    %3474 = vdwg.mxu0
    %3475 = vmatprep.subr.mxu0 %v3402
    %3476 = vmatpush1.msra.mxu0 %v3400
    %3477 = vmatprep.subr.mxu0 0.0
    %3478 = vmatpush1.msra.mxu0 0.0
    %3479 = vmatprep.subr.mxu0 0.0
    %3480 = vmatpush1.msra.mxu0 0.0
    %3481 = vmatprep.subr.mxu0 0.0
    %3482 = vmatpush1.msra.mxu0 0.0
    %3483 = vmatprep.subr.mxu0 0.0
    %3484 = vmatpush1.msra.mxu0 0.0
    %3485 = vmatprep.subr.mxu0 0.0
    %3486 = vmatpush1.msra.mxu0 0.0
    %3487 = vmatprep.subr.mxu0 0.0
    %3488 = vmatpush1.msra.mxu0 0.0
    %3489 = vmatprep.subr.mxu0 0.0
    %3490 = vmatpush1.msra.mxu0 0.0
    %3491 = vmatprep.subr.mxu0 0.0
    %3492 = vmatpush1.msra.mxu0 0.0
    %3493 = vmatprep.subr.mxu0 0.0
    %3494 = vmatpush1.msra.mxu0 0.0
    %3495 = vmatprep.subr.mxu0 0.0
    %3496 = vmatpush1.msra.mxu0 0.0
    %3497 = vmatprep.subr.mxu0 0.0
    %3498 = vmatpush1.msra.mxu0 0.0
    %3499 = vmatprep.subr.mxu0 0.0
    %3500 = vmatpush1.msra.mxu0 0.0
    %3501 = vmatprep.subr.mxu0 0.0
    %3502 = vmatpush1.msra.mxu0 0.0
    %3503 = vmatprep.subr.mxu0 0.0
    %3504 = vmatpush1.msra.mxu0 0.0
    %3505 = vmatprep.subr.mxu0 0.0
    %3506 = vmatpush1.msra.mxu0 0.0
    %3507 = vmatprep.subr.mxu0 0.0
    %3508 = vmatpush1.msra.mxu0 0.0
    %3509 = vmatprep.subr.mxu0 0.0
    %3510 = vmatpush1.msra.mxu0 0.0
    %3511 = vmatprep.subr.mxu0 0.0
    %3512 = vmatpush1.msra.mxu0 0.0
    %3513 = vmatprep.subr.mxu0 0.0
    %3514 = vmatpush1.msra.mxu0 0.0
    %3515 = vmatprep.subr.mxu0 0.0
    %3516 = vmatpush1.msra.mxu0 0.0
    %3517 = vmatprep.subr.mxu0 0.0
    %3518 = vmatpush1.msra.mxu0 0.0
    %3519 = vmatprep.subr.mxu0 0.0
    %3520 = vmatpush1.msra.mxu0 0.0
    %3521 = vmatprep.subr.mxu0 0.0
    %3522 = vmatpush1.msra.mxu0 0.0
    %3523 = vmatprep.subr.mxu0 0.0
    %3524 = vmatpush1.msra.mxu0 0.0
    %3525 = vmatprep.subr.mxu0 0.0
    %3526 = vmatpush1.msra.mxu0 0.0
    %3527 = vmatprep.subr.mxu0 0.0
    %3528 = vmatpush1.msra.mxu0 0.0
    %3529 = vmatprep.subr.mxu0 0.0
    %3530 = vmatpush1.msra.mxu0 0.0
    %3531 = vmatprep.subr.mxu0 0.0
    %3532 = vmatpush1.msra.mxu0 0.0
    %3533 = vmatprep.subr.mxu0 0.0
    %3534 = vmatpush1.msra.mxu0 0.0
    %3535 = vmatprep.subr.mxu0 0.0
    %3536 = vmatpush1.msra.mxu0 0.0
    %3537 = vmatprep.subr.mxu0 0.0
    %3538 = vmatpush1.msra.mxu0 0.0
    %3539 = vmatprep.mubr.f32.mxu0 0.0
    %3540 = vmatmul.mubr.f32.gmra.mrb[0].mxu0 %v1820
    %v3541 = vpop.f32.mrb[0].mxu0
    %v3542 = vadd.f32 0.0, %v3541
    %v3543 = vpop.f32.mrb[0].mxu0
    %v3544 = vadd.f32 0.0, %v3543
    %3545 = vdwg.mxu0
    %v3546 = vadd.f32 %v3381, %v3471
    %v3547 = vadd.f32 %v3382, %v3473
    %v3548 = vadd.f32 %v3383, %v3542
    %v3549 = vadd.f32 %v3384, %v3544
    %3550 = vrot.lane.b32.xlu0 %v2404, 83
    %v3551 = vpop.permute.xlu0 %3550
    %3552 = vrot.lane.b32.xlu0 %v2412, 83
    %v3553 = vpop.permute.xlu0 %3552
    %3554 = vrot.lane.b32.xlu0 %v2411, 83
    %v3555 = vpop.permute.xlu0 %3554
    %3556 = vrot.lane.b32.xlu0 %v2413, 83
    %v3557 = vpop.permute.xlu0 %3556
    %v3558 = vsel %vm1984, %v3551, %v3553
    %v3559 = vsel %vm1984, %v3553, %v3555
    %v3560 = vsel %vm1984, %v3555, %v3557
    %v3561 = vsel %vm75, %v3558, 0
    %v3563 = vsel %vm75, %v3559, 0
    %v3565 = vsel %vm75, %v3560, 0
    %v3567 = vsel %vm75, %v3557, 0
    %3569 = vmatprep.subr.mxu0 %v3563
    %3570 = vmatpush1.msra.mxu0 %v3561
    %3571 = vmatprep.subr.mxu0 0.0
    %3572 = vmatpush1.msra.mxu0 0.0
    %3573 = vmatprep.subr.mxu0 0.0
    %3574 = vmatpush1.msra.mxu0 0.0
    %3575 = vmatprep.subr.mxu0 0.0
    %3576 = vmatpush1.msra.mxu0 0.0
    %3577 = vmatprep.subr.mxu0 0.0
    %3578 = vmatpush1.msra.mxu0 0.0
    %3579 = vmatprep.subr.mxu0 0.0
    %3580 = vmatpush1.msra.mxu0 0.0
    %3581 = vmatprep.subr.mxu0 0.0
    %3582 = vmatpush1.msra.mxu0 0.0
    %3583 = vmatprep.subr.mxu0 0.0
    %3584 = vmatpush1.msra.mxu0 0.0
    %3585 = vmatprep.subr.mxu0 0.0
    %3586 = vmatpush1.msra.mxu0 0.0
    %3587 = vmatprep.subr.mxu0 0.0
    %3588 = vmatpush1.msra.mxu0 0.0
    %3589 = vmatprep.subr.mxu0 0.0
    %3590 = vmatpush1.msra.mxu0 0.0
    %3591 = vmatprep.subr.mxu0 0.0
    %3592 = vmatpush1.msra.mxu0 0.0
    %3593 = vmatprep.subr.mxu0 0.0
    %3594 = vmatpush1.msra.mxu0 0.0
    %3595 = vmatprep.subr.mxu0 0.0
    %3596 = vmatpush1.msra.mxu0 0.0
    %3597 = vmatprep.subr.mxu0 0.0
    %3598 = vmatpush1.msra.mxu0 0.0
    %3599 = vmatprep.subr.mxu0 0.0
    %3600 = vmatpush1.msra.mxu0 0.0
    %3601 = vmatprep.subr.mxu0 0.0
    %3602 = vmatpush1.msra.mxu0 0.0
    %3603 = vmatprep.subr.mxu0 0.0
    %3604 = vmatpush1.msra.mxu0 0.0
    %3605 = vmatprep.subr.mxu0 0.0
    %3606 = vmatpush1.msra.mxu0 0.0
    %3607 = vmatprep.subr.mxu0 0.0
    %3608 = vmatpush1.msra.mxu0 0.0
    %3609 = vmatprep.subr.mxu0 0.0
    %3610 = vmatpush1.msra.mxu0 0.0
    %3611 = vmatprep.subr.mxu0 0.0
    %3612 = vmatpush1.msra.mxu0 0.0
    %3613 = vmatprep.subr.mxu0 0.0
    %3614 = vmatpush1.msra.mxu0 0.0
    %3615 = vmatprep.subr.mxu0 0.0
    %3616 = vmatpush1.msra.mxu0 0.0
    %3617 = vmatprep.subr.mxu0 0.0
    %3618 = vmatpush1.msra.mxu0 0.0
    %3619 = vmatprep.subr.mxu0 0.0
    %3620 = vmatpush1.msra.mxu0 0.0
    %3621 = vmatprep.subr.mxu0 0.0
    %3622 = vmatpush1.msra.mxu0 0.0
    %3623 = vmatprep.subr.mxu0 0.0
    %3624 = vmatpush1.msra.mxu0 0.0
    %3625 = vmatprep.subr.mxu0 0.0
    %3626 = vmatpush1.msra.mxu0 0.0
    %3627 = vmatprep.subr.mxu0 0.0
    %3628 = vmatpush1.msra.mxu0 0.0
    %3629 = vmatprep.subr.mxu0 0.0
    %3630 = vmatpush1.msra.mxu0 0.0
    %3631 = vmatprep.subr.mxu0 0.0
    %3632 = vmatpush1.msra.mxu0 0.0
    %3633 = vmatprep.mubr.f32.mxu0 0.0
    %3634 = vmatmul.mubr.f32.gmra.mrb[0].mxu0 %v1989
    %v3635 = vpop.f32.mrb[0].mxu0
    %v3636 = vadd.f32 0.0, %v3635
    %v3637 = vpop.f32.mrb[0].mxu0
    %v3638 = vadd.f32 0.0, %v3637
    %3639 = vdwg.mxu0
    %3640 = vmatprep.subr.mxu0 %v3567
    %3641 = vmatpush1.msra.mxu0 %v3565
    %3642 = vmatprep.subr.mxu0 0.0
    %3643 = vmatpush1.msra.mxu0 0.0
    %3644 = vmatprep.subr.mxu0 0.0
    %3645 = vmatpush1.msra.mxu0 0.0
    %3646 = vmatprep.subr.mxu0 0.0
    %3647 = vmatpush1.msra.mxu0 0.0
    %3648 = vmatprep.subr.mxu0 0.0
    %3649 = vmatpush1.msra.mxu0 0.0
    %3650 = vmatprep.subr.mxu0 0.0
    %3651 = vmatpush1.msra.mxu0 0.0
    %3652 = vmatprep.subr.mxu0 0.0
    %3653 = vmatpush1.msra.mxu0 0.0
    %3654 = vmatprep.subr.mxu0 0.0
    %3655 = vmatpush1.msra.mxu0 0.0
    %3656 = vmatprep.subr.mxu0 0.0
    %3657 = vmatpush1.msra.mxu0 0.0
    %3658 = vmatprep.subr.mxu0 0.0
    %3659 = vmatpush1.msra.mxu0 0.0
    %3660 = vmatprep.subr.mxu0 0.0
    %3661 = vmatpush1.msra.mxu0 0.0
    %3662 = vmatprep.subr.mxu0 0.0
    %3663 = vmatpush1.msra.mxu0 0.0
    %3664 = vmatprep.subr.mxu0 0.0
    %3665 = vmatpush1.msra.mxu0 0.0
    %3666 = vmatprep.subr.mxu0 0.0
    %3667 = vmatpush1.msra.mxu0 0.0
    %3668 = vmatprep.subr.mxu0 0.0
    %3669 = vmatpush1.msra.mxu0 0.0
    %3670 = vmatprep.subr.mxu0 0.0
    %3671 = vmatpush1.msra.mxu0 0.0
    %3672 = vmatprep.subr.mxu0 0.0
    %3673 = vmatpush1.msra.mxu0 0.0
    %3674 = vmatprep.subr.mxu0 0.0
    %3675 = vmatpush1.msra.mxu0 0.0
    %3676 = vmatprep.subr.mxu0 0.0
    %3677 = vmatpush1.msra.mxu0 0.0
    %3678 = vmatprep.subr.mxu0 0.0
    %3679 = vmatpush1.msra.mxu0 0.0
    %3680 = vmatprep.subr.mxu0 0.0
    %3681 = vmatpush1.msra.mxu0 0.0
    %3682 = vmatprep.subr.mxu0 0.0
    %3683 = vmatpush1.msra.mxu0 0.0
    %3684 = vmatprep.subr.mxu0 0.0
    %3685 = vmatpush1.msra.mxu0 0.0
    %3686 = vmatprep.subr.mxu0 0.0
    %3687 = vmatpush1.msra.mxu0 0.0
    %3688 = vmatprep.subr.mxu0 0.0
    %3689 = vmatpush1.msra.mxu0 0.0
    %3690 = vmatprep.subr.mxu0 0.0
    %3691 = vmatpush1.msra.mxu0 0.0
    %3692 = vmatprep.subr.mxu0 0.0
    %3693 = vmatpush1.msra.mxu0 0.0
    %3694 = vmatprep.subr.mxu0 0.0
    %3695 = vmatpush1.msra.mxu0 0.0
    %3696 = vmatprep.subr.mxu0 0.0
    %3697 = vmatpush1.msra.mxu0 0.0
    %3698 = vmatprep.subr.mxu0 0.0
    %3699 = vmatpush1.msra.mxu0 0.0
    %3700 = vmatprep.subr.mxu0 0.0
    %3701 = vmatpush1.msra.mxu0 0.0
    %3702 = vmatprep.subr.mxu0 0.0
    %3703 = vmatpush1.msra.mxu0 0.0
    %3704 = vmatprep.mubr.f32.mxu0 0.0
    %3705 = vmatmul.mubr.f32.gmra.mrb[0].mxu0 %v1989
    %v3706 = vpop.f32.mrb[0].mxu0
    %v3707 = vadd.f32 0.0, %v3706
    %v3708 = vpop.f32.mrb[0].mxu0
    %v3709 = vadd.f32 0.0, %v3708
    %3710 = vdwg.mxu0
    %v3711 = vadd.f32 %v3546, %v3636
    %v3712 = vadd.f32 %v3547, %v3638
    %v3713 = vadd.f32 %v3548, %v3707
    %v3714 = vadd.f32 %v3549, %v3709
    %3715 = vrot.lane.b32.xlu0 %v2404, 82
    %v3716 = vpop.permute.xlu0 %3715
    %3717 = vrot.lane.b32.xlu0 %v2412, 82
    %v3718 = vpop.permute.xlu0 %3717
    %3719 = vrot.lane.b32.xlu0 %v2411, 82
    %v3720 = vpop.permute.xlu0 %3719
    %3721 = vrot.lane.b32.xlu0 %v2413, 82
    %v3722 = vpop.permute.xlu0 %3721
    %v3723 = vsel %vm2153, %v3716, %v3718
    %v3724 = vsel %vm2153, %v3718, %v3720
    %v3725 = vsel %vm2153, %v3720, %v3722
    %v3726 = vsel %vm75, %v3723, 0
    %v3728 = vsel %vm75, %v3724, 0
    %v3730 = vsel %vm75, %v3725, 0
    %v3732 = vsel %vm75, %v3722, 0
    %3734 = vmatprep.subr.mxu0 %v3728
    %3735 = vmatpush1.msra.mxu0 %v3726
    %3736 = vmatprep.subr.mxu0 0.0
    %3737 = vmatpush1.msra.mxu0 0.0
    %3738 = vmatprep.subr.mxu0 0.0
    %3739 = vmatpush1.msra.mxu0 0.0
    %3740 = vmatprep.subr.mxu0 0.0
    %3741 = vmatpush1.msra.mxu0 0.0
    %3742 = vmatprep.subr.mxu0 0.0
    %3743 = vmatpush1.msra.mxu0 0.0
    %3744 = vmatprep.subr.mxu0 0.0
    %3745 = vmatpush1.msra.mxu0 0.0
    %3746 = vmatprep.subr.mxu0 0.0
    %3747 = vmatpush1.msra.mxu0 0.0
    %3748 = vmatprep.subr.mxu0 0.0
    %3749 = vmatpush1.msra.mxu0 0.0
    %3750 = vmatprep.subr.mxu0 0.0
    %3751 = vmatpush1.msra.mxu0 0.0
    %3752 = vmatprep.subr.mxu0 0.0
    %3753 = vmatpush1.msra.mxu0 0.0
    %3754 = vmatprep.subr.mxu0 0.0
    %3755 = vmatpush1.msra.mxu0 0.0
    %3756 = vmatprep.subr.mxu0 0.0
    %3757 = vmatpush1.msra.mxu0 0.0
    %3758 = vmatprep.subr.mxu0 0.0
    %3759 = vmatpush1.msra.mxu0 0.0
    %3760 = vmatprep.subr.mxu0 0.0
    %3761 = vmatpush1.msra.mxu0 0.0
    %3762 = vmatprep.subr.mxu0 0.0
    %3763 = vmatpush1.msra.mxu0 0.0
    %3764 = vmatprep.subr.mxu0 0.0
    %3765 = vmatpush1.msra.mxu0 0.0
    %3766 = vmatprep.subr.mxu0 0.0
    %3767 = vmatpush1.msra.mxu0 0.0
    %3768 = vmatprep.subr.mxu0 0.0
    %3769 = vmatpush1.msra.mxu0 0.0
    %3770 = vmatprep.subr.mxu0 0.0
    %3771 = vmatpush1.msra.mxu0 0.0
    %3772 = vmatprep.subr.mxu0 0.0
    %3773 = vmatpush1.msra.mxu0 0.0
    %3774 = vmatprep.subr.mxu0 0.0
    %3775 = vmatpush1.msra.mxu0 0.0
    %3776 = vmatprep.subr.mxu0 0.0
    %3777 = vmatpush1.msra.mxu0 0.0
    %3778 = vmatprep.subr.mxu0 0.0
    %3779 = vmatpush1.msra.mxu0 0.0
    %3780 = vmatprep.subr.mxu0 0.0
    %3781 = vmatpush1.msra.mxu0 0.0
    %3782 = vmatprep.subr.mxu0 0.0
    %3783 = vmatpush1.msra.mxu0 0.0
    %3784 = vmatprep.subr.mxu0 0.0
    %3785 = vmatpush1.msra.mxu0 0.0
    %3786 = vmatprep.subr.mxu0 0.0
    %3787 = vmatpush1.msra.mxu0 0.0
    %3788 = vmatprep.subr.mxu0 0.0
    %3789 = vmatpush1.msra.mxu0 0.0
    %3790 = vmatprep.subr.mxu0 0.0
    %3791 = vmatpush1.msra.mxu0 0.0
    %3792 = vmatprep.subr.mxu0 0.0
    %3793 = vmatpush1.msra.mxu0 0.0
    %3794 = vmatprep.subr.mxu0 0.0
    %3795 = vmatpush1.msra.mxu0 0.0
    %3796 = vmatprep.subr.mxu0 0.0
    %3797 = vmatpush1.msra.mxu0 0.0
    %3798 = vmatprep.mubr.f32.mxu0 0.0
    %3799 = vmatmul.mubr.f32.gmra.mrb[0].mxu0 %v2158
    %v3800 = vpop.f32.mrb[0].mxu0
    %v3801 = vadd.f32 0.0, %v3800
    %v3802 = vpop.f32.mrb[0].mxu0
    %v3803 = vadd.f32 0.0, %v3802
    %3804 = vdwg.mxu0
    %3805 = vmatprep.subr.mxu0 %v3732
    %3806 = vmatpush1.msra.mxu0 %v3730
    %3807 = vmatprep.subr.mxu0 0.0
    %3808 = vmatpush1.msra.mxu0 0.0
    %3809 = vmatprep.subr.mxu0 0.0
    %3810 = vmatpush1.msra.mxu0 0.0
    %3811 = vmatprep.subr.mxu0 0.0
    %3812 = vmatpush1.msra.mxu0 0.0
    %3813 = vmatprep.subr.mxu0 0.0
    %3814 = vmatpush1.msra.mxu0 0.0
    %3815 = vmatprep.subr.mxu0 0.0
    %3816 = vmatpush1.msra.mxu0 0.0
    %3817 = vmatprep.subr.mxu0 0.0
    %3818 = vmatpush1.msra.mxu0 0.0
    %3819 = vmatprep.subr.mxu0 0.0
    %3820 = vmatpush1.msra.mxu0 0.0
    %3821 = vmatprep.subr.mxu0 0.0
    %3822 = vmatpush1.msra.mxu0 0.0
    %3823 = vmatprep.subr.mxu0 0.0
    %3824 = vmatpush1.msra.mxu0 0.0
    %3825 = vmatprep.subr.mxu0 0.0
    %3826 = vmatpush1.msra.mxu0 0.0
    %3827 = vmatprep.subr.mxu0 0.0
    %3828 = vmatpush1.msra.mxu0 0.0
    %3829 = vmatprep.subr.mxu0 0.0
    %3830 = vmatpush1.msra.mxu0 0.0
    %3831 = vmatprep.subr.mxu0 0.0
    %3832 = vmatpush1.msra.mxu0 0.0
    %3833 = vmatprep.subr.mxu0 0.0
    %3834 = vmatpush1.msra.mxu0 0.0
    %3835 = vmatprep.subr.mxu0 0.0
    %3836 = vmatpush1.msra.mxu0 0.0
    %3837 = vmatprep.subr.mxu0 0.0
    %3838 = vmatpush1.msra.mxu0 0.0
    %3839 = vmatprep.subr.mxu0 0.0
    %3840 = vmatpush1.msra.mxu0 0.0
    %3841 = vmatprep.subr.mxu0 0.0
    %3842 = vmatpush1.msra.mxu0 0.0
    %3843 = vmatprep.subr.mxu0 0.0
    %3844 = vmatpush1.msra.mxu0 0.0
    %3845 = vmatprep.subr.mxu0 0.0
    %3846 = vmatpush1.msra.mxu0 0.0
    %3847 = vmatprep.subr.mxu0 0.0
    %3848 = vmatpush1.msra.mxu0 0.0
    %3849 = vmatprep.subr.mxu0 0.0
    %3850 = vmatpush1.msra.mxu0 0.0
    %3851 = vmatprep.subr.mxu0 0.0
    %3852 = vmatpush1.msra.mxu0 0.0
    %3853 = vmatprep.subr.mxu0 0.0
    %3854 = vmatpush1.msra.mxu0 0.0
    %3855 = vmatprep.subr.mxu0 0.0
    %3856 = vmatpush1.msra.mxu0 0.0
    %3857 = vmatprep.subr.mxu0 0.0
    %3858 = vmatpush1.msra.mxu0 0.0
    %3859 = vmatprep.subr.mxu0 0.0
    %3860 = vmatpush1.msra.mxu0 0.0
    %3861 = vmatprep.subr.mxu0 0.0
    %3862 = vmatpush1.msra.mxu0 0.0
    %3863 = vmatprep.subr.mxu0 0.0
    %3864 = vmatpush1.msra.mxu0 0.0
    %3865 = vmatprep.subr.mxu0 0.0
    %3866 = vmatpush1.msra.mxu0 0.0
    %3867 = vmatprep.subr.mxu0 0.0
    %3868 = vmatpush1.msra.mxu0 0.0
    %3869 = vmatprep.mubr.f32.mxu0 0.0
    %3870 = vmatmul.mubr.f32.gmra.mrb[0].mxu0 %v2158
    %v3871 = vpop.f32.mrb[0].mxu0
    %v3872 = vadd.f32 0.0, %v3871
    %v3873 = vpop.f32.mrb[0].mxu0
    %v3874 = vadd.f32 0.0, %v3873
    %3875 = vdwg.mxu0
    %v3876 = vadd.f32 %v3711, %v3801
    %v3877 = vadd.f32 %v3712, %v3803
    %v3878 = vadd.f32 %v3713, %v3872
    %v3879 = vadd.f32 %v3714, %v3874
    %v3880 = vadd.f32 %v3876, %v2317
    %v3881 = vadd.f32 %v3877, %v2317
    %v3882 = vadd.f32 %v3878, %v2317
    %v3883 = vadd.f32 %v3879, %v2317
    %v3884 = vmax.f32 %v3880, 0.0
    %v3885 = vmax.f32 %v3881, 0.0
    %v3886 = vmax.f32 %v3882, 0.0
    %v3887 = vmax.f32 %v3883, 0.0
    %3889 = vrot.lane.b32.xlu0 %v3884, 23
    %v3890 = vpop.permute.xlu0 %3889
    %s3892 = scalar_lea.vmem [#allocation3], 32
    %3893 = vst.msk [vmem:[%s3892] sm:$0xff] %vm2331, %v3890
    %3894 = vst.msk [vmem:[%s3892] sm:$0xff] %vm2333, %v3890
    %3895 = vst.msk [vmem:[%s3892] sm:$0xff] %vm2335, %v3890
    %3896 = vst.msk [vmem:[%s3892] sm:$0xff] %vm2337, %v3890
    %3897 = vst.msk [vmem:[%s3892] sm:$0xff] %vm2339, %v3890
    %3898 = vst.msk [vmem:[%s3892 + $0x8] sm:$0xff] %vm2341, %v3890
    %3900 = vrot.lane.b32.xlu0 %v3885, 23
    %v3901 = vpop.permute.xlu0 %3900
    %v3902 = vsel %vm2346, %v3890, %v3901
    %3904 = vst.msk [vmem:[%s3892 + $0x8] sm:$0xff] %vm2349, %v3902
    %3906 = vst.msk [vmem:[%s3892 + $0x8] sm:$0xff] %vm2352, %v3901
    %3907 = vst.msk [vmem:[%s3892 + $0x8] sm:$0xff] %vm2354, %v3901
    %3908 = vst.msk [vmem:[%s3892 + $0x8] sm:$0xff] %vm2356, %v3901
    %3909 = vst.msk [vmem:[%s3892 + $0x8] sm:$0xff] %vm2358, %v3901
    %3910 = vst.msk [vmem:[%s3892 + $0x8] sm:$0xff] %vm2360, %v3901
    %3911 = vst.msk [vmem:[%s3892 + $0x10] sm:$0xff] %vm2362, %v3901
    %3913 = vrot.lane.b32.xlu0 %v3886, 23
    %v3914 = vpop.permute.xlu0 %3913
    %v3915 = vsel %vm2346, %v3901, %v3914
    %3917 = vst.msk [vmem:[%s3892 + $0x10] sm:$0xff] %vm2369, %v3915
    %3919 = vst.msk [vmem:[%s3892 + $0x10] sm:$0xff] %vm2372, %v3914
    %3920 = vst.msk [vmem:[%s3892 + $0x10] sm:$0xff] %vm2374, %v3914
    %3921 = vst.msk [vmem:[%s3892 + $0x10] sm:$0xff] %vm2376, %v3914
    %3922 = vst.msk [vmem:[%s3892 + $0x10] sm:$0xff] %vm2378, %v3914
    %3923 = vst.msk [vmem:[%s3892 + $0x10] sm:$0xff] %vm2380, %v3914
    %3924 = vst.msk [vmem:[%s3892 + $0x18] sm:$0xff] %vm2382, %v3914
    %3926 = vrot.lane.b32.xlu0 %v3887, 23
    %v3927 = vpop.permute.xlu0 %3926
    %v3928 = vsel %vm2346, %v3914, %v3927
    %3930 = vst.msk [vmem:[%s3892 + $0x18] sm:$0xff] %vm2389, %v3928
    %3932 = vst.msk [vmem:[%s3892 + $0x18] sm:$0xff] %vm2392, %v3927
    %3933 = vst.msk [vmem:[%s3892 + $0x18] sm:$0xff] %vm2394, %v3927
    %v3934 = vld [vmem:[#allocation3] sm:$0xff]
    %v3935 = vld [vmem:[#allocation3 + $0x8] sm:$0xff]
    %v3936 = vld [vmem:[#allocation3 + $0x10] sm:$0xff]
    %v3937 = vld [vmem:[#allocation3 + $0x18] sm:$0xff]
    %v3938 = vld [vmem:[#allocation3 + $0x20] sm:$0xff]
    %v3939 = vld [vmem:[#allocation3 + $0x28] sm:$0xff]
    %v3940 = vld [vmem:[#allocation3 + $0x30] sm:$0xff]
    %v3941 = vld [vmem:[#allocation3 + $0x38] sm:$0xff]
    %3946 = vrot.lane.b32.xlu0 %v3934, 127
    %v3947 = vpop.permute.xlu0 %3946
    %3948 = vrot.lane.b32.xlu0 %v3935, 127
    %v3949 = vpop.permute.xlu0 %3948
    %3950 = vrot.lane.b32.xlu0 %v3936, 127
    %v3951 = vpop.permute.xlu0 %3950
    %3952 = vrot.lane.b32.xlu0 %v3937, 127
    %v3953 = vpop.permute.xlu0 %3952
    %v3954 = vsel %vm820, %v3947, %v3949
    %v3955 = vsel %vm820, %v3949, %v3951
    %v3956 = vsel %vm820, %v3951, %v3953
    %vm3961 = vcmask 64512
    %v3963 = vsel %vm3961, %v774, 0
    %3965 = vmatprep.subr.mxu0 %v3955
    %3966 = vmatpush1.msra.mxu0 %v3954
    %3967 = vmatprep.subr.mxu0 0.0
    %3968 = vmatpush1.msra.mxu0 0.0
    %3969 = vmatprep.subr.mxu0 0.0
    %3970 = vmatpush1.msra.mxu0 0.0
    %3971 = vmatprep.subr.mxu0 0.0
    %3972 = vmatpush1.msra.mxu0 0.0
    %3973 = vmatprep.subr.mxu0 0.0
    %3974 = vmatpush1.msra.mxu0 0.0
    %3975 = vmatprep.subr.mxu0 0.0
    %3976 = vmatpush1.msra.mxu0 0.0
    %3977 = vmatprep.subr.mxu0 0.0
    %3978 = vmatpush1.msra.mxu0 0.0
    %3979 = vmatprep.subr.mxu0 0.0
    %3980 = vmatpush1.msra.mxu0 0.0
    %3981 = vmatprep.subr.mxu0 0.0
    %3982 = vmatpush1.msra.mxu0 0.0
    %3983 = vmatprep.subr.mxu0 0.0
    %3984 = vmatpush1.msra.mxu0 0.0
    %3985 = vmatprep.subr.mxu0 0.0
    %3986 = vmatpush1.msra.mxu0 0.0
    %3987 = vmatprep.subr.mxu0 0.0
    %3988 = vmatpush1.msra.mxu0 0.0
    %3989 = vmatprep.subr.mxu0 0.0
    %3990 = vmatpush1.msra.mxu0 0.0
    %3991 = vmatprep.subr.mxu0 0.0
    %3992 = vmatpush1.msra.mxu0 0.0
    %3993 = vmatprep.subr.mxu0 0.0
    %3994 = vmatpush1.msra.mxu0 0.0
    %3995 = vmatprep.subr.mxu0 0.0
    %3996 = vmatpush1.msra.mxu0 0.0
    %3997 = vmatprep.subr.mxu0 0.0
    %3998 = vmatpush1.msra.mxu0 0.0
    %3999 = vmatprep.subr.mxu0 0.0
    %4000 = vmatpush1.msra.mxu0 0.0
    %4001 = vmatprep.subr.mxu0 0.0
    %4002 = vmatpush1.msra.mxu0 0.0
    %4003 = vmatprep.subr.mxu0 0.0
    %4004 = vmatpush1.msra.mxu0 0.0
    %4005 = vmatprep.subr.mxu0 0.0
    %4006 = vmatpush1.msra.mxu0 0.0
    %4007 = vmatprep.subr.mxu0 0.0
    %4008 = vmatpush1.msra.mxu0 0.0
    %4009 = vmatprep.subr.mxu0 0.0
    %4010 = vmatpush1.msra.mxu0 0.0
    %4011 = vmatprep.subr.mxu0 0.0
    %4012 = vmatpush1.msra.mxu0 0.0
    %4013 = vmatprep.subr.mxu0 0.0
    %4014 = vmatpush1.msra.mxu0 0.0
    %4015 = vmatprep.subr.mxu0 0.0
    %4016 = vmatpush1.msra.mxu0 0.0
    %4017 = vmatprep.subr.mxu0 0.0
    %4018 = vmatpush1.msra.mxu0 0.0
    %4019 = vmatprep.subr.mxu0 0.0
    %4020 = vmatpush1.msra.mxu0 0.0
    %4021 = vmatprep.subr.mxu0 0.0
    %4022 = vmatpush1.msra.mxu0 0.0
    %4023 = vmatprep.subr.mxu0 0.0
    %4024 = vmatpush1.msra.mxu0 0.0
    %4025 = vmatprep.subr.mxu0 0.0
    %4026 = vmatpush1.msra.mxu0 0.0
    %4027 = vmatprep.subr.mxu0 0.0
    %4028 = vmatpush1.msra.mxu0 0.0
    %4029 = vmatprep.mubr.f32.mxu0 0.0
    %4030 = vmatmul.mubr.f32.gmra.mrb[0].mxu0 %v3963
    %v4031 = vpop.f32.mrb[0].mxu0
    %v4032 = vadd.f32 0.0, %v4031
    %v4033 = vpop.f32.mrb[0].mxu0
    %v4034 = vadd.f32 0.0, %v4033
    %4035 = vdwg.mxu0
    %4036 = vmatprep.subr.mxu0 %v3953
    %4037 = vmatpush1.msra.mxu0 %v3956
    %4038 = vmatprep.subr.mxu0 0.0
    %4039 = vmatpush1.msra.mxu0 0.0
    %4040 = vmatprep.subr.mxu0 0.0
    %4041 = vmatpush1.msra.mxu0 0.0
    %4042 = vmatprep.subr.mxu0 0.0
    %4043 = vmatpush1.msra.mxu0 0.0
    %4044 = vmatprep.subr.mxu0 0.0
    %4045 = vmatpush1.msra.mxu0 0.0
    %4046 = vmatprep.subr.mxu0 0.0
    %4047 = vmatpush1.msra.mxu0 0.0
    %4048 = vmatprep.subr.mxu0 0.0
    %4049 = vmatpush1.msra.mxu0 0.0
    %4050 = vmatprep.subr.mxu0 0.0
    %4051 = vmatpush1.msra.mxu0 0.0
    %4052 = vmatprep.subr.mxu0 0.0
    %4053 = vmatpush1.msra.mxu0 0.0
    %4054 = vmatprep.subr.mxu0 0.0
    %4055 = vmatpush1.msra.mxu0 0.0
    %4056 = vmatprep.subr.mxu0 0.0
    %4057 = vmatpush1.msra.mxu0 0.0
    %4058 = vmatprep.subr.mxu0 0.0
    %4059 = vmatpush1.msra.mxu0 0.0
    %4060 = vmatprep.subr.mxu0 0.0
    %4061 = vmatpush1.msra.mxu0 0.0
    %4062 = vmatprep.subr.mxu0 0.0
    %4063 = vmatpush1.msra.mxu0 0.0
    %4064 = vmatprep.subr.mxu0 0.0
    %4065 = vmatpush1.msra.mxu0 0.0
    %4066 = vmatprep.subr.mxu0 0.0
    %4067 = vmatpush1.msra.mxu0 0.0
    %4068 = vmatprep.subr.mxu0 0.0
    %4069 = vmatpush1.msra.mxu0 0.0
    %4070 = vmatprep.subr.mxu0 0.0
    %4071 = vmatpush1.msra.mxu0 0.0
    %4072 = vmatprep.subr.mxu0 0.0
    %4073 = vmatpush1.msra.mxu0 0.0
    %4074 = vmatprep.subr.mxu0 0.0
    %4075 = vmatpush1.msra.mxu0 0.0
    %4076 = vmatprep.subr.mxu0 0.0
    %4077 = vmatpush1.msra.mxu0 0.0
    %4078 = vmatprep.subr.mxu0 0.0
    %4079 = vmatpush1.msra.mxu0 0.0
    %4080 = vmatprep.subr.mxu0 0.0
    %4081 = vmatpush1.msra.mxu0 0.0
    %4082 = vmatprep.subr.mxu0 0.0
    %4083 = vmatpush1.msra.mxu0 0.0
    %4084 = vmatprep.subr.mxu0 0.0
    %4085 = vmatpush1.msra.mxu0 0.0
    %4086 = vmatprep.subr.mxu0 0.0
    %4087 = vmatpush1.msra.mxu0 0.0
    %4088 = vmatprep.subr.mxu0 0.0
    %4089 = vmatpush1.msra.mxu0 0.0
    %4090 = vmatprep.subr.mxu0 0.0
    %4091 = vmatpush1.msra.mxu0 0.0
    %4092 = vmatprep.subr.mxu0 0.0
    %4093 = vmatpush1.msra.mxu0 0.0
    %4094 = vmatprep.subr.mxu0 0.0
    %4095 = vmatpush1.msra.mxu0 0.0
    %4096 = vmatprep.subr.mxu0 0.0
    %4097 = vmatpush1.msra.mxu0 0.0
    %4098 = vmatprep.subr.mxu0 0.0
    %4099 = vmatpush1.msra.mxu0 0.0
    %4100 = vmatprep.mubr.f32.mxu0 0.0
    %4101 = vmatmul.mubr.f32.gmra.mrb[0].mxu0 %v3963
    %v4102 = vpop.f32.mrb[0].mxu0
    %v4103 = vadd.f32 0.0, %v4102
    %v4104 = vpop.f32.mrb[0].mxu0
    %v4105 = vadd.f32 0.0, %v4104
    %4106 = vdwg.mxu0
    %v4108 = vsel %vm3961, %v773, 0
    %4110 = vmatprep.subr.mxu0 %v3935
    %4111 = vmatpush1.msra.mxu0 %v3934
    %4112 = vmatprep.subr.mxu0 0.0
    %4113 = vmatpush1.msra.mxu0 0.0
    %4114 = vmatprep.subr.mxu0 0.0
    %4115 = vmatpush1.msra.mxu0 0.0
    %4116 = vmatprep.subr.mxu0 0.0
    %4117 = vmatpush1.msra.mxu0 0.0
    %4118 = vmatprep.subr.mxu0 0.0
    %4119 = vmatpush1.msra.mxu0 0.0
    %4120 = vmatprep.subr.mxu0 0.0
    %4121 = vmatpush1.msra.mxu0 0.0
    %4122 = vmatprep.subr.mxu0 0.0
    %4123 = vmatpush1.msra.mxu0 0.0
    %4124 = vmatprep.subr.mxu0 0.0
    %4125 = vmatpush1.msra.mxu0 0.0
    %4126 = vmatprep.subr.mxu0 0.0
    %4127 = vmatpush1.msra.mxu0 0.0
    %4128 = vmatprep.subr.mxu0 0.0
    %4129 = vmatpush1.msra.mxu0 0.0
    %4130 = vmatprep.subr.mxu0 0.0
    %4131 = vmatpush1.msra.mxu0 0.0
    %4132 = vmatprep.subr.mxu0 0.0
    %4133 = vmatpush1.msra.mxu0 0.0
    %4134 = vmatprep.subr.mxu0 0.0
    %4135 = vmatpush1.msra.mxu0 0.0
    %4136 = vmatprep.subr.mxu0 0.0
    %4137 = vmatpush1.msra.mxu0 0.0
    %4138 = vmatprep.subr.mxu0 0.0
    %4139 = vmatpush1.msra.mxu0 0.0
    %4140 = vmatprep.subr.mxu0 0.0
    %4141 = vmatpush1.msra.mxu0 0.0
    %4142 = vmatprep.subr.mxu0 0.0
    %4143 = vmatpush1.msra.mxu0 0.0
    %4144 = vmatprep.subr.mxu0 0.0
    %4145 = vmatpush1.msra.mxu0 0.0
    %4146 = vmatprep.subr.mxu0 0.0
    %4147 = vmatpush1.msra.mxu0 0.0
    %4148 = vmatprep.subr.mxu0 0.0
    %4149 = vmatpush1.msra.mxu0 0.0
    %4150 = vmatprep.subr.mxu0 0.0
    %4151 = vmatpush1.msra.mxu0 0.0
    %4152 = vmatprep.subr.mxu0 0.0
    %4153 = vmatpush1.msra.mxu0 0.0
    %4154 = vmatprep.subr.mxu0 0.0
    %4155 = vmatpush1.msra.mxu0 0.0
    %4156 = vmatprep.subr.mxu0 0.0
    %4157 = vmatpush1.msra.mxu0 0.0
    %4158 = vmatprep.subr.mxu0 0.0
    %4159 = vmatpush1.msra.mxu0 0.0
    %4160 = vmatprep.subr.mxu0 0.0
    %4161 = vmatpush1.msra.mxu0 0.0
    %4162 = vmatprep.subr.mxu0 0.0
    %4163 = vmatpush1.msra.mxu0 0.0
    %4164 = vmatprep.subr.mxu0 0.0
    %4165 = vmatpush1.msra.mxu0 0.0
    %4166 = vmatprep.subr.mxu0 0.0
    %4167 = vmatpush1.msra.mxu0 0.0
    %4168 = vmatprep.subr.mxu0 0.0
    %4169 = vmatpush1.msra.mxu0 0.0
    %4170 = vmatprep.subr.mxu0 0.0
    %4171 = vmatpush1.msra.mxu0 0.0
    %4172 = vmatprep.subr.mxu0 0.0
    %4173 = vmatpush1.msra.mxu0 0.0
    %4174 = vmatprep.mubr.f32.mxu0 0.0
    %4175 = vmatmul.mubr.f32.gmra.mrb[0].mxu0 %v4108
    %v4176 = vpop.f32.mrb[0].mxu0
    %v4177 = vadd.f32 %v4032, %v4176
    %v4178 = vpop.f32.mrb[0].mxu0
    %v4179 = vadd.f32 %v4034, %v4178
    %4180 = vdwg.mxu0
    %4181 = vmatprep.subr.mxu0 %v3937
    %4182 = vmatpush1.msra.mxu0 %v3936
    %4183 = vmatprep.subr.mxu0 0.0
    %4184 = vmatpush1.msra.mxu0 0.0
    %4185 = vmatprep.subr.mxu0 0.0
    %4186 = vmatpush1.msra.mxu0 0.0
    %4187 = vmatprep.subr.mxu0 0.0
    %4188 = vmatpush1.msra.mxu0 0.0
    %4189 = vmatprep.subr.mxu0 0.0
    %4190 = vmatpush1.msra.mxu0 0.0
    %4191 = vmatprep.subr.mxu0 0.0
    %4192 = vmatpush1.msra.mxu0 0.0
    %4193 = vmatprep.subr.mxu0 0.0
    %4194 = vmatpush1.msra.mxu0 0.0
    %4195 = vmatprep.subr.mxu0 0.0
    %4196 = vmatpush1.msra.mxu0 0.0
    %4197 = vmatprep.subr.mxu0 0.0
    %4198 = vmatpush1.msra.mxu0 0.0
    %4199 = vmatprep.subr.mxu0 0.0
    %4200 = vmatpush1.msra.mxu0 0.0
    %4201 = vmatprep.subr.mxu0 0.0
    %4202 = vmatpush1.msra.mxu0 0.0
    %4203 = vmatprep.subr.mxu0 0.0
    %4204 = vmatpush1.msra.mxu0 0.0
    %4205 = vmatprep.subr.mxu0 0.0
    %4206 = vmatpush1.msra.mxu0 0.0
    %4207 = vmatprep.subr.mxu0 0.0
    %4208 = vmatpush1.msra.mxu0 0.0
    %4209 = vmatprep.subr.mxu0 0.0
    %4210 = vmatpush1.msra.mxu0 0.0
    %4211 = vmatprep.subr.mxu0 0.0
    %4212 = vmatpush1.msra.mxu0 0.0
    %4213 = vmatprep.subr.mxu0 0.0
    %4214 = vmatpush1.msra.mxu0 0.0
    %4215 = vmatprep.subr.mxu0 0.0
    %4216 = vmatpush1.msra.mxu0 0.0
    %4217 = vmatprep.subr.mxu0 0.0
    %4218 = vmatpush1.msra.mxu0 0.0
    %4219 = vmatprep.subr.mxu0 0.0
    %4220 = vmatpush1.msra.mxu0 0.0
    %4221 = vmatprep.subr.mxu0 0.0
    %4222 = vmatpush1.msra.mxu0 0.0
    %4223 = vmatprep.subr.mxu0 0.0
    %4224 = vmatpush1.msra.mxu0 0.0
    %4225 = vmatprep.subr.mxu0 0.0
    %4226 = vmatpush1.msra.mxu0 0.0
    %4227 = vmatprep.subr.mxu0 0.0
    %4228 = vmatpush1.msra.mxu0 0.0
    %4229 = vmatprep.subr.mxu0 0.0
    %4230 = vmatpush1.msra.mxu0 0.0
    %4231 = vmatprep.subr.mxu0 0.0
    %4232 = vmatpush1.msra.mxu0 0.0
    %4233 = vmatprep.subr.mxu0 0.0
    %4234 = vmatpush1.msra.mxu0 0.0
    %4235 = vmatprep.subr.mxu0 0.0
    %4236 = vmatpush1.msra.mxu0 0.0
    %4237 = vmatprep.subr.mxu0 0.0
    %4238 = vmatpush1.msra.mxu0 0.0
    %4239 = vmatprep.subr.mxu0 0.0
    %4240 = vmatpush1.msra.mxu0 0.0
    %4241 = vmatprep.subr.mxu0 0.0
    %4242 = vmatpush1.msra.mxu0 0.0
    %4243 = vmatprep.subr.mxu0 0.0
    %4244 = vmatpush1.msra.mxu0 0.0
    %4245 = vmatprep.mubr.f32.mxu0 0.0
    %4246 = vmatmul.mubr.f32.gmra.mrb[0].mxu0 %v4108
    %v4247 = vpop.f32.mrb[0].mxu0
    %v4248 = vadd.f32 %v4103, %v4247
    %v4249 = vpop.f32.mrb[0].mxu0
    %v4250 = vadd.f32 %v4105, %v4249
    %4251 = vdwg.mxu0
    %4252 = vrot.lane.b32.xlu0 %v3934, 126
    %v4253 = vpop.permute.xlu0 %4252
    %4254 = vrot.lane.b32.xlu0 %v3935, 126
    %v4255 = vpop.permute.xlu0 %4254
    %4256 = vrot.lane.b32.xlu0 %v3936, 126
    %v4257 = vpop.permute.xlu0 %4256
    %4258 = vrot.lane.b32.xlu0 %v3937, 126
    %v4259 = vpop.permute.xlu0 %4258
    %v4260 = vsel %vm1139, %v4253, %v4255
    %v4261 = vsel %vm1139, %v4255, %v4257
    %v4262 = vsel %vm1139, %v4257, %v4259
    %v4268 = vsel %vm3961, %v775, 0
    %4270 = vmatprep.subr.mxu0 %v4261
    %4271 = vmatpush1.msra.mxu0 %v4260
    %4272 = vmatprep.subr.mxu0 0.0
    %4273 = vmatpush1.msra.mxu0 0.0
    %4274 = vmatprep.subr.mxu0 0.0
    %4275 = vmatpush1.msra.mxu0 0.0
    %4276 = vmatprep.subr.mxu0 0.0
    %4277 = vmatpush1.msra.mxu0 0.0
    %4278 = vmatprep.subr.mxu0 0.0
    %4279 = vmatpush1.msra.mxu0 0.0
    %4280 = vmatprep.subr.mxu0 0.0
    %4281 = vmatpush1.msra.mxu0 0.0
    %4282 = vmatprep.subr.mxu0 0.0
    %4283 = vmatpush1.msra.mxu0 0.0
    %4284 = vmatprep.subr.mxu0 0.0
    %4285 = vmatpush1.msra.mxu0 0.0
    %4286 = vmatprep.subr.mxu0 0.0
    %4287 = vmatpush1.msra.mxu0 0.0
    %4288 = vmatprep.subr.mxu0 0.0
    %4289 = vmatpush1.msra.mxu0 0.0
    %4290 = vmatprep.subr.mxu0 0.0
    %4291 = vmatpush1.msra.mxu0 0.0
    %4292 = vmatprep.subr.mxu0 0.0
    %4293 = vmatpush1.msra.mxu0 0.0
    %4294 = vmatprep.subr.mxu0 0.0
    %4295 = vmatpush1.msra.mxu0 0.0
    %4296 = vmatprep.subr.mxu0 0.0
    %4297 = vmatpush1.msra.mxu0 0.0
    %4298 = vmatprep.subr.mxu0 0.0
    %4299 = vmatpush1.msra.mxu0 0.0
    %4300 = vmatprep.subr.mxu0 0.0
    %4301 = vmatpush1.msra.mxu0 0.0
    %4302 = vmatprep.subr.mxu0 0.0
    %4303 = vmatpush1.msra.mxu0 0.0
    %4304 = vmatprep.subr.mxu0 0.0
    %4305 = vmatpush1.msra.mxu0 0.0
    %4306 = vmatprep.subr.mxu0 0.0
    %4307 = vmatpush1.msra.mxu0 0.0
    %4308 = vmatprep.subr.mxu0 0.0
    %4309 = vmatpush1.msra.mxu0 0.0
    %4310 = vmatprep.subr.mxu0 0.0
    %4311 = vmatpush1.msra.mxu0 0.0
    %4312 = vmatprep.subr.mxu0 0.0
    %4313 = vmatpush1.msra.mxu0 0.0
    %4314 = vmatprep.subr.mxu0 0.0
    %4315 = vmatpush1.msra.mxu0 0.0
    %4316 = vmatprep.subr.mxu0 0.0
    %4317 = vmatpush1.msra.mxu0 0.0
    %4318 = vmatprep.subr.mxu0 0.0
    %4319 = vmatpush1.msra.mxu0 0.0
    %4320 = vmatprep.subr.mxu0 0.0
    %4321 = vmatpush1.msra.mxu0 0.0
    %4322 = vmatprep.subr.mxu0 0.0
    %4323 = vmatpush1.msra.mxu0 0.0
    %4324 = vmatprep.subr.mxu0 0.0
    %4325 = vmatpush1.msra.mxu0 0.0
    %4326 = vmatprep.subr.mxu0 0.0
    %4327 = vmatpush1.msra.mxu0 0.0
    %4328 = vmatprep.subr.mxu0 0.0
    %4329 = vmatpush1.msra.mxu0 0.0
    %4330 = vmatprep.subr.mxu0 0.0
    %4331 = vmatpush1.msra.mxu0 0.0
    %4332 = vmatprep.subr.mxu0 0.0
    %4333 = vmatpush1.msra.mxu0 0.0
    %4334 = vmatprep.mubr.f32.mxu0 0.0
    %4335 = vmatmul.mubr.f32.gmra.mrb[0].mxu0 %v4268
    %v4336 = vpop.f32.mrb[0].mxu0
    %v4337 = vadd.f32 0.0, %v4336
    %v4338 = vpop.f32.mrb[0].mxu0
    %v4339 = vadd.f32 0.0, %v4338
    %4340 = vdwg.mxu0
    %4341 = vmatprep.subr.mxu0 %v4259
    %4342 = vmatpush1.msra.mxu0 %v4262
    %4343 = vmatprep.subr.mxu0 0.0
    %4344 = vmatpush1.msra.mxu0 0.0
    %4345 = vmatprep.subr.mxu0 0.0
    %4346 = vmatpush1.msra.mxu0 0.0
    %4347 = vmatprep.subr.mxu0 0.0
    %4348 = vmatpush1.msra.mxu0 0.0
    %4349 = vmatprep.subr.mxu0 0.0
    %4350 = vmatpush1.msra.mxu0 0.0
    %4351 = vmatprep.subr.mxu0 0.0
    %4352 = vmatpush1.msra.mxu0 0.0
    %4353 = vmatprep.subr.mxu0 0.0
    %4354 = vmatpush1.msra.mxu0 0.0
    %4355 = vmatprep.subr.mxu0 0.0
    %4356 = vmatpush1.msra.mxu0 0.0
    %4357 = vmatprep.subr.mxu0 0.0
    %4358 = vmatpush1.msra.mxu0 0.0
    %4359 = vmatprep.subr.mxu0 0.0
    %4360 = vmatpush1.msra.mxu0 0.0
    %4361 = vmatprep.subr.mxu0 0.0
    %4362 = vmatpush1.msra.mxu0 0.0
    %4363 = vmatprep.subr.mxu0 0.0
    %4364 = vmatpush1.msra.mxu0 0.0
    %4365 = vmatprep.subr.mxu0 0.0
    %4366 = vmatpush1.msra.mxu0 0.0
    %4367 = vmatprep.subr.mxu0 0.0
    %4368 = vmatpush1.msra.mxu0 0.0
    %4369 = vmatprep.subr.mxu0 0.0
    %4370 = vmatpush1.msra.mxu0 0.0
    %4371 = vmatprep.subr.mxu0 0.0
    %4372 = vmatpush1.msra.mxu0 0.0
    %4373 = vmatprep.subr.mxu0 0.0
    %4374 = vmatpush1.msra.mxu0 0.0
    %4375 = vmatprep.subr.mxu0 0.0
    %4376 = vmatpush1.msra.mxu0 0.0
    %4377 = vmatprep.subr.mxu0 0.0
    %4378 = vmatpush1.msra.mxu0 0.0
    %4379 = vmatprep.subr.mxu0 0.0
    %4380 = vmatpush1.msra.mxu0 0.0
    %4381 = vmatprep.subr.mxu0 0.0
    %4382 = vmatpush1.msra.mxu0 0.0
    %4383 = vmatprep.subr.mxu0 0.0
    %4384 = vmatpush1.msra.mxu0 0.0
    %4385 = vmatprep.subr.mxu0 0.0
    %4386 = vmatpush1.msra.mxu0 0.0
    %4387 = vmatprep.subr.mxu0 0.0
    %4388 = vmatpush1.msra.mxu0 0.0
    %4389 = vmatprep.subr.mxu0 0.0
    %4390 = vmatpush1.msra.mxu0 0.0
    %4391 = vmatprep.subr.mxu0 0.0
    %4392 = vmatpush1.msra.mxu0 0.0
    %4393 = vmatprep.subr.mxu0 0.0
    %4394 = vmatpush1.msra.mxu0 0.0
    %4395 = vmatprep.subr.mxu0 0.0
    %4396 = vmatpush1.msra.mxu0 0.0
    %4397 = vmatprep.subr.mxu0 0.0
    %4398 = vmatpush1.msra.mxu0 0.0
    %4399 = vmatprep.subr.mxu0 0.0
    %4400 = vmatpush1.msra.mxu0 0.0
    %4401 = vmatprep.subr.mxu0 0.0
    %4402 = vmatpush1.msra.mxu0 0.0
    %4403 = vmatprep.subr.mxu0 0.0
    %4404 = vmatpush1.msra.mxu0 0.0
    %4405 = vmatprep.mubr.f32.mxu0 0.0
    %4406 = vmatmul.mubr.f32.gmra.mrb[0].mxu0 %v4268
    %v4407 = vpop.f32.mrb[0].mxu0
    %v4408 = vadd.f32 0.0, %v4407
    %v4409 = vpop.f32.mrb[0].mxu0
    %v4410 = vadd.f32 0.0, %v4409
    %4411 = vdwg.mxu0
    %v4412 = vadd.f32 %v4177, %v4337
    %v4413 = vadd.f32 %v4179, %v4339
    %v4414 = vadd.f32 %v4248, %v4408
    %v4415 = vadd.f32 %v4250, %v4410
    %4416 = vrot.lane.b32.xlu0 %v3934, 106
    %v4417 = vpop.permute.xlu0 %4416
    %4418 = vrot.lane.b32.xlu0 %v3935, 106
    %v4419 = vpop.permute.xlu0 %4418
    %4420 = vrot.lane.b32.xlu0 %v3936, 106
    %v4421 = vpop.permute.xlu0 %4420
    %4422 = vrot.lane.b32.xlu0 %v3937, 106
    %v4423 = vpop.permute.xlu0 %4422
    %v4424 = vsel %vm1308, %v4417, %v4419
    %v4425 = vsel %vm1308, %v4419, %v4421
    %v4426 = vsel %vm1308, %v4421, %v4423
    %v4432 = vsel %vm3961, %v776, 0
    %4434 = vmatprep.subr.mxu0 %v4425
    %4435 = vmatpush1.msra.mxu0 %v4424
    %4436 = vmatprep.subr.mxu0 0.0
    %4437 = vmatpush1.msra.mxu0 0.0
    %4438 = vmatprep.subr.mxu0 0.0
    %4439 = vmatpush1.msra.mxu0 0.0
    %4440 = vmatprep.subr.mxu0 0.0
    %4441 = vmatpush1.msra.mxu0 0.0
    %4442 = vmatprep.subr.mxu0 0.0
    %4443 = vmatpush1.msra.mxu0 0.0
    %4444 = vmatprep.subr.mxu0 0.0
    %4445 = vmatpush1.msra.mxu0 0.0
    %4446 = vmatprep.subr.mxu0 0.0
    %4447 = vmatpush1.msra.mxu0 0.0
    %4448 = vmatprep.subr.mxu0 0.0
    %4449 = vmatpush1.msra.mxu0 0.0
    %4450 = vmatprep.subr.mxu0 0.0
    %4451 = vmatpush1.msra.mxu0 0.0
    %4452 = vmatprep.subr.mxu0 0.0
    %4453 = vmatpush1.msra.mxu0 0.0
    %4454 = vmatprep.subr.mxu0 0.0
    %4455 = vmatpush1.msra.mxu0 0.0
    %4456 = vmatprep.subr.mxu0 0.0
    %4457 = vmatpush1.msra.mxu0 0.0
    %4458 = vmatprep.subr.mxu0 0.0
    %4459 = vmatpush1.msra.mxu0 0.0
    %4460 = vmatprep.subr.mxu0 0.0
    %4461 = vmatpush1.msra.mxu0 0.0
    %4462 = vmatprep.subr.mxu0 0.0
    %4463 = vmatpush1.msra.mxu0 0.0
    %4464 = vmatprep.subr.mxu0 0.0
    %4465 = vmatpush1.msra.mxu0 0.0
    %4466 = vmatprep.subr.mxu0 0.0
    %4467 = vmatpush1.msra.mxu0 0.0
    %4468 = vmatprep.subr.mxu0 0.0
    %4469 = vmatpush1.msra.mxu0 0.0
    %4470 = vmatprep.subr.mxu0 0.0
    %4471 = vmatpush1.msra.mxu0 0.0
    %4472 = vmatprep.subr.mxu0 0.0
    %4473 = vmatpush1.msra.mxu0 0.0
    %4474 = vmatprep.subr.mxu0 0.0
    %4475 = vmatpush1.msra.mxu0 0.0
    %4476 = vmatprep.subr.mxu0 0.0
    %4477 = vmatpush1.msra.mxu0 0.0
    %4478 = vmatprep.subr.mxu0 0.0
    %4479 = vmatpush1.msra.mxu0 0.0
    %4480 = vmatprep.subr.mxu0 0.0
    %4481 = vmatpush1.msra.mxu0 0.0
    %4482 = vmatprep.subr.mxu0 0.0
    %4483 = vmatpush1.msra.mxu0 0.0
    %4484 = vmatprep.subr.mxu0 0.0
    %4485 = vmatpush1.msra.mxu0 0.0
    %4486 = vmatprep.subr.mxu0 0.0
    %4487 = vmatpush1.msra.mxu0 0.0
    %4488 = vmatprep.subr.mxu0 0.0
    %4489 = vmatpush1.msra.mxu0 0.0
    %4490 = vmatprep.subr.mxu0 0.0
    %4491 = vmatpush1.msra.mxu0 0.0
    %4492 = vmatprep.subr.mxu0 0.0
    %4493 = vmatpush1.msra.mxu0 0.0
    %4494 = vmatprep.subr.mxu0 0.0
    %4495 = vmatpush1.msra.mxu0 0.0
    %4496 = vmatprep.subr.mxu0 0.0
    %4497 = vmatpush1.msra.mxu0 0.0
    %4498 = vmatprep.mubr.f32.mxu0 0.0
    %4499 = vmatmul.mubr.f32.gmra.mrb[0].mxu0 %v4432
    %v4500 = vpop.f32.mrb[0].mxu0
    %v4501 = vadd.f32 0.0, %v4500
    %v4502 = vpop.f32.mrb[0].mxu0
    %v4503 = vadd.f32 0.0, %v4502
    %4504 = vdwg.mxu0
    %4505 = vmatprep.subr.mxu0 %v4423
    %4506 = vmatpush1.msra.mxu0 %v4426
    %4507 = vmatprep.subr.mxu0 0.0
    %4508 = vmatpush1.msra.mxu0 0.0
    %4509 = vmatprep.subr.mxu0 0.0
    %4510 = vmatpush1.msra.mxu0 0.0
    %4511 = vmatprep.subr.mxu0 0.0
    %4512 = vmatpush1.msra.mxu0 0.0
    %4513 = vmatprep.subr.mxu0 0.0
    %4514 = vmatpush1.msra.mxu0 0.0
    %4515 = vmatprep.subr.mxu0 0.0
    %4516 = vmatpush1.msra.mxu0 0.0
    %4517 = vmatprep.subr.mxu0 0.0
    %4518 = vmatpush1.msra.mxu0 0.0
    %4519 = vmatprep.subr.mxu0 0.0
    %4520 = vmatpush1.msra.mxu0 0.0
    %4521 = vmatprep.subr.mxu0 0.0
    %4522 = vmatpush1.msra.mxu0 0.0
    %4523 = vmatprep.subr.mxu0 0.0
    %4524 = vmatpush1.msra.mxu0 0.0
    %4525 = vmatprep.subr.mxu0 0.0
    %4526 = vmatpush1.msra.mxu0 0.0
    %4527 = vmatprep.subr.mxu0 0.0
    %4528 = vmatpush1.msra.mxu0 0.0
    %4529 = vmatprep.subr.mxu0 0.0
    %4530 = vmatpush1.msra.mxu0 0.0
    %4531 = vmatprep.subr.mxu0 0.0
    %4532 = vmatpush1.msra.mxu0 0.0
    %4533 = vmatprep.subr.mxu0 0.0
    %4534 = vmatpush1.msra.mxu0 0.0
    %4535 = vmatprep.subr.mxu0 0.0
    %4536 = vmatpush1.msra.mxu0 0.0
    %4537 = vmatprep.subr.mxu0 0.0
    %4538 = vmatpush1.msra.mxu0 0.0
    %4539 = vmatprep.subr.mxu0 0.0
    %4540 = vmatpush1.msra.mxu0 0.0
    %4541 = vmatprep.subr.mxu0 0.0
    %4542 = vmatpush1.msra.mxu0 0.0
    %4543 = vmatprep.subr.mxu0 0.0
    %4544 = vmatpush1.msra.mxu0 0.0
    %4545 = vmatprep.subr.mxu0 0.0
    %4546 = vmatpush1.msra.mxu0 0.0
    %4547 = vmatprep.subr.mxu0 0.0
    %4548 = vmatpush1.msra.mxu0 0.0
    %4549 = vmatprep.subr.mxu0 0.0
    %4550 = vmatpush1.msra.mxu0 0.0
    %4551 = vmatprep.subr.mxu0 0.0
    %4552 = vmatpush1.msra.mxu0 0.0
    %4553 = vmatprep.subr.mxu0 0.0
    %4554 = vmatpush1.msra.mxu0 0.0
    %4555 = vmatprep.subr.mxu0 0.0
    %4556 = vmatpush1.msra.mxu0 0.0
    %4557 = vmatprep.subr.mxu0 0.0
    %4558 = vmatpush1.msra.mxu0 0.0
    %4559 = vmatprep.subr.mxu0 0.0
    %4560 = vmatpush1.msra.mxu0 0.0
    %4561 = vmatprep.subr.mxu0 0.0
    %4562 = vmatpush1.msra.mxu0 0.0
    %4563 = vmatprep.subr.mxu0 0.0
    %4564 = vmatpush1.msra.mxu0 0.0
    %4565 = vmatprep.subr.mxu0 0.0
    %4566 = vmatpush1.msra.mxu0 0.0
    %4567 = vmatprep.subr.mxu0 0.0
    %4568 = vmatpush1.msra.mxu0 0.0
    %4569 = vmatprep.mubr.f32.mxu0 0.0
    %4570 = vmatmul.mubr.f32.gmra.mrb[0].mxu0 %v4432
    %v4571 = vpop.f32.mrb[0].mxu0
    %v4572 = vadd.f32 0.0, %v4571
    %v4573 = vpop.f32.mrb[0].mxu0
    %v4574 = vadd.f32 0.0, %v4573
    %4575 = vdwg.mxu0
    %v4576 = vadd.f32 %v4412, %v4501
    %v4577 = vadd.f32 %v4413, %v4503
    %v4578 = vadd.f32 %v4414, %v4572
    %v4579 = vadd.f32 %v4415, %v4574
    %4580 = vrot.lane.b32.xlu0 %v3934, 105
    %v4581 = vpop.permute.xlu0 %4580
    %4582 = vrot.lane.b32.xlu0 %v3935, 105
    %v4583 = vpop.permute.xlu0 %4582
    %4584 = vrot.lane.b32.xlu0 %v3936, 105
    %v4585 = vpop.permute.xlu0 %4584
    %4586 = vrot.lane.b32.xlu0 %v3937, 105
    %v4587 = vpop.permute.xlu0 %4586
    %v4588 = vsel %vm1477, %v4581, %v4583
    %v4589 = vsel %vm1477, %v4583, %v4585
    %v4590 = vsel %vm1477, %v4585, %v4587
    %v4596 = vsel %vm3961, %v777, 0
    %4598 = vmatprep.subr.mxu0 %v4589
    %4599 = vmatpush1.msra.mxu0 %v4588
    %4600 = vmatprep.subr.mxu0 0.0
    %4601 = vmatpush1.msra.mxu0 0.0
    %4602 = vmatprep.subr.mxu0 0.0
    %4603 = vmatpush1.msra.mxu0 0.0
    %4604 = vmatprep.subr.mxu0 0.0
    %4605 = vmatpush1.msra.mxu0 0.0
    %4606 = vmatprep.subr.mxu0 0.0
    %4607 = vmatpush1.msra.mxu0 0.0
    %4608 = vmatprep.subr.mxu0 0.0
    %4609 = vmatpush1.msra.mxu0 0.0
    %4610 = vmatprep.subr.mxu0 0.0
    %4611 = vmatpush1.msra.mxu0 0.0
    %4612 = vmatprep.subr.mxu0 0.0
    %4613 = vmatpush1.msra.mxu0 0.0
    %4614 = vmatprep.subr.mxu0 0.0
    %4615 = vmatpush1.msra.mxu0 0.0
    %4616 = vmatprep.subr.mxu0 0.0
    %4617 = vmatpush1.msra.mxu0 0.0
    %4618 = vmatprep.subr.mxu0 0.0
    %4619 = vmatpush1.msra.mxu0 0.0
    %4620 = vmatprep.subr.mxu0 0.0
    %4621 = vmatpush1.msra.mxu0 0.0
    %4622 = vmatprep.subr.mxu0 0.0
    %4623 = vmatpush1.msra.mxu0 0.0
    %4624 = vmatprep.subr.mxu0 0.0
    %4625 = vmatpush1.msra.mxu0 0.0
    %4626 = vmatprep.subr.mxu0 0.0
    %4627 = vmatpush1.msra.mxu0 0.0
    %4628 = vmatprep.subr.mxu0 0.0
    %4629 = vmatpush1.msra.mxu0 0.0
    %4630 = vmatprep.subr.mxu0 0.0
    %4631 = vmatpush1.msra.mxu0 0.0
    %4632 = vmatprep.subr.mxu0 0.0
    %4633 = vmatpush1.msra.mxu0 0.0
    %4634 = vmatprep.subr.mxu0 0.0
    %4635 = vmatpush1.msra.mxu0 0.0
    %4636 = vmatprep.subr.mxu0 0.0
    %4637 = vmatpush1.msra.mxu0 0.0
    %4638 = vmatprep.subr.mxu0 0.0
    %4639 = vmatpush1.msra.mxu0 0.0
    %4640 = vmatprep.subr.mxu0 0.0
    %4641 = vmatpush1.msra.mxu0 0.0
    %4642 = vmatprep.subr.mxu0 0.0
    %4643 = vmatpush1.msra.mxu0 0.0
    %4644 = vmatprep.subr.mxu0 0.0
    %4645 = vmatpush1.msra.mxu0 0.0
    %4646 = vmatprep.subr.mxu0 0.0
    %4647 = vmatpush1.msra.mxu0 0.0
    %4648 = vmatprep.subr.mxu0 0.0
    %4649 = vmatpush1.msra.mxu0 0.0
    %4650 = vmatprep.subr.mxu0 0.0
    %4651 = vmatpush1.msra.mxu0 0.0
    %4652 = vmatprep.subr.mxu0 0.0
    %4653 = vmatpush1.msra.mxu0 0.0
    %4654 = vmatprep.subr.mxu0 0.0
    %4655 = vmatpush1.msra.mxu0 0.0
    %4656 = vmatprep.subr.mxu0 0.0
    %4657 = vmatpush1.msra.mxu0 0.0
    %4658 = vmatprep.subr.mxu0 0.0
    %4659 = vmatpush1.msra.mxu0 0.0
    %4660 = vmatprep.subr.mxu0 0.0
    %4661 = vmatpush1.msra.mxu0 0.0
    %4662 = vmatprep.mubr.f32.mxu0 0.0
    %4663 = vmatmul.mubr.f32.gmra.mrb[0].mxu0 %v4596
    %v4664 = vpop.f32.mrb[0].mxu0
    %v4665 = vadd.f32 0.0, %v4664
    %v4666 = vpop.f32.mrb[0].mxu0
    %v4667 = vadd.f32 0.0, %v4666
    %4668 = vdwg.mxu0
    %4669 = vmatprep.subr.mxu0 %v4587
    %4670 = vmatpush1.msra.mxu0 %v4590
    %4671 = vmatprep.subr.mxu0 0.0
    %4672 = vmatpush1.msra.mxu0 0.0
    %4673 = vmatprep.subr.mxu0 0.0
    %4674 = vmatpush1.msra.mxu0 0.0
    %4675 = vmatprep.subr.mxu0 0.0
    %4676 = vmatpush1.msra.mxu0 0.0
    %4677 = vmatprep.subr.mxu0 0.0
    %4678 = vmatpush1.msra.mxu0 0.0
    %4679 = vmatprep.subr.mxu0 0.0
    %4680 = vmatpush1.msra.mxu0 0.0
    %4681 = vmatprep.subr.mxu0 0.0
    %4682 = vmatpush1.msra.mxu0 0.0
    %4683 = vmatprep.subr.mxu0 0.0
    %4684 = vmatpush1.msra.mxu0 0.0
    %4685 = vmatprep.subr.mxu0 0.0
    %4686 = vmatpush1.msra.mxu0 0.0
    %4687 = vmatprep.subr.mxu0 0.0
    %4688 = vmatpush1.msra.mxu0 0.0
    %4689 = vmatprep.subr.mxu0 0.0
    %4690 = vmatpush1.msra.mxu0 0.0
    %4691 = vmatprep.subr.mxu0 0.0
    %4692 = vmatpush1.msra.mxu0 0.0
    %4693 = vmatprep.subr.mxu0 0.0
    %4694 = vmatpush1.msra.mxu0 0.0
    %4695 = vmatprep.subr.mxu0 0.0
    %4696 = vmatpush1.msra.mxu0 0.0
    %4697 = vmatprep.subr.mxu0 0.0
    %4698 = vmatpush1.msra.mxu0 0.0
    %4699 = vmatprep.subr.mxu0 0.0
    %4700 = vmatpush1.msra.mxu0 0.0
    %4701 = vmatprep.subr.mxu0 0.0
    %4702 = vmatpush1.msra.mxu0 0.0
    %4703 = vmatprep.subr.mxu0 0.0
    %4704 = vmatpush1.msra.mxu0 0.0
    %4705 = vmatprep.subr.mxu0 0.0
    %4706 = vmatpush1.msra.mxu0 0.0
    %4707 = vmatprep.subr.mxu0 0.0
    %4708 = vmatpush1.msra.mxu0 0.0
    %4709 = vmatprep.subr.mxu0 0.0
    %4710 = vmatpush1.msra.mxu0 0.0
    %4711 = vmatprep.subr.mxu0 0.0
    %4712 = vmatpush1.msra.mxu0 0.0
    %4713 = vmatprep.subr.mxu0 0.0
    %4714 = vmatpush1.msra.mxu0 0.0
    %4715 = vmatprep.subr.mxu0 0.0
    %4716 = vmatpush1.msra.mxu0 0.0
    %4717 = vmatprep.subr.mxu0 0.0
    %4718 = vmatpush1.msra.mxu0 0.0
    %4719 = vmatprep.subr.mxu0 0.0
    %4720 = vmatpush1.msra.mxu0 0.0
    %4721 = vmatprep.subr.mxu0 0.0
    %4722 = vmatpush1.msra.mxu0 0.0
    %4723 = vmatprep.subr.mxu0 0.0
    %4724 = vmatpush1.msra.mxu0 0.0
    %4725 = vmatprep.subr.mxu0 0.0
    %4726 = vmatpush1.msra.mxu0 0.0
    %4727 = vmatprep.subr.mxu0 0.0
    %4728 = vmatpush1.msra.mxu0 0.0
    %4729 = vmatprep.subr.mxu0 0.0
    %4730 = vmatpush1.msra.mxu0 0.0
    %4731 = vmatprep.subr.mxu0 0.0
    %4732 = vmatpush1.msra.mxu0 0.0
    %4733 = vmatprep.mubr.f32.mxu0 0.0
    %4734 = vmatmul.mubr.f32.gmra.mrb[0].mxu0 %v4596
    %v4735 = vpop.f32.mrb[0].mxu0
    %v4736 = vadd.f32 0.0, %v4735
    %v4737 = vpop.f32.mrb[0].mxu0
    %v4738 = vadd.f32 0.0, %v4737
    %4739 = vdwg.mxu0
    %v4740 = vadd.f32 %v4576, %v4665
    %v4741 = vadd.f32 %v4577, %v4667
    %v4742 = vadd.f32 %v4578, %v4736
    %v4743 = vadd.f32 %v4579, %v4738
    %4744 = vrot.lane.b32.xlu0 %v3934, 104
    %v4745 = vpop.permute.xlu0 %4744
    %4746 = vrot.lane.b32.xlu0 %v3935, 104
    %v4747 = vpop.permute.xlu0 %4746
    %4748 = vrot.lane.b32.xlu0 %v3936, 104
    %v4749 = vpop.permute.xlu0 %4748
    %4750 = vrot.lane.b32.xlu0 %v3937, 104
    %v4751 = vpop.permute.xlu0 %4750
    %v4752 = vsel %vm1646, %v4745, %v4747
    %v4753 = vsel %vm1646, %v4747, %v4749
    %v4754 = vsel %vm1646, %v4749, %v4751
    %v4760 = vsel %vm3961, %v778, 0
    %4762 = vmatprep.subr.mxu0 %v4753
    %4763 = vmatpush1.msra.mxu0 %v4752
    %4764 = vmatprep.subr.mxu0 0.0
    %4765 = vmatpush1.msra.mxu0 0.0
    %4766 = vmatprep.subr.mxu0 0.0
    %4767 = vmatpush1.msra.mxu0 0.0
    %4768 = vmatprep.subr.mxu0 0.0
    %4769 = vmatpush1.msra.mxu0 0.0
    %4770 = vmatprep.subr.mxu0 0.0
    %4771 = vmatpush1.msra.mxu0 0.0
    %4772 = vmatprep.subr.mxu0 0.0
    %4773 = vmatpush1.msra.mxu0 0.0
    %4774 = vmatprep.subr.mxu0 0.0
    %4775 = vmatpush1.msra.mxu0 0.0
    %4776 = vmatprep.subr.mxu0 0.0
    %4777 = vmatpush1.msra.mxu0 0.0
    %4778 = vmatprep.subr.mxu0 0.0
    %4779 = vmatpush1.msra.mxu0 0.0
    %4780 = vmatprep.subr.mxu0 0.0
    %4781 = vmatpush1.msra.mxu0 0.0
    %4782 = vmatprep.subr.mxu0 0.0
    %4783 = vmatpush1.msra.mxu0 0.0
    %4784 = vmatprep.subr.mxu0 0.0
    %4785 = vmatpush1.msra.mxu0 0.0
    %4786 = vmatprep.subr.mxu0 0.0
    %4787 = vmatpush1.msra.mxu0 0.0
    %4788 = vmatprep.subr.mxu0 0.0
    %4789 = vmatpush1.msra.mxu0 0.0
    %4790 = vmatprep.subr.mxu0 0.0
    %4791 = vmatpush1.msra.mxu0 0.0
    %4792 = vmatprep.subr.mxu0 0.0
    %4793 = vmatpush1.msra.mxu0 0.0
    %4794 = vmatprep.subr.mxu0 0.0
    %4795 = vmatpush1.msra.mxu0 0.0
    %4796 = vmatprep.subr.mxu0 0.0
    %4797 = vmatpush1.msra.mxu0 0.0
    %4798 = vmatprep.subr.mxu0 0.0
    %4799 = vmatpush1.msra.mxu0 0.0
    %4800 = vmatprep.subr.mxu0 0.0
    %4801 = vmatpush1.msra.mxu0 0.0
    %4802 = vmatprep.subr.mxu0 0.0
    %4803 = vmatpush1.msra.mxu0 0.0
    %4804 = vmatprep.subr.mxu0 0.0
    %4805 = vmatpush1.msra.mxu0 0.0
    %4806 = vmatprep.subr.mxu0 0.0
    %4807 = vmatpush1.msra.mxu0 0.0
    %4808 = vmatprep.subr.mxu0 0.0
    %4809 = vmatpush1.msra.mxu0 0.0
    %4810 = vmatprep.subr.mxu0 0.0
    %4811 = vmatpush1.msra.mxu0 0.0
    %4812 = vmatprep.subr.mxu0 0.0
    %4813 = vmatpush1.msra.mxu0 0.0
    %4814 = vmatprep.subr.mxu0 0.0
    %4815 = vmatpush1.msra.mxu0 0.0
    %4816 = vmatprep.subr.mxu0 0.0
    %4817 = vmatpush1.msra.mxu0 0.0
    %4818 = vmatprep.subr.mxu0 0.0
    %4819 = vmatpush1.msra.mxu0 0.0
    %4820 = vmatprep.subr.mxu0 0.0
    %4821 = vmatpush1.msra.mxu0 0.0
    %4822 = vmatprep.subr.mxu0 0.0
    %4823 = vmatpush1.msra.mxu0 0.0
    %4824 = vmatprep.subr.mxu0 0.0
    %4825 = vmatpush1.msra.mxu0 0.0
    %4826 = vmatprep.mubr.f32.mxu0 0.0
    %4827 = vmatmul.mubr.f32.gmra.mrb[0].mxu0 %v4760
    %v4828 = vpop.f32.mrb[0].mxu0
    %v4829 = vadd.f32 0.0, %v4828
    %v4830 = vpop.f32.mrb[0].mxu0
    %v4831 = vadd.f32 0.0, %v4830
    %4832 = vdwg.mxu0
    %4833 = vmatprep.subr.mxu0 %v4751
    %4834 = vmatpush1.msra.mxu0 %v4754
    %4835 = vmatprep.subr.mxu0 0.0
    %4836 = vmatpush1.msra.mxu0 0.0
    %4837 = vmatprep.subr.mxu0 0.0
    %4838 = vmatpush1.msra.mxu0 0.0
    %4839 = vmatprep.subr.mxu0 0.0
    %4840 = vmatpush1.msra.mxu0 0.0
    %4841 = vmatprep.subr.mxu0 0.0
    %4842 = vmatpush1.msra.mxu0 0.0
    %4843 = vmatprep.subr.mxu0 0.0
    %4844 = vmatpush1.msra.mxu0 0.0
    %4845 = vmatprep.subr.mxu0 0.0
    %4846 = vmatpush1.msra.mxu0 0.0
    %4847 = vmatprep.subr.mxu0 0.0
    %4848 = vmatpush1.msra.mxu0 0.0
    %4849 = vmatprep.subr.mxu0 0.0
    %4850 = vmatpush1.msra.mxu0 0.0
    %4851 = vmatprep.subr.mxu0 0.0
    %4852 = vmatpush1.msra.mxu0 0.0
    %4853 = vmatprep.subr.mxu0 0.0
    %4854 = vmatpush1.msra.mxu0 0.0
    %4855 = vmatprep.subr.mxu0 0.0
    %4856 = vmatpush1.msra.mxu0 0.0
    %4857 = vmatprep.subr.mxu0 0.0
    %4858 = vmatpush1.msra.mxu0 0.0
    %4859 = vmatprep.subr.mxu0 0.0
    %4860 = vmatpush1.msra.mxu0 0.0
    %4861 = vmatprep.subr.mxu0 0.0
    %4862 = vmatpush1.msra.mxu0 0.0
    %4863 = vmatprep.subr.mxu0 0.0
    %4864 = vmatpush1.msra.mxu0 0.0
    %4865 = vmatprep.subr.mxu0 0.0
    %4866 = vmatpush1.msra.mxu0 0.0
    %4867 = vmatprep.subr.mxu0 0.0
    %4868 = vmatpush1.msra.mxu0 0.0
    %4869 = vmatprep.subr.mxu0 0.0
    %4870 = vmatpush1.msra.mxu0 0.0
    %4871 = vmatprep.subr.mxu0 0.0
    %4872 = vmatpush1.msra.mxu0 0.0
    %4873 = vmatprep.subr.mxu0 0.0
    %4874 = vmatpush1.msra.mxu0 0.0
    %4875 = vmatprep.subr.mxu0 0.0
    %4876 = vmatpush1.msra.mxu0 0.0
    %4877 = vmatprep.subr.mxu0 0.0
    %4878 = vmatpush1.msra.mxu0 0.0
    %4879 = vmatprep.subr.mxu0 0.0
    %4880 = vmatpush1.msra.mxu0 0.0
    %4881 = vmatprep.subr.mxu0 0.0
    %4882 = vmatpush1.msra.mxu0 0.0
    %4883 = vmatprep.subr.mxu0 0.0
    %4884 = vmatpush1.msra.mxu0 0.0
    %4885 = vmatprep.subr.mxu0 0.0
    %4886 = vmatpush1.msra.mxu0 0.0
    %4887 = vmatprep.subr.mxu0 0.0
    %4888 = vmatpush1.msra.mxu0 0.0
    %4889 = vmatprep.subr.mxu0 0.0
    %4890 = vmatpush1.msra.mxu0 0.0
    %4891 = vmatprep.subr.mxu0 0.0
    %4892 = vmatpush1.msra.mxu0 0.0
    %4893 = vmatprep.subr.mxu0 0.0
    %4894 = vmatpush1.msra.mxu0 0.0
    %4895 = vmatprep.subr.mxu0 0.0
    %4896 = vmatpush1.msra.mxu0 0.0
    %4897 = vmatprep.mubr.f32.mxu0 0.0
    %4898 = vmatmul.mubr.f32.gmra.mrb[0].mxu0 %v4760
    %v4899 = vpop.f32.mrb[0].mxu0
    %v4900 = vadd.f32 0.0, %v4899
    %v4901 = vpop.f32.mrb[0].mxu0
    %v4902 = vadd.f32 0.0, %v4901
    %4903 = vdwg.mxu0
    %v4904 = vadd.f32 %v4740, %v4829
    %v4905 = vadd.f32 %v4741, %v4831
    %v4906 = vadd.f32 %v4742, %v4900
    %v4907 = vadd.f32 %v4743, %v4902
    %4908 = vrot.lane.b32.xlu0 %v3934, 84
    %v4909 = vpop.permute.xlu0 %4908
    %4910 = vrot.lane.b32.xlu0 %v3935, 84
    %v4911 = vpop.permute.xlu0 %4910
    %4912 = vrot.lane.b32.xlu0 %v3936, 84
    %v4913 = vpop.permute.xlu0 %4912
    %4914 = vrot.lane.b32.xlu0 %v3937, 84
    %v4915 = vpop.permute.xlu0 %4914
    %v4916 = vsel %vm1815, %v4909, %v4911
    %v4917 = vsel %vm1815, %v4911, %v4913
    %v4918 = vsel %vm1815, %v4913, %v4915
    %v4924 = vsel %vm3961, %v779, 0
    %4926 = vmatprep.subr.mxu0 %v4917
    %4927 = vmatpush1.msra.mxu0 %v4916
    %4928 = vmatprep.subr.mxu0 0.0
    %4929 = vmatpush1.msra.mxu0 0.0
    %4930 = vmatprep.subr.mxu0 0.0
    %4931 = vmatpush1.msra.mxu0 0.0
    %4932 = vmatprep.subr.mxu0 0.0
    %4933 = vmatpush1.msra.mxu0 0.0
    %4934 = vmatprep.subr.mxu0 0.0
    %4935 = vmatpush1.msra.mxu0 0.0
    %4936 = vmatprep.subr.mxu0 0.0
    %4937 = vmatpush1.msra.mxu0 0.0
    %4938 = vmatprep.subr.mxu0 0.0
    %4939 = vmatpush1.msra.mxu0 0.0
    %4940 = vmatprep.subr.mxu0 0.0
    %4941 = vmatpush1.msra.mxu0 0.0
    %4942 = vmatprep.subr.mxu0 0.0
    %4943 = vmatpush1.msra.mxu0 0.0
    %4944 = vmatprep.subr.mxu0 0.0
    %4945 = vmatpush1.msra.mxu0 0.0
    %4946 = vmatprep.subr.mxu0 0.0
    %4947 = vmatpush1.msra.mxu0 0.0
    %4948 = vmatprep.subr.mxu0 0.0
    %4949 = vmatpush1.msra.mxu0 0.0
    %4950 = vmatprep.subr.mxu0 0.0
    %4951 = vmatpush1.msra.mxu0 0.0
    %4952 = vmatprep.subr.mxu0 0.0
    %4953 = vmatpush1.msra.mxu0 0.0
    %4954 = vmatprep.subr.mxu0 0.0
    %4955 = vmatpush1.msra.mxu0 0.0
    %4956 = vmatprep.subr.mxu0 0.0
    %4957 = vmatpush1.msra.mxu0 0.0
    %4958 = vmatprep.subr.mxu0 0.0
    %4959 = vmatpush1.msra.mxu0 0.0
    %4960 = vmatprep.subr.mxu0 0.0
    %4961 = vmatpush1.msra.mxu0 0.0
    %4962 = vmatprep.subr.mxu0 0.0
    %4963 = vmatpush1.msra.mxu0 0.0
    %4964 = vmatprep.subr.mxu0 0.0
    %4965 = vmatpush1.msra.mxu0 0.0
    %4966 = vmatprep.subr.mxu0 0.0
    %4967 = vmatpush1.msra.mxu0 0.0
    %4968 = vmatprep.subr.mxu0 0.0
    %4969 = vmatpush1.msra.mxu0 0.0
    %4970 = vmatprep.subr.mxu0 0.0
    %4971 = vmatpush1.msra.mxu0 0.0
    %4972 = vmatprep.subr.mxu0 0.0
    %4973 = vmatpush1.msra.mxu0 0.0
    %4974 = vmatprep.subr.mxu0 0.0
    %4975 = vmatpush1.msra.mxu0 0.0
    %4976 = vmatprep.subr.mxu0 0.0
    %4977 = vmatpush1.msra.mxu0 0.0
    %4978 = vmatprep.subr.mxu0 0.0
    %4979 = vmatpush1.msra.mxu0 0.0
    %4980 = vmatprep.subr.mxu0 0.0
    %4981 = vmatpush1.msra.mxu0 0.0
    %4982 = vmatprep.subr.mxu0 0.0
    %4983 = vmatpush1.msra.mxu0 0.0
    %4984 = vmatprep.subr.mxu0 0.0
    %4985 = vmatpush1.msra.mxu0 0.0
    %4986 = vmatprep.subr.mxu0 0.0
    %4987 = vmatpush1.msra.mxu0 0.0
    %4988 = vmatprep.subr.mxu0 0.0
    %4989 = vmatpush1.msra.mxu0 0.0
    %4990 = vmatprep.mubr.f32.mxu0 0.0
    %4991 = vmatmul.mubr.f32.gmra.mrb[0].mxu0 %v4924
    %v4992 = vpop.f32.mrb[0].mxu0
    %v4993 = vadd.f32 0.0, %v4992
    %v4994 = vpop.f32.mrb[0].mxu0
    %v4995 = vadd.f32 0.0, %v4994
    %4996 = vdwg.mxu0
    %4997 = vmatprep.subr.mxu0 %v4915
    %4998 = vmatpush1.msra.mxu0 %v4918
    %4999 = vmatprep.subr.mxu0 0.0
    %5000 = vmatpush1.msra.mxu0 0.0
    %5001 = vmatprep.subr.mxu0 0.0
    %5002 = vmatpush1.msra.mxu0 0.0
    %5003 = vmatprep.subr.mxu0 0.0
    %5004 = vmatpush1.msra.mxu0 0.0
    %5005 = vmatprep.subr.mxu0 0.0
    %5006 = vmatpush1.msra.mxu0 0.0
    %5007 = vmatprep.subr.mxu0 0.0
    %5008 = vmatpush1.msra.mxu0 0.0
    %5009 = vmatprep.subr.mxu0 0.0
    %5010 = vmatpush1.msra.mxu0 0.0
    %5011 = vmatprep.subr.mxu0 0.0
    %5012 = vmatpush1.msra.mxu0 0.0
    %5013 = vmatprep.subr.mxu0 0.0
    %5014 = vmatpush1.msra.mxu0 0.0
    %5015 = vmatprep.subr.mxu0 0.0
    %5016 = vmatpush1.msra.mxu0 0.0
    %5017 = vmatprep.subr.mxu0 0.0
    %5018 = vmatpush1.msra.mxu0 0.0
    %5019 = vmatprep.subr.mxu0 0.0
    %5020 = vmatpush1.msra.mxu0 0.0
    %5021 = vmatprep.subr.mxu0 0.0
    %5022 = vmatpush1.msra.mxu0 0.0
    %5023 = vmatprep.subr.mxu0 0.0
    %5024 = vmatpush1.msra.mxu0 0.0
    %5025 = vmatprep.subr.mxu0 0.0
    %5026 = vmatpush1.msra.mxu0 0.0
    %5027 = vmatprep.subr.mxu0 0.0
    %5028 = vmatpush1.msra.mxu0 0.0
    %5029 = vmatprep.subr.mxu0 0.0
    %5030 = vmatpush1.msra.mxu0 0.0
    %5031 = vmatprep.subr.mxu0 0.0
    %5032 = vmatpush1.msra.mxu0 0.0
    %5033 = vmatprep.subr.mxu0 0.0
    %5034 = vmatpush1.msra.mxu0 0.0
    %5035 = vmatprep.subr.mxu0 0.0
    %5036 = vmatpush1.msra.mxu0 0.0
    %5037 = vmatprep.subr.mxu0 0.0
    %5038 = vmatpush1.msra.mxu0 0.0
    %5039 = vmatprep.subr.mxu0 0.0
    %5040 = vmatpush1.msra.mxu0 0.0
    %5041 = vmatprep.subr.mxu0 0.0
    %5042 = vmatpush1.msra.mxu0 0.0
    %5043 = vmatprep.subr.mxu0 0.0
    %5044 = vmatpush1.msra.mxu0 0.0
    %5045 = vmatprep.subr.mxu0 0.0
    %5046 = vmatpush1.msra.mxu0 0.0
    %5047 = vmatprep.subr.mxu0 0.0
    %5048 = vmatpush1.msra.mxu0 0.0
    %5049 = vmatprep.subr.mxu0 0.0
    %5050 = vmatpush1.msra.mxu0 0.0
    %5051 = vmatprep.subr.mxu0 0.0
    %5052 = vmatpush1.msra.mxu0 0.0
    %5053 = vmatprep.subr.mxu0 0.0
    %5054 = vmatpush1.msra.mxu0 0.0
    %5055 = vmatprep.subr.mxu0 0.0
    %5056 = vmatpush1.msra.mxu0 0.0
    %5057 = vmatprep.subr.mxu0 0.0
    %5058 = vmatpush1.msra.mxu0 0.0
    %5059 = vmatprep.subr.mxu0 0.0
    %5060 = vmatpush1.msra.mxu0 0.0
    %5061 = vmatprep.mubr.f32.mxu0 0.0
    %5062 = vmatmul.mubr.f32.gmra.mrb[0].mxu0 %v4924
    %v5063 = vpop.f32.mrb[0].mxu0
    %v5064 = vadd.f32 0.0, %v5063
    %v5065 = vpop.f32.mrb[0].mxu0
    %v5066 = vadd.f32 0.0, %v5065
    %5067 = vdwg.mxu0
    %v5068 = vadd.f32 %v4904, %v4993
    %v5069 = vadd.f32 %v4905, %v4995
    %v5070 = vadd.f32 %v4906, %v5064
    %v5071 = vadd.f32 %v4907, %v5066
    %5072 = vrot.lane.b32.xlu0 %v3934, 83
    %v5073 = vpop.permute.xlu0 %5072
    %5074 = vrot.lane.b32.xlu0 %v3935, 83
    %v5075 = vpop.permute.xlu0 %5074
    %5076 = vrot.lane.b32.xlu0 %v3936, 83
    %v5077 = vpop.permute.xlu0 %5076
    %5078 = vrot.lane.b32.xlu0 %v3937, 83
    %v5079 = vpop.permute.xlu0 %5078
    %v5080 = vsel %vm1984, %v5073, %v5075
    %v5081 = vsel %vm1984, %v5075, %v5077
    %v5082 = vsel %vm1984, %v5077, %v5079
    %v5088 = vsel %vm3961, %v780, 0
    %5090 = vmatprep.subr.mxu0 %v5081
    %5091 = vmatpush1.msra.mxu0 %v5080
    %5092 = vmatprep.subr.mxu0 0.0
    %5093 = vmatpush1.msra.mxu0 0.0
    %5094 = vmatprep.subr.mxu0 0.0
    %5095 = vmatpush1.msra.mxu0 0.0
    %5096 = vmatprep.subr.mxu0 0.0
    %5097 = vmatpush1.msra.mxu0 0.0
    %5098 = vmatprep.subr.mxu0 0.0
    %5099 = vmatpush1.msra.mxu0 0.0
    %5100 = vmatprep.subr.mxu0 0.0
    %5101 = vmatpush1.msra.mxu0 0.0
    %5102 = vmatprep.subr.mxu0 0.0
    %5103 = vmatpush1.msra.mxu0 0.0
    %5104 = vmatprep.subr.mxu0 0.0
    %5105 = vmatpush1.msra.mxu0 0.0
    %5106 = vmatprep.subr.mxu0 0.0
    %5107 = vmatpush1.msra.mxu0 0.0
    %5108 = vmatprep.subr.mxu0 0.0
    %5109 = vmatpush1.msra.mxu0 0.0
    %5110 = vmatprep.subr.mxu0 0.0
    %5111 = vmatpush1.msra.mxu0 0.0
    %5112 = vmatprep.subr.mxu0 0.0
    %5113 = vmatpush1.msra.mxu0 0.0
    %5114 = vmatprep.subr.mxu0 0.0
    %5115 = vmatpush1.msra.mxu0 0.0
    %5116 = vmatprep.subr.mxu0 0.0
    %5117 = vmatpush1.msra.mxu0 0.0
    %5118 = vmatprep.subr.mxu0 0.0
    %5119 = vmatpush1.msra.mxu0 0.0
    %5120 = vmatprep.subr.mxu0 0.0
    %5121 = vmatpush1.msra.mxu0 0.0
    %5122 = vmatprep.subr.mxu0 0.0
    %5123 = vmatpush1.msra.mxu0 0.0
    %5124 = vmatprep.subr.mxu0 0.0
    %5125 = vmatpush1.msra.mxu0 0.0
    %5126 = vmatprep.subr.mxu0 0.0
    %5127 = vmatpush1.msra.mxu0 0.0
    %5128 = vmatprep.subr.mxu0 0.0
    %5129 = vmatpush1.msra.mxu0 0.0
    %5130 = vmatprep.subr.mxu0 0.0
    %5131 = vmatpush1.msra.mxu0 0.0
    %5132 = vmatprep.subr.mxu0 0.0
    %5133 = vmatpush1.msra.mxu0 0.0
    %5134 = vmatprep.subr.mxu0 0.0
    %5135 = vmatpush1.msra.mxu0 0.0
    %5136 = vmatprep.subr.mxu0 0.0
    %5137 = vmatpush1.msra.mxu0 0.0
    %5138 = vmatprep.subr.mxu0 0.0
    %5139 = vmatpush1.msra.mxu0 0.0
    %5140 = vmatprep.subr.mxu0 0.0
    %5141 = vmatpush1.msra.mxu0 0.0
    %5142 = vmatprep.subr.mxu0 0.0
    %5143 = vmatpush1.msra.mxu0 0.0
    %5144 = vmatprep.subr.mxu0 0.0
    %5145 = vmatpush1.msra.mxu0 0.0
    %5146 = vmatprep.subr.mxu0 0.0
    %5147 = vmatpush1.msra.mxu0 0.0
    %5148 = vmatprep.subr.mxu0 0.0
    %5149 = vmatpush1.msra.mxu0 0.0
    %5150 = vmatprep.subr.mxu0 0.0
    %5151 = vmatpush1.msra.mxu0 0.0
    %5152 = vmatprep.subr.mxu0 0.0
    %5153 = vmatpush1.msra.mxu0 0.0
    %5154 = vmatprep.mubr.f32.mxu0 0.0
    %5155 = vmatmul.mubr.f32.gmra.mrb[0].mxu0 %v5088
    %v5156 = vpop.f32.mrb[0].mxu0
    %v5157 = vadd.f32 0.0, %v5156
    %v5158 = vpop.f32.mrb[0].mxu0
    %v5159 = vadd.f32 0.0, %v5158
    %5160 = vdwg.mxu0
    %5161 = vmatprep.subr.mxu0 %v5079
    %5162 = vmatpush1.msra.mxu0 %v5082
    %5163 = vmatprep.subr.mxu0 0.0
    %5164 = vmatpush1.msra.mxu0 0.0
    %5165 = vmatprep.subr.mxu0 0.0
    %5166 = vmatpush1.msra.mxu0 0.0
    %5167 = vmatprep.subr.mxu0 0.0
    %5168 = vmatpush1.msra.mxu0 0.0
    %5169 = vmatprep.subr.mxu0 0.0
    %5170 = vmatpush1.msra.mxu0 0.0
    %5171 = vmatprep.subr.mxu0 0.0
    %5172 = vmatpush1.msra.mxu0 0.0
    %5173 = vmatprep.subr.mxu0 0.0
    %5174 = vmatpush1.msra.mxu0 0.0
    %5175 = vmatprep.subr.mxu0 0.0
    %5176 = vmatpush1.msra.mxu0 0.0
    %5177 = vmatprep.subr.mxu0 0.0
    %5178 = vmatpush1.msra.mxu0 0.0
    %5179 = vmatprep.subr.mxu0 0.0
    %5180 = vmatpush1.msra.mxu0 0.0
    %5181 = vmatprep.subr.mxu0 0.0
    %5182 = vmatpush1.msra.mxu0 0.0
    %5183 = vmatprep.subr.mxu0 0.0
    %5184 = vmatpush1.msra.mxu0 0.0
    %5185 = vmatprep.subr.mxu0 0.0
    %5186 = vmatpush1.msra.mxu0 0.0
    %5187 = vmatprep.subr.mxu0 0.0
    %5188 = vmatpush1.msra.mxu0 0.0
    %5189 = vmatprep.subr.mxu0 0.0
    %5190 = vmatpush1.msra.mxu0 0.0
    %5191 = vmatprep.subr.mxu0 0.0
    %5192 = vmatpush1.msra.mxu0 0.0
    %5193 = vmatprep.subr.mxu0 0.0
    %5194 = vmatpush1.msra.mxu0 0.0
    %5195 = vmatprep.subr.mxu0 0.0
    %5196 = vmatpush1.msra.mxu0 0.0
    %5197 = vmatprep.subr.mxu0 0.0
    %5198 = vmatpush1.msra.mxu0 0.0
    %5199 = vmatprep.subr.mxu0 0.0
    %5200 = vmatpush1.msra.mxu0 0.0
    %5201 = vmatprep.subr.mxu0 0.0
    %5202 = vmatpush1.msra.mxu0 0.0
    %5203 = vmatprep.subr.mxu0 0.0
    %5204 = vmatpush1.msra.mxu0 0.0
    %5205 = vmatprep.subr.mxu0 0.0
    %5206 = vmatpush1.msra.mxu0 0.0
    %5207 = vmatprep.subr.mxu0 0.0
    %5208 = vmatpush1.msra.mxu0 0.0
    %5209 = vmatprep.subr.mxu0 0.0
    %5210 = vmatpush1.msra.mxu0 0.0
    %5211 = vmatprep.subr.mxu0 0.0
    %5212 = vmatpush1.msra.mxu0 0.0
    %5213 = vmatprep.subr.mxu0 0.0
    %5214 = vmatpush1.msra.mxu0 0.0
    %5215 = vmatprep.subr.mxu0 0.0
    %5216 = vmatpush1.msra.mxu0 0.0
    %5217 = vmatprep.subr.mxu0 0.0
    %5218 = vmatpush1.msra.mxu0 0.0
    %5219 = vmatprep.subr.mxu0 0.0
    %5220 = vmatpush1.msra.mxu0 0.0
    %5221 = vmatprep.subr.mxu0 0.0
    %5222 = vmatpush1.msra.mxu0 0.0
    %5223 = vmatprep.subr.mxu0 0.0
    %5224 = vmatpush1.msra.mxu0 0.0
    %5225 = vmatprep.mubr.f32.mxu0 0.0
    %5226 = vmatmul.mubr.f32.gmra.mrb[0].mxu0 %v5088
    %v5227 = vpop.f32.mrb[0].mxu0
    %v5228 = vadd.f32 0.0, %v5227
    %v5229 = vpop.f32.mrb[0].mxu0
    %v5230 = vadd.f32 0.0, %v5229
    %5231 = vdwg.mxu0
    %v5232 = vadd.f32 %v5068, %v5157
    %v5233 = vadd.f32 %v5069, %v5159
    %v5234 = vadd.f32 %v5070, %v5228
    %v5235 = vadd.f32 %v5071, %v5230
    %5236 = vrot.lane.b32.xlu0 %v3934, 82
    %v5237 = vpop.permute.xlu0 %5236
    %5238 = vrot.lane.b32.xlu0 %v3935, 82
    %v5239 = vpop.permute.xlu0 %5238
    %5240 = vrot.lane.b32.xlu0 %v3936, 82
    %v5241 = vpop.permute.xlu0 %5240
    %5242 = vrot.lane.b32.xlu0 %v3937, 82
    %v5243 = vpop.permute.xlu0 %5242
    %v5244 = vsel %vm2153, %v5237, %v5239
    %v5245 = vsel %vm2153, %v5239, %v5241
    %v5246 = vsel %vm2153, %v5241, %v5243
    %v5252 = vsel %vm3961, %v781, 0
    %5254 = vmatprep.subr.mxu0 %v5245
    %5255 = vmatpush1.msra.mxu0 %v5244
    %5256 = vmatprep.subr.mxu0 0.0
    %5257 = vmatpush1.msra.mxu0 0.0
    %5258 = vmatprep.subr.mxu0 0.0
    %5259 = vmatpush1.msra.mxu0 0.0
    %5260 = vmatprep.subr.mxu0 0.0
    %5261 = vmatpush1.msra.mxu0 0.0
    %5262 = vmatprep.subr.mxu0 0.0
    %5263 = vmatpush1.msra.mxu0 0.0
    %5264 = vmatprep.subr.mxu0 0.0
    %5265 = vmatpush1.msra.mxu0 0.0
    %5266 = vmatprep.subr.mxu0 0.0
    %5267 = vmatpush1.msra.mxu0 0.0
    %5268 = vmatprep.subr.mxu0 0.0
    %5269 = vmatpush1.msra.mxu0 0.0
    %5270 = vmatprep.subr.mxu0 0.0
    %5271 = vmatpush1.msra.mxu0 0.0
    %5272 = vmatprep.subr.mxu0 0.0
    %5273 = vmatpush1.msra.mxu0 0.0
    %5274 = vmatprep.subr.mxu0 0.0
    %5275 = vmatpush1.msra.mxu0 0.0
    %5276 = vmatprep.subr.mxu0 0.0
    %5277 = vmatpush1.msra.mxu0 0.0
    %5278 = vmatprep.subr.mxu0 0.0
    %5279 = vmatpush1.msra.mxu0 0.0
    %5280 = vmatprep.subr.mxu0 0.0
    %5281 = vmatpush1.msra.mxu0 0.0
    %5282 = vmatprep.subr.mxu0 0.0
    %5283 = vmatpush1.msra.mxu0 0.0
    %5284 = vmatprep.subr.mxu0 0.0
    %5285 = vmatpush1.msra.mxu0 0.0
    %5286 = vmatprep.subr.mxu0 0.0
    %5287 = vmatpush1.msra.mxu0 0.0
    %5288 = vmatprep.subr.mxu0 0.0
    %5289 = vmatpush1.msra.mxu0 0.0
    %5290 = vmatprep.subr.mxu0 0.0
    %5291 = vmatpush1.msra.mxu0 0.0
    %5292 = vmatprep.subr.mxu0 0.0
    %5293 = vmatpush1.msra.mxu0 0.0
    %5294 = vmatprep.subr.mxu0 0.0
    %5295 = vmatpush1.msra.mxu0 0.0
    %5296 = vmatprep.subr.mxu0 0.0
    %5297 = vmatpush1.msra.mxu0 0.0
    %5298 = vmatprep.subr.mxu0 0.0
    %5299 = vmatpush1.msra.mxu0 0.0
    %5300 = vmatprep.subr.mxu0 0.0
    %5301 = vmatpush1.msra.mxu0 0.0
    %5302 = vmatprep.subr.mxu0 0.0
    %5303 = vmatpush1.msra.mxu0 0.0
    %5304 = vmatprep.subr.mxu0 0.0
    %5305 = vmatpush1.msra.mxu0 0.0
    %5306 = vmatprep.subr.mxu0 0.0
    %5307 = vmatpush1.msra.mxu0 0.0
    %5308 = vmatprep.subr.mxu0 0.0
    %5309 = vmatpush1.msra.mxu0 0.0
    %5310 = vmatprep.subr.mxu0 0.0
    %5311 = vmatpush1.msra.mxu0 0.0
    %5312 = vmatprep.subr.mxu0 0.0
    %5313 = vmatpush1.msra.mxu0 0.0
    %5314 = vmatprep.subr.mxu0 0.0
    %5315 = vmatpush1.msra.mxu0 0.0
    %5316 = vmatprep.subr.mxu0 0.0
    %5317 = vmatpush1.msra.mxu0 0.0
    %5318 = vmatprep.mubr.f32.mxu0 0.0
    %5319 = vmatmul.mubr.f32.gmra.mrb[0].mxu0 %v5252
    %v5320 = vpop.f32.mrb[0].mxu0
    %v5321 = vadd.f32 0.0, %v5320
    %v5322 = vpop.f32.mrb[0].mxu0
    %v5323 = vadd.f32 0.0, %v5322
    %5324 = vdwg.mxu0
    %5325 = vmatprep.subr.mxu0 %v5243
    %5326 = vmatpush1.msra.mxu0 %v5246
    %5327 = vmatprep.subr.mxu0 0.0
    %5328 = vmatpush1.msra.mxu0 0.0
    %5329 = vmatprep.subr.mxu0 0.0
    %5330 = vmatpush1.msra.mxu0 0.0
    %5331 = vmatprep.subr.mxu0 0.0
    %5332 = vmatpush1.msra.mxu0 0.0
    %5333 = vmatprep.subr.mxu0 0.0
    %5334 = vmatpush1.msra.mxu0 0.0
    %5335 = vmatprep.subr.mxu0 0.0
    %5336 = vmatpush1.msra.mxu0 0.0
    %5337 = vmatprep.subr.mxu0 0.0
    %5338 = vmatpush1.msra.mxu0 0.0
    %5339 = vmatprep.subr.mxu0 0.0
    %5340 = vmatpush1.msra.mxu0 0.0
    %5341 = vmatprep.subr.mxu0 0.0
    %5342 = vmatpush1.msra.mxu0 0.0
    %5343 = vmatprep.subr.mxu0 0.0
    %5344 = vmatpush1.msra.mxu0 0.0
    %5345 = vmatprep.subr.mxu0 0.0
    %5346 = vmatpush1.msra.mxu0 0.0
    %5347 = vmatprep.subr.mxu0 0.0
    %5348 = vmatpush1.msra.mxu0 0.0
    %5349 = vmatprep.subr.mxu0 0.0
    %5350 = vmatpush1.msra.mxu0 0.0
    %5351 = vmatprep.subr.mxu0 0.0
    %5352 = vmatpush1.msra.mxu0 0.0
    %5353 = vmatprep.subr.mxu0 0.0
    %5354 = vmatpush1.msra.mxu0 0.0
    %5355 = vmatprep.subr.mxu0 0.0
    %5356 = vmatpush1.msra.mxu0 0.0
    %5357 = vmatprep.subr.mxu0 0.0
    %5358 = vmatpush1.msra.mxu0 0.0
    %5359 = vmatprep.subr.mxu0 0.0
    %5360 = vmatpush1.msra.mxu0 0.0
    %5361 = vmatprep.subr.mxu0 0.0
    %5362 = vmatpush1.msra.mxu0 0.0
    %5363 = vmatprep.subr.mxu0 0.0
    %5364 = vmatpush1.msra.mxu0 0.0
    %5365 = vmatprep.subr.mxu0 0.0
    %5366 = vmatpush1.msra.mxu0 0.0
    %5367 = vmatprep.subr.mxu0 0.0
    %5368 = vmatpush1.msra.mxu0 0.0
    %5369 = vmatprep.subr.mxu0 0.0
    %5370 = vmatpush1.msra.mxu0 0.0
    %5371 = vmatprep.subr.mxu0 0.0
    %5372 = vmatpush1.msra.mxu0 0.0
    %5373 = vmatprep.subr.mxu0 0.0
    %5374 = vmatpush1.msra.mxu0 0.0
    %5375 = vmatprep.subr.mxu0 0.0
    %5376 = vmatpush1.msra.mxu0 0.0
    %5377 = vmatprep.subr.mxu0 0.0
    %5378 = vmatpush1.msra.mxu0 0.0
    %5379 = vmatprep.subr.mxu0 0.0
    %5380 = vmatpush1.msra.mxu0 0.0
    %5381 = vmatprep.subr.mxu0 0.0
    %5382 = vmatpush1.msra.mxu0 0.0
    %5383 = vmatprep.subr.mxu0 0.0
    %5384 = vmatpush1.msra.mxu0 0.0
    %5385 = vmatprep.subr.mxu0 0.0
    %5386 = vmatpush1.msra.mxu0 0.0
    %5387 = vmatprep.subr.mxu0 0.0
    %5388 = vmatpush1.msra.mxu0 0.0
    %5389 = vmatprep.mubr.f32.mxu0 0.0
    %5390 = vmatmul.mubr.f32.gmra.mrb[0].mxu0 %v5252
    %v5391 = vpop.f32.mrb[0].mxu0
    %v5392 = vadd.f32 0.0, %v5391
    %v5393 = vpop.f32.mrb[0].mxu0
    %v5394 = vadd.f32 0.0, %v5393
    %5395 = vdwg.mxu0
    %v5396 = vadd.f32 %v5232, %v5321
    %v5397 = vadd.f32 %v5233, %v5323
    %v5398 = vadd.f32 %v5234, %v5392
    %v5399 = vadd.f32 %v5235, %v5394
    %5401 = vset.pattern.permute.xlu0 0
    %5402 = vperm.xlu0 %5401, %v782
    %v5403 = vpop.permute.xlu0 %5402
    %v5405 = vadd.f32 %v5396, %v5403
    %v5406 = vadd.f32 %v5397, %v5403
    %v5407 = vadd.f32 %v5398, %v5403
    %v5408 = vadd.f32 %v5399, %v5403
    %v5409 = vmax.f32 %v5405, 0.0
    %v5410 = vmax.f32 %v5406, 0.0
    %v5411 = vmax.f32 %v5407, 0.0
    %v5412 = vmax.f32 %v5408, 0.0
    %v5413 = vadd.f32 %v5409, 0.0
    %v5414 = vadd.f32 %v5410, 0.0
    %v5415 = vadd.f32 %v5411, 0.0
    %5419 = vrot.lane.b32.xlu0 %v5409, 127
    %v5420 = vpop.permute.xlu0 %5419
    %5421 = vrot.lane.b32.xlu0 %v5410, 127
    %v5422 = vpop.permute.xlu0 %5421
    %5423 = vrot.lane.b32.xlu0 %v5411, 127
    %v5424 = vpop.permute.xlu0 %5423
    %v5425 = vsel %vm820, %v5420, %v5422
    %v5426 = vsel %vm820, %v5422, %v5424
    %v5430 = vadd.f32 %v5413, %v5425
    %v5431 = vadd.f32 %v5414, %v5426
    %v5432 = vadd.f32 %v5415, %v5424
    %5433 = vrot.lane.b32.xlu0 %v5409, 126
    %v5434 = vpop.permute.xlu0 %5433
    %5435 = vrot.lane.b32.xlu0 %v5410, 126
    %v5436 = vpop.permute.xlu0 %5435
    %5437 = vrot.lane.b32.xlu0 %v5411, 126
    %v5438 = vpop.permute.xlu0 %5437
    %v5439 = vsel %vm1139, %v5434, %v5436
    %v5440 = vsel %vm1139, %v5436, %v5438
    %v5444 = vadd.f32 %v5430, %v5439
    %v5445 = vadd.f32 %v5431, %v5440
    %v5446 = vadd.f32 %v5432, %v5438
    %5447 = vrot.lane.b32.xlu0 %v5409, 125
    %v5448 = vpop.permute.xlu0 %5447
    %5449 = vrot.lane.b32.xlu0 %v5410, 125
    %v5450 = vpop.permute.xlu0 %5449
    %5451 = vrot.lane.b32.xlu0 %v5411, 125
    %v5452 = vpop.permute.xlu0 %5451
    %vm5453 = vcmask 1022976
    %v5454 = vsel %vm5453, %v5448, %v5450
    %v5455 = vsel %vm5453, %v5450, %v5452
    %v5459 = vadd.f32 %v5444, %v5454
    %v5460 = vadd.f32 %v5445, %v5455
    %v5461 = vadd.f32 %v5446, %v5452
    %5463 = vrot.lane.b32.xlu0 %v5409, 106
    %v5464 = vpop.permute.xlu0 %5463
    %5465 = vrot.lane.b32.xlu0 %v5410, 106
    %v5466 = vpop.permute.xlu0 %5465
    %5467 = vrot.lane.b32.xlu0 %v5411, 106
    %v5468 = vpop.permute.xlu0 %5467
    %5469 = vrot.lane.b32.xlu0 %v5412, 106
    %v5470 = vpop.permute.xlu0 %5469
    %v5471 = vsel %vm1308, %v5464, %v5466
    %v5472 = vsel %vm1308, %v5466, %v5468
    %v5473 = vsel %vm1308, %v5468, %v5470
    %v5477 = vadd.f32 %v5459, %v5471
    %v5478 = vadd.f32 %v5460, %v5472
    %v5479 = vadd.f32 %v5461, %v5473
    %5480 = vrot.lane.b32.xlu0 %v5409, 105
    %v5481 = vpop.permute.xlu0 %5480
    %5482 = vrot.lane.b32.xlu0 %v5410, 105
    %v5483 = vpop.permute.xlu0 %5482
    %5484 = vrot.lane.b32.xlu0 %v5411, 105
    %v5485 = vpop.permute.xlu0 %5484
    %5486 = vrot.lane.b32.xlu0 %v5412, 105
    %v5487 = vpop.permute.xlu0 %5486
    %v5488 = vsel %vm1477, %v5481, %v5483
    %v5489 = vsel %vm1477, %v5483, %v5485
    %v5490 = vsel %vm1477, %v5485, %v5487
    %v5494 = vadd.f32 %v5477, %v5488
    %v5495 = vadd.f32 %v5478, %v5489
    %v5496 = vadd.f32 %v5479, %v5490
    %5497 = vrot.lane.b32.xlu0 %v5409, 104
    %v5498 = vpop.permute.xlu0 %5497
    %5499 = vrot.lane.b32.xlu0 %v5410, 104
    %v5500 = vpop.permute.xlu0 %5499
    %5501 = vrot.lane.b32.xlu0 %v5411, 104
    %v5502 = vpop.permute.xlu0 %5501
    %5503 = vrot.lane.b32.xlu0 %v5412, 104
    %v5504 = vpop.permute.xlu0 %5503
    %v5505 = vsel %vm1646, %v5498, %v5500
    %v5506 = vsel %vm1646, %v5500, %v5502
    %v5507 = vsel %vm1646, %v5502, %v5504
    %v5511 = vadd.f32 %v5494, %v5505
    %v5512 = vadd.f32 %v5495, %v5506
    %v5513 = vadd.f32 %v5496, %v5507
    %5514 = vrot.lane.b32.xlu0 %v5409, 103
    %v5515 = vpop.permute.xlu0 %5514
    %5516 = vrot.lane.b32.xlu0 %v5410, 103
    %v5517 = vpop.permute.xlu0 %5516
    %5518 = vrot.lane.b32.xlu0 %v5411, 103
    %v5519 = vpop.permute.xlu0 %5518
    %5520 = vrot.lane.b32.xlu0 %v5412, 103
    %v5521 = vpop.permute.xlu0 %5520
    %vm5522 = vcmask 842752
    %v5523 = vsel %vm5522, %v5515, %v5517
    %v5524 = vsel %vm5522, %v5517, %v5519
    %v5525 = vsel %vm5522, %v5519, %v5521
    %v5529 = vadd.f32 %v5511, %v5523
    %v5530 = vadd.f32 %v5512, %v5524
    %v5531 = vadd.f32 %v5513, %v5525
    %5532 = vrot.lane.b32.xlu0 %v5409, 84
    %v5533 = vpop.permute.xlu0 %5532
    %5534 = vrot.lane.b32.xlu0 %v5410, 84
    %v5535 = vpop.permute.xlu0 %5534
    %5536 = vrot.lane.b32.xlu0 %v5411, 84
    %v5537 = vpop.permute.xlu0 %5536
    %5538 = vrot.lane.b32.xlu0 %v5412, 84
    %v5539 = vpop.permute.xlu0 %5538
    %v5540 = vsel %vm1815, %v5533, %v5535
    %v5541 = vsel %vm1815, %v5535, %v5537
    %v5542 = vsel %vm1815, %v5537, %v5539
    %v5546 = vadd.f32 %v5529, %v5540
    %v5547 = vadd.f32 %v5530, %v5541
    %v5548 = vadd.f32 %v5531, %v5542
    %5549 = vrot.lane.b32.xlu0 %v5409, 83
    %v5550 = vpop.permute.xlu0 %5549
    %5551 = vrot.lane.b32.xlu0 %v5410, 83
    %v5552 = vpop.permute.xlu0 %5551
    %5553 = vrot.lane.b32.xlu0 %v5411, 83
    %v5554 = vpop.permute.xlu0 %5553
    %5555 = vrot.lane.b32.xlu0 %v5412, 83
    %v5556 = vpop.permute.xlu0 %5555
    %v5557 = vsel %vm1984, %v5550, %v5552
    %v5558 = vsel %vm1984, %v5552, %v5554
    %v5559 = vsel %vm1984, %v5554, %v5556
    %v5563 = vadd.f32 %v5546, %v5557
    %v5564 = vadd.f32 %v5547, %v5558
    %v5565 = vadd.f32 %v5548, %v5559
    %5566 = vrot.lane.b32.xlu0 %v5409, 82
    %v5567 = vpop.permute.xlu0 %5566
    %5568 = vrot.lane.b32.xlu0 %v5410, 82
    %v5569 = vpop.permute.xlu0 %5568
    %5570 = vrot.lane.b32.xlu0 %v5411, 82
    %v5571 = vpop.permute.xlu0 %5570
    %5572 = vrot.lane.b32.xlu0 %v5412, 82
    %v5573 = vpop.permute.xlu0 %5572
    %v5574 = vsel %vm2153, %v5567, %v5569
    %v5575 = vsel %vm2153, %v5569, %v5571
    %v5576 = vsel %vm2153, %v5571, %v5573
    %v5580 = vadd.f32 %v5563, %v5574
    %v5581 = vadd.f32 %v5564, %v5575
    %v5582 = vadd.f32 %v5565, %v5576
    %5583 = vrot.lane.b32.xlu0 %v5409, 81
    %v5584 = vpop.permute.xlu0 %5583
    %5585 = vrot.lane.b32.xlu0 %v5410, 81
    %v5586 = vpop.permute.xlu0 %5585
    %5587 = vrot.lane.b32.xlu0 %v5411, 81
    %v5588 = vpop.permute.xlu0 %5587
    %5589 = vrot.lane.b32.xlu0 %v5412, 81
    %v5590 = vpop.permute.xlu0 %5589
    %vm5591 = vcmask 662528
    %v5592 = vsel %vm5591, %v5584, %v5586
    %v5593 = vsel %vm5591, %v5586, %v5588
    %v5594 = vsel %vm5591, %v5588, %v5590
    %v5598 = vadd.f32 %v5580, %v5592
    %v5599 = vadd.f32 %v5581, %v5593
    %v5600 = vadd.f32 %v5582, %v5594
    %5601 = vrot.lane.b32.xlu0 %v5409, 62
    %v5602 = vpop.permute.xlu0 %5601
    %5603 = vrot.lane.b32.xlu0 %v5410, 62
    %v5604 = vpop.permute.xlu0 %5603
    %5605 = vrot.lane.b32.xlu0 %v5411, 62
    %v5606 = vpop.permute.xlu0 %5605
    %5607 = vrot.lane.b32.xlu0 %v5412, 62
    %v5608 = vpop.permute.xlu0 %5607
    %vm5609 = vcmask 506880
    %v5610 = vsel %vm5609, %v5602, %v5604
    %v5611 = vsel %vm5609, %v5604, %v5606
    %v5612 = vsel %vm5609, %v5606, %v5608
    %v5616 = vadd.f32 %v5598, %v5610
    %v5617 = vadd.f32 %v5599, %v5611
    %v5618 = vadd.f32 %v5600, %v5612
    %5619 = vrot.lane.b32.xlu0 %v5409, 61
    %v5620 = vpop.permute.xlu0 %5619
    %5621 = vrot.lane.b32.xlu0 %v5410, 61
    %v5622 = vpop.permute.xlu0 %5621
    %5623 = vrot.lane.b32.xlu0 %v5411, 61
    %v5624 = vpop.permute.xlu0 %5623
    %5625 = vrot.lane.b32.xlu0 %v5412, 61
    %v5626 = vpop.permute.xlu0 %5625
    %vm5627 = vcmask 498688
    %v5628 = vsel %vm5627, %v5620, %v5622
    %v5629 = vsel %vm5627, %v5622, %v5624
    %v5630 = vsel %vm5627, %v5624, %v5626
    %v5634 = vadd.f32 %v5616, %v5628
    %v5635 = vadd.f32 %v5617, %v5629
    %v5636 = vadd.f32 %v5618, %v5630
    %5637 = vrot.lane.b32.xlu0 %v5409, 60
    %v5638 = vpop.permute.xlu0 %5637
    %5639 = vrot.lane.b32.xlu0 %v5410, 60
    %v5640 = vpop.permute.xlu0 %5639
    %5641 = vrot.lane.b32.xlu0 %v5411, 60
    %v5642 = vpop.permute.xlu0 %5641
    %5643 = vrot.lane.b32.xlu0 %v5412, 60
    %v5644 = vpop.permute.xlu0 %5643
    %vm5645 = vcmask 490496
    %v5646 = vsel %vm5645, %v5638, %v5640
    %v5647 = vsel %vm5645, %v5640, %v5642
    %v5648 = vsel %vm5645, %v5642, %v5644
    %v5652 = vadd.f32 %v5634, %v5646
    %v5653 = vadd.f32 %v5635, %v5647
    %v5654 = vadd.f32 %v5636, %v5648
    %5655 = vrot.lane.b32.xlu0 %v5409, 59
    %v5656 = vpop.permute.xlu0 %5655
    %5657 = vrot.lane.b32.xlu0 %v5410, 59
    %v5658 = vpop.permute.xlu0 %5657
    %5659 = vrot.lane.b32.xlu0 %v5411, 59
    %v5660 = vpop.permute.xlu0 %5659
    %5661 = vrot.lane.b32.xlu0 %v5412, 59
    %v5662 = vpop.permute.xlu0 %5661
    %vm5663 = vcmask 482304
    %v5664 = vsel %vm5663, %v5656, %v5658
    %v5665 = vsel %vm5663, %v5658, %v5660
    %v5666 = vsel %vm5663, %v5660, %v5662
    %v5670 = vadd.f32 %v5652, %v5664
    %v5671 = vadd.f32 %v5653, %v5665
    %v5672 = vadd.f32 %v5654, %v5666
    %5677 = vrot.lane.b32.xlu0 %v3938, 127
    %v5678 = vpop.permute.xlu0 %5677
    %5679 = vrot.lane.b32.xlu0 %v3939, 127
    %v5680 = vpop.permute.xlu0 %5679
    %5681 = vrot.lane.b32.xlu0 %v3940, 127
    %v5682 = vpop.permute.xlu0 %5681
    %5683 = vrot.lane.b32.xlu0 %v3941, 127
    %v5684 = vpop.permute.xlu0 %5683
    %v5685 = vsel %vm820, %v5678, %v5680
    %v5686 = vsel %vm820, %v5680, %v5682
    %v5687 = vsel %vm820, %v5682, %v5684
    %5692 = vmatprep.subr.mxu0 %v5686
    %5693 = vmatpush1.msra.mxu0 %v5685
    %5694 = vmatprep.subr.mxu0 0.0
    %5695 = vmatpush1.msra.mxu0 0.0
    %5696 = vmatprep.subr.mxu0 0.0
    %5697 = vmatpush1.msra.mxu0 0.0
    %5698 = vmatprep.subr.mxu0 0.0
    %5699 = vmatpush1.msra.mxu0 0.0
    %5700 = vmatprep.subr.mxu0 0.0
    %5701 = vmatpush1.msra.mxu0 0.0
    %5702 = vmatprep.subr.mxu0 0.0
    %5703 = vmatpush1.msra.mxu0 0.0
    %5704 = vmatprep.subr.mxu0 0.0
    %5705 = vmatpush1.msra.mxu0 0.0
    %5706 = vmatprep.subr.mxu0 0.0
    %5707 = vmatpush1.msra.mxu0 0.0
    %5708 = vmatprep.subr.mxu0 0.0
    %5709 = vmatpush1.msra.mxu0 0.0
    %5710 = vmatprep.subr.mxu0 0.0
    %5711 = vmatpush1.msra.mxu0 0.0
    %5712 = vmatprep.subr.mxu0 0.0
    %5713 = vmatpush1.msra.mxu0 0.0
    %5714 = vmatprep.subr.mxu0 0.0
    %5715 = vmatpush1.msra.mxu0 0.0
    %5716 = vmatprep.subr.mxu0 0.0
    %5717 = vmatpush1.msra.mxu0 0.0
    %5718 = vmatprep.subr.mxu0 0.0
    %5719 = vmatpush1.msra.mxu0 0.0
    %5720 = vmatprep.subr.mxu0 0.0
    %5721 = vmatpush1.msra.mxu0 0.0
    %5722 = vmatprep.subr.mxu0 0.0
    %5723 = vmatpush1.msra.mxu0 0.0
    %5724 = vmatprep.subr.mxu0 0.0
    %5725 = vmatpush1.msra.mxu0 0.0
    %5726 = vmatprep.subr.mxu0 0.0
    %5727 = vmatpush1.msra.mxu0 0.0
    %5728 = vmatprep.subr.mxu0 0.0
    %5729 = vmatpush1.msra.mxu0 0.0
    %5730 = vmatprep.subr.mxu0 0.0
    %5731 = vmatpush1.msra.mxu0 0.0
    %5732 = vmatprep.subr.mxu0 0.0
    %5733 = vmatpush1.msra.mxu0 0.0
    %5734 = vmatprep.subr.mxu0 0.0
    %5735 = vmatpush1.msra.mxu0 0.0
    %5736 = vmatprep.subr.mxu0 0.0
    %5737 = vmatpush1.msra.mxu0 0.0
    %5738 = vmatprep.subr.mxu0 0.0
    %5739 = vmatpush1.msra.mxu0 0.0
    %5740 = vmatprep.subr.mxu0 0.0
    %5741 = vmatpush1.msra.mxu0 0.0
    %5742 = vmatprep.subr.mxu0 0.0
    %5743 = vmatpush1.msra.mxu0 0.0
    %5744 = vmatprep.subr.mxu0 0.0
    %5745 = vmatpush1.msra.mxu0 0.0
    %5746 = vmatprep.subr.mxu0 0.0
    %5747 = vmatpush1.msra.mxu0 0.0
    %5748 = vmatprep.subr.mxu0 0.0
    %5749 = vmatpush1.msra.mxu0 0.0
    %5750 = vmatprep.subr.mxu0 0.0
    %5751 = vmatpush1.msra.mxu0 0.0
    %5752 = vmatprep.subr.mxu0 0.0
    %5753 = vmatpush1.msra.mxu0 0.0
    %5754 = vmatprep.subr.mxu0 0.0
    %5755 = vmatpush1.msra.mxu0 0.0
    %5756 = vmatprep.mubr.f32.mxu0 0.0
    %5757 = vmatmul.mubr.f32.gmra.mrb[0].mxu0 %v3963
    %v5758 = vpop.f32.mrb[0].mxu0
    %v5759 = vadd.f32 0.0, %v5758
    %v5760 = vpop.f32.mrb[0].mxu0
    %v5761 = vadd.f32 0.0, %v5760
    %5762 = vdwg.mxu0
    %5763 = vmatprep.subr.mxu0 %v5684
    %5764 = vmatpush1.msra.mxu0 %v5687
    %5765 = vmatprep.subr.mxu0 0.0
    %5766 = vmatpush1.msra.mxu0 0.0
    %5767 = vmatprep.subr.mxu0 0.0
    %5768 = vmatpush1.msra.mxu0 0.0
    %5769 = vmatprep.subr.mxu0 0.0
    %5770 = vmatpush1.msra.mxu0 0.0
    %5771 = vmatprep.subr.mxu0 0.0
    %5772 = vmatpush1.msra.mxu0 0.0
    %5773 = vmatprep.subr.mxu0 0.0
    %5774 = vmatpush1.msra.mxu0 0.0
    %5775 = vmatprep.subr.mxu0 0.0
    %5776 = vmatpush1.msra.mxu0 0.0
    %5777 = vmatprep.subr.mxu0 0.0
    %5778 = vmatpush1.msra.mxu0 0.0
    %5779 = vmatprep.subr.mxu0 0.0
    %5780 = vmatpush1.msra.mxu0 0.0
    %5781 = vmatprep.subr.mxu0 0.0
    %5782 = vmatpush1.msra.mxu0 0.0
    %5783 = vmatprep.subr.mxu0 0.0
    %5784 = vmatpush1.msra.mxu0 0.0
    %5785 = vmatprep.subr.mxu0 0.0
    %5786 = vmatpush1.msra.mxu0 0.0
    %5787 = vmatprep.subr.mxu0 0.0
    %5788 = vmatpush1.msra.mxu0 0.0
    %5789 = vmatprep.subr.mxu0 0.0
    %5790 = vmatpush1.msra.mxu0 0.0
    %5791 = vmatprep.subr.mxu0 0.0
    %5792 = vmatpush1.msra.mxu0 0.0
    %5793 = vmatprep.subr.mxu0 0.0
    %5794 = vmatpush1.msra.mxu0 0.0
    %5795 = vmatprep.subr.mxu0 0.0
    %5796 = vmatpush1.msra.mxu0 0.0
    %5797 = vmatprep.subr.mxu0 0.0
    %5798 = vmatpush1.msra.mxu0 0.0
    %5799 = vmatprep.subr.mxu0 0.0
    %5800 = vmatpush1.msra.mxu0 0.0
    %5801 = vmatprep.subr.mxu0 0.0
    %5802 = vmatpush1.msra.mxu0 0.0
    %5803 = vmatprep.subr.mxu0 0.0
    %5804 = vmatpush1.msra.mxu0 0.0
    %5805 = vmatprep.subr.mxu0 0.0
    %5806 = vmatpush1.msra.mxu0 0.0
    %5807 = vmatprep.subr.mxu0 0.0
    %5808 = vmatpush1.msra.mxu0 0.0
    %5809 = vmatprep.subr.mxu0 0.0
    %5810 = vmatpush1.msra.mxu0 0.0
    %5811 = vmatprep.subr.mxu0 0.0
    %5812 = vmatpush1.msra.mxu0 0.0
    %5813 = vmatprep.subr.mxu0 0.0
    %5814 = vmatpush1.msra.mxu0 0.0
    %5815 = vmatprep.subr.mxu0 0.0
    %5816 = vmatpush1.msra.mxu0 0.0
    %5817 = vmatprep.subr.mxu0 0.0
    %5818 = vmatpush1.msra.mxu0 0.0
    %5819 = vmatprep.subr.mxu0 0.0
    %5820 = vmatpush1.msra.mxu0 0.0
    %5821 = vmatprep.subr.mxu0 0.0
    %5822 = vmatpush1.msra.mxu0 0.0
    %5823 = vmatprep.subr.mxu0 0.0
    %5824 = vmatpush1.msra.mxu0 0.0
    %5825 = vmatprep.subr.mxu0 0.0
    %5826 = vmatpush1.msra.mxu0 0.0
    %5827 = vmatprep.mubr.f32.mxu0 0.0
    %5828 = vmatmul.mubr.f32.gmra.mrb[0].mxu0 %v3963
    %v5829 = vpop.f32.mrb[0].mxu0
    %v5830 = vadd.f32 0.0, %v5829
    %v5831 = vpop.f32.mrb[0].mxu0
    %v5832 = vadd.f32 0.0, %v5831
    %5833 = vdwg.mxu0
    %5834 = vmatprep.subr.mxu0 %v3939
    %5835 = vmatpush1.msra.mxu0 %v3938
    %5836 = vmatprep.subr.mxu0 0.0
    %5837 = vmatpush1.msra.mxu0 0.0
    %5838 = vmatprep.subr.mxu0 0.0
    %5839 = vmatpush1.msra.mxu0 0.0
    %5840 = vmatprep.subr.mxu0 0.0
    %5841 = vmatpush1.msra.mxu0 0.0
    %5842 = vmatprep.subr.mxu0 0.0
    %5843 = vmatpush1.msra.mxu0 0.0
    %5844 = vmatprep.subr.mxu0 0.0
    %5845 = vmatpush1.msra.mxu0 0.0
    %5846 = vmatprep.subr.mxu0 0.0
    %5847 = vmatpush1.msra.mxu0 0.0
    %5848 = vmatprep.subr.mxu0 0.0
    %5849 = vmatpush1.msra.mxu0 0.0
    %5850 = vmatprep.subr.mxu0 0.0
    %5851 = vmatpush1.msra.mxu0 0.0
    %5852 = vmatprep.subr.mxu0 0.0
    %5853 = vmatpush1.msra.mxu0 0.0
    %5854 = vmatprep.subr.mxu0 0.0
    %5855 = vmatpush1.msra.mxu0 0.0
    %5856 = vmatprep.subr.mxu0 0.0
    %5857 = vmatpush1.msra.mxu0 0.0
    %5858 = vmatprep.subr.mxu0 0.0
    %5859 = vmatpush1.msra.mxu0 0.0
    %5860 = vmatprep.subr.mxu0 0.0
    %5861 = vmatpush1.msra.mxu0 0.0
    %5862 = vmatprep.subr.mxu0 0.0
    %5863 = vmatpush1.msra.mxu0 0.0
    %5864 = vmatprep.subr.mxu0 0.0
    %5865 = vmatpush1.msra.mxu0 0.0
    %5866 = vmatprep.subr.mxu0 0.0
    %5867 = vmatpush1.msra.mxu0 0.0
    %5868 = vmatprep.subr.mxu0 0.0
    %5869 = vmatpush1.msra.mxu0 0.0
    %5870 = vmatprep.subr.mxu0 0.0
    %5871 = vmatpush1.msra.mxu0 0.0
    %5872 = vmatprep.subr.mxu0 0.0
    %5873 = vmatpush1.msra.mxu0 0.0
    %5874 = vmatprep.subr.mxu0 0.0
    %5875 = vmatpush1.msra.mxu0 0.0
    %5876 = vmatprep.subr.mxu0 0.0
    %5877 = vmatpush1.msra.mxu0 0.0
    %5878 = vmatprep.subr.mxu0 0.0
    %5879 = vmatpush1.msra.mxu0 0.0
    %5880 = vmatprep.subr.mxu0 0.0
    %5881 = vmatpush1.msra.mxu0 0.0
    %5882 = vmatprep.subr.mxu0 0.0
    %5883 = vmatpush1.msra.mxu0 0.0
    %5884 = vmatprep.subr.mxu0 0.0
    %5885 = vmatpush1.msra.mxu0 0.0
    %5886 = vmatprep.subr.mxu0 0.0
    %5887 = vmatpush1.msra.mxu0 0.0
    %5888 = vmatprep.subr.mxu0 0.0
    %5889 = vmatpush1.msra.mxu0 0.0
    %5890 = vmatprep.subr.mxu0 0.0
    %5891 = vmatpush1.msra.mxu0 0.0
    %5892 = vmatprep.subr.mxu0 0.0
    %5893 = vmatpush1.msra.mxu0 0.0
    %5894 = vmatprep.subr.mxu0 0.0
    %5895 = vmatpush1.msra.mxu0 0.0
    %5896 = vmatprep.subr.mxu0 0.0
    %5897 = vmatpush1.msra.mxu0 0.0
    %5898 = vmatprep.mubr.f32.mxu0 0.0
    %5899 = vmatmul.mubr.f32.gmra.mrb[0].mxu0 %v4108
    %v5900 = vpop.f32.mrb[0].mxu0
    %v5901 = vadd.f32 %v5759, %v5900
    %v5902 = vpop.f32.mrb[0].mxu0
    %v5903 = vadd.f32 %v5761, %v5902
    %5904 = vdwg.mxu0
    %5905 = vmatprep.subr.mxu0 %v3941
    %5906 = vmatpush1.msra.mxu0 %v3940
    %5907 = vmatprep.subr.mxu0 0.0
    %5908 = vmatpush1.msra.mxu0 0.0
    %5909 = vmatprep.subr.mxu0 0.0
    %5910 = vmatpush1.msra.mxu0 0.0
    %5911 = vmatprep.subr.mxu0 0.0
    %5912 = vmatpush1.msra.mxu0 0.0
    %5913 = vmatprep.subr.mxu0 0.0
    %5914 = vmatpush1.msra.mxu0 0.0
    %5915 = vmatprep.subr.mxu0 0.0
    %5916 = vmatpush1.msra.mxu0 0.0
    %5917 = vmatprep.subr.mxu0 0.0
    %5918 = vmatpush1.msra.mxu0 0.0
    %5919 = vmatprep.subr.mxu0 0.0
    %5920 = vmatpush1.msra.mxu0 0.0
    %5921 = vmatprep.subr.mxu0 0.0
    %5922 = vmatpush1.msra.mxu0 0.0
    %5923 = vmatprep.subr.mxu0 0.0
    %5924 = vmatpush1.msra.mxu0 0.0
    %5925 = vmatprep.subr.mxu0 0.0
    %5926 = vmatpush1.msra.mxu0 0.0
    %5927 = vmatprep.subr.mxu0 0.0
    %5928 = vmatpush1.msra.mxu0 0.0
    %5929 = vmatprep.subr.mxu0 0.0
    %5930 = vmatpush1.msra.mxu0 0.0
    %5931 = vmatprep.subr.mxu0 0.0
    %5932 = vmatpush1.msra.mxu0 0.0
    %5933 = vmatprep.subr.mxu0 0.0
    %5934 = vmatpush1.msra.mxu0 0.0
    %5935 = vmatprep.subr.mxu0 0.0
    %5936 = vmatpush1.msra.mxu0 0.0
    %5937 = vmatprep.subr.mxu0 0.0
    %5938 = vmatpush1.msra.mxu0 0.0
    %5939 = vmatprep.subr.mxu0 0.0
    %5940 = vmatpush1.msra.mxu0 0.0
    %5941 = vmatprep.subr.mxu0 0.0
    %5942 = vmatpush1.msra.mxu0 0.0
    %5943 = vmatprep.subr.mxu0 0.0
    %5944 = vmatpush1.msra.mxu0 0.0
    %5945 = vmatprep.subr.mxu0 0.0
    %5946 = vmatpush1.msra.mxu0 0.0
    %5947 = vmatprep.subr.mxu0 0.0
    %5948 = vmatpush1.msra.mxu0 0.0
    %5949 = vmatprep.subr.mxu0 0.0
    %5950 = vmatpush1.msra.mxu0 0.0
    %5951 = vmatprep.subr.mxu0 0.0
    %5952 = vmatpush1.msra.mxu0 0.0
    %5953 = vmatprep.subr.mxu0 0.0
    %5954 = vmatpush1.msra.mxu0 0.0
    %5955 = vmatprep.subr.mxu0 0.0
    %5956 = vmatpush1.msra.mxu0 0.0
    %5957 = vmatprep.subr.mxu0 0.0
    %5958 = vmatpush1.msra.mxu0 0.0
    %5959 = vmatprep.subr.mxu0 0.0
    %5960 = vmatpush1.msra.mxu0 0.0
    %5961 = vmatprep.subr.mxu0 0.0
    %5962 = vmatpush1.msra.mxu0 0.0
    %5963 = vmatprep.subr.mxu0 0.0
    %5964 = vmatpush1.msra.mxu0 0.0
    %5965 = vmatprep.subr.mxu0 0.0
    %5966 = vmatpush1.msra.mxu0 0.0
    %5967 = vmatprep.subr.mxu0 0.0
    %5968 = vmatpush1.msra.mxu0 0.0
    %5969 = vmatprep.mubr.f32.mxu0 0.0
    %5970 = vmatmul.mubr.f32.gmra.mrb[0].mxu0 %v4108
    %v5971 = vpop.f32.mrb[0].mxu0
    %v5972 = vadd.f32 %v5830, %v5971
    %v5973 = vpop.f32.mrb[0].mxu0
    %v5974 = vadd.f32 %v5832, %v5973
    %5975 = vdwg.mxu0
    %5976 = vrot.lane.b32.xlu0 %v3938, 126
    %v5977 = vpop.permute.xlu0 %5976
    %5978 = vrot.lane.b32.xlu0 %v3939, 126
    %v5979 = vpop.permute.xlu0 %5978
    %5980 = vrot.lane.b32.xlu0 %v3940, 126
    %v5981 = vpop.permute.xlu0 %5980
    %5982 = vrot.lane.b32.xlu0 %v3941, 126
    %v5983 = vpop.permute.xlu0 %5982
    %v5984 = vsel %vm1139, %v5977, %v5979
    %v5985 = vsel %vm1139, %v5979, %v5981
    %v5986 = vsel %vm1139, %v5981, %v5983
    %5991 = vmatprep.subr.mxu0 %v5985
    %5992 = vmatpush1.msra.mxu0 %v5984
    %5993 = vmatprep.subr.mxu0 0.0
    %5994 = vmatpush1.msra.mxu0 0.0
    %5995 = vmatprep.subr.mxu0 0.0
    %5996 = vmatpush1.msra.mxu0 0.0
    %5997 = vmatprep.subr.mxu0 0.0
    %5998 = vmatpush1.msra.mxu0 0.0
    %5999 = vmatprep.subr.mxu0 0.0
    %6000 = vmatpush1.msra.mxu0 0.0
    %6001 = vmatprep.subr.mxu0 0.0
    %6002 = vmatpush1.msra.mxu0 0.0
    %6003 = vmatprep.subr.mxu0 0.0
    %6004 = vmatpush1.msra.mxu0 0.0
    %6005 = vmatprep.subr.mxu0 0.0
    %6006 = vmatpush1.msra.mxu0 0.0
    %6007 = vmatprep.subr.mxu0 0.0
    %6008 = vmatpush1.msra.mxu0 0.0
    %6009 = vmatprep.subr.mxu0 0.0
    %6010 = vmatpush1.msra.mxu0 0.0
    %6011 = vmatprep.subr.mxu0 0.0
    %6012 = vmatpush1.msra.mxu0 0.0
    %6013 = vmatprep.subr.mxu0 0.0
    %6014 = vmatpush1.msra.mxu0 0.0
    %6015 = vmatprep.subr.mxu0 0.0
    %6016 = vmatpush1.msra.mxu0 0.0
    %6017 = vmatprep.subr.mxu0 0.0
    %6018 = vmatpush1.msra.mxu0 0.0
    %6019 = vmatprep.subr.mxu0 0.0
    %6020 = vmatpush1.msra.mxu0 0.0
    %6021 = vmatprep.subr.mxu0 0.0
    %6022 = vmatpush1.msra.mxu0 0.0
    %6023 = vmatprep.subr.mxu0 0.0
    %6024 = vmatpush1.msra.mxu0 0.0
    %6025 = vmatprep.subr.mxu0 0.0
    %6026 = vmatpush1.msra.mxu0 0.0
    %6027 = vmatprep.subr.mxu0 0.0
    %6028 = vmatpush1.msra.mxu0 0.0
    %6029 = vmatprep.subr.mxu0 0.0
    %6030 = vmatpush1.msra.mxu0 0.0
    %6031 = vmatprep.subr.mxu0 0.0
    %6032 = vmatpush1.msra.mxu0 0.0
    %6033 = vmatprep.subr.mxu0 0.0
    %6034 = vmatpush1.msra.mxu0 0.0
    %6035 = vmatprep.subr.mxu0 0.0
    %6036 = vmatpush1.msra.mxu0 0.0
    %6037 = vmatprep.subr.mxu0 0.0
    %6038 = vmatpush1.msra.mxu0 0.0
    %6039 = vmatprep.subr.mxu0 0.0
    %6040 = vmatpush1.msra.mxu0 0.0
    %6041 = vmatprep.subr.mxu0 0.0
    %6042 = vmatpush1.msra.mxu0 0.0
    %6043 = vmatprep.subr.mxu0 0.0
    %6044 = vmatpush1.msra.mxu0 0.0
    %6045 = vmatprep.subr.mxu0 0.0
    %6046 = vmatpush1.msra.mxu0 0.0
    %6047 = vmatprep.subr.mxu0 0.0
    %6048 = vmatpush1.msra.mxu0 0.0
    %6049 = vmatprep.subr.mxu0 0.0
    %6050 = vmatpush1.msra.mxu0 0.0
    %6051 = vmatprep.subr.mxu0 0.0
    %6052 = vmatpush1.msra.mxu0 0.0
    %6053 = vmatprep.subr.mxu0 0.0
    %6054 = vmatpush1.msra.mxu0 0.0
    %6055 = vmatprep.mubr.f32.mxu0 0.0
    %6056 = vmatmul.mubr.f32.gmra.mrb[0].mxu0 %v4268
    %v6057 = vpop.f32.mrb[0].mxu0
    %v6058 = vadd.f32 0.0, %v6057
    %v6059 = vpop.f32.mrb[0].mxu0
    %v6060 = vadd.f32 0.0, %v6059
    %6061 = vdwg.mxu0
    %6062 = vmatprep.subr.mxu0 %v5983
    %6063 = vmatpush1.msra.mxu0 %v5986
    %6064 = vmatprep.subr.mxu0 0.0
    %6065 = vmatpush1.msra.mxu0 0.0
    %6066 = vmatprep.subr.mxu0 0.0
    %6067 = vmatpush1.msra.mxu0 0.0
    %6068 = vmatprep.subr.mxu0 0.0
    %6069 = vmatpush1.msra.mxu0 0.0
    %6070 = vmatprep.subr.mxu0 0.0
    %6071 = vmatpush1.msra.mxu0 0.0
    %6072 = vmatprep.subr.mxu0 0.0
    %6073 = vmatpush1.msra.mxu0 0.0
    %6074 = vmatprep.subr.mxu0 0.0
    %6075 = vmatpush1.msra.mxu0 0.0
    %6076 = vmatprep.subr.mxu0 0.0
    %6077 = vmatpush1.msra.mxu0 0.0
    %6078 = vmatprep.subr.mxu0 0.0
    %6079 = vmatpush1.msra.mxu0 0.0
    %6080 = vmatprep.subr.mxu0 0.0
    %6081 = vmatpush1.msra.mxu0 0.0
    %6082 = vmatprep.subr.mxu0 0.0
    %6083 = vmatpush1.msra.mxu0 0.0
    %6084 = vmatprep.subr.mxu0 0.0
    %6085 = vmatpush1.msra.mxu0 0.0
    %6086 = vmatprep.subr.mxu0 0.0
    %6087 = vmatpush1.msra.mxu0 0.0
    %6088 = vmatprep.subr.mxu0 0.0
    %6089 = vmatpush1.msra.mxu0 0.0
    %6090 = vmatprep.subr.mxu0 0.0
    %6091 = vmatpush1.msra.mxu0 0.0
    %6092 = vmatprep.subr.mxu0 0.0
    %6093 = vmatpush1.msra.mxu0 0.0
    %6094 = vmatprep.subr.mxu0 0.0
    %6095 = vmatpush1.msra.mxu0 0.0
    %6096 = vmatprep.subr.mxu0 0.0
    %6097 = vmatpush1.msra.mxu0 0.0
    %6098 = vmatprep.subr.mxu0 0.0
    %6099 = vmatpush1.msra.mxu0 0.0
    %6100 = vmatprep.subr.mxu0 0.0
    %6101 = vmatpush1.msra.mxu0 0.0
    %6102 = vmatprep.subr.mxu0 0.0
    %6103 = vmatpush1.msra.mxu0 0.0
    %6104 = vmatprep.subr.mxu0 0.0
    %6105 = vmatpush1.msra.mxu0 0.0
    %6106 = vmatprep.subr.mxu0 0.0
    %6107 = vmatpush1.msra.mxu0 0.0
    %6108 = vmatprep.subr.mxu0 0.0
    %6109 = vmatpush1.msra.mxu0 0.0
    %6110 = vmatprep.subr.mxu0 0.0
    %6111 = vmatpush1.msra.mxu0 0.0
    %6112 = vmatprep.subr.mxu0 0.0
    %6113 = vmatpush1.msra.mxu0 0.0
    %6114 = vmatprep.subr.mxu0 0.0
    %6115 = vmatpush1.msra.mxu0 0.0
    %6116 = vmatprep.subr.mxu0 0.0
    %6117 = vmatpush1.msra.mxu0 0.0
    %6118 = vmatprep.subr.mxu0 0.0
    %6119 = vmatpush1.msra.mxu0 0.0
    %6120 = vmatprep.subr.mxu0 0.0
    %6121 = vmatpush1.msra.mxu0 0.0
    %6122 = vmatprep.subr.mxu0 0.0
    %6123 = vmatpush1.msra.mxu0 0.0
    %6124 = vmatprep.subr.mxu0 0.0
    %6125 = vmatpush1.msra.mxu0 0.0
    %6126 = vmatprep.mubr.f32.mxu0 0.0
    %6127 = vmatmul.mubr.f32.gmra.mrb[0].mxu0 %v4268
    %v6128 = vpop.f32.mrb[0].mxu0
    %v6129 = vadd.f32 0.0, %v6128
    %v6130 = vpop.f32.mrb[0].mxu0
    %v6131 = vadd.f32 0.0, %v6130
    %6132 = vdwg.mxu0
    %v6133 = vadd.f32 %v5901, %v6058
    %v6134 = vadd.f32 %v5903, %v6060
    %v6135 = vadd.f32 %v5972, %v6129
    %v6136 = vadd.f32 %v5974, %v6131
    %6137 = vrot.lane.b32.xlu0 %v3938, 106
    %v6138 = vpop.permute.xlu0 %6137
    %6139 = vrot.lane.b32.xlu0 %v3939, 106
    %v6140 = vpop.permute.xlu0 %6139
    %6141 = vrot.lane.b32.xlu0 %v3940, 106
    %v6142 = vpop.permute.xlu0 %6141
    %6143 = vrot.lane.b32.xlu0 %v3941, 106
    %v6144 = vpop.permute.xlu0 %6143
    %v6145 = vsel %vm1308, %v6138, %v6140
    %v6146 = vsel %vm1308, %v6140, %v6142
    %v6147 = vsel %vm1308, %v6142, %v6144
    %6152 = vmatprep.subr.mxu0 %v6146
    %6153 = vmatpush1.msra.mxu0 %v6145
    %6154 = vmatprep.subr.mxu0 0.0
    %6155 = vmatpush1.msra.mxu0 0.0
    %6156 = vmatprep.subr.mxu0 0.0
    %6157 = vmatpush1.msra.mxu0 0.0
    %6158 = vmatprep.subr.mxu0 0.0
    %6159 = vmatpush1.msra.mxu0 0.0
    %6160 = vmatprep.subr.mxu0 0.0
    %6161 = vmatpush1.msra.mxu0 0.0
    %6162 = vmatprep.subr.mxu0 0.0
    %6163 = vmatpush1.msra.mxu0 0.0
    %6164 = vmatprep.subr.mxu0 0.0
    %6165 = vmatpush1.msra.mxu0 0.0
    %6166 = vmatprep.subr.mxu0 0.0
    %6167 = vmatpush1.msra.mxu0 0.0
    %6168 = vmatprep.subr.mxu0 0.0
    %6169 = vmatpush1.msra.mxu0 0.0
    %6170 = vmatprep.subr.mxu0 0.0
    %6171 = vmatpush1.msra.mxu0 0.0
    %6172 = vmatprep.subr.mxu0 0.0
    %6173 = vmatpush1.msra.mxu0 0.0
    %6174 = vmatprep.subr.mxu0 0.0
    %6175 = vmatpush1.msra.mxu0 0.0
    %6176 = vmatprep.subr.mxu0 0.0
    %6177 = vmatpush1.msra.mxu0 0.0
    %6178 = vmatprep.subr.mxu0 0.0
    %6179 = vmatpush1.msra.mxu0 0.0
    %6180 = vmatprep.subr.mxu0 0.0
    %6181 = vmatpush1.msra.mxu0 0.0
    %6182 = vmatprep.subr.mxu0 0.0
    %6183 = vmatpush1.msra.mxu0 0.0
    %6184 = vmatprep.subr.mxu0 0.0
    %6185 = vmatpush1.msra.mxu0 0.0
    %6186 = vmatprep.subr.mxu0 0.0
    %6187 = vmatpush1.msra.mxu0 0.0
    %6188 = vmatprep.subr.mxu0 0.0
    %6189 = vmatpush1.msra.mxu0 0.0
    %6190 = vmatprep.subr.mxu0 0.0
    %6191 = vmatpush1.msra.mxu0 0.0
    %6192 = vmatprep.subr.mxu0 0.0
    %6193 = vmatpush1.msra.mxu0 0.0
    %6194 = vmatprep.subr.mxu0 0.0
    %6195 = vmatpush1.msra.mxu0 0.0
    %6196 = vmatprep.subr.mxu0 0.0
    %6197 = vmatpush1.msra.mxu0 0.0
    %6198 = vmatprep.subr.mxu0 0.0
    %6199 = vmatpush1.msra.mxu0 0.0
    %6200 = vmatprep.subr.mxu0 0.0
    %6201 = vmatpush1.msra.mxu0 0.0
    %6202 = vmatprep.subr.mxu0 0.0
    %6203 = vmatpush1.msra.mxu0 0.0
    %6204 = vmatprep.subr.mxu0 0.0
    %6205 = vmatpush1.msra.mxu0 0.0
    %6206 = vmatprep.subr.mxu0 0.0
    %6207 = vmatpush1.msra.mxu0 0.0
    %6208 = vmatprep.subr.mxu0 0.0
    %6209 = vmatpush1.msra.mxu0 0.0
    %6210 = vmatprep.subr.mxu0 0.0
    %6211 = vmatpush1.msra.mxu0 0.0
    %6212 = vmatprep.subr.mxu0 0.0
    %6213 = vmatpush1.msra.mxu0 0.0
    %6214 = vmatprep.subr.mxu0 0.0
    %6215 = vmatpush1.msra.mxu0 0.0
    %6216 = vmatprep.mubr.f32.mxu0 0.0
    %6217 = vmatmul.mubr.f32.gmra.mrb[0].mxu0 %v4432
    %v6218 = vpop.f32.mrb[0].mxu0
    %v6219 = vadd.f32 0.0, %v6218
    %v6220 = vpop.f32.mrb[0].mxu0
    %v6221 = vadd.f32 0.0, %v6220
    %6222 = vdwg.mxu0
    %6223 = vmatprep.subr.mxu0 %v6144
    %6224 = vmatpush1.msra.mxu0 %v6147
    %6225 = vmatprep.subr.mxu0 0.0
    %6226 = vmatpush1.msra.mxu0 0.0
    %6227 = vmatprep.subr.mxu0 0.0
    %6228 = vmatpush1.msra.mxu0 0.0
    %6229 = vmatprep.subr.mxu0 0.0
    %6230 = vmatpush1.msra.mxu0 0.0
    %6231 = vmatprep.subr.mxu0 0.0
    %6232 = vmatpush1.msra.mxu0 0.0
    %6233 = vmatprep.subr.mxu0 0.0
    %6234 = vmatpush1.msra.mxu0 0.0
    %6235 = vmatprep.subr.mxu0 0.0
    %6236 = vmatpush1.msra.mxu0 0.0
    %6237 = vmatprep.subr.mxu0 0.0
    %6238 = vmatpush1.msra.mxu0 0.0
    %6239 = vmatprep.subr.mxu0 0.0
    %6240 = vmatpush1.msra.mxu0 0.0
    %6241 = vmatprep.subr.mxu0 0.0
    %6242 = vmatpush1.msra.mxu0 0.0
    %6243 = vmatprep.subr.mxu0 0.0
    %6244 = vmatpush1.msra.mxu0 0.0
    %6245 = vmatprep.subr.mxu0 0.0
    %6246 = vmatpush1.msra.mxu0 0.0
    %6247 = vmatprep.subr.mxu0 0.0
    %6248 = vmatpush1.msra.mxu0 0.0
    %6249 = vmatprep.subr.mxu0 0.0
    %6250 = vmatpush1.msra.mxu0 0.0
    %6251 = vmatprep.subr.mxu0 0.0
    %6252 = vmatpush1.msra.mxu0 0.0
    %6253 = vmatprep.subr.mxu0 0.0
    %6254 = vmatpush1.msra.mxu0 0.0
    %6255 = vmatprep.subr.mxu0 0.0
    %6256 = vmatpush1.msra.mxu0 0.0
    %6257 = vmatprep.subr.mxu0 0.0
    %6258 = vmatpush1.msra.mxu0 0.0
    %6259 = vmatprep.subr.mxu0 0.0
    %6260 = vmatpush1.msra.mxu0 0.0
    %6261 = vmatprep.subr.mxu0 0.0
    %6262 = vmatpush1.msra.mxu0 0.0
    %6263 = vmatprep.subr.mxu0 0.0
    %6264 = vmatpush1.msra.mxu0 0.0
    %6265 = vmatprep.subr.mxu0 0.0
    %6266 = vmatpush1.msra.mxu0 0.0
    %6267 = vmatprep.subr.mxu0 0.0
    %6268 = vmatpush1.msra.mxu0 0.0
    %6269 = vmatprep.subr.mxu0 0.0
    %6270 = vmatpush1.msra.mxu0 0.0
    %6271 = vmatprep.subr.mxu0 0.0
    %6272 = vmatpush1.msra.mxu0 0.0
    %6273 = vmatprep.subr.mxu0 0.0
    %6274 = vmatpush1.msra.mxu0 0.0
    %6275 = vmatprep.subr.mxu0 0.0
    %6276 = vmatpush1.msra.mxu0 0.0
    %6277 = vmatprep.subr.mxu0 0.0
    %6278 = vmatpush1.msra.mxu0 0.0
    %6279 = vmatprep.subr.mxu0 0.0
    %6280 = vmatpush1.msra.mxu0 0.0
    %6281 = vmatprep.subr.mxu0 0.0
    %6282 = vmatpush1.msra.mxu0 0.0
    %6283 = vmatprep.subr.mxu0 0.0
    %6284 = vmatpush1.msra.mxu0 0.0
    %6285 = vmatprep.subr.mxu0 0.0
    %6286 = vmatpush1.msra.mxu0 0.0
    %6287 = vmatprep.mubr.f32.mxu0 0.0
    %6288 = vmatmul.mubr.f32.gmra.mrb[0].mxu0 %v4432
    %v6289 = vpop.f32.mrb[0].mxu0
    %v6290 = vadd.f32 0.0, %v6289
    %v6291 = vpop.f32.mrb[0].mxu0
    %v6292 = vadd.f32 0.0, %v6291
    %6293 = vdwg.mxu0
    %v6294 = vadd.f32 %v6133, %v6219
    %v6295 = vadd.f32 %v6134, %v6221
    %v6296 = vadd.f32 %v6135, %v6290
    %v6297 = vadd.f32 %v6136, %v6292
    %6298 = vrot.lane.b32.xlu0 %v3938, 105
    %v6299 = vpop.permute.xlu0 %6298
    %6300 = vrot.lane.b32.xlu0 %v3939, 105
    %v6301 = vpop.permute.xlu0 %6300
    %6302 = vrot.lane.b32.xlu0 %v3940, 105
    %v6303 = vpop.permute.xlu0 %6302
    %6304 = vrot.lane.b32.xlu0 %v3941, 105
    %v6305 = vpop.permute.xlu0 %6304
    %v6306 = vsel %vm1477, %v6299, %v6301
    %v6307 = vsel %vm1477, %v6301, %v6303
    %v6308 = vsel %vm1477, %v6303, %v6305
    %6313 = vmatprep.subr.mxu0 %v6307
    %6314 = vmatpush1.msra.mxu0 %v6306
    %6315 = vmatprep.subr.mxu0 0.0
    %6316 = vmatpush1.msra.mxu0 0.0
    %6317 = vmatprep.subr.mxu0 0.0
    %6318 = vmatpush1.msra.mxu0 0.0
    %6319 = vmatprep.subr.mxu0 0.0
    %6320 = vmatpush1.msra.mxu0 0.0
    %6321 = vmatprep.subr.mxu0 0.0
    %6322 = vmatpush1.msra.mxu0 0.0
    %6323 = vmatprep.subr.mxu0 0.0
    %6324 = vmatpush1.msra.mxu0 0.0
    %6325 = vmatprep.subr.mxu0 0.0
    %6326 = vmatpush1.msra.mxu0 0.0
    %6327 = vmatprep.subr.mxu0 0.0
    %6328 = vmatpush1.msra.mxu0 0.0
    %6329 = vmatprep.subr.mxu0 0.0
    %6330 = vmatpush1.msra.mxu0 0.0
    %6331 = vmatprep.subr.mxu0 0.0
    %6332 = vmatpush1.msra.mxu0 0.0
    %6333 = vmatprep.subr.mxu0 0.0
    %6334 = vmatpush1.msra.mxu0 0.0
    %6335 = vmatprep.subr.mxu0 0.0
    %6336 = vmatpush1.msra.mxu0 0.0
    %6337 = vmatprep.subr.mxu0 0.0
    %6338 = vmatpush1.msra.mxu0 0.0
    %6339 = vmatprep.subr.mxu0 0.0
    %6340 = vmatpush1.msra.mxu0 0.0
    %6341 = vmatprep.subr.mxu0 0.0
    %6342 = vmatpush1.msra.mxu0 0.0
    %6343 = vmatprep.subr.mxu0 0.0
    %6344 = vmatpush1.msra.mxu0 0.0
    %6345 = vmatprep.subr.mxu0 0.0
    %6346 = vmatpush1.msra.mxu0 0.0
    %6347 = vmatprep.subr.mxu0 0.0
    %6348 = vmatpush1.msra.mxu0 0.0
    %6349 = vmatprep.subr.mxu0 0.0
    %6350 = vmatpush1.msra.mxu0 0.0
    %6351 = vmatprep.subr.mxu0 0.0
    %6352 = vmatpush1.msra.mxu0 0.0
    %6353 = vmatprep.subr.mxu0 0.0
    %6354 = vmatpush1.msra.mxu0 0.0
    %6355 = vmatprep.subr.mxu0 0.0
    %6356 = vmatpush1.msra.mxu0 0.0
    %6357 = vmatprep.subr.mxu0 0.0
    %6358 = vmatpush1.msra.mxu0 0.0
    %6359 = vmatprep.subr.mxu0 0.0
    %6360 = vmatpush1.msra.mxu0 0.0
    %6361 = vmatprep.subr.mxu0 0.0
    %6362 = vmatpush1.msra.mxu0 0.0
    %6363 = vmatprep.subr.mxu0 0.0
    %6364 = vmatpush1.msra.mxu0 0.0
    %6365 = vmatprep.subr.mxu0 0.0
    %6366 = vmatpush1.msra.mxu0 0.0
    %6367 = vmatprep.subr.mxu0 0.0
    %6368 = vmatpush1.msra.mxu0 0.0
    %6369 = vmatprep.subr.mxu0 0.0
    %6370 = vmatpush1.msra.mxu0 0.0
    %6371 = vmatprep.subr.mxu0 0.0
    %6372 = vmatpush1.msra.mxu0 0.0
    %6373 = vmatprep.subr.mxu0 0.0
    %6374 = vmatpush1.msra.mxu0 0.0
    %6375 = vmatprep.subr.mxu0 0.0
    %6376 = vmatpush1.msra.mxu0 0.0
    %6377 = vmatprep.mubr.f32.mxu0 0.0
    %6378 = vmatmul.mubr.f32.gmra.mrb[0].mxu0 %v4596
    %v6379 = vpop.f32.mrb[0].mxu0
    %v6380 = vadd.f32 0.0, %v6379
    %v6381 = vpop.f32.mrb[0].mxu0
    %v6382 = vadd.f32 0.0, %v6381
    %6383 = vdwg.mxu0
    %6384 = vmatprep.subr.mxu0 %v6305
    %6385 = vmatpush1.msra.mxu0 %v6308
    %6386 = vmatprep.subr.mxu0 0.0
    %6387 = vmatpush1.msra.mxu0 0.0
    %6388 = vmatprep.subr.mxu0 0.0
    %6389 = vmatpush1.msra.mxu0 0.0
    %6390 = vmatprep.subr.mxu0 0.0
    %6391 = vmatpush1.msra.mxu0 0.0
    %6392 = vmatprep.subr.mxu0 0.0
    %6393 = vmatpush1.msra.mxu0 0.0
    %6394 = vmatprep.subr.mxu0 0.0
    %6395 = vmatpush1.msra.mxu0 0.0
    %6396 = vmatprep.subr.mxu0 0.0
    %6397 = vmatpush1.msra.mxu0 0.0
    %6398 = vmatprep.subr.mxu0 0.0
    %6399 = vmatpush1.msra.mxu0 0.0
    %6400 = vmatprep.subr.mxu0 0.0
    %6401 = vmatpush1.msra.mxu0 0.0
    %6402 = vmatprep.subr.mxu0 0.0
    %6403 = vmatpush1.msra.mxu0 0.0
    %6404 = vmatprep.subr.mxu0 0.0
    %6405 = vmatpush1.msra.mxu0 0.0
    %6406 = vmatprep.subr.mxu0 0.0
    %6407 = vmatpush1.msra.mxu0 0.0
    %6408 = vmatprep.subr.mxu0 0.0
    %6409 = vmatpush1.msra.mxu0 0.0
    %6410 = vmatprep.subr.mxu0 0.0
    %6411 = vmatpush1.msra.mxu0 0.0
    %6412 = vmatprep.subr.mxu0 0.0
    %6413 = vmatpush1.msra.mxu0 0.0
    %6414 = vmatprep.subr.mxu0 0.0
    %6415 = vmatpush1.msra.mxu0 0.0
    %6416 = vmatprep.subr.mxu0 0.0
    %6417 = vmatpush1.msra.mxu0 0.0
    %6418 = vmatprep.subr.mxu0 0.0
    %6419 = vmatpush1.msra.mxu0 0.0
    %6420 = vmatprep.subr.mxu0 0.0
    %6421 = vmatpush1.msra.mxu0 0.0
    %6422 = vmatprep.subr.mxu0 0.0
    %6423 = vmatpush1.msra.mxu0 0.0
    %6424 = vmatprep.subr.mxu0 0.0
    %6425 = vmatpush1.msra.mxu0 0.0
    %6426 = vmatprep.subr.mxu0 0.0
    %6427 = vmatpush1.msra.mxu0 0.0
    %6428 = vmatprep.subr.mxu0 0.0
    %6429 = vmatpush1.msra.mxu0 0.0
    %6430 = vmatprep.subr.mxu0 0.0
    %6431 = vmatpush1.msra.mxu0 0.0
    %6432 = vmatprep.subr.mxu0 0.0
    %6433 = vmatpush1.msra.mxu0 0.0
    %6434 = vmatprep.subr.mxu0 0.0
    %6435 = vmatpush1.msra.mxu0 0.0
    %6436 = vmatprep.subr.mxu0 0.0
    %6437 = vmatpush1.msra.mxu0 0.0
    %6438 = vmatprep.subr.mxu0 0.0
    %6439 = vmatpush1.msra.mxu0 0.0
    %6440 = vmatprep.subr.mxu0 0.0
    %6441 = vmatpush1.msra.mxu0 0.0
    %6442 = vmatprep.subr.mxu0 0.0
    %6443 = vmatpush1.msra.mxu0 0.0
    %6444 = vmatprep.subr.mxu0 0.0
    %6445 = vmatpush1.msra.mxu0 0.0
    %6446 = vmatprep.subr.mxu0 0.0
    %6447 = vmatpush1.msra.mxu0 0.0
    %6448 = vmatprep.mubr.f32.mxu0 0.0
    %6449 = vmatmul.mubr.f32.gmra.mrb[0].mxu0 %v4596
    %v6450 = vpop.f32.mrb[0].mxu0
    %v6451 = vadd.f32 0.0, %v6450
    %v6452 = vpop.f32.mrb[0].mxu0
    %v6453 = vadd.f32 0.0, %v6452
    %6454 = vdwg.mxu0
    %v6455 = vadd.f32 %v6294, %v6380
    %v6456 = vadd.f32 %v6295, %v6382
    %v6457 = vadd.f32 %v6296, %v6451
    %v6458 = vadd.f32 %v6297, %v6453
    %6459 = vrot.lane.b32.xlu0 %v3938, 104
    %v6460 = vpop.permute.xlu0 %6459
    %6461 = vrot.lane.b32.xlu0 %v3939, 104
    %v6462 = vpop.permute.xlu0 %6461
    %6463 = vrot.lane.b32.xlu0 %v3940, 104
    %v6464 = vpop.permute.xlu0 %6463
    %6465 = vrot.lane.b32.xlu0 %v3941, 104
    %v6466 = vpop.permute.xlu0 %6465
    %v6467 = vsel %vm1646, %v6460, %v6462
    %v6468 = vsel %vm1646, %v6462, %v6464
    %v6469 = vsel %vm1646, %v6464, %v6466
    %6474 = vmatprep.subr.mxu0 %v6468
    %6475 = vmatpush1.msra.mxu0 %v6467
    %6476 = vmatprep.subr.mxu0 0.0
    %6477 = vmatpush1.msra.mxu0 0.0
    %6478 = vmatprep.subr.mxu0 0.0
    %6479 = vmatpush1.msra.mxu0 0.0
    %6480 = vmatprep.subr.mxu0 0.0
    %6481 = vmatpush1.msra.mxu0 0.0
    %6482 = vmatprep.subr.mxu0 0.0
    %6483 = vmatpush1.msra.mxu0 0.0
    %6484 = vmatprep.subr.mxu0 0.0
    %6485 = vmatpush1.msra.mxu0 0.0
    %6486 = vmatprep.subr.mxu0 0.0
    %6487 = vmatpush1.msra.mxu0 0.0
    %6488 = vmatprep.subr.mxu0 0.0
    %6489 = vmatpush1.msra.mxu0 0.0
    %6490 = vmatprep.subr.mxu0 0.0
    %6491 = vmatpush1.msra.mxu0 0.0
    %6492 = vmatprep.subr.mxu0 0.0
    %6493 = vmatpush1.msra.mxu0 0.0
    %6494 = vmatprep.subr.mxu0 0.0
    %6495 = vmatpush1.msra.mxu0 0.0
    %6496 = vmatprep.subr.mxu0 0.0
    %6497 = vmatpush1.msra.mxu0 0.0
    %6498 = vmatprep.subr.mxu0 0.0
    %6499 = vmatpush1.msra.mxu0 0.0
    %6500 = vmatprep.subr.mxu0 0.0
    %6501 = vmatpush1.msra.mxu0 0.0
    %6502 = vmatprep.subr.mxu0 0.0
    %6503 = vmatpush1.msra.mxu0 0.0
    %6504 = vmatprep.subr.mxu0 0.0
    %6505 = vmatpush1.msra.mxu0 0.0
    %6506 = vmatprep.subr.mxu0 0.0
    %6507 = vmatpush1.msra.mxu0 0.0
    %6508 = vmatprep.subr.mxu0 0.0
    %6509 = vmatpush1.msra.mxu0 0.0
    %6510 = vmatprep.subr.mxu0 0.0
    %6511 = vmatpush1.msra.mxu0 0.0
    %6512 = vmatprep.subr.mxu0 0.0
    %6513 = vmatpush1.msra.mxu0 0.0
    %6514 = vmatprep.subr.mxu0 0.0
    %6515 = vmatpush1.msra.mxu0 0.0
    %6516 = vmatprep.subr.mxu0 0.0
    %6517 = vmatpush1.msra.mxu0 0.0
    %6518 = vmatprep.subr.mxu0 0.0
    %6519 = vmatpush1.msra.mxu0 0.0
    %6520 = vmatprep.subr.mxu0 0.0
    %6521 = vmatpush1.msra.mxu0 0.0
    %6522 = vmatprep.subr.mxu0 0.0
    %6523 = vmatpush1.msra.mxu0 0.0
    %6524 = vmatprep.subr.mxu0 0.0
    %6525 = vmatpush1.msra.mxu0 0.0
    %6526 = vmatprep.subr.mxu0 0.0
    %6527 = vmatpush1.msra.mxu0 0.0
    %6528 = vmatprep.subr.mxu0 0.0
    %6529 = vmatpush1.msra.mxu0 0.0
    %6530 = vmatprep.subr.mxu0 0.0
    %6531 = vmatpush1.msra.mxu0 0.0
    %6532 = vmatprep.subr.mxu0 0.0
    %6533 = vmatpush1.msra.mxu0 0.0
    %6534 = vmatprep.subr.mxu0 0.0
    %6535 = vmatpush1.msra.mxu0 0.0
    %6536 = vmatprep.subr.mxu0 0.0
    %6537 = vmatpush1.msra.mxu0 0.0
    %6538 = vmatprep.mubr.f32.mxu0 0.0
    %6539 = vmatmul.mubr.f32.gmra.mrb[0].mxu0 %v4760
    %v6540 = vpop.f32.mrb[0].mxu0
    %v6541 = vadd.f32 0.0, %v6540
    %v6542 = vpop.f32.mrb[0].mxu0
    %v6543 = vadd.f32 0.0, %v6542
    %6544 = vdwg.mxu0
    %6545 = vmatprep.subr.mxu0 %v6466
    %6546 = vmatpush1.msra.mxu0 %v6469
    %6547 = vmatprep.subr.mxu0 0.0
    %6548 = vmatpush1.msra.mxu0 0.0
    %6549 = vmatprep.subr.mxu0 0.0
    %6550 = vmatpush1.msra.mxu0 0.0
    %6551 = vmatprep.subr.mxu0 0.0
    %6552 = vmatpush1.msra.mxu0 0.0
    %6553 = vmatprep.subr.mxu0 0.0
    %6554 = vmatpush1.msra.mxu0 0.0
    %6555 = vmatprep.subr.mxu0 0.0
    %6556 = vmatpush1.msra.mxu0 0.0
    %6557 = vmatprep.subr.mxu0 0.0
    %6558 = vmatpush1.msra.mxu0 0.0
    %6559 = vmatprep.subr.mxu0 0.0
    %6560 = vmatpush1.msra.mxu0 0.0
    %6561 = vmatprep.subr.mxu0 0.0
    %6562 = vmatpush1.msra.mxu0 0.0
    %6563 = vmatprep.subr.mxu0 0.0
    %6564 = vmatpush1.msra.mxu0 0.0
    %6565 = vmatprep.subr.mxu0 0.0
    %6566 = vmatpush1.msra.mxu0 0.0
    %6567 = vmatprep.subr.mxu0 0.0
    %6568 = vmatpush1.msra.mxu0 0.0
    %6569 = vmatprep.subr.mxu0 0.0
    %6570 = vmatpush1.msra.mxu0 0.0
    %6571 = vmatprep.subr.mxu0 0.0
    %6572 = vmatpush1.msra.mxu0 0.0
    %6573 = vmatprep.subr.mxu0 0.0
    %6574 = vmatpush1.msra.mxu0 0.0
    %6575 = vmatprep.subr.mxu0 0.0
    %6576 = vmatpush1.msra.mxu0 0.0
    %6577 = vmatprep.subr.mxu0 0.0
    %6578 = vmatpush1.msra.mxu0 0.0
    %6579 = vmatprep.subr.mxu0 0.0
    %6580 = vmatpush1.msra.mxu0 0.0
    %6581 = vmatprep.subr.mxu0 0.0
    %6582 = vmatpush1.msra.mxu0 0.0
    %6583 = vmatprep.subr.mxu0 0.0
    %6584 = vmatpush1.msra.mxu0 0.0
    %6585 = vmatprep.subr.mxu0 0.0
    %6586 = vmatpush1.msra.mxu0 0.0
    %6587 = vmatprep.subr.mxu0 0.0
    %6588 = vmatpush1.msra.mxu0 0.0
    %6589 = vmatprep.subr.mxu0 0.0
    %6590 = vmatpush1.msra.mxu0 0.0
    %6591 = vmatprep.subr.mxu0 0.0
    %6592 = vmatpush1.msra.mxu0 0.0
    %6593 = vmatprep.subr.mxu0 0.0
    %6594 = vmatpush1.msra.mxu0 0.0
    %6595 = vmatprep.subr.mxu0 0.0
    %6596 = vmatpush1.msra.mxu0 0.0
    %6597 = vmatprep.subr.mxu0 0.0
    %6598 = vmatpush1.msra.mxu0 0.0
    %6599 = vmatprep.subr.mxu0 0.0
    %6600 = vmatpush1.msra.mxu0 0.0
    %6601 = vmatprep.subr.mxu0 0.0
    %6602 = vmatpush1.msra.mxu0 0.0
    %6603 = vmatprep.subr.mxu0 0.0
    %6604 = vmatpush1.msra.mxu0 0.0
    %6605 = vmatprep.subr.mxu0 0.0
    %6606 = vmatpush1.msra.mxu0 0.0
    %6607 = vmatprep.subr.mxu0 0.0
    %6608 = vmatpush1.msra.mxu0 0.0
    %6609 = vmatprep.mubr.f32.mxu0 0.0
    %6610 = vmatmul.mubr.f32.gmra.mrb[0].mxu0 %v4760
    %v6611 = vpop.f32.mrb[0].mxu0
    %v6612 = vadd.f32 0.0, %v6611
    %v6613 = vpop.f32.mrb[0].mxu0
    %v6614 = vadd.f32 0.0, %v6613
    %6615 = vdwg.mxu0
    %v6616 = vadd.f32 %v6455, %v6541
    %v6617 = vadd.f32 %v6456, %v6543
    %v6618 = vadd.f32 %v6457, %v6612
    %v6619 = vadd.f32 %v6458, %v6614
    %6620 = vrot.lane.b32.xlu0 %v3938, 84
    %v6621 = vpop.permute.xlu0 %6620
    %6622 = vrot.lane.b32.xlu0 %v3939, 84
    %v6623 = vpop.permute.xlu0 %6622
    %6624 = vrot.lane.b32.xlu0 %v3940, 84
    %v6625 = vpop.permute.xlu0 %6624
    %6626 = vrot.lane.b32.xlu0 %v3941, 84
    %v6627 = vpop.permute.xlu0 %6626
    %v6628 = vsel %vm1815, %v6621, %v6623
    %v6629 = vsel %vm1815, %v6623, %v6625
    %v6630 = vsel %vm1815, %v6625, %v6627
    %6635 = vmatprep.subr.mxu0 %v6629
    %6636 = vmatpush1.msra.mxu0 %v6628
    %6637 = vmatprep.subr.mxu0 0.0
    %6638 = vmatpush1.msra.mxu0 0.0
    %6639 = vmatprep.subr.mxu0 0.0
    %6640 = vmatpush1.msra.mxu0 0.0
    %6641 = vmatprep.subr.mxu0 0.0
    %6642 = vmatpush1.msra.mxu0 0.0
    %6643 = vmatprep.subr.mxu0 0.0
    %6644 = vmatpush1.msra.mxu0 0.0
    %6645 = vmatprep.subr.mxu0 0.0
    %6646 = vmatpush1.msra.mxu0 0.0
    %6647 = vmatprep.subr.mxu0 0.0
    %6648 = vmatpush1.msra.mxu0 0.0
    %6649 = vmatprep.subr.mxu0 0.0
    %6650 = vmatpush1.msra.mxu0 0.0
    %6651 = vmatprep.subr.mxu0 0.0
    %6652 = vmatpush1.msra.mxu0 0.0
    %6653 = vmatprep.subr.mxu0 0.0
    %6654 = vmatpush1.msra.mxu0 0.0
    %6655 = vmatprep.subr.mxu0 0.0
    %6656 = vmatpush1.msra.mxu0 0.0
    %6657 = vmatprep.subr.mxu0 0.0
    %6658 = vmatpush1.msra.mxu0 0.0
    %6659 = vmatprep.subr.mxu0 0.0
    %6660 = vmatpush1.msra.mxu0 0.0
    %6661 = vmatprep.subr.mxu0 0.0
    %6662 = vmatpush1.msra.mxu0 0.0
    %6663 = vmatprep.subr.mxu0 0.0
    %6664 = vmatpush1.msra.mxu0 0.0
    %6665 = vmatprep.subr.mxu0 0.0
    %6666 = vmatpush1.msra.mxu0 0.0
    %6667 = vmatprep.subr.mxu0 0.0
    %6668 = vmatpush1.msra.mxu0 0.0
    %6669 = vmatprep.subr.mxu0 0.0
    %6670 = vmatpush1.msra.mxu0 0.0
    %6671 = vmatprep.subr.mxu0 0.0
    %6672 = vmatpush1.msra.mxu0 0.0
    %6673 = vmatprep.subr.mxu0 0.0
    %6674 = vmatpush1.msra.mxu0 0.0
    %6675 = vmatprep.subr.mxu0 0.0
    %6676 = vmatpush1.msra.mxu0 0.0
    %6677 = vmatprep.subr.mxu0 0.0
    %6678 = vmatpush1.msra.mxu0 0.0
    %6679 = vmatprep.subr.mxu0 0.0
    %6680 = vmatpush1.msra.mxu0 0.0
    %6681 = vmatprep.subr.mxu0 0.0
    %6682 = vmatpush1.msra.mxu0 0.0
    %6683 = vmatprep.subr.mxu0 0.0
    %6684 = vmatpush1.msra.mxu0 0.0
    %6685 = vmatprep.subr.mxu0 0.0
    %6686 = vmatpush1.msra.mxu0 0.0
    %6687 = vmatprep.subr.mxu0 0.0
    %6688 = vmatpush1.msra.mxu0 0.0
    %6689 = vmatprep.subr.mxu0 0.0
    %6690 = vmatpush1.msra.mxu0 0.0
    %6691 = vmatprep.subr.mxu0 0.0
    %6692 = vmatpush1.msra.mxu0 0.0
    %6693 = vmatprep.subr.mxu0 0.0
    %6694 = vmatpush1.msra.mxu0 0.0
    %6695 = vmatprep.subr.mxu0 0.0
    %6696 = vmatpush1.msra.mxu0 0.0
    %6697 = vmatprep.subr.mxu0 0.0
    %6698 = vmatpush1.msra.mxu0 0.0
    %6699 = vmatprep.mubr.f32.mxu0 0.0
    %6700 = vmatmul.mubr.f32.gmra.mrb[0].mxu0 %v4924
    %v6701 = vpop.f32.mrb[0].mxu0
    %v6702 = vadd.f32 0.0, %v6701
    %v6703 = vpop.f32.mrb[0].mxu0
    %v6704 = vadd.f32 0.0, %v6703
    %6705 = vdwg.mxu0
    %6706 = vmatprep.subr.mxu0 %v6627
    %6707 = vmatpush1.msra.mxu0 %v6630
    %6708 = vmatprep.subr.mxu0 0.0
    %6709 = vmatpush1.msra.mxu0 0.0
    %6710 = vmatprep.subr.mxu0 0.0
    %6711 = vmatpush1.msra.mxu0 0.0
    %6712 = vmatprep.subr.mxu0 0.0
    %6713 = vmatpush1.msra.mxu0 0.0
    %6714 = vmatprep.subr.mxu0 0.0
    %6715 = vmatpush1.msra.mxu0 0.0
    %6716 = vmatprep.subr.mxu0 0.0
    %6717 = vmatpush1.msra.mxu0 0.0
    %6718 = vmatprep.subr.mxu0 0.0
    %6719 = vmatpush1.msra.mxu0 0.0
    %6720 = vmatprep.subr.mxu0 0.0
    %6721 = vmatpush1.msra.mxu0 0.0
    %6722 = vmatprep.subr.mxu0 0.0
    %6723 = vmatpush1.msra.mxu0 0.0
    %6724 = vmatprep.subr.mxu0 0.0
    %6725 = vmatpush1.msra.mxu0 0.0
    %6726 = vmatprep.subr.mxu0 0.0
    %6727 = vmatpush1.msra.mxu0 0.0
    %6728 = vmatprep.subr.mxu0 0.0
    %6729 = vmatpush1.msra.mxu0 0.0
    %6730 = vmatprep.subr.mxu0 0.0
    %6731 = vmatpush1.msra.mxu0 0.0
    %6732 = vmatprep.subr.mxu0 0.0
    %6733 = vmatpush1.msra.mxu0 0.0
    %6734 = vmatprep.subr.mxu0 0.0
    %6735 = vmatpush1.msra.mxu0 0.0
    %6736 = vmatprep.subr.mxu0 0.0
    %6737 = vmatpush1.msra.mxu0 0.0
    %6738 = vmatprep.subr.mxu0 0.0
    %6739 = vmatpush1.msra.mxu0 0.0
    %6740 = vmatprep.subr.mxu0 0.0
    %6741 = vmatpush1.msra.mxu0 0.0
    %6742 = vmatprep.subr.mxu0 0.0
    %6743 = vmatpush1.msra.mxu0 0.0
    %6744 = vmatprep.subr.mxu0 0.0
    %6745 = vmatpush1.msra.mxu0 0.0
    %6746 = vmatprep.subr.mxu0 0.0
    %6747 = vmatpush1.msra.mxu0 0.0
    %6748 = vmatprep.subr.mxu0 0.0
    %6749 = vmatpush1.msra.mxu0 0.0
    %6750 = vmatprep.subr.mxu0 0.0
    %6751 = vmatpush1.msra.mxu0 0.0
    %6752 = vmatprep.subr.mxu0 0.0
    %6753 = vmatpush1.msra.mxu0 0.0
    %6754 = vmatprep.subr.mxu0 0.0
    %6755 = vmatpush1.msra.mxu0 0.0
    %6756 = vmatprep.subr.mxu0 0.0
    %6757 = vmatpush1.msra.mxu0 0.0
    %6758 = vmatprep.subr.mxu0 0.0
    %6759 = vmatpush1.msra.mxu0 0.0
    %6760 = vmatprep.subr.mxu0 0.0
    %6761 = vmatpush1.msra.mxu0 0.0
    %6762 = vmatprep.subr.mxu0 0.0
    %6763 = vmatpush1.msra.mxu0 0.0
    %6764 = vmatprep.subr.mxu0 0.0
    %6765 = vmatpush1.msra.mxu0 0.0
    %6766 = vmatprep.subr.mxu0 0.0
    %6767 = vmatpush1.msra.mxu0 0.0
    %6768 = vmatprep.subr.mxu0 0.0
    %6769 = vmatpush1.msra.mxu0 0.0
    %6770 = vmatprep.mubr.f32.mxu0 0.0
    %6771 = vmatmul.mubr.f32.gmra.mrb[0].mxu0 %v4924
    %v6772 = vpop.f32.mrb[0].mxu0
    %v6773 = vadd.f32 0.0, %v6772
    %v6774 = vpop.f32.mrb[0].mxu0
    %v6775 = vadd.f32 0.0, %v6774
    %6776 = vdwg.mxu0
    %v6777 = vadd.f32 %v6616, %v6702
    %v6778 = vadd.f32 %v6617, %v6704
    %v6779 = vadd.f32 %v6618, %v6773
    %v6780 = vadd.f32 %v6619, %v6775
    %6781 = vrot.lane.b32.xlu0 %v3938, 83
    %v6782 = vpop.permute.xlu0 %6781
    %6783 = vrot.lane.b32.xlu0 %v3939, 83
    %v6784 = vpop.permute.xlu0 %6783
    %6785 = vrot.lane.b32.xlu0 %v3940, 83
    %v6786 = vpop.permute.xlu0 %6785
    %6787 = vrot.lane.b32.xlu0 %v3941, 83
    %v6788 = vpop.permute.xlu0 %6787
    %v6789 = vsel %vm1984, %v6782, %v6784
    %v6790 = vsel %vm1984, %v6784, %v6786
    %v6791 = vsel %vm1984, %v6786, %v6788
    %6796 = vmatprep.subr.mxu0 %v6790
    %6797 = vmatpush1.msra.mxu0 %v6789
    %6798 = vmatprep.subr.mxu0 0.0
    %6799 = vmatpush1.msra.mxu0 0.0
    %6800 = vmatprep.subr.mxu0 0.0
    %6801 = vmatpush1.msra.mxu0 0.0
    %6802 = vmatprep.subr.mxu0 0.0
    %6803 = vmatpush1.msra.mxu0 0.0
    %6804 = vmatprep.subr.mxu0 0.0
    %6805 = vmatpush1.msra.mxu0 0.0
    %6806 = vmatprep.subr.mxu0 0.0
    %6807 = vmatpush1.msra.mxu0 0.0
    %6808 = vmatprep.subr.mxu0 0.0
    %6809 = vmatpush1.msra.mxu0 0.0
    %6810 = vmatprep.subr.mxu0 0.0
    %6811 = vmatpush1.msra.mxu0 0.0
    %6812 = vmatprep.subr.mxu0 0.0
    %6813 = vmatpush1.msra.mxu0 0.0
    %6814 = vmatprep.subr.mxu0 0.0
    %6815 = vmatpush1.msra.mxu0 0.0
    %6816 = vmatprep.subr.mxu0 0.0
    %6817 = vmatpush1.msra.mxu0 0.0
    %6818 = vmatprep.subr.mxu0 0.0
    %6819 = vmatpush1.msra.mxu0 0.0
    %6820 = vmatprep.subr.mxu0 0.0
    %6821 = vmatpush1.msra.mxu0 0.0
    %6822 = vmatprep.subr.mxu0 0.0
    %6823 = vmatpush1.msra.mxu0 0.0
    %6824 = vmatprep.subr.mxu0 0.0
    %6825 = vmatpush1.msra.mxu0 0.0
    %6826 = vmatprep.subr.mxu0 0.0
    %6827 = vmatpush1.msra.mxu0 0.0
    %6828 = vmatprep.subr.mxu0 0.0
    %6829 = vmatpush1.msra.mxu0 0.0
    %6830 = vmatprep.subr.mxu0 0.0
    %6831 = vmatpush1.msra.mxu0 0.0
    %6832 = vmatprep.subr.mxu0 0.0
    %6833 = vmatpush1.msra.mxu0 0.0
    %6834 = vmatprep.subr.mxu0 0.0
    %6835 = vmatpush1.msra.mxu0 0.0
    %6836 = vmatprep.subr.mxu0 0.0
    %6837 = vmatpush1.msra.mxu0 0.0
    %6838 = vmatprep.subr.mxu0 0.0
    %6839 = vmatpush1.msra.mxu0 0.0
    %6840 = vmatprep.subr.mxu0 0.0
    %6841 = vmatpush1.msra.mxu0 0.0
    %6842 = vmatprep.subr.mxu0 0.0
    %6843 = vmatpush1.msra.mxu0 0.0
    %6844 = vmatprep.subr.mxu0 0.0
    %6845 = vmatpush1.msra.mxu0 0.0
    %6846 = vmatprep.subr.mxu0 0.0
    %6847 = vmatpush1.msra.mxu0 0.0
    %6848 = vmatprep.subr.mxu0 0.0
    %6849 = vmatpush1.msra.mxu0 0.0
    %6850 = vmatprep.subr.mxu0 0.0
    %6851 = vmatpush1.msra.mxu0 0.0
    %6852 = vmatprep.subr.mxu0 0.0
    %6853 = vmatpush1.msra.mxu0 0.0
    %6854 = vmatprep.subr.mxu0 0.0
    %6855 = vmatpush1.msra.mxu0 0.0
    %6856 = vmatprep.subr.mxu0 0.0
    %6857 = vmatpush1.msra.mxu0 0.0
    %6858 = vmatprep.subr.mxu0 0.0
    %6859 = vmatpush1.msra.mxu0 0.0
    %6860 = vmatprep.mubr.f32.mxu0 0.0
    %6861 = vmatmul.mubr.f32.gmra.mrb[0].mxu0 %v5088
    %v6862 = vpop.f32.mrb[0].mxu0
    %v6863 = vadd.f32 0.0, %v6862
    %v6864 = vpop.f32.mrb[0].mxu0
    %v6865 = vadd.f32 0.0, %v6864
    %6866 = vdwg.mxu0
    %6867 = vmatprep.subr.mxu0 %v6788
    %6868 = vmatpush1.msra.mxu0 %v6791
    %6869 = vmatprep.subr.mxu0 0.0
    %6870 = vmatpush1.msra.mxu0 0.0
    %6871 = vmatprep.subr.mxu0 0.0
    %6872 = vmatpush1.msra.mxu0 0.0
    %6873 = vmatprep.subr.mxu0 0.0
    %6874 = vmatpush1.msra.mxu0 0.0
    %6875 = vmatprep.subr.mxu0 0.0
    %6876 = vmatpush1.msra.mxu0 0.0
    %6877 = vmatprep.subr.mxu0 0.0
    %6878 = vmatpush1.msra.mxu0 0.0
    %6879 = vmatprep.subr.mxu0 0.0
    %6880 = vmatpush1.msra.mxu0 0.0
    %6881 = vmatprep.subr.mxu0 0.0
    %6882 = vmatpush1.msra.mxu0 0.0
    %6883 = vmatprep.subr.mxu0 0.0
    %6884 = vmatpush1.msra.mxu0 0.0
    %6885 = vmatprep.subr.mxu0 0.0
    %6886 = vmatpush1.msra.mxu0 0.0
    %6887 = vmatprep.subr.mxu0 0.0
    %6888 = vmatpush1.msra.mxu0 0.0
    %6889 = vmatprep.subr.mxu0 0.0
    %6890 = vmatpush1.msra.mxu0 0.0
    %6891 = vmatprep.subr.mxu0 0.0
    %6892 = vmatpush1.msra.mxu0 0.0
    %6893 = vmatprep.subr.mxu0 0.0
    %6894 = vmatpush1.msra.mxu0 0.0
    %6895 = vmatprep.subr.mxu0 0.0
    %6896 = vmatpush1.msra.mxu0 0.0
    %6897 = vmatprep.subr.mxu0 0.0
    %6898 = vmatpush1.msra.mxu0 0.0
    %6899 = vmatprep.subr.mxu0 0.0
    %6900 = vmatpush1.msra.mxu0 0.0
    %6901 = vmatprep.subr.mxu0 0.0
    %6902 = vmatpush1.msra.mxu0 0.0
    %6903 = vmatprep.subr.mxu0 0.0
    %6904 = vmatpush1.msra.mxu0 0.0
    %6905 = vmatprep.subr.mxu0 0.0
    %6906 = vmatpush1.msra.mxu0 0.0
    %6907 = vmatprep.subr.mxu0 0.0
    %6908 = vmatpush1.msra.mxu0 0.0
    %6909 = vmatprep.subr.mxu0 0.0
    %6910 = vmatpush1.msra.mxu0 0.0
    %6911 = vmatprep.subr.mxu0 0.0
    %6912 = vmatpush1.msra.mxu0 0.0
    %6913 = vmatprep.subr.mxu0 0.0
    %6914 = vmatpush1.msra.mxu0 0.0
    %6915 = vmatprep.subr.mxu0 0.0
    %6916 = vmatpush1.msra.mxu0 0.0
    %6917 = vmatprep.subr.mxu0 0.0
    %6918 = vmatpush1.msra.mxu0 0.0
    %6919 = vmatprep.subr.mxu0 0.0
    %6920 = vmatpush1.msra.mxu0 0.0
    %6921 = vmatprep.subr.mxu0 0.0
    %6922 = vmatpush1.msra.mxu0 0.0
    %6923 = vmatprep.subr.mxu0 0.0
    %6924 = vmatpush1.msra.mxu0 0.0
    %6925 = vmatprep.subr.mxu0 0.0
    %6926 = vmatpush1.msra.mxu0 0.0
    %6927 = vmatprep.subr.mxu0 0.0
    %6928 = vmatpush1.msra.mxu0 0.0
    %6929 = vmatprep.subr.mxu0 0.0
    %6930 = vmatpush1.msra.mxu0 0.0
    %6931 = vmatprep.mubr.f32.mxu0 0.0
    %6932 = vmatmul.mubr.f32.gmra.mrb[0].mxu0 %v5088
    %v6933 = vpop.f32.mrb[0].mxu0
    %v6934 = vadd.f32 0.0, %v6933
    %v6935 = vpop.f32.mrb[0].mxu0
    %v6936 = vadd.f32 0.0, %v6935
    %6937 = vdwg.mxu0
    %v6938 = vadd.f32 %v6777, %v6863
    %v6939 = vadd.f32 %v6778, %v6865
    %v6940 = vadd.f32 %v6779, %v6934
    %v6941 = vadd.f32 %v6780, %v6936
    %6942 = vrot.lane.b32.xlu0 %v3938, 82
    %v6943 = vpop.permute.xlu0 %6942
    %6944 = vrot.lane.b32.xlu0 %v3939, 82
    %v6945 = vpop.permute.xlu0 %6944
    %6946 = vrot.lane.b32.xlu0 %v3940, 82
    %v6947 = vpop.permute.xlu0 %6946
    %6948 = vrot.lane.b32.xlu0 %v3941, 82
    %v6949 = vpop.permute.xlu0 %6948
    %v6950 = vsel %vm2153, %v6943, %v6945
    %v6951 = vsel %vm2153, %v6945, %v6947
    %v6952 = vsel %vm2153, %v6947, %v6949
    %6957 = vmatprep.subr.mxu0 %v6951
    %6958 = vmatpush1.msra.mxu0 %v6950
    %6959 = vmatprep.subr.mxu0 0.0
    %6960 = vmatpush1.msra.mxu0 0.0
    %6961 = vmatprep.subr.mxu0 0.0
    %6962 = vmatpush1.msra.mxu0 0.0
    %6963 = vmatprep.subr.mxu0 0.0
    %6964 = vmatpush1.msra.mxu0 0.0
    %6965 = vmatprep.subr.mxu0 0.0
    %6966 = vmatpush1.msra.mxu0 0.0
    %6967 = vmatprep.subr.mxu0 0.0
    %6968 = vmatpush1.msra.mxu0 0.0
    %6969 = vmatprep.subr.mxu0 0.0
    %6970 = vmatpush1.msra.mxu0 0.0
    %6971 = vmatprep.subr.mxu0 0.0
    %6972 = vmatpush1.msra.mxu0 0.0
    %6973 = vmatprep.subr.mxu0 0.0
    %6974 = vmatpush1.msra.mxu0 0.0
    %6975 = vmatprep.subr.mxu0 0.0
    %6976 = vmatpush1.msra.mxu0 0.0
    %6977 = vmatprep.subr.mxu0 0.0
    %6978 = vmatpush1.msra.mxu0 0.0
    %6979 = vmatprep.subr.mxu0 0.0
    %6980 = vmatpush1.msra.mxu0 0.0
    %6981 = vmatprep.subr.mxu0 0.0
    %6982 = vmatpush1.msra.mxu0 0.0
    %6983 = vmatprep.subr.mxu0 0.0
    %6984 = vmatpush1.msra.mxu0 0.0
    %6985 = vmatprep.subr.mxu0 0.0
    %6986 = vmatpush1.msra.mxu0 0.0
    %6987 = vmatprep.subr.mxu0 0.0
    %6988 = vmatpush1.msra.mxu0 0.0
    %6989 = vmatprep.subr.mxu0 0.0
    %6990 = vmatpush1.msra.mxu0 0.0
    %6991 = vmatprep.subr.mxu0 0.0
    %6992 = vmatpush1.msra.mxu0 0.0
    %6993 = vmatprep.subr.mxu0 0.0
    %6994 = vmatpush1.msra.mxu0 0.0
    %6995 = vmatprep.subr.mxu0 0.0
    %6996 = vmatpush1.msra.mxu0 0.0
    %6997 = vmatprep.subr.mxu0 0.0
    %6998 = vmatpush1.msra.mxu0 0.0
    %6999 = vmatprep.subr.mxu0 0.0
    %7000 = vmatpush1.msra.mxu0 0.0
    %7001 = vmatprep.subr.mxu0 0.0
    %7002 = vmatpush1.msra.mxu0 0.0
    %7003 = vmatprep.subr.mxu0 0.0
    %7004 = vmatpush1.msra.mxu0 0.0
    %7005 = vmatprep.subr.mxu0 0.0
    %7006 = vmatpush1.msra.mxu0 0.0
    %7007 = vmatprep.subr.mxu0 0.0
    %7008 = vmatpush1.msra.mxu0 0.0
    %7009 = vmatprep.subr.mxu0 0.0
    %7010 = vmatpush1.msra.mxu0 0.0
    %7011 = vmatprep.subr.mxu0 0.0
    %7012 = vmatpush1.msra.mxu0 0.0
    %7013 = vmatprep.subr.mxu0 0.0
    %7014 = vmatpush1.msra.mxu0 0.0
    %7015 = vmatprep.subr.mxu0 0.0
    %7016 = vmatpush1.msra.mxu0 0.0
    %7017 = vmatprep.subr.mxu0 0.0
    %7018 = vmatpush1.msra.mxu0 0.0
    %7019 = vmatprep.subr.mxu0 0.0
    %7020 = vmatpush1.msra.mxu0 0.0
    %7021 = vmatprep.mubr.f32.mxu0 0.0
    %7022 = vmatmul.mubr.f32.gmra.mrb[0].mxu0 %v5252
    %v7023 = vpop.f32.mrb[0].mxu0
    %v7024 = vadd.f32 0.0, %v7023
    %v7025 = vpop.f32.mrb[0].mxu0
    %v7026 = vadd.f32 0.0, %v7025
    %7027 = vdwg.mxu0
    %7028 = vmatprep.subr.mxu0 %v6949
    %7029 = vmatpush1.msra.mxu0 %v6952
    %7030 = vmatprep.subr.mxu0 0.0
    %7031 = vmatpush1.msra.mxu0 0.0
    %7032 = vmatprep.subr.mxu0 0.0
    %7033 = vmatpush1.msra.mxu0 0.0
    %7034 = vmatprep.subr.mxu0 0.0
    %7035 = vmatpush1.msra.mxu0 0.0
    %7036 = vmatprep.subr.mxu0 0.0
    %7037 = vmatpush1.msra.mxu0 0.0
    %7038 = vmatprep.subr.mxu0 0.0
    %7039 = vmatpush1.msra.mxu0 0.0
    %7040 = vmatprep.subr.mxu0 0.0
    %7041 = vmatpush1.msra.mxu0 0.0
    %7042 = vmatprep.subr.mxu0 0.0
    %7043 = vmatpush1.msra.mxu0 0.0
    %7044 = vmatprep.subr.mxu0 0.0
    %7045 = vmatpush1.msra.mxu0 0.0
    %7046 = vmatprep.subr.mxu0 0.0
    %7047 = vmatpush1.msra.mxu0 0.0
    %7048 = vmatprep.subr.mxu0 0.0
    %7049 = vmatpush1.msra.mxu0 0.0
    %7050 = vmatprep.subr.mxu0 0.0
    %7051 = vmatpush1.msra.mxu0 0.0
    %7052 = vmatprep.subr.mxu0 0.0
    %7053 = vmatpush1.msra.mxu0 0.0
    %7054 = vmatprep.subr.mxu0 0.0
    %7055 = vmatpush1.msra.mxu0 0.0
    %7056 = vmatprep.subr.mxu0 0.0
    %7057 = vmatpush1.msra.mxu0 0.0
    %7058 = vmatprep.subr.mxu0 0.0
    %7059 = vmatpush1.msra.mxu0 0.0
    %7060 = vmatprep.subr.mxu0 0.0
    %7061 = vmatpush1.msra.mxu0 0.0
    %7062 = vmatprep.subr.mxu0 0.0
    %7063 = vmatpush1.msra.mxu0 0.0
    %7064 = vmatprep.subr.mxu0 0.0
    %7065 = vmatpush1.msra.mxu0 0.0
    %7066 = vmatprep.subr.mxu0 0.0
    %7067 = vmatpush1.msra.mxu0 0.0
    %7068 = vmatprep.subr.mxu0 0.0
    %7069 = vmatpush1.msra.mxu0 0.0
    %7070 = vmatprep.subr.mxu0 0.0
    %7071 = vmatpush1.msra.mxu0 0.0
    %7072 = vmatprep.subr.mxu0 0.0
    %7073 = vmatpush1.msra.mxu0 0.0
    %7074 = vmatprep.subr.mxu0 0.0
    %7075 = vmatpush1.msra.mxu0 0.0
    %7076 = vmatprep.subr.mxu0 0.0
    %7077 = vmatpush1.msra.mxu0 0.0
    %7078 = vmatprep.subr.mxu0 0.0
    %7079 = vmatpush1.msra.mxu0 0.0
    %7080 = vmatprep.subr.mxu0 0.0
    %7081 = vmatpush1.msra.mxu0 0.0
    %7082 = vmatprep.subr.mxu0 0.0
    %7083 = vmatpush1.msra.mxu0 0.0
    %7084 = vmatprep.subr.mxu0 0.0
    %7085 = vmatpush1.msra.mxu0 0.0
    %7086 = vmatprep.subr.mxu0 0.0
    %7087 = vmatpush1.msra.mxu0 0.0
    %7088 = vmatprep.subr.mxu0 0.0
    %7089 = vmatpush1.msra.mxu0 0.0
    %7090 = vmatprep.subr.mxu0 0.0
    %7091 = vmatpush1.msra.mxu0 0.0
    %7092 = vmatprep.mubr.f32.mxu0 0.0
    %7093 = vmatmul.mubr.f32.gmra.mrb[0].mxu0 %v5252
    %v7094 = vpop.f32.mrb[0].mxu0
    %v7095 = vadd.f32 0.0, %v7094
    %v7096 = vpop.f32.mrb[0].mxu0
    %v7097 = vadd.f32 0.0, %v7096
    %7098 = vdwg.mxu0
    %v7099 = vadd.f32 %v6938, %v7024
    %v7100 = vadd.f32 %v6939, %v7026
    %v7101 = vadd.f32 %v6940, %v7095
    %v7102 = vadd.f32 %v6941, %v7097
    %v7103 = vadd.f32 %v7099, %v5403
    %v7104 = vadd.f32 %v7100, %v5403
    %v7105 = vadd.f32 %v7101, %v5403
    %v7106 = vadd.f32 %v7102, %v5403
    %v7107 = vmax.f32 %v7103, 0.0
    %v7108 = vmax.f32 %v7104, 0.0
    %v7109 = vmax.f32 %v7105, 0.0
    %v7110 = vmax.f32 %v7106, 0.0
    %v7111 = vadd.f32 %v7107, 0.0
    %v7112 = vadd.f32 %v7108, 0.0
    %v7113 = vadd.f32 %v7109, 0.0
    %7117 = vrot.lane.b32.xlu0 %v7107, 127
    %v7118 = vpop.permute.xlu0 %7117
    %7119 = vrot.lane.b32.xlu0 %v7108, 127
    %v7120 = vpop.permute.xlu0 %7119
    %7121 = vrot.lane.b32.xlu0 %v7109, 127
    %v7122 = vpop.permute.xlu0 %7121
    %v7123 = vsel %vm820, %v7118, %v7120
    %v7124 = vsel %vm820, %v7120, %v7122
    %v7128 = vadd.f32 %v7111, %v7123
    %v7129 = vadd.f32 %v7112, %v7124
    %v7130 = vadd.f32 %v7113, %v7122
    %7131 = vrot.lane.b32.xlu0 %v7107, 126
    %v7132 = vpop.permute.xlu0 %7131
    %7133 = vrot.lane.b32.xlu0 %v7108, 126
    %v7134 = vpop.permute.xlu0 %7133
    %7135 = vrot.lane.b32.xlu0 %v7109, 126
    %v7136 = vpop.permute.xlu0 %7135
    %v7137 = vsel %vm1139, %v7132, %v7134
    %v7138 = vsel %vm1139, %v7134, %v7136
    %v7142 = vadd.f32 %v7128, %v7137
    %v7143 = vadd.f32 %v7129, %v7138
    %v7144 = vadd.f32 %v7130, %v7136
    %7145 = vrot.lane.b32.xlu0 %v7107, 125
    %v7146 = vpop.permute.xlu0 %7145
    %7147 = vrot.lane.b32.xlu0 %v7108, 125
    %v7148 = vpop.permute.xlu0 %7147
    %7149 = vrot.lane.b32.xlu0 %v7109, 125
    %v7150 = vpop.permute.xlu0 %7149
    %v7151 = vsel %vm5453, %v7146, %v7148
    %v7152 = vsel %vm5453, %v7148, %v7150
    %v7156 = vadd.f32 %v7142, %v7151
    %v7157 = vadd.f32 %v7143, %v7152
    %v7158 = vadd.f32 %v7144, %v7150
    %7160 = vrot.lane.b32.xlu0 %v7107, 106
    %v7161 = vpop.permute.xlu0 %7160
    %7162 = vrot.lane.b32.xlu0 %v7108, 106
    %v7163 = vpop.permute.xlu0 %7162
    %7164 = vrot.lane.b32.xlu0 %v7109, 106
    %v7165 = vpop.permute.xlu0 %7164
    %7166 = vrot.lane.b32.xlu0 %v7110, 106
    %v7167 = vpop.permute.xlu0 %7166
    %v7168 = vsel %vm1308, %v7161, %v7163
    %v7169 = vsel %vm1308, %v7163, %v7165
    %v7170 = vsel %vm1308, %v7165, %v7167
    %v7174 = vadd.f32 %v7156, %v7168
    %v7175 = vadd.f32 %v7157, %v7169
    %v7176 = vadd.f32 %v7158, %v7170
    %7177 = vrot.lane.b32.xlu0 %v7107, 105
    %v7178 = vpop.permute.xlu0 %7177
    %7179 = vrot.lane.b32.xlu0 %v7108, 105
    %v7180 = vpop.permute.xlu0 %7179
    %7181 = vrot.lane.b32.xlu0 %v7109, 105
    %v7182 = vpop.permute.xlu0 %7181
    %7183 = vrot.lane.b32.xlu0 %v7110, 105
    %v7184 = vpop.permute.xlu0 %7183
    %v7185 = vsel %vm1477, %v7178, %v7180
    %v7186 = vsel %vm1477, %v7180, %v7182
    %v7187 = vsel %vm1477, %v7182, %v7184
    %v7191 = vadd.f32 %v7174, %v7185
    %v7192 = vadd.f32 %v7175, %v7186
    %v7193 = vadd.f32 %v7176, %v7187
    %7194 = vrot.lane.b32.xlu0 %v7107, 104
    %v7195 = vpop.permute.xlu0 %7194
    %7196 = vrot.lane.b32.xlu0 %v7108, 104
    %v7197 = vpop.permute.xlu0 %7196
    %7198 = vrot.lane.b32.xlu0 %v7109, 104
    %v7199 = vpop.permute.xlu0 %7198
    %7200 = vrot.lane.b32.xlu0 %v7110, 104
    %v7201 = vpop.permute.xlu0 %7200
    %v7202 = vsel %vm1646, %v7195, %v7197
    %v7203 = vsel %vm1646, %v7197, %v7199
    %v7204 = vsel %vm1646, %v7199, %v7201
    %v7208 = vadd.f32 %v7191, %v7202
    %v7209 = vadd.f32 %v7192, %v7203
    %v7210 = vadd.f32 %v7193, %v7204
    %7211 = vrot.lane.b32.xlu0 %v7107, 103
    %v7212 = vpop.permute.xlu0 %7211
    %7213 = vrot.lane.b32.xlu0 %v7108, 103
    %v7214 = vpop.permute.xlu0 %7213
    %7215 = vrot.lane.b32.xlu0 %v7109, 103
    %v7216 = vpop.permute.xlu0 %7215
    %7217 = vrot.lane.b32.xlu0 %v7110, 103
    %v7218 = vpop.permute.xlu0 %7217
    %v7219 = vsel %vm5522, %v7212, %v7214
    %v7220 = vsel %vm5522, %v7214, %v7216
    %v7221 = vsel %vm5522, %v7216, %v7218
    %v7225 = vadd.f32 %v7208, %v7219
    %v7226 = vadd.f32 %v7209, %v7220
    %v7227 = vadd.f32 %v7210, %v7221
    %7228 = vrot.lane.b32.xlu0 %v7107, 84
    %v7229 = vpop.permute.xlu0 %7228
    %7230 = vrot.lane.b32.xlu0 %v7108, 84
    %v7231 = vpop.permute.xlu0 %7230
    %7232 = vrot.lane.b32.xlu0 %v7109, 84
    %v7233 = vpop.permute.xlu0 %7232
    %7234 = vrot.lane.b32.xlu0 %v7110, 84
    %v7235 = vpop.permute.xlu0 %7234
    %v7236 = vsel %vm1815, %v7229, %v7231
    %v7237 = vsel %vm1815, %v7231, %v7233
    %v7238 = vsel %vm1815, %v7233, %v7235
    %v7242 = vadd.f32 %v7225, %v7236
    %v7243 = vadd.f32 %v7226, %v7237
    %v7244 = vadd.f32 %v7227, %v7238
    %7245 = vrot.lane.b32.xlu0 %v7107, 83
    %v7246 = vpop.permute.xlu0 %7245
    %7247 = vrot.lane.b32.xlu0 %v7108, 83
    %v7248 = vpop.permute.xlu0 %7247
    %7249 = vrot.lane.b32.xlu0 %v7109, 83
    %v7250 = vpop.permute.xlu0 %7249
    %7251 = vrot.lane.b32.xlu0 %v7110, 83
    %v7252 = vpop.permute.xlu0 %7251
    %v7253 = vsel %vm1984, %v7246, %v7248
    %v7254 = vsel %vm1984, %v7248, %v7250
    %v7255 = vsel %vm1984, %v7250, %v7252
    %v7259 = vadd.f32 %v7242, %v7253
    %v7260 = vadd.f32 %v7243, %v7254
    %v7261 = vadd.f32 %v7244, %v7255
    %7262 = vrot.lane.b32.xlu0 %v7107, 82
    %v7263 = vpop.permute.xlu0 %7262
    %7264 = vrot.lane.b32.xlu0 %v7108, 82
    %v7265 = vpop.permute.xlu0 %7264
    %7266 = vrot.lane.b32.xlu0 %v7109, 82
    %v7267 = vpop.permute.xlu0 %7266
    %7268 = vrot.lane.b32.xlu0 %v7110, 82
    %v7269 = vpop.permute.xlu0 %7268
    %v7270 = vsel %vm2153, %v7263, %v7265
    %v7271 = vsel %vm2153, %v7265, %v7267
    %v7272 = vsel %vm2153, %v7267, %v7269
    %v7276 = vadd.f32 %v7259, %v7270
    %v7277 = vadd.f32 %v7260, %v7271
    %v7278 = vadd.f32 %v7261, %v7272
    %7279 = vrot.lane.b32.xlu0 %v7107, 81
    %v7280 = vpop.permute.xlu0 %7279
    %7281 = vrot.lane.b32.xlu0 %v7108, 81
    %v7282 = vpop.permute.xlu0 %7281
    %7283 = vrot.lane.b32.xlu0 %v7109, 81
    %v7284 = vpop.permute.xlu0 %7283
    %7285 = vrot.lane.b32.xlu0 %v7110, 81
    %v7286 = vpop.permute.xlu0 %7285
    %v7287 = vsel %vm5591, %v7280, %v7282
    %v7288 = vsel %vm5591, %v7282, %v7284
    %v7289 = vsel %vm5591, %v7284, %v7286
    %v7293 = vadd.f32 %v7276, %v7287
    %v7294 = vadd.f32 %v7277, %v7288
    %v7295 = vadd.f32 %v7278, %v7289
    %7296 = vrot.lane.b32.xlu0 %v7107, 62
    %v7297 = vpop.permute.xlu0 %7296
    %7298 = vrot.lane.b32.xlu0 %v7108, 62
    %v7299 = vpop.permute.xlu0 %7298
    %7300 = vrot.lane.b32.xlu0 %v7109, 62
    %v7301 = vpop.permute.xlu0 %7300
    %7302 = vrot.lane.b32.xlu0 %v7110, 62
    %v7303 = vpop.permute.xlu0 %7302
    %v7304 = vsel %vm5609, %v7297, %v7299
    %v7305 = vsel %vm5609, %v7299, %v7301
    %v7306 = vsel %vm5609, %v7301, %v7303
    %v7310 = vadd.f32 %v7293, %v7304
    %v7311 = vadd.f32 %v7294, %v7305
    %v7312 = vadd.f32 %v7295, %v7306
    %7313 = vrot.lane.b32.xlu0 %v7107, 61
    %v7314 = vpop.permute.xlu0 %7313
    %7315 = vrot.lane.b32.xlu0 %v7108, 61
    %v7316 = vpop.permute.xlu0 %7315
    %7317 = vrot.lane.b32.xlu0 %v7109, 61
    %v7318 = vpop.permute.xlu0 %7317
    %7319 = vrot.lane.b32.xlu0 %v7110, 61
    %v7320 = vpop.permute.xlu0 %7319
    %v7321 = vsel %vm5627, %v7314, %v7316
    %v7322 = vsel %vm5627, %v7316, %v7318
    %v7323 = vsel %vm5627, %v7318, %v7320
    %v7327 = vadd.f32 %v7310, %v7321
    %v7328 = vadd.f32 %v7311, %v7322
    %v7329 = vadd.f32 %v7312, %v7323
    %7330 = vrot.lane.b32.xlu0 %v7107, 60
    %v7331 = vpop.permute.xlu0 %7330
    %7332 = vrot.lane.b32.xlu0 %v7108, 60
    %v7333 = vpop.permute.xlu0 %7332
    %7334 = vrot.lane.b32.xlu0 %v7109, 60
    %v7335 = vpop.permute.xlu0 %7334
    %7336 = vrot.lane.b32.xlu0 %v7110, 60
    %v7337 = vpop.permute.xlu0 %7336
    %v7338 = vsel %vm5645, %v7331, %v7333
    %v7339 = vsel %vm5645, %v7333, %v7335
    %v7340 = vsel %vm5645, %v7335, %v7337
    %v7344 = vadd.f32 %v7327, %v7338
    %v7345 = vadd.f32 %v7328, %v7339
    %v7346 = vadd.f32 %v7329, %v7340
    %7347 = vrot.lane.b32.xlu0 %v7107, 59
    %v7348 = vpop.permute.xlu0 %7347
    %7349 = vrot.lane.b32.xlu0 %v7108, 59
    %v7350 = vpop.permute.xlu0 %7349
    %7351 = vrot.lane.b32.xlu0 %v7109, 59
    %v7352 = vpop.permute.xlu0 %7351
    %7353 = vrot.lane.b32.xlu0 %v7110, 59
    %v7354 = vpop.permute.xlu0 %7353
    %v7355 = vsel %vm5663, %v7348, %v7350
    %v7356 = vsel %vm5663, %v7350, %v7352
    %v7357 = vsel %vm5663, %v7352, %v7354
    %v7361 = vadd.f32 %v7344, %v7355
    %v7362 = vadd.f32 %v7345, %v7356
    %v7363 = vadd.f32 %v7346, %v7357
    %v7364 = vld [vmem:[%s7] sm:$0xff]
    %v7365 = vld [vmem:[%s7 + $0x8] sm:$0xff]
    %v7366 = vld [vmem:[%s7 + $0x10] sm:$0xff]
    %v7367 = vld [vmem:[%s7 + $0x18] sm:$0xff]
    %v7368 = vld [vmem:[%s7 + $0x20] sm:$0xff]
    %v7369 = vld [vmem:[%s7 + $0x28] sm:$0xff]
    %v7370 = vld [vmem:[%s7 + $0x30] sm:$0xff]
    %v7371 = vld [vmem:[%s7 + $0x38] sm:$0xff]
    %v7372 = vld [vmem:[%s7 + $0x40] sm:$0xff]
    %v7373 = vld [vmem:[%s7 + $0x48] sm:$0xff]
    %v7374 = vld [vmem:[%s7 + $0x50] sm:$0xff]
    %v7375 = vld [vmem:[%s7 + $0x58] sm:$0xff]
    %v7376 = vld [vmem:[%s7 + $0x60] sm:$0xff]
    %v7377 = vld [vmem:[%s7 + $0x68] sm:$0xff]
    %v7378 = vld [vmem:[%s7 + $0x70] sm:$0xff]
    %v7379 = vld [vmem:[%s7 + $0x78] sm:$0xff]
    %v7380 = vld [vmem:[%s7 + $0x80] sm:$0xff]
    %v7381 = vld [vmem:[%s7 + $0x88] sm:$0xff]
    %v7382 = vld [vmem:[%s7 + $0x90] sm:$0xff]
    %v7383 = vld [vmem:[%s7 + $0x98] sm:$0xff]
    %v7384 = vld [vmem:[%s7 + $0xa0] sm:$0xff]
    %v7385 = vld [vmem:[%s7 + $0xa8] sm:$0xff]
    %v7386 = vld [vmem:[%s7 + $0xb0] sm:$0xff]
    %v7387 = vld [vmem:[%s7 + $0xb8] sm:$0xff]
    %v7388 = vld [vmem:[%s7 + $0xc0] sm:$0xff]
    %v7389 = vld [vmem:[%s7 + $0xc8] sm:$0xff]
    %v7390 = vld [vmem:[%s7 + $0xd0] sm:$0xff]
    %v7391 = vld [vmem:[%s7 + $0xd8] sm:$0xff]
    %v7392 = vld [vmem:[%s7 + $0xe0] sm:$0xff]
    %v7393 = vld [vmem:[%s7 + $0xe8] sm:$0xff]
    %v7394 = vld [vmem:[%s7 + $0xf0] sm:$0xff]
    %v7395 = vld [vmem:[%s7 + $0xf8] sm:$0xff]
    %v7396 = vld [vmem:[%s7 + $0x100] sm:$0xff]
    %v7397 = vld [vmem:[%s7 + $0x108] sm:$0xff]
    %v7398 = vld [vmem:[%s7 + $0x110] sm:$0xff]
    %v7399 = vld [vmem:[%s7 + $0x118] sm:$0xff]
    %v7400 = vld [vmem:[%s7 + $0x120] sm:$0xff]
    %v7401 = vld [vmem:[%s7 + $0x128] sm:$0xff]
    %v7402 = vld [vmem:[%s7 + $0x130] sm:$0xff]
    %v7403 = vld [vmem:[%s7 + $0x138] sm:$0xff]
    %v7404 = vld [vmem:[%s7 + $0x140] sm:$0xff]
    %v7405 = vld [vmem:[%s7 + $0x148] sm:$0xff]
    %v7406 = vld [vmem:[%s7 + $0x150] sm:$0xff]
    %v7407 = vld [vmem:[%s7 + $0x158] sm:$0xff]
    %v7408 = vld [vmem:[%s7 + $0x160] sm:$0xff]
    %v7409 = vld [vmem:[%s7 + $0x168] sm:$0xff]
    %v7410 = vld [vmem:[%s7 + $0x170] sm:$0x1]
    %vm7411 = vcmask 924672
    %v7413 = vsel %vm7411, %v5672, 0
    %v7416 = vsel %vm7411, %v7363, 0
    %vm7418 = vcmask 1040384
    %v7420 = vsel %vm7418, %v7410, 0
    %7422 = vmatprep.subr.mxu0 0.0
    %7423 = vmatpush1.msra.mxu0 %v7364
    %7424 = vmatprep.subr.mxu0 0.0
    %7425 = vmatpush1.msra.mxu0 %v7365
    %7426 = vmatprep.subr.mxu0 0.0
    %7427 = vmatpush1.msra.mxu0 %v7366
    %7428 = vmatprep.subr.mxu0 0.0
    %7429 = vmatpush1.msra.mxu0 %v7367
    %7430 = vmatprep.subr.mxu0 0.0
    %7431 = vmatpush1.msra.mxu0 %v7368
    %7432 = vmatprep.subr.mxu0 0.0
    %7433 = vmatpush1.msra.mxu0 %v7369
    %7434 = vmatprep.subr.mxu0 0.0
    %7435 = vmatpush1.msra.mxu0 %v7370
    %7436 = vmatprep.subr.mxu0 0.0
    %7437 = vmatpush1.msra.mxu0 %v7371
    %7438 = vmatprep.subr.mxu0 0.0
    %7439 = vmatpush1.msra.mxu0 %v7372
    %7440 = vmatprep.subr.mxu0 0.0
    %7441 = vmatpush1.msra.mxu0 %v7373
    %7442 = vmatprep.subr.mxu0 0.0
    %7443 = vmatpush1.msra.mxu0 %v7374
    %7444 = vmatprep.subr.mxu0 0.0
    %7445 = vmatpush1.msra.mxu0 %v7375
    %7446 = vmatprep.subr.mxu0 0.0
    %7447 = vmatpush1.msra.mxu0 %v7376
    %7448 = vmatprep.subr.mxu0 0.0
    %7449 = vmatpush1.msra.mxu0 %v7377
    %7450 = vmatprep.subr.mxu0 0.0
    %7451 = vmatpush1.msra.mxu0 %v7378
    %7452 = vmatprep.subr.mxu0 0.0
    %7453 = vmatpush1.msra.mxu0 %v7379
    %7454 = vmatprep.subr.mxu0 0.0
    %7455 = vmatpush1.msra.mxu0 %v7380
    %7456 = vmatprep.subr.mxu0 0.0
    %7457 = vmatpush1.msra.mxu0 %v7381
    %7458 = vmatprep.subr.mxu0 0.0
    %7459 = vmatpush1.msra.mxu0 %v7382
    %7460 = vmatprep.subr.mxu0 0.0
    %7461 = vmatpush1.msra.mxu0 %v7383
    %7462 = vmatprep.subr.mxu0 0.0
    %7463 = vmatpush1.msra.mxu0 %v7384
    %7464 = vmatprep.subr.mxu0 0.0
    %7465 = vmatpush1.msra.mxu0 %v7385
    %7466 = vmatprep.subr.mxu0 0.0
    %7467 = vmatpush1.msra.mxu0 %v7386
    %7468 = vmatprep.subr.mxu0 0.0
    %7469 = vmatpush1.msra.mxu0 %v7387
    %7470 = vmatprep.subr.mxu0 0.0
    %7471 = vmatpush1.msra.mxu0 %v7388
    %7472 = vmatprep.subr.mxu0 0.0
    %7473 = vmatpush1.msra.mxu0 %v7389
    %7474 = vmatprep.subr.mxu0 0.0
    %7475 = vmatpush1.msra.mxu0 %v7390
    %7476 = vmatprep.subr.mxu0 0.0
    %7477 = vmatpush1.msra.mxu0 %v7391
    %7478 = vmatprep.subr.mxu0 0.0
    %7479 = vmatpush1.msra.mxu0 %v7392
    %7480 = vmatprep.subr.mxu0 0.0
    %7481 = vmatpush1.msra.mxu0 %v7393
    %7482 = vmatprep.subr.mxu0 0.0
    %7483 = vmatpush1.msra.mxu0 %v7394
    %7484 = vmatprep.subr.mxu0 0.0
    %7485 = vmatpush1.msra.mxu0 %v7395
    %7486 = vmatprep.mubr.f32.mxu0 %v5671
    %7487 = vmatmul.mubr.f32.gmra.mrb[0].mxu0 %v5670
    %v7488 = vpop.f32.mrb[0].mxu0
    %v7489 = vadd.f32 0.0, %v7488
    %v7490 = vpop.f32.mrb[0].mxu0
    %7491 = vmatprep.mubr.f32.mxu0 %v7362
    %7492 = vmatmul.mubr.f32.gmra.mrb[0].mxu0 %v7361
    %v7493 = vpop.f32.mrb[0].mxu0
    %v7494 = vadd.f32 0.0, %v7493
    %v7495 = vpop.f32.mrb[0].mxu0
    %7496 = vdwg.mxu0
    %7497 = vmatprep.subr.mxu0 0.0
    %7498 = vmatpush1.msra.mxu0 %v7396
    %7499 = vmatprep.subr.mxu0 0.0
    %7500 = vmatpush1.msra.mxu0 %v7397
    %7501 = vmatprep.subr.mxu0 0.0
    %7502 = vmatpush1.msra.mxu0 %v7398
    %7503 = vmatprep.subr.mxu0 0.0
    %7504 = vmatpush1.msra.mxu0 %v7399
    %7505 = vmatprep.subr.mxu0 0.0
    %7506 = vmatpush1.msra.mxu0 %v7400
    %7507 = vmatprep.subr.mxu0 0.0
    %7508 = vmatpush1.msra.mxu0 %v7401
    %7509 = vmatprep.subr.mxu0 0.0
    %7510 = vmatpush1.msra.mxu0 %v7402
    %7511 = vmatprep.subr.mxu0 0.0
    %7512 = vmatpush1.msra.mxu0 %v7403
    %7513 = vmatprep.subr.mxu0 0.0
    %7514 = vmatpush1.msra.mxu0 %v7404
    %7515 = vmatprep.subr.mxu0 0.0
    %7516 = vmatpush1.msra.mxu0 %v7405
    %7517 = vmatprep.subr.mxu0 0.0
    %7518 = vmatpush1.msra.mxu0 %v7406
    %7519 = vmatprep.subr.mxu0 0.0
    %7520 = vmatpush1.msra.mxu0 %v7407
    %7521 = vmatprep.subr.mxu0 0.0
    %7522 = vmatpush1.msra.mxu0 %v7408
    %7523 = vmatprep.subr.mxu0 0.0
    %7524 = vmatpush1.msra.mxu0 %v7409
    %7525 = vmatprep.subr.mxu0 0.0
    %7526 = vmatpush1.msra.mxu0 %v7420
    %7527 = vmatprep.subr.mxu0 0.0
    %7528 = vmatpush1.msra.mxu0 0.0
    %7529 = vmatprep.subr.mxu0 0.0
    %7530 = vmatpush1.msra.mxu0 0.0
    %7531 = vmatprep.subr.mxu0 0.0
    %7532 = vmatpush1.msra.mxu0 0.0
    %7533 = vmatprep.subr.mxu0 0.0
    %7534 = vmatpush1.msra.mxu0 0.0
    %7535 = vmatprep.subr.mxu0 0.0
    %7536 = vmatpush1.msra.mxu0 0.0
    %7537 = vmatprep.subr.mxu0 0.0
    %7538 = vmatpush1.msra.mxu0 0.0
    %7539 = vmatprep.subr.mxu0 0.0
    %7540 = vmatpush1.msra.mxu0 0.0
    %7541 = vmatprep.subr.mxu0 0.0
    %7542 = vmatpush1.msra.mxu0 0.0
    %7543 = vmatprep.subr.mxu0 0.0
    %7544 = vmatpush1.msra.mxu0 0.0
    %7545 = vmatprep.subr.mxu0 0.0
    %7546 = vmatpush1.msra.mxu0 0.0
    %7547 = vmatprep.subr.mxu0 0.0
    %7548 = vmatpush1.msra.mxu0 0.0
    %7549 = vmatprep.subr.mxu0 0.0
    %7550 = vmatpush1.msra.mxu0 0.0
    %7551 = vmatprep.subr.mxu0 0.0
    %7552 = vmatpush1.msra.mxu0 0.0
    %7553 = vmatprep.subr.mxu0 0.0
    %7554 = vmatpush1.msra.mxu0 0.0
    %7555 = vmatprep.subr.mxu0 0.0
    %7556 = vmatpush1.msra.mxu0 0.0
    %7557 = vmatprep.subr.mxu0 0.0
    %7558 = vmatpush1.msra.mxu0 0.0
    %7559 = vmatprep.subr.mxu0 0.0
    %7560 = vmatpush1.msra.mxu0 0.0
    %7561 = vmatprep.mubr.f32.mxu0 0.0
    %7562 = vmatmul.mubr.f32.gmra.mrb[0].mxu0 %v7413
    %v7563 = vpop.f32.mrb[0].mxu0
    %v7564 = vadd.f32 %v7489, %v7563
    %v7565 = vpop.f32.mrb[0].mxu0
    %7566 = vmatprep.mubr.f32.mxu0 0.0
    %7567 = vmatmul.mubr.f32.gmra.mrb[0].mxu0 %v7416
    %v7568 = vpop.f32.mrb[0].mxu0
    %v7569 = vadd.f32 %v7494, %v7568
    %v7570 = vpop.f32.mrb[0].mxu0
    %7571 = vdwg.mxu0
    %v7573 = vrot.slane %v7564, 1
    %7574 = vrot.lane.b32.xlu0 %v7573, 25
    %v7575 = vpop.permute.xlu0 %7574
    %v7577 = vrot.slane %v7564, 2
    %7578 = vrot.lane.b32.xlu0 %v7577, 50
    %v7579 = vpop.permute.xlu0 %7578
    %v7581 = vrot.slane %v7564, 3
    %7582 = vrot.lane.b32.xlu0 %v7581, 75
    %v7583 = vpop.permute.xlu0 %7582
    %v7585 = vrot.slane %v7564, 4
    %7586 = vrot.lane.b32.xlu0 %v7585, 100
    %v7587 = vpop.permute.xlu0 %7586
    %v7589 = vrot.slane %v7564, 5
    %7590 = vrot.lane.b32.xlu0 %v7589, 125
    %v7591 = vpop.permute.xlu0 %7590
    %v7593 = vrot.slane %v7564, 6
    %7594 = vrot.lane.b32.xlu0 %v7593, 22
    %v7595 = vpop.permute.xlu0 %7594
    %v7597 = vrot.slane %v7564, 7
    %7598 = vrot.lane.b32.xlu0 %v7597, 47
    %v7599 = vpop.permute.xlu0 %7598
    %vm7601 = vcmask 203776
    %v7602 = vsel %vm7601, %v7564, %v7575
    %vm7603 = vcmask 408576
    %v7604 = vsel %vm7603, %v7602, %v7579
    %vm7605 = vcmask 613376
    %v7606 = vsel %vm7605, %v7604, %v7583
    %v7607 = vsel %vm786, %v7606, %v7587
    %v7608 = vsel %vm5453, %v7607, %v7591
    %vm7609 = vcmask 179200
    %v7610 = vsel %vm7609, %v7591, %v7595
    %vm7611 = vcmask 384000
    %v7612 = vsel %vm7611, %v7610, %v7599
    %v7614 = vrot.slane %v7569, 1
    %7615 = vrot.lane.b32.xlu0 %v7614, 25
    %v7616 = vpop.permute.xlu0 %7615
    %v7618 = vrot.slane %v7569, 2
    %7619 = vrot.lane.b32.xlu0 %v7618, 50
    %v7620 = vpop.permute.xlu0 %7619
    %v7622 = vrot.slane %v7569, 3
    %7623 = vrot.lane.b32.xlu0 %v7622, 75
    %v7624 = vpop.permute.xlu0 %7623
    %v7626 = vrot.slane %v7569, 4
    %7627 = vrot.lane.b32.xlu0 %v7626, 100
    %v7628 = vpop.permute.xlu0 %7627
    %v7630 = vrot.slane %v7569, 5
    %7631 = vrot.lane.b32.xlu0 %v7630, 125
    %v7632 = vpop.permute.xlu0 %7631
    %v7634 = vrot.slane %v7569, 6
    %7635 = vrot.lane.b32.xlu0 %v7634, 22
    %v7636 = vpop.permute.xlu0 %7635
    %v7638 = vrot.slane %v7569, 7
    %7639 = vrot.lane.b32.xlu0 %v7638, 47
    %v7640 = vpop.permute.xlu0 %7639
    %v7642 = vsel %vm7601, %v7569, %v7616
    %v7643 = vsel %vm7603, %v7642, %v7620
    %v7644 = vsel %vm7605, %v7643, %v7624
    %v7645 = vsel %vm786, %v7644, %v7628
    %v7646 = vsel %vm5453, %v7645, %v7632
    %v7647 = vsel %vm7609, %v7632, %v7636
    %v7648 = vsel %vm7611, %v7647, %v7640
    %v7651 = vrot.slane %v7646, 7
    %v7652 = vrot.slane %v7648, 7
    %v7655 = vsel %vm7418, %v7608, %v7651
    %v7656 = vsel %vm7418, %v7612, %v7652
    %v7657 = vld [vmem:[%s8] sm:$0xff]
    %v7658 = vld [vmem:[%s8 + $0x8] sm:$0xff]
    %v7659 = vld [vmem:[%s8 + $0x10] sm:$0xff]
    %v7660 = vld [vmem:[%s8 + $0x18] sm:$0xff]
    %v7661 = vld [vmem:[%s8 + $0x20] sm:$0xff]
    %v7662 = vld [vmem:[%s8 + $0x28] sm:$0xff]
    %v7663 = vld [vmem:[%s8 + $0x30] sm:$0xff]
    %v7664 = vld [vmem:[%s8 + $0x38] sm:$0xff]
    %v7665 = vld [vmem:[%s8 + $0x40] sm:$0xff]
    %v7666 = vld [vmem:[%s8 + $0x48] sm:$0xff]
    %v7667 = vld [vmem:[%s8 + $0x50] sm:$0xff]
    %v7668 = vld [vmem:[%s8 + $0x58] sm:$0xff]
    %v7669 = vld [vmem:[%s8 + $0x60] sm:$0xff]
    %v7670 = vld [vmem:[%s8 + $0x68] sm:$0xff]
    %v7671 = vld [vmem:[%s8 + $0x70] sm:$0xff]
    %v7672 = vld [vmem:[%s8 + $0x78] sm:$0xff]
    %v7673 = vld [vmem:[%s8 + $0x80] sm:$0xff]
    %v7674 = vld [vmem:[%s8 + $0x88] sm:$0xff]
    %v7675 = vld [vmem:[%s8 + $0x90] sm:$0xff]
    %v7676 = vld [vmem:[%s8 + $0x98] sm:$0xff]
    %v7677 = vld [vmem:[%s8 + $0xa0] sm:$0xff]
    %v7678 = vld [vmem:[%s8 + $0xa8] sm:$0xff]
    %v7679 = vld [vmem:[%s8 + $0xb0] sm:$0xff]
    %v7680 = vld [vmem:[%s8 + $0xb8] sm:$0xff]
    %v7681 = vld [vmem:[%s8 + $0xc0] sm:$0xff]
    %v7682 = vld [vmem:[%s9] sm:$0x1]
    %v7684 = vlaneseq
    %v7685 = vshrl.u32 %v7684, 7
    %v7686 = vsub.s32 0, %v7685
    %v7687 = vrot.slane %v7682, %v7686
    %vm7689 = vcmask 588800
    %v7691 = vsel %vm7689, %v7656, 0
    %7693 = vmatprep.subr.mxu0 0.0
    %7694 = vmatpush1.msra.mxu0 %v7657
    %7695 = vmatprep.subr.mxu0 0.0
    %7696 = vmatpush1.msra.mxu0 %v7658
    %7697 = vmatprep.subr.mxu0 0.0
    %7698 = vmatpush1.msra.mxu0 %v7659
    %7699 = vmatprep.subr.mxu0 0.0
    %7700 = vmatpush1.msra.mxu0 %v7660
    %7701 = vmatprep.subr.mxu0 0.0
    %7702 = vmatpush1.msra.mxu0 %v7661
    %7703 = vmatprep.subr.mxu0 0.0
    %7704 = vmatpush1.msra.mxu0 %v7662
    %7705 = vmatprep.subr.mxu0 0.0
    %7706 = vmatpush1.msra.mxu0 %v7663
    %7707 = vmatprep.subr.mxu0 0.0
    %7708 = vmatpush1.msra.mxu0 %v7664
    %7709 = vmatprep.subr.mxu0 0.0
    %7710 = vmatpush1.msra.mxu0 %v7665
    %7711 = vmatprep.subr.mxu0 0.0
    %7712 = vmatpush1.msra.mxu0 %v7666
    %7713 = vmatprep.subr.mxu0 0.0
    %7714 = vmatpush1.msra.mxu0 %v7667
    %7715 = vmatprep.subr.mxu0 0.0
    %7716 = vmatpush1.msra.mxu0 %v7668
    %7717 = vmatprep.subr.mxu0 0.0
    %7718 = vmatpush1.msra.mxu0 %v7669
    %7719 = vmatprep.subr.mxu0 0.0
    %7720 = vmatpush1.msra.mxu0 %v7670
    %7721 = vmatprep.subr.mxu0 0.0
    %7722 = vmatpush1.msra.mxu0 %v7671
    %7723 = vmatprep.subr.mxu0 0.0
    %7724 = vmatpush1.msra.mxu0 %v7672
    %7725 = vmatprep.subr.mxu0 0.0
    %7726 = vmatpush1.msra.mxu0 %v7673
    %7727 = vmatprep.subr.mxu0 0.0
    %7728 = vmatpush1.msra.mxu0 %v7674
    %7729 = vmatprep.subr.mxu0 0.0
    %7730 = vmatpush1.msra.mxu0 %v7675
    %7731 = vmatprep.subr.mxu0 0.0
    %7732 = vmatpush1.msra.mxu0 %v7676
    %7733 = vmatprep.subr.mxu0 0.0
    %7734 = vmatpush1.msra.mxu0 %v7677
    %7735 = vmatprep.subr.mxu0 0.0
    %7736 = vmatpush1.msra.mxu0 %v7678
    %7737 = vmatprep.subr.mxu0 0.0
    %7738 = vmatpush1.msra.mxu0 %v7679
    %7739 = vmatprep.subr.mxu0 0.0
    %7740 = vmatpush1.msra.mxu0 %v7680
    %7741 = vmatprep.subr.mxu0 0.0
    %7742 = vmatpush1.msra.mxu0 %v7681
    %7743 = vmatprep.subr.mxu0 0.0
    %7744 = vmatpush1.msra.mxu0 0.0
    %7745 = vmatprep.subr.mxu0 0.0
    %7746 = vmatpush1.msra.mxu0 0.0
    %7747 = vmatprep.subr.mxu0 0.0
    %7748 = vmatpush1.msra.mxu0 0.0
    %7749 = vmatprep.subr.mxu0 0.0
    %7750 = vmatpush1.msra.mxu0 0.0
    %7751 = vmatprep.subr.mxu0 0.0
    %7752 = vmatpush1.msra.mxu0 0.0
    %7753 = vmatprep.subr.mxu0 0.0
    %7754 = vmatpush1.msra.mxu0 0.0
    %7755 = vmatprep.subr.mxu0 0.0
    %7756 = vmatpush1.msra.mxu0 0.0
    %7757 = vmatprep.mubr.f32.mxu0 %v7691
    %7758 = vmatmul.mubr.f32.gmra.mrb[0].mxu0 %v7655
    %v7759 = vpop.f32.mrb[0].mxu0
    %v7760 = vadd.f32 %v7687, %v7759
    %v7761 = vpop.f32.mrb[0].mxu0
    %7762 = vdwg.mxu0
    %v7763 = vld [vmem:[%s1] sm:$0xff]
    %v7764 = vld [vmem:[%s10] sm:$0xff]
    %v7765 = vld [vmem:[%s10 + $0x8] sm:$0xff]
    %v7766 = vld [vmem:[%s10 + $0x10] sm:$0xff]
    %v7767 = vld [vmem:[%s10 + $0x18] sm:$0xff]
    %v7768 = vld [vmem:[%s10 + $0x20] sm:$0xff]
    %v7769 = vld [vmem:[%s10 + $0x28] sm:$0xff]
    %v7770 = vld [vmem:[%s10 + $0x30] sm:$0xff]
    %v7771 = vld [vmem:[%s10 + $0x38] sm:$0xff]
    %v7772 = vld [vmem:[%s10 + $0x40] sm:$0xff]
    %v7773 = vld [vmem:[%s10 + $0x48] sm:$0xff]
    %v7774 = vld [vmem:[%s10 + $0x50] sm:$0xff]
    %v7775 = vld [vmem:[%s10 + $0x58] sm:$0xff]
    %v7776 = vld [vmem:[%s11] sm:$0xff]
    %v7777 = vld [vmem:[%s11 + $0x8] sm:$0xff]
    %v7778 = vld [vmem:[%s11 + $0x10] sm:$0xff]
    %v7779 = vld [vmem:[%s11 + $0x18] sm:$0xff]
    %v7780 = vld [vmem:[%s11 + $0x20] sm:$0xff]
    %v7781 = vld [vmem:[%s11 + $0x28] sm:$0xff]
    %v7782 = vld [vmem:[%s11 + $0x30] sm:$0xff]
    %v7783 = vld [vmem:[%s11 + $0x38] sm:$0xff]
    %v7784 = vld [vmem:[%s11 + $0x40] sm:$0xff]
    %v7785 = vld [vmem:[%s11 + $0x48] sm:$0xff]
    %v7786 = vld [vmem:[%s11 + $0x50] sm:$0xff]
    %v7787 = vld [vmem:[%s11 + $0x58] sm:$0xff]
    %v7788 = vld [vmem:[%s11 + $0x60] sm:$0xff]
    %v7789 = vld [vmem:[%s11 + $0x68] sm:$0xff]
    %v7790 = vld [vmem:[%s11 + $0x70] sm:$0xff]
    %v7791 = vld [vmem:[%s11 + $0x78] sm:$0xff]
    %v7792 = vld [vmem:[%s11 + $0x80] sm:$0xff]
    %v7793 = vld [vmem:[%s11 + $0x88] sm:$0xff]
    %v7794 = vld [vmem:[%s11 + $0x90] sm:$0xff]
    %v7795 = vld [vmem:[%s11 + $0x98] sm:$0xff]
    %v7796 = vld [vmem:[%s11 + $0xa0] sm:$0xff]
    %v7797 = vld [vmem:[%s11 + $0xa8] sm:$0xff]
    %v7798 = vld [vmem:[%s11 + $0xb0] sm:$0xff]
    %v7799 = vld [vmem:[%s11 + $0xb8] sm:$0xff]
    %v7800 = vld [vmem:[%s11 + $0xc0] sm:$0xff]
    %v7801 = vld [vmem:[%s11 + $0xc8] sm:$0xff]
    %v7802 = vld [vmem:[%s11 + $0xd0] sm:$0xff]
    %v7803 = vld [vmem:[%s11 + $0xd8] sm:$0xff]
    %v7804 = vld [vmem:[%s11 + $0xe0] sm:$0xff]
    %v7805 = vld [vmem:[%s11 + $0xe8] sm:$0xff]
    %v7806 = vld [vmem:[%s11 + $0xf0] sm:$0xff]
    %v7807 = vld [vmem:[%s11 + $0xf8] sm:$0xff]
    %v7808 = vld [vmem:[%s11 + $0x100] sm:$0xff]
    %v7809 = vld [vmem:[%s11 + $0x108] sm:$0xff]
    %v7810 = vld [vmem:[%s11 + $0x110] sm:$0xff]
    %v7811 = vld [vmem:[%s11 + $0x118] sm:$0xff]
    %v7812 = vld [vmem:[%s11 + $0x120] sm:$0xff]
    %v7813 = vld [vmem:[%s11 + $0x128] sm:$0xff]
    %v7814 = vld [vmem:[%s11 + $0x130] sm:$0xff]
    %v7815 = vld [vmem:[%s11 + $0x138] sm:$0xff]
    %v7816 = vld [vmem:[%s11 + $0x140] sm:$0xff]
    %v7817 = vld [vmem:[%s11 + $0x148] sm:$0xff]
    %v7818 = vld [vmem:[%s11 + $0x150] sm:$0xff]
    %v7819 = vld [vmem:[%s11 + $0x158] sm:$0xff]
    %v7820 = vld [vmem:[%s11 + $0x160] sm:$0xff]
    %v7821 = vld [vmem:[%s11 + $0x168] sm:$0xff]
    %v7822 = vld [vmem:[%s11 + $0x170] sm:$0xff]
    %v7823 = vld [vmem:[%s11 + $0x178] sm:$0xff]
    %v7824 = vld [vmem:[%s11 + $0x180] sm:$0xff]
    %v7825 = vld [vmem:[%s11 + $0x188] sm:$0xff]
    %v7826 = vld [vmem:[%s11 + $0x190] sm:$0xff]
    %v7827 = vld [vmem:[%s11 + $0x198] sm:$0xff]
    %v7828 = vld [vmem:[%s11 + $0x1a0] sm:$0xff]
    %v7829 = vld [vmem:[%s11 + $0x1a8] sm:$0xff]
    %v7830 = vld [vmem:[%s11 + $0x1b0] sm:$0xff]
    %v7831 = vld [vmem:[%s11 + $0x1b8] sm:$0xff]
    %v7832 = vld [vmem:[%s11 + $0x1c0] sm:$0xff]
    %v7833 = vld [vmem:[%s11 + $0x1c8] sm:$0xff]
    %v7834 = vld [vmem:[%s11 + $0x1d0] sm:$0xff]
    %v7835 = vld [vmem:[%s11 + $0x1d8] sm:$0xff]
    %v7836 = vld [vmem:[%s11 + $0x1e0] sm:$0xff]
    %v7837 = vld [vmem:[%s11 + $0x1e8] sm:$0xff]
    %v7838 = vld [vmem:[%s11 + $0x1f0] sm:$0xff]
    %v7839 = vld [vmem:[%s11 + $0x1f8] sm:$0xff]
    %v7840 = vld [vmem:[%s11 + $0x200] sm:$0xff]
    %v7841 = vld [vmem:[%s11 + $0x208] sm:$0xff]
    %v7842 = vld [vmem:[%s11 + $0x210] sm:$0xff]
    %v7843 = vld [vmem:[%s11 + $0x218] sm:$0xff]
    %v7844 = vld [vmem:[%s11 + $0x220] sm:$0xff]
    %v7845 = vld [vmem:[%s11 + $0x228] sm:$0xff]
    %v7846 = vld [vmem:[%s11 + $0x230] sm:$0xff]
    %v7847 = vld [vmem:[%s11 + $0x238] sm:$0xff]
    %v7848 = vld [vmem:[%s11 + $0x240] sm:$0xff]
    %v7849 = vld [vmem:[%s11 + $0x248] sm:$0xff]
    %v7850 = vld [vmem:[%s11 + $0x250] sm:$0xff]
    %v7851 = vld [vmem:[%s11 + $0x258] sm:$0xff]
    %v7852 = vld [vmem:[%s11 + $0x260] sm:$0xff]
    %v7853 = vld [vmem:[%s11 + $0x268] sm:$0xff]
    %v7854 = vld [vmem:[%s11 + $0x270] sm:$0xff]
    %v7855 = vld [vmem:[%s11 + $0x278] sm:$0xff]
    %v7856 = vld [vmem:[%s11 + $0x280] sm:$0xff]
    %v7857 = vld [vmem:[%s11 + $0x288] sm:$0xff]
    %v7858 = vld [vmem:[%s11 + $0x290] sm:$0xff]
    %v7859 = vld [vmem:[%s11 + $0x298] sm:$0xff]
    %v7860 = vld [vmem:[%s11 + $0x2a0] sm:$0xff]
    %v7861 = vld [vmem:[%s11 + $0x2a8] sm:$0xff]
    %v7862 = vld [vmem:[%s11 + $0x2b0] sm:$0xff]
    %v7863 = vld [vmem:[%s11 + $0x2b8] sm:$0xff]
    %v7864 = vld [vmem:[%s11 + $0x2c0] sm:$0xff]
    %v7865 = vld [vmem:[%s11 + $0x2c8] sm:$0xff]
    %v7866 = vld [vmem:[%s11 + $0x2d0] sm:$0xff]
    %v7867 = vld [vmem:[%s11 + $0x2d8] sm:$0xff]
    %v7868 = vld [vmem:[%s11 + $0x2e0] sm:$0xff]
    %v7869 = vld [vmem:[%s11 + $0x2e8] sm:$0xff]
    %v7870 = vld [vmem:[%s11 + $0x2f0] sm:$0xff]
    %v7871 = vld [vmem:[%s11 + $0x2f8] sm:$0xff]
    %v7872 = vld [vmem:[%s11 + $0x300] sm:$0xff]
    %v7873 = vld [vmem:[%s11 + $0x308] sm:$0xff]
    %v7874 = vld [vmem:[%s11 + $0x310] sm:$0xff]
    %v7875 = vld [vmem:[%s11 + $0x318] sm:$0xff]
    %v7876 = vld [vmem:[%s11 + $0x320] sm:$0xff]
    %v7877 = vld [vmem:[%s11 + $0x328] sm:$0xff]
    %v7878 = vld [vmem:[%s11 + $0x330] sm:$0xff]
    %v7879 = vld [vmem:[%s11 + $0x338] sm:$0xff]
    %v7880 = vld [vmem:[%s11 + $0x340] sm:$0xff]
    %v7881 = vld [vmem:[%s11 + $0x348] sm:$0xff]
    %v7882 = vld [vmem:[%s11 + $0x350] sm:$0xff]
    %v7883 = vld [vmem:[%s11 + $0x358] sm:$0xff]
    %v7884 = vld [vmem:[%s11 + $0x360] sm:$0xff]
    %v7885 = vld [vmem:[%s11 + $0x368] sm:$0xff]
    %v7886 = vld [vmem:[%s11 + $0x370] sm:$0xff]
    %v7887 = vld [vmem:[%s11 + $0x378] sm:$0xff]
    %v7888 = vld [vmem:[%s11 + $0x380] sm:$0xff]
    %v7889 = vld [vmem:[%s11 + $0x388] sm:$0xff]
    %v7890 = vld [vmem:[%s11 + $0x390] sm:$0xff]
    %v7891 = vld [vmem:[%s11 + $0x398] sm:$0xff]
    %v7892 = vld [vmem:[%s11 + $0x3a0] sm:$0xff]
    %v7893 = vld [vmem:[%s11 + $0x3a8] sm:$0xff]
    %v7894 = vld [vmem:[%s11 + $0x3b0] sm:$0xff]
    %v7895 = vld [vmem:[%s11 + $0x3b8] sm:$0xff]
    %v7896 = vld [vmem:[%s11 + $0x3c0] sm:$0xff]
    %v7897 = vld [vmem:[%s11 + $0x3c8] sm:$0xff]
    %v7898 = vld [vmem:[%s11 + $0x3d0] sm:$0xff]
    %v7899 = vld [vmem:[%s11 + $0x3d8] sm:$0xff]
    %v7900 = vld [vmem:[%s11 + $0x3e0] sm:$0xff]
    %v7901 = vld [vmem:[%s11 + $0x3e8] sm:$0xff]
    %v7902 = vld [vmem:[%s11 + $0x3f0] sm:$0xff]
    %v7903 = vld [vmem:[%s11 + $0x3f8] sm:$0xff]
    %v7904 = vld [vmem:[%s11 + $0x400] sm:$0xff]
    %v7905 = vld [vmem:[%s11 + $0x408] sm:$0xff]
    %v7906 = vld [vmem:[%s11 + $0x410] sm:$0xff]
    %v7907 = vld [vmem:[%s11 + $0x418] sm:$0xff]
    %v7908 = vld [vmem:[%s11 + $0x420] sm:$0xff]
    %v7909 = vld [vmem:[%s11 + $0x428] sm:$0xff]
    %v7910 = vld [vmem:[%s11 + $0x430] sm:$0xff]
    %v7911 = vld [vmem:[%s11 + $0x438] sm:$0xff]
    %v7912 = vld [vmem:[%s11 + $0x440] sm:$0xff]
    %v7913 = vld [vmem:[%s11 + $0x448] sm:$0xff]
    %v7914 = vld [vmem:[%s11 + $0x450] sm:$0xff]
    %v7915 = vld [vmem:[%s11 + $0x458] sm:$0xff]
    %v7916 = vld [vmem:[%s11 + $0x460] sm:$0xff]
    %v7917 = vld [vmem:[%s11 + $0x468] sm:$0xff]
    %v7918 = vld [vmem:[%s11 + $0x470] sm:$0xff]
    %v7919 = vld [vmem:[%s11 + $0x478] sm:$0xff]
    %v7920 = vld [vmem:[%s11 + $0x480] sm:$0xff]
    %v7921 = vld [vmem:[%s11 + $0x488] sm:$0xff]
    %v7922 = vld [vmem:[%s11 + $0x490] sm:$0xff]
    %v7923 = vld [vmem:[%s11 + $0x498] sm:$0xff]
    %v7924 = vld [vmem:[%s11 + $0x4a0] sm:$0xff]
    %v7925 = vld [vmem:[%s11 + $0x4a8] sm:$0xff]
    %v7927 = vcombine.high %v7763, %v7763
    %v7929 = vunpack.c.l.s4 1983009808
    %v7930 = vunpack.c.0.s8 %v7929
    %v7931 = vlaneseq
    %v7932 = vshrl.u32 %v7931, 7
    %v7933 = vsub.s32 %v7930, %v7932
    %v7934 = vrot.slane %v7763, %v7933
    %v7936 = vunpack.c.l.s4 1983009808
    %v7937 = vunpack.c.0.s8 %v7936
    %v7938 = vlaneseq
    %v7939 = vshrl.u32 %v7938, 7
    %v7940 = vsub.s32 %v7937, %v7939
    %v7941 = vrot.slane %v7927, %v7940
    %v7942 = vcombine.high %v7934, %v7934
    %v7943 = vcombine.high %v7941, %v7941
    %vm7947 = vcmask 130048
    %v7948 = vsel %vm7947, %v7943, 0
    %7950 = vmatprep.subr.mxu0 %v7777
    %7951 = vmatpush1.msra.mxu0 %v7776
    %7952 = vmatprep.subr.mxu0 %v7780
    %7953 = vmatpush1.msra.mxu0 %v7779
    %7954 = vmatprep.subr.mxu0 %v7783
    %7955 = vmatpush1.msra.mxu0 %v7782
    %7956 = vmatprep.subr.mxu0 %v7786
    %7957 = vmatpush1.msra.mxu0 %v7785
    %7958 = vmatprep.subr.mxu0 %v7789
    %7959 = vmatpush1.msra.mxu0 %v7788
    %7960 = vmatprep.subr.mxu0 %v7792
    %7961 = vmatpush1.msra.mxu0 %v7791
    %7962 = vmatprep.subr.mxu0 %v7795
    %7963 = vmatpush1.msra.mxu0 %v7794
    %7964 = vmatprep.subr.mxu0 %v7798
    %7965 = vmatpush1.msra.mxu0 %v7797
    %7966 = vmatprep.subr.mxu0 %v7801
    %7967 = vmatpush1.msra.mxu0 %v7800
    %7968 = vmatprep.subr.mxu0 %v7804
    %7969 = vmatpush1.msra.mxu0 %v7803
    %7970 = vmatprep.subr.mxu0 %v7807
    %7971 = vmatpush1.msra.mxu0 %v7806
    %7972 = vmatprep.subr.mxu0 %v7810
    %7973 = vmatpush1.msra.mxu0 %v7809
    %7974 = vmatprep.subr.mxu0 %v7813
    %7975 = vmatpush1.msra.mxu0 %v7812
    %7976 = vmatprep.subr.mxu0 %v7816
    %7977 = vmatpush1.msra.mxu0 %v7815
    %7978 = vmatprep.subr.mxu0 %v7819
    %7979 = vmatpush1.msra.mxu0 %v7818
    %7980 = vmatprep.subr.mxu0 %v7822
    %7981 = vmatpush1.msra.mxu0 %v7821
    %7982 = vmatprep.subr.mxu0 %v7825
    %7983 = vmatpush1.msra.mxu0 %v7824
    %7984 = vmatprep.subr.mxu0 %v7828
    %7985 = vmatpush1.msra.mxu0 %v7827
    %7986 = vmatprep.subr.mxu0 %v7831
    %7987 = vmatpush1.msra.mxu0 %v7830
    %7988 = vmatprep.subr.mxu0 %v7834
    %7989 = vmatpush1.msra.mxu0 %v7833
    %7990 = vmatprep.subr.mxu0 %v7837
    %7991 = vmatpush1.msra.mxu0 %v7836
    %7992 = vmatprep.subr.mxu0 %v7840
    %7993 = vmatpush1.msra.mxu0 %v7839
    %7994 = vmatprep.subr.mxu0 %v7843
    %7995 = vmatpush1.msra.mxu0 %v7842
    %7996 = vmatprep.subr.mxu0 %v7846
    %7997 = vmatpush1.msra.mxu0 %v7845
    %7998 = vmatprep.subr.mxu0 %v7849
    %7999 = vmatpush1.msra.mxu0 %v7848
    %8000 = vmatprep.subr.mxu0 %v7852
    %8001 = vmatpush1.msra.mxu0 %v7851
    %8002 = vmatprep.subr.mxu0 %v7855
    %8003 = vmatpush1.msra.mxu0 %v7854
    %8004 = vmatprep.subr.mxu0 %v7858
    %8005 = vmatpush1.msra.mxu0 %v7857
    %8006 = vmatprep.subr.mxu0 %v7861
    %8007 = vmatpush1.msra.mxu0 %v7860
    %8008 = vmatprep.subr.mxu0 %v7864
    %8009 = vmatpush1.msra.mxu0 %v7863
    %8010 = vmatprep.subr.mxu0 %v7867
    %8011 = vmatpush1.msra.mxu0 %v7866
    %8012 = vmatprep.subr.mxu0 %v7870
    %8013 = vmatpush1.msra.mxu0 %v7869
    %8014 = vmatprep.mubr.f32.mxu0 %v7942
    %8015 = vmatmul.mubr.f32.gmra.mrb[0].mxu0 %v7934
    %v8016 = vpop.f32.mrb[0].mxu0
    %v8017 = vadd.f32 0.0, %v8016
    %v8018 = vpop.f32.mrb[0].mxu0
    %v8019 = vadd.f32 0.0, %v8018
    %8020 = vdwg.mxu0
    %8021 = vmatprep.subr.mxu0 %v7873
    %8022 = vmatpush1.msra.mxu0 %v7872
    %8023 = vmatprep.subr.mxu0 %v7876
    %8024 = vmatpush1.msra.mxu0 %v7875
    %8025 = vmatprep.subr.mxu0 %v7879
    %8026 = vmatpush1.msra.mxu0 %v7878
    %8027 = vmatprep.subr.mxu0 %v7882
    %8028 = vmatpush1.msra.mxu0 %v7881
    %8029 = vmatprep.subr.mxu0 %v7885
    %8030 = vmatpush1.msra.mxu0 %v7884
    %8031 = vmatprep.subr.mxu0 %v7888
    %8032 = vmatpush1.msra.mxu0 %v7887
    %8033 = vmatprep.subr.mxu0 %v7891
    %8034 = vmatpush1.msra.mxu0 %v7890
    %8035 = vmatprep.subr.mxu0 %v7894
    %8036 = vmatpush1.msra.mxu0 %v7893
    %8037 = vmatprep.subr.mxu0 %v7897
    %8038 = vmatpush1.msra.mxu0 %v7896
    %8039 = vmatprep.subr.mxu0 %v7900
    %8040 = vmatpush1.msra.mxu0 %v7899
    %8041 = vmatprep.subr.mxu0 %v7903
    %8042 = vmatpush1.msra.mxu0 %v7902
    %8043 = vmatprep.subr.mxu0 %v7906
    %8044 = vmatpush1.msra.mxu0 %v7905
    %8045 = vmatprep.subr.mxu0 %v7909
    %8046 = vmatpush1.msra.mxu0 %v7908
    %8047 = vmatprep.subr.mxu0 %v7912
    %8048 = vmatpush1.msra.mxu0 %v7911
    %8049 = vmatprep.subr.mxu0 %v7915
    %8050 = vmatpush1.msra.mxu0 %v7914
    %8051 = vmatprep.subr.mxu0 %v7918
    %8052 = vmatpush1.msra.mxu0 %v7917
    %8053 = vmatprep.subr.mxu0 %v7921
    %8054 = vmatpush1.msra.mxu0 %v7920
    %8055 = vmatprep.subr.mxu0 %v7924
    %8056 = vmatpush1.msra.mxu0 %v7923
    %8057 = vmatprep.subr.mxu0 0.0
    %8058 = vmatpush1.msra.mxu0 0.0
    %8059 = vmatprep.subr.mxu0 0.0
    %8060 = vmatpush1.msra.mxu0 0.0
    %8061 = vmatprep.subr.mxu0 0.0
    %8062 = vmatpush1.msra.mxu0 0.0
    %8063 = vmatprep.subr.mxu0 0.0
    %8064 = vmatpush1.msra.mxu0 0.0
    %8065 = vmatprep.subr.mxu0 0.0
    %8066 = vmatpush1.msra.mxu0 0.0
    %8067 = vmatprep.subr.mxu0 0.0
    %8068 = vmatpush1.msra.mxu0 0.0
    %8069 = vmatprep.subr.mxu0 0.0
    %8070 = vmatpush1.msra.mxu0 0.0
    %8071 = vmatprep.subr.mxu0 0.0
    %8072 = vmatpush1.msra.mxu0 0.0
    %8073 = vmatprep.subr.mxu0 0.0
    %8074 = vmatpush1.msra.mxu0 0.0
    %8075 = vmatprep.subr.mxu0 0.0
    %8076 = vmatpush1.msra.mxu0 0.0
    %8077 = vmatprep.subr.mxu0 0.0
    %8078 = vmatpush1.msra.mxu0 0.0
    %8079 = vmatprep.subr.mxu0 0.0
    %8080 = vmatpush1.msra.mxu0 0.0
    %8081 = vmatprep.subr.mxu0 0.0
    %8082 = vmatpush1.msra.mxu0 0.0
    %8083 = vmatprep.subr.mxu0 0.0
    %8084 = vmatpush1.msra.mxu0 0.0
    %8085 = vmatprep.mubr.f32.mxu0 %v7948
    %8086 = vmatmul.mubr.f32.gmra.mrb[0].mxu0 %v7941
    %v8087 = vpop.f32.mrb[0].mxu0
    %v8088 = vadd.f32 %v8017, %v8087
    %v8089 = vpop.f32.mrb[0].mxu0
    %v8090 = vadd.f32 %v8019, %v8089
    %8091 = vdwg.mxu0
    %8092 = vmatprep.subr.mxu0 0.0
    %8093 = vmatpush1.msra.mxu0 %v7778
    %8094 = vmatprep.subr.mxu0 0.0
    %8095 = vmatpush1.msra.mxu0 %v7781
    %8096 = vmatprep.subr.mxu0 0.0
    %8097 = vmatpush1.msra.mxu0 %v7784
    %8098 = vmatprep.subr.mxu0 0.0
    %8099 = vmatpush1.msra.mxu0 %v7787
    %8100 = vmatprep.subr.mxu0 0.0
    %8101 = vmatpush1.msra.mxu0 %v7790
    %8102 = vmatprep.subr.mxu0 0.0
    %8103 = vmatpush1.msra.mxu0 %v7793
    %8104 = vmatprep.subr.mxu0 0.0
    %8105 = vmatpush1.msra.mxu0 %v7796
    %8106 = vmatprep.subr.mxu0 0.0
    %8107 = vmatpush1.msra.mxu0 %v7799
    %8108 = vmatprep.subr.mxu0 0.0
    %8109 = vmatpush1.msra.mxu0 %v7802
    %8110 = vmatprep.subr.mxu0 0.0
    %8111 = vmatpush1.msra.mxu0 %v7805
    %8112 = vmatprep.subr.mxu0 0.0
    %8113 = vmatpush1.msra.mxu0 %v7808
    %8114 = vmatprep.subr.mxu0 0.0
    %8115 = vmatpush1.msra.mxu0 %v7811
    %8116 = vmatprep.subr.mxu0 0.0
    %8117 = vmatpush1.msra.mxu0 %v7814
    %8118 = vmatprep.subr.mxu0 0.0
    %8119 = vmatpush1.msra.mxu0 %v7817
    %8120 = vmatprep.subr.mxu0 0.0
    %8121 = vmatpush1.msra.mxu0 %v7820
    %8122 = vmatprep.subr.mxu0 0.0
    %8123 = vmatpush1.msra.mxu0 %v7823
    %8124 = vmatprep.subr.mxu0 0.0
    %8125 = vmatpush1.msra.mxu0 %v7826
    %8126 = vmatprep.subr.mxu0 0.0
    %8127 = vmatpush1.msra.mxu0 %v7829
    %8128 = vmatprep.subr.mxu0 0.0
    %8129 = vmatpush1.msra.mxu0 %v7832
    %8130 = vmatprep.subr.mxu0 0.0
    %8131 = vmatpush1.msra.mxu0 %v7835
    %8132 = vmatprep.subr.mxu0 0.0
    %8133 = vmatpush1.msra.mxu0 %v7838
    %8134 = vmatprep.subr.mxu0 0.0
    %8135 = vmatpush1.msra.mxu0 %v7841
    %8136 = vmatprep.subr.mxu0 0.0
    %8137 = vmatpush1.msra.mxu0 %v7844
    %8138 = vmatprep.subr.mxu0 0.0
    %8139 = vmatpush1.msra.mxu0 %v7847
    %8140 = vmatprep.subr.mxu0 0.0
    %8141 = vmatpush1.msra.mxu0 %v7850
    %8142 = vmatprep.subr.mxu0 0.0
    %8143 = vmatpush1.msra.mxu0 %v7853
    %8144 = vmatprep.subr.mxu0 0.0
    %8145 = vmatpush1.msra.mxu0 %v7856
    %8146 = vmatprep.subr.mxu0 0.0
    %8147 = vmatpush1.msra.mxu0 %v7859
    %8148 = vmatprep.subr.mxu0 0.0
    %8149 = vmatpush1.msra.mxu0 %v7862
    %8150 = vmatprep.subr.mxu0 0.0
    %8151 = vmatpush1.msra.mxu0 %v7865
    %8152 = vmatprep.subr.mxu0 0.0
    %8153 = vmatpush1.msra.mxu0 %v7868
    %8154 = vmatprep.subr.mxu0 0.0
    %8155 = vmatpush1.msra.mxu0 %v7871
    %8156 = vmatprep.mubr.f32.mxu0 %v7942
    %8157 = vmatmul.mubr.f32.gmra.mrb[0].mxu0 %v7934
    %v8158 = vpop.f32.mrb[0].mxu0
    %v8159 = vadd.f32 0.0, %v8158
    %v8160 = vpop.f32.mrb[0].mxu0
    %8161 = vdwg.mxu0
    %8162 = vmatprep.subr.mxu0 0.0
    %8163 = vmatpush1.msra.mxu0 %v7874
    %8164 = vmatprep.subr.mxu0 0.0
    %8165 = vmatpush1.msra.mxu0 %v7877
    %8166 = vmatprep.subr.mxu0 0.0
    %8167 = vmatpush1.msra.mxu0 %v7880
    %8168 = vmatprep.subr.mxu0 0.0
    %8169 = vmatpush1.msra.mxu0 %v7883
    %8170 = vmatprep.subr.mxu0 0.0
    %8171 = vmatpush1.msra.mxu0 %v7886
    %8172 = vmatprep.subr.mxu0 0.0
    %8173 = vmatpush1.msra.mxu0 %v7889
    %8174 = vmatprep.subr.mxu0 0.0
    %8175 = vmatpush1.msra.mxu0 %v7892
    %8176 = vmatprep.subr.mxu0 0.0
    %8177 = vmatpush1.msra.mxu0 %v7895
    %8178 = vmatprep.subr.mxu0 0.0
    %8179 = vmatpush1.msra.mxu0 %v7898
    %8180 = vmatprep.subr.mxu0 0.0
    %8181 = vmatpush1.msra.mxu0 %v7901
    %8182 = vmatprep.subr.mxu0 0.0
    %8183 = vmatpush1.msra.mxu0 %v7904
    %8184 = vmatprep.subr.mxu0 0.0
    %8185 = vmatpush1.msra.mxu0 %v7907
    %8186 = vmatprep.subr.mxu0 0.0
    %8187 = vmatpush1.msra.mxu0 %v7910
    %8188 = vmatprep.subr.mxu0 0.0
    %8189 = vmatpush1.msra.mxu0 %v7913
    %8190 = vmatprep.subr.mxu0 0.0
    %8191 = vmatpush1.msra.mxu0 %v7916
    %8192 = vmatprep.subr.mxu0 0.0
    %8193 = vmatpush1.msra.mxu0 %v7919
    %8194 = vmatprep.subr.mxu0 0.0
    %8195 = vmatpush1.msra.mxu0 %v7922
    %8196 = vmatprep.subr.mxu0 0.0
    %8197 = vmatpush1.msra.mxu0 %v7925
    %8198 = vmatprep.subr.mxu0 0.0
    %8199 = vmatpush1.msra.mxu0 0.0
    %8200 = vmatprep.subr.mxu0 0.0
    %8201 = vmatpush1.msra.mxu0 0.0
    %8202 = vmatprep.subr.mxu0 0.0
    %8203 = vmatpush1.msra.mxu0 0.0
    %8204 = vmatprep.subr.mxu0 0.0
    %8205 = vmatpush1.msra.mxu0 0.0
    %8206 = vmatprep.subr.mxu0 0.0
    %8207 = vmatpush1.msra.mxu0 0.0
    %8208 = vmatprep.subr.mxu0 0.0
    %8209 = vmatpush1.msra.mxu0 0.0
    %8210 = vmatprep.subr.mxu0 0.0
    %8211 = vmatpush1.msra.mxu0 0.0
    %8212 = vmatprep.subr.mxu0 0.0
    %8213 = vmatpush1.msra.mxu0 0.0
    %8214 = vmatprep.subr.mxu0 0.0
    %8215 = vmatpush1.msra.mxu0 0.0
    %8216 = vmatprep.subr.mxu0 0.0
    %8217 = vmatpush1.msra.mxu0 0.0
    %8218 = vmatprep.subr.mxu0 0.0
    %8219 = vmatpush1.msra.mxu0 0.0
    %8220 = vmatprep.subr.mxu0 0.0
    %8221 = vmatpush1.msra.mxu0 0.0
    %8222 = vmatprep.subr.mxu0 0.0
    %8223 = vmatpush1.msra.mxu0 0.0
    %8224 = vmatprep.subr.mxu0 0.0
    %8225 = vmatpush1.msra.mxu0 0.0
    %8226 = vmatprep.mubr.f32.mxu0 %v7948
    %8227 = vmatmul.mubr.f32.gmra.mrb[0].mxu0 %v7941
    %v8228 = vpop.f32.mrb[0].mxu0
    %v8229 = vadd.f32 %v8159, %v8228
    %v8230 = vpop.f32.mrb[0].mxu0
    %8231 = vdwg.mxu0
    %vm8232 = vcmask 261120
    %v8234 = vsel %vm8232, %v7760, 0
    %8236 = vmatprep.subr.mxu0 %v7765
    %8237 = vmatpush1.msra.mxu0 %v7764
    %8238 = vmatprep.subr.mxu0 %v7768
    %8239 = vmatpush1.msra.mxu0 %v7767
    %8240 = vmatprep.subr.mxu0 %v7771
    %8241 = vmatpush1.msra.mxu0 %v7770
    %8242 = vmatprep.subr.mxu0 %v7774
    %8243 = vmatpush1.msra.mxu0 %v7773
    %8244 = vmatprep.subr.mxu0 0.0
    %8245 = vmatpush1.msra.mxu0 0.0
    %8246 = vmatprep.subr.mxu0 0.0
    %8247 = vmatpush1.msra.mxu0 0.0
    %8248 = vmatprep.subr.mxu0 0.0
    %8249 = vmatpush1.msra.mxu0 0.0
    %8250 = vmatprep.subr.mxu0 0.0
    %8251 = vmatpush1.msra.mxu0 0.0
    %8252 = vmatprep.subr.mxu0 0.0
    %8253 = vmatpush1.msra.mxu0 0.0
    %8254 = vmatprep.subr.mxu0 0.0
    %8255 = vmatpush1.msra.mxu0 0.0
    %8256 = vmatprep.subr.mxu0 0.0
    %8257 = vmatpush1.msra.mxu0 0.0
    %8258 = vmatprep.subr.mxu0 0.0
    %8259 = vmatpush1.msra.mxu0 0.0
    %8260 = vmatprep.subr.mxu0 0.0
    %8261 = vmatpush1.msra.mxu0 0.0
    %8262 = vmatprep.subr.mxu0 0.0
    %8263 = vmatpush1.msra.mxu0 0.0
    %8264 = vmatprep.subr.mxu0 0.0
    %8265 = vmatpush1.msra.mxu0 0.0
    %8266 = vmatprep.subr.mxu0 0.0
    %8267 = vmatpush1.msra.mxu0 0.0
    %8268 = vmatprep.subr.mxu0 0.0
    %8269 = vmatpush1.msra.mxu0 0.0
    %8270 = vmatprep.subr.mxu0 0.0
    %8271 = vmatpush1.msra.mxu0 0.0
    %8272 = vmatprep.subr.mxu0 0.0
    %8273 = vmatpush1.msra.mxu0 0.0
    %8274 = vmatprep.subr.mxu0 0.0
    %8275 = vmatpush1.msra.mxu0 0.0
    %8276 = vmatprep.subr.mxu0 0.0
    %8277 = vmatpush1.msra.mxu0 0.0
    %8278 = vmatprep.subr.mxu0 0.0
    %8279 = vmatpush1.msra.mxu0 0.0
    %8280 = vmatprep.subr.mxu0 0.0
    %8281 = vmatpush1.msra.mxu0 0.0
    %8282 = vmatprep.subr.mxu0 0.0
    %8283 = vmatpush1.msra.mxu0 0.0
    %8284 = vmatprep.subr.mxu0 0.0
    %8285 = vmatpush1.msra.mxu0 0.0
    %8286 = vmatprep.subr.mxu0 0.0
    %8287 = vmatpush1.msra.mxu0 0.0
    %8288 = vmatprep.subr.mxu0 0.0
    %8289 = vmatpush1.msra.mxu0 0.0
    %8290 = vmatprep.subr.mxu0 0.0
    %8291 = vmatpush1.msra.mxu0 0.0
    %8292 = vmatprep.subr.mxu0 0.0
    %8293 = vmatpush1.msra.mxu0 0.0
    %8294 = vmatprep.subr.mxu0 0.0
    %8295 = vmatpush1.msra.mxu0 0.0
    %8296 = vmatprep.subr.mxu0 0.0
    %8297 = vmatpush1.msra.mxu0 0.0
    %8298 = vmatprep.subr.mxu0 0.0
    %8299 = vmatpush1.msra.mxu0 0.0
    %8300 = vmatprep.mubr.f32.mxu0 0.0
    %8301 = vmatmul.mubr.f32.gmra.mrb[0].mxu0 %v8234
    %v8302 = vpop.f32.mrb[0].mxu0
    %v8303 = vadd.f32 %v8088, %v8302
    %v8304 = vpop.f32.mrb[0].mxu0
    %v8305 = vadd.f32 %v8090, %v8304
    %8306 = vdwg.mxu0
    %8307 = vmatprep.subr.mxu0 0.0
    %8308 = vmatpush1.msra.mxu0 %v7766
    %8309 = vmatprep.subr.mxu0 0.0
    %8310 = vmatpush1.msra.mxu0 %v7769
    %8311 = vmatprep.subr.mxu0 0.0
    %8312 = vmatpush1.msra.mxu0 %v7772
    %8313 = vmatprep.subr.mxu0 0.0
    %8314 = vmatpush1.msra.mxu0 %v7775
    %8315 = vmatprep.subr.mxu0 0.0
    %8316 = vmatpush1.msra.mxu0 0.0
    %8317 = vmatprep.subr.mxu0 0.0
    %8318 = vmatpush1.msra.mxu0 0.0
    %8319 = vmatprep.subr.mxu0 0.0
    %8320 = vmatpush1.msra.mxu0 0.0
    %8321 = vmatprep.subr.mxu0 0.0
    %8322 = vmatpush1.msra.mxu0 0.0
    %8323 = vmatprep.subr.mxu0 0.0
    %8324 = vmatpush1.msra.mxu0 0.0
    %8325 = vmatprep.subr.mxu0 0.0
    %8326 = vmatpush1.msra.mxu0 0.0
    %8327 = vmatprep.subr.mxu0 0.0
    %8328 = vmatpush1.msra.mxu0 0.0
    %8329 = vmatprep.subr.mxu0 0.0
    %8330 = vmatpush1.msra.mxu0 0.0
    %8331 = vmatprep.subr.mxu0 0.0
    %8332 = vmatpush1.msra.mxu0 0.0
    %8333 = vmatprep.subr.mxu0 0.0
    %8334 = vmatpush1.msra.mxu0 0.0
    %8335 = vmatprep.subr.mxu0 0.0
    %8336 = vmatpush1.msra.mxu0 0.0
    %8337 = vmatprep.subr.mxu0 0.0
    %8338 = vmatpush1.msra.mxu0 0.0
    %8339 = vmatprep.subr.mxu0 0.0
    %8340 = vmatpush1.msra.mxu0 0.0
    %8341 = vmatprep.subr.mxu0 0.0
    %8342 = vmatpush1.msra.mxu0 0.0
    %8343 = vmatprep.subr.mxu0 0.0
    %8344 = vmatpush1.msra.mxu0 0.0
    %8345 = vmatprep.subr.mxu0 0.0
    %8346 = vmatpush1.msra.mxu0 0.0
    %8347 = vmatprep.subr.mxu0 0.0
    %8348 = vmatpush1.msra.mxu0 0.0
    %8349 = vmatprep.subr.mxu0 0.0
    %8350 = vmatpush1.msra.mxu0 0.0
    %8351 = vmatprep.subr.mxu0 0.0
    %8352 = vmatpush1.msra.mxu0 0.0
    %8353 = vmatprep.subr.mxu0 0.0
    %8354 = vmatpush1.msra.mxu0 0.0
    %8355 = vmatprep.subr.mxu0 0.0
    %8356 = vmatpush1.msra.mxu0 0.0
    %8357 = vmatprep.subr.mxu0 0.0
    %8358 = vmatpush1.msra.mxu0 0.0
    %8359 = vmatprep.subr.mxu0 0.0
    %8360 = vmatpush1.msra.mxu0 0.0
    %8361 = vmatprep.subr.mxu0 0.0
    %8362 = vmatpush1.msra.mxu0 0.0
    %8363 = vmatprep.subr.mxu0 0.0
    %8364 = vmatpush1.msra.mxu0 0.0
    %8365 = vmatprep.subr.mxu0 0.0
    %8366 = vmatpush1.msra.mxu0 0.0
    %8367 = vmatprep.subr.mxu0 0.0
    %8368 = vmatpush1.msra.mxu0 0.0
    %8369 = vmatprep.subr.mxu0 0.0
    %8370 = vmatpush1.msra.mxu0 0.0
    %8371 = vmatprep.mubr.f32.mxu0 0.0
    %8372 = vmatmul.mubr.f32.gmra.mrb[0].mxu0 %v8234
    %v8373 = vpop.f32.mrb[0].mxu0
    %v8374 = vadd.f32 %v8229, %v8373
    %v8375 = vpop.f32.mrb[0].mxu0
    %8376 = vdwg.mxu0
    %v8377 = vld [vmem:[%s12] sm:$0x7]
    %v8379 = vlaneseq
    %v8380 = vshrl.u32 %v8379, 7
    %v8381 = vsub.s32 0, %v8380
    %v8382 = vrot.slane %v8377, %v8381
    %v8383 = vlaneseq
    %v8384 = vshrl.u32 %v8383, 7
    %v8385 = vsub.s32 1, %v8384
    %v8386 = vrot.slane %v8377, %v8385
    %v8387 = vlaneseq
    %v8388 = vshrl.u32 %v8387, 7
    %v8389 = vsub.s32 2, %v8388
    %v8390 = vrot.slane %v8377, %v8389
    %v8394 = vadd.f32 %v8303, %v8382
    %v8395 = vadd.f32 %v8305, %v8386
    %v8396 = vadd.f32 %v8374, %v8390
    %v8397 = vmax.f32 %v8394, 0.0
    %v8398 = vmax.f32 %v8395, 0.0
    %v8399 = vmax.f32 %v8396, 0.0
    %v8400 = vld [vmem:[%s13] sm:$0xff]
    %v8401 = vld [vmem:[%s13 + $0x8] sm:$0xff]
    %v8402 = vld [vmem:[%s13 + $0x10] sm:$0xff]
    %v8403 = vld [vmem:[%s13 + $0x18] sm:$0xff]
    %v8404 = vld [vmem:[%s13 + $0x20] sm:$0xff]
    %v8405 = vld [vmem:[%s13 + $0x28] sm:$0xff]
    %v8406 = vld [vmem:[%s13 + $0x30] sm:$0xff]
    %v8407 = vld [vmem:[%s13 + $0x38] sm:$0xff]
    %v8408 = vld [vmem:[%s13 + $0x40] sm:$0xff]
    %v8409 = vld [vmem:[%s13 + $0x48] sm:$0xff]
    %v8410 = vld [vmem:[%s13 + $0x50] sm:$0xff]
    %v8411 = vld [vmem:[%s13 + $0x58] sm:$0xff]
    %v8412 = vld [vmem:[%s13 + $0x60] sm:$0xff]
    %v8413 = vld [vmem:[%s13 + $0x68] sm:$0xff]
    %v8414 = vld [vmem:[%s13 + $0x70] sm:$0xff]
    %v8415 = vld [vmem:[%s13 + $0x78] sm:$0xff]
    %v8416 = vld [vmem:[%s13 + $0x80] sm:$0xff]
    %v8417 = vld [vmem:[%s13 + $0x88] sm:$0xff]
    %v8418 = vld [vmem:[%s13 + $0x90] sm:$0xff]
    %v8419 = vld [vmem:[%s13 + $0x98] sm:$0xff]
    %v8420 = vld [vmem:[%s13 + $0xa0] sm:$0xff]
    %v8421 = vld [vmem:[%s13 + $0xa8] sm:$0xff]
    %v8422 = vld [vmem:[%s13 + $0xb0] sm:$0xff]
    %v8423 = vld [vmem:[%s13 + $0xb8] sm:$0xff]
    %v8424 = vld [vmem:[%s13 + $0xc0] sm:$0xff]
    %v8425 = vld [vmem:[%s13 + $0xc8] sm:$0xff]
    %v8426 = vld [vmem:[%s13 + $0xd0] sm:$0xff]
    %v8427 = vld [vmem:[%s13 + $0xd8] sm:$0xff]
    %v8428 = vld [vmem:[%s13 + $0xe0] sm:$0xff]
    %v8429 = vld [vmem:[%s13 + $0xe8] sm:$0xff]
    %v8430 = vld [vmem:[%s13 + $0xf0] sm:$0xff]
    %v8431 = vld [vmem:[%s13 + $0xf8] sm:$0xff]
    %v8432 = vld [vmem:[%s13 + $0x100] sm:$0xff]
    %v8433 = vld [vmem:[%s13 + $0x108] sm:$0xff]
    %v8434 = vld [vmem:[%s13 + $0x110] sm:$0xff]
    %v8435 = vld [vmem:[%s13 + $0x118] sm:$0xff]
    %v8436 = vld [vmem:[%s13 + $0x120] sm:$0xff]
    %v8437 = vld [vmem:[%s13 + $0x128] sm:$0xff]
    %v8438 = vld [vmem:[%s13 + $0x130] sm:$0xff]
    %v8439 = vld [vmem:[%s13 + $0x138] sm:$0xff]
    %v8440 = vld [vmem:[%s13 + $0x140] sm:$0xff]
    %v8441 = vld [vmem:[%s13 + $0x148] sm:$0xff]
    %v8442 = vld [vmem:[%s13 + $0x150] sm:$0xff]
    %v8443 = vld [vmem:[%s13 + $0x158] sm:$0xff]
    %v8444 = vld [vmem:[%s13 + $0x160] sm:$0xff]
    %v8445 = vld [vmem:[%s13 + $0x168] sm:$0xff]
    %v8446 = vld [vmem:[%s13 + $0x170] sm:$0xff]
    %v8447 = vld [vmem:[%s13 + $0x178] sm:$0xff]
    %v8448 = vld [vmem:[%s14] sm:$0x1]
    %v8450 = vlaneseq
    %v8451 = vshrl.u32 %v8450, 7
    %v8452 = vsub.s32 0, %v8451
    %v8453 = vrot.slane %v8448, %v8452
    %8455 = vmatprep.subr.mxu0 0.0
    %8456 = vmatpush1.msra.mxu0 %v8400
    %8457 = vmatprep.subr.mxu0 0.0
    %8458 = vmatpush1.msra.mxu0 %v8401
    %8459 = vmatprep.subr.mxu0 0.0
    %8460 = vmatpush1.msra.mxu0 %v8402
    %8461 = vmatprep.subr.mxu0 0.0
    %8462 = vmatpush1.msra.mxu0 %v8403
    %8463 = vmatprep.subr.mxu0 0.0
    %8464 = vmatpush1.msra.mxu0 %v8404
    %8465 = vmatprep.subr.mxu0 0.0
    %8466 = vmatpush1.msra.mxu0 %v8405
    %8467 = vmatprep.subr.mxu0 0.0
    %8468 = vmatpush1.msra.mxu0 %v8406
    %8469 = vmatprep.subr.mxu0 0.0
    %8470 = vmatpush1.msra.mxu0 %v8407
    %8471 = vmatprep.subr.mxu0 0.0
    %8472 = vmatpush1.msra.mxu0 %v8408
    %8473 = vmatprep.subr.mxu0 0.0
    %8474 = vmatpush1.msra.mxu0 %v8409
    %8475 = vmatprep.subr.mxu0 0.0
    %8476 = vmatpush1.msra.mxu0 %v8410
    %8477 = vmatprep.subr.mxu0 0.0
    %8478 = vmatpush1.msra.mxu0 %v8411
    %8479 = vmatprep.subr.mxu0 0.0
    %8480 = vmatpush1.msra.mxu0 %v8412
    %8481 = vmatprep.subr.mxu0 0.0
    %8482 = vmatpush1.msra.mxu0 %v8413
    %8483 = vmatprep.subr.mxu0 0.0
    %8484 = vmatpush1.msra.mxu0 %v8414
    %8485 = vmatprep.subr.mxu0 0.0
    %8486 = vmatpush1.msra.mxu0 %v8415
    %8487 = vmatprep.subr.mxu0 0.0
    %8488 = vmatpush1.msra.mxu0 %v8416
    %8489 = vmatprep.subr.mxu0 0.0
    %8490 = vmatpush1.msra.mxu0 %v8417
    %8491 = vmatprep.subr.mxu0 0.0
    %8492 = vmatpush1.msra.mxu0 %v8418
    %8493 = vmatprep.subr.mxu0 0.0
    %8494 = vmatpush1.msra.mxu0 %v8419
    %8495 = vmatprep.subr.mxu0 0.0
    %8496 = vmatpush1.msra.mxu0 %v8420
    %8497 = vmatprep.subr.mxu0 0.0
    %8498 = vmatpush1.msra.mxu0 %v8421
    %8499 = vmatprep.subr.mxu0 0.0
    %8500 = vmatpush1.msra.mxu0 %v8422
    %8501 = vmatprep.subr.mxu0 0.0
    %8502 = vmatpush1.msra.mxu0 %v8423
    %8503 = vmatprep.subr.mxu0 0.0
    %8504 = vmatpush1.msra.mxu0 %v8424
    %8505 = vmatprep.subr.mxu0 0.0
    %8506 = vmatpush1.msra.mxu0 %v8425
    %8507 = vmatprep.subr.mxu0 0.0
    %8508 = vmatpush1.msra.mxu0 %v8426
    %8509 = vmatprep.subr.mxu0 0.0
    %8510 = vmatpush1.msra.mxu0 %v8427
    %8511 = vmatprep.subr.mxu0 0.0
    %8512 = vmatpush1.msra.mxu0 %v8428
    %8513 = vmatprep.subr.mxu0 0.0
    %8514 = vmatpush1.msra.mxu0 %v8429
    %8515 = vmatprep.subr.mxu0 0.0
    %8516 = vmatpush1.msra.mxu0 %v8430
    %8517 = vmatprep.subr.mxu0 0.0
    %8518 = vmatpush1.msra.mxu0 %v8431
    %8519 = vmatprep.mubr.f32.mxu0 %v8398
    %8520 = vmatmul.mubr.f32.gmra.mrb[0].mxu0 %v8397
    %v8521 = vpop.f32.mrb[0].mxu0
    %v8522 = vadd.f32 %v8453, %v8521
    %v8523 = vpop.f32.mrb[0].mxu0
    %8524 = vdwg.mxu0
    %8525 = vmatprep.subr.mxu0 0.0
    %8526 = vmatpush1.msra.mxu0 %v8432
    %8527 = vmatprep.subr.mxu0 0.0
    %8528 = vmatpush1.msra.mxu0 %v8433
    %8529 = vmatprep.subr.mxu0 0.0
    %8530 = vmatpush1.msra.mxu0 %v8434
    %8531 = vmatprep.subr.mxu0 0.0
    %8532 = vmatpush1.msra.mxu0 %v8435
    %8533 = vmatprep.subr.mxu0 0.0
    %8534 = vmatpush1.msra.mxu0 %v8436
    %8535 = vmatprep.subr.mxu0 0.0
    %8536 = vmatpush1.msra.mxu0 %v8437
    %8537 = vmatprep.subr.mxu0 0.0
    %8538 = vmatpush1.msra.mxu0 %v8438
    %8539 = vmatprep.subr.mxu0 0.0
    %8540 = vmatpush1.msra.mxu0 %v8439
    %8541 = vmatprep.subr.mxu0 0.0
    %8542 = vmatpush1.msra.mxu0 %v8440
    %8543 = vmatprep.subr.mxu0 0.0
    %8544 = vmatpush1.msra.mxu0 %v8441
    %8545 = vmatprep.subr.mxu0 0.0
    %8546 = vmatpush1.msra.mxu0 %v8442
    %8547 = vmatprep.subr.mxu0 0.0
    %8548 = vmatpush1.msra.mxu0 %v8443
    %8549 = vmatprep.subr.mxu0 0.0
    %8550 = vmatpush1.msra.mxu0 %v8444
    %8551 = vmatprep.subr.mxu0 0.0
    %8552 = vmatpush1.msra.mxu0 %v8445
    %8553 = vmatprep.subr.mxu0 0.0
    %8554 = vmatpush1.msra.mxu0 %v8446
    %8555 = vmatprep.subr.mxu0 0.0
    %8556 = vmatpush1.msra.mxu0 %v8447
    %8557 = vmatprep.subr.mxu0 0.0
    %8558 = vmatpush1.msra.mxu0 0.0
    %8559 = vmatprep.subr.mxu0 0.0
    %8560 = vmatpush1.msra.mxu0 0.0
    %8561 = vmatprep.subr.mxu0 0.0
    %8562 = vmatpush1.msra.mxu0 0.0
    %8563 = vmatprep.subr.mxu0 0.0
    %8564 = vmatpush1.msra.mxu0 0.0
    %8565 = vmatprep.subr.mxu0 0.0
    %8566 = vmatpush1.msra.mxu0 0.0
    %8567 = vmatprep.subr.mxu0 0.0
    %8568 = vmatpush1.msra.mxu0 0.0
    %8569 = vmatprep.subr.mxu0 0.0
    %8570 = vmatpush1.msra.mxu0 0.0
    %8571 = vmatprep.subr.mxu0 0.0
    %8572 = vmatpush1.msra.mxu0 0.0
    %8573 = vmatprep.subr.mxu0 0.0
    %8574 = vmatpush1.msra.mxu0 0.0
    %8575 = vmatprep.subr.mxu0 0.0
    %8576 = vmatpush1.msra.mxu0 0.0
    %8577 = vmatprep.subr.mxu0 0.0
    %8578 = vmatpush1.msra.mxu0 0.0
    %8579 = vmatprep.subr.mxu0 0.0
    %8580 = vmatpush1.msra.mxu0 0.0
    %8581 = vmatprep.subr.mxu0 0.0
    %8582 = vmatpush1.msra.mxu0 0.0
    %8583 = vmatprep.subr.mxu0 0.0
    %8584 = vmatpush1.msra.mxu0 0.0
    %8585 = vmatprep.subr.mxu0 0.0
    %8586 = vmatpush1.msra.mxu0 0.0
    %8587 = vmatprep.subr.mxu0 0.0
    %8588 = vmatpush1.msra.mxu0 0.0
    %8589 = vmatprep.mubr.f32.mxu0 0.0
    %8590 = vmatmul.mubr.f32.gmra.mrb[0].mxu0 %v8399
    %v8591 = vpop.f32.mrb[0].mxu0
    %v8592 = vadd.f32 %v8522, %v8591
    %v8593 = vpop.f32.mrb[0].mxu0
    %8594 = vdwg.mxu0
    %v8595 = vld [vmem:[%s15] sm:$0xff]
    %v8596 = vld [vmem:[%s15 + $0x8] sm:$0xff]
    %v8597 = vld [vmem:[%s15 + $0x10] sm:$0xff]
    %v8598 = vld [vmem:[%s15 + $0x18] sm:$0xff]
    %v8599 = vld [vmem:[%s15 + $0x20] sm:$0xff]
    %v8600 = vld [vmem:[%s15 + $0x28] sm:$0xff]
    %v8601 = vld [vmem:[%s15 + $0x30] sm:$0xff]
    %v8602 = vld [vmem:[%s15 + $0x38] sm:$0xff]
    %v8603 = vld [vmem:[%s15 + $0x40] sm:$0xff]
    %v8604 = vld [vmem:[%s15 + $0x48] sm:$0xff]
    %v8605 = vld [vmem:[%s15 + $0x50] sm:$0xff]
    %v8606 = vld [vmem:[%s15 + $0x58] sm:$0xff]
    %v8607 = vld [vmem:[%s15 + $0x60] sm:$0xff]
    %v8608 = vld [vmem:[%s15 + $0x68] sm:$0xff]
    %v8609 = vld [vmem:[%s15 + $0x70] sm:$0xff]
    %v8610 = vld [vmem:[%s15 + $0x78] sm:$0xff]
    %v8611 = vld [vmem:[%s15 + $0x80] sm:$0xff]
    %v8612 = vld [vmem:[%s15 + $0x88] sm:$0xff]
    %v8613 = vld [vmem:[%s15 + $0x90] sm:$0xff]
    %v8614 = vld [vmem:[%s15 + $0x98] sm:$0xff]
    %v8615 = vld [vmem:[%s15 + $0xa0] sm:$0xff]
    %v8616 = vld [vmem:[%s15 + $0xa8] sm:$0xff]
    %v8617 = vld [vmem:[%s15 + $0xb0] sm:$0xff]
    %v8618 = vld [vmem:[%s15 + $0xb8] sm:$0xff]
    %v8619 = vld [vmem:[%s15 + $0xc0] sm:$0xff]
    %v8620 = vld [vmem:[%s15 + $0xc8] sm:$0xff]
    %v8621 = vld [vmem:[%s15 + $0xd0] sm:$0xff]
    %v8622 = vld [vmem:[%s15 + $0xd8] sm:$0xff]
    %v8623 = vld [vmem:[%s15 + $0xe0] sm:$0xff]
    %v8624 = vld [vmem:[%s15 + $0xe8] sm:$0xff]
    %v8625 = vld [vmem:[%s15 + $0xf0] sm:$0xff]
    %v8626 = vld [vmem:[%s15 + $0xf8] sm:$0xff]
    %v8627 = vld [vmem:[%s15 + $0x100] sm:$0xff]
    %v8628 = vld [vmem:[%s15 + $0x108] sm:$0xff]
    %v8629 = vld [vmem:[%s15 + $0x110] sm:$0xff]
    %v8630 = vld [vmem:[%s15 + $0x118] sm:$0xff]
    %v8631 = vld [vmem:[%s15 + $0x120] sm:$0xff]
    %v8632 = vld [vmem:[%s15 + $0x128] sm:$0xff]
    %v8633 = vld [vmem:[%s15 + $0x130] sm:$0xff]
    %v8634 = vld [vmem:[%s15 + $0x138] sm:$0xff]
    %v8635 = vld [vmem:[%s15 + $0x140] sm:$0xff]
    %v8636 = vld [vmem:[%s15 + $0x148] sm:$0xff]
    %v8637 = vld [vmem:[%s15 + $0x150] sm:$0xff]
    %v8638 = vld [vmem:[%s15 + $0x158] sm:$0xff]
    %v8639 = vld [vmem:[%s15 + $0x160] sm:$0xff]
    %v8640 = vld [vmem:[%s15 + $0x168] sm:$0xff]
    %v8641 = vld [vmem:[%s15 + $0x170] sm:$0xff]
    %v8642 = vld [vmem:[%s15 + $0x178] sm:$0xff]
    %v8643 = vld [vmem:[%s16] sm:$0x1]
    %v8645 = vlaneseq
    %v8646 = vshrl.u32 %v8645, 7
    %v8647 = vsub.s32 0, %v8646
    %v8648 = vrot.slane %v8643, %v8647
    %8650 = vmatprep.subr.mxu0 0.0
    %8651 = vmatpush1.msra.mxu0 %v8595
    %8652 = vmatprep.subr.mxu0 0.0
    %8653 = vmatpush1.msra.mxu0 %v8596
    %8654 = vmatprep.subr.mxu0 0.0
    %8655 = vmatpush1.msra.mxu0 %v8597
    %8656 = vmatprep.subr.mxu0 0.0
    %8657 = vmatpush1.msra.mxu0 %v8598
    %8658 = vmatprep.subr.mxu0 0.0
    %8659 = vmatpush1.msra.mxu0 %v8599
    %8660 = vmatprep.subr.mxu0 0.0
    %8661 = vmatpush1.msra.mxu0 %v8600
    %8662 = vmatprep.subr.mxu0 0.0
    %8663 = vmatpush1.msra.mxu0 %v8601
    %8664 = vmatprep.subr.mxu0 0.0
    %8665 = vmatpush1.msra.mxu0 %v8602
    %8666 = vmatprep.subr.mxu0 0.0
    %8667 = vmatpush1.msra.mxu0 %v8603
    %8668 = vmatprep.subr.mxu0 0.0
    %8669 = vmatpush1.msra.mxu0 %v8604
    %8670 = vmatprep.subr.mxu0 0.0
    %8671 = vmatpush1.msra.mxu0 %v8605
    %8672 = vmatprep.subr.mxu0 0.0
    %8673 = vmatpush1.msra.mxu0 %v8606
    %8674 = vmatprep.subr.mxu0 0.0
    %8675 = vmatpush1.msra.mxu0 %v8607
    %8676 = vmatprep.subr.mxu0 0.0
    %8677 = vmatpush1.msra.mxu0 %v8608
    %8678 = vmatprep.subr.mxu0 0.0
    %8679 = vmatpush1.msra.mxu0 %v8609
    %8680 = vmatprep.subr.mxu0 0.0
    %8681 = vmatpush1.msra.mxu0 %v8610
    %8682 = vmatprep.subr.mxu0 0.0
    %8683 = vmatpush1.msra.mxu0 %v8611
    %8684 = vmatprep.subr.mxu0 0.0
    %8685 = vmatpush1.msra.mxu0 %v8612
    %8686 = vmatprep.subr.mxu0 0.0
    %8687 = vmatpush1.msra.mxu0 %v8613
    %8688 = vmatprep.subr.mxu0 0.0
    %8689 = vmatpush1.msra.mxu0 %v8614
    %8690 = vmatprep.subr.mxu0 0.0
    %8691 = vmatpush1.msra.mxu0 %v8615
    %8692 = vmatprep.subr.mxu0 0.0
    %8693 = vmatpush1.msra.mxu0 %v8616
    %8694 = vmatprep.subr.mxu0 0.0
    %8695 = vmatpush1.msra.mxu0 %v8617
    %8696 = vmatprep.subr.mxu0 0.0
    %8697 = vmatpush1.msra.mxu0 %v8618
    %8698 = vmatprep.subr.mxu0 0.0
    %8699 = vmatpush1.msra.mxu0 %v8619
    %8700 = vmatprep.subr.mxu0 0.0
    %8701 = vmatpush1.msra.mxu0 %v8620
    %8702 = vmatprep.subr.mxu0 0.0
    %8703 = vmatpush1.msra.mxu0 %v8621
    %8704 = vmatprep.subr.mxu0 0.0
    %8705 = vmatpush1.msra.mxu0 %v8622
    %8706 = vmatprep.subr.mxu0 0.0
    %8707 = vmatpush1.msra.mxu0 %v8623
    %8708 = vmatprep.subr.mxu0 0.0
    %8709 = vmatpush1.msra.mxu0 %v8624
    %8710 = vmatprep.subr.mxu0 0.0
    %8711 = vmatpush1.msra.mxu0 %v8625
    %8712 = vmatprep.subr.mxu0 0.0
    %8713 = vmatpush1.msra.mxu0 %v8626
    %8714 = vmatprep.mubr.f32.mxu0 %v8398
    %8715 = vmatmul.mubr.f32.gmra.mrb[0].mxu0 %v8397
    %v8716 = vpop.f32.mrb[0].mxu0
    %v8717 = vadd.f32 %v8648, %v8716
    %v8718 = vpop.f32.mrb[0].mxu0
    %8719 = vdwg.mxu0
    %8720 = vmatprep.subr.mxu0 0.0
    %8721 = vmatpush1.msra.mxu0 %v8627
    %8722 = vmatprep.subr.mxu0 0.0
    %8723 = vmatpush1.msra.mxu0 %v8628
    %8724 = vmatprep.subr.mxu0 0.0
    %8725 = vmatpush1.msra.mxu0 %v8629
    %8726 = vmatprep.subr.mxu0 0.0
    %8727 = vmatpush1.msra.mxu0 %v8630
    %8728 = vmatprep.subr.mxu0 0.0
    %8729 = vmatpush1.msra.mxu0 %v8631
    %8730 = vmatprep.subr.mxu0 0.0
    %8731 = vmatpush1.msra.mxu0 %v8632
    %8732 = vmatprep.subr.mxu0 0.0
    %8733 = vmatpush1.msra.mxu0 %v8633
    %8734 = vmatprep.subr.mxu0 0.0
    %8735 = vmatpush1.msra.mxu0 %v8634
    %8736 = vmatprep.subr.mxu0 0.0
    %8737 = vmatpush1.msra.mxu0 %v8635
    %8738 = vmatprep.subr.mxu0 0.0
    %8739 = vmatpush1.msra.mxu0 %v8636
    %8740 = vmatprep.subr.mxu0 0.0
    %8741 = vmatpush1.msra.mxu0 %v8637
    %8742 = vmatprep.subr.mxu0 0.0
    %8743 = vmatpush1.msra.mxu0 %v8638
    %8744 = vmatprep.subr.mxu0 0.0
    %8745 = vmatpush1.msra.mxu0 %v8639
    %8746 = vmatprep.subr.mxu0 0.0
    %8747 = vmatpush1.msra.mxu0 %v8640
    %8748 = vmatprep.subr.mxu0 0.0
    %8749 = vmatpush1.msra.mxu0 %v8641
    %8750 = vmatprep.subr.mxu0 0.0
    %8751 = vmatpush1.msra.mxu0 %v8642
    %8752 = vmatprep.subr.mxu0 0.0
    %8753 = vmatpush1.msra.mxu0 0.0
    %8754 = vmatprep.subr.mxu0 0.0
    %8755 = vmatpush1.msra.mxu0 0.0
    %8756 = vmatprep.subr.mxu0 0.0
    %8757 = vmatpush1.msra.mxu0 0.0
    %8758 = vmatprep.subr.mxu0 0.0
    %8759 = vmatpush1.msra.mxu0 0.0
    %8760 = vmatprep.subr.mxu0 0.0
    %8761 = vmatpush1.msra.mxu0 0.0
    %8762 = vmatprep.subr.mxu0 0.0
    %8763 = vmatpush1.msra.mxu0 0.0
    %8764 = vmatprep.subr.mxu0 0.0
    %8765 = vmatpush1.msra.mxu0 0.0
    %8766 = vmatprep.subr.mxu0 0.0
    %8767 = vmatpush1.msra.mxu0 0.0
    %8768 = vmatprep.subr.mxu0 0.0
    %8769 = vmatpush1.msra.mxu0 0.0
    %8770 = vmatprep.subr.mxu0 0.0
    %8771 = vmatpush1.msra.mxu0 0.0
    %8772 = vmatprep.subr.mxu0 0.0
    %8773 = vmatpush1.msra.mxu0 0.0
    %8774 = vmatprep.subr.mxu0 0.0
    %8775 = vmatpush1.msra.mxu0 0.0
    %8776 = vmatprep.subr.mxu0 0.0
    %8777 = vmatpush1.msra.mxu0 0.0
    %8778 = vmatprep.subr.mxu0 0.0
    %8779 = vmatpush1.msra.mxu0 0.0
    %8780 = vmatprep.subr.mxu0 0.0
    %8781 = vmatpush1.msra.mxu0 0.0
    %8782 = vmatprep.subr.mxu0 0.0
    %8783 = vmatpush1.msra.mxu0 0.0
    %8784 = vmatprep.mubr.f32.mxu0 0.0
    %8785 = vmatmul.mubr.f32.gmra.mrb[0].mxu0 %v8399
    %v8786 = vpop.f32.mrb[0].mxu0
    %v8787 = vadd.f32 %v8717, %v8786
    %v8788 = vpop.f32.mrb[0].mxu0
    %8789 = vdwg.mxu0
    %v8790 = vld [vmem:[%s2] sm:$0x3]
    %v8791 = vmul.f32 %v8787, 0.5
    %v8792 = vmul.f32 %v8791, 1.442695
    %v8793 = vpow.pop %v8792
    %v8794 = vmul.f32 %v8790, %v8793
    %v8795 = vadd.f32 %v8592, %v8794
    %v8796 = vld [vmem:[%s17] sm:$0xff]
    %v8797 = vld [vmem:[%s17 + $0x8] sm:$0xff]
    %v8798 = vld [vmem:[%s17 + $0x10] sm:$0xff]
    %v8799 = vld [vmem:[%s17 + $0x18] sm:$0xff]
    %v8800 = vld [vmem:[%s17 + $0x20] sm:$0xff]
    %v8801 = vld [vmem:[%s17 + $0x28] sm:$0xff]
    %v8802 = vld [vmem:[%s17 + $0x30] sm:$0xff]
    %v8803 = vld [vmem:[%s17 + $0x38] sm:$0xff]
    %v8804 = vld [vmem:[%s17 + $0x40] sm:$0xff]
    %v8805 = vld [vmem:[%s17 + $0x48] sm:$0xff]
    %v8806 = vld [vmem:[%s17 + $0x50] sm:$0xff]
    %v8807 = vld [vmem:[%s17 + $0x58] sm:$0xff]
    %v8808 = vld [vmem:[%s17 + $0x60] sm:$0xff]
    %v8809 = vld [vmem:[%s17 + $0x68] sm:$0xff]
    %v8810 = vld [vmem:[%s17 + $0x70] sm:$0xff]
    %v8811 = vld [vmem:[%s17 + $0x78] sm:$0xff]
    %v8812 = vld [vmem:[%s17 + $0x80] sm:$0xff]
    %v8813 = vld [vmem:[%s17 + $0x88] sm:$0xff]
    %v8814 = vld [vmem:[%s17 + $0x90] sm:$0xff]
    %v8815 = vld [vmem:[%s17 + $0x98] sm:$0xff]
    %v8816 = vld [vmem:[%s17 + $0xa0] sm:$0xff]
    %v8817 = vld [vmem:[%s17 + $0xa8] sm:$0xff]
    %v8818 = vld [vmem:[%s17 + $0xb0] sm:$0xff]
    %v8819 = vld [vmem:[%s17 + $0xb8] sm:$0xff]
    %v8820 = vld [vmem:[%s17 + $0xc0] sm:$0xff]
    %v8821 = vld [vmem:[%s17 + $0xc8] sm:$0xff]
    %v8822 = vld [vmem:[%s17 + $0xd0] sm:$0xff]
    %v8823 = vld [vmem:[%s17 + $0xd8] sm:$0xff]
    %v8824 = vld [vmem:[%s17 + $0xe0] sm:$0xff]
    %v8825 = vld [vmem:[%s17 + $0xe8] sm:$0xff]
    %v8826 = vld [vmem:[%s17 + $0xf0] sm:$0xff]
    %v8827 = vld [vmem:[%s17 + $0xf8] sm:$0xff]
    %v8828 = vld [vmem:[%s17 + $0x100] sm:$0xff]
    %v8829 = vld [vmem:[%s17 + $0x108] sm:$0xff]
    %v8830 = vld [vmem:[%s17 + $0x110] sm:$0xff]
    %v8831 = vld [vmem:[%s17 + $0x118] sm:$0xff]
    %v8832 = vld [vmem:[%s18] sm:$0x7]
    %v8834 = vlaneseq
    %v8835 = vshrl.u32 %v8834, 7
    %v8836 = vsub.s32 0, %v8835
    %v8837 = vrot.slane %v8832, %v8836
    %v8838 = vlaneseq
    %v8839 = vshrl.u32 %v8838, 7
    %v8840 = vsub.s32 1, %v8839
    %v8841 = vrot.slane %v8832, %v8840
    %v8842 = vlaneseq
    %v8843 = vshrl.u32 %v8842, 7
    %v8844 = vsub.s32 2, %v8843
    %v8845 = vrot.slane %v8832, %v8844
    %vm8849 = vcmask 785408
    %v8851 = vsel %vm8849, %v8795, 0
    %8853 = vmatprep.subr.mxu0 %v8797
    %8854 = vmatpush1.msra.mxu0 %v8796
    %8855 = vmatprep.subr.mxu0 %v8800
    %8856 = vmatpush1.msra.mxu0 %v8799
    %8857 = vmatprep.subr.mxu0 %v8803
    %8858 = vmatpush1.msra.mxu0 %v8802
    %8859 = vmatprep.subr.mxu0 %v8806
    %8860 = vmatpush1.msra.mxu0 %v8805
    %8861 = vmatprep.subr.mxu0 %v8809
    %8862 = vmatpush1.msra.mxu0 %v8808
    %8863 = vmatprep.subr.mxu0 %v8812
    %8864 = vmatpush1.msra.mxu0 %v8811
    %8865 = vmatprep.subr.mxu0 %v8815
    %8866 = vmatpush1.msra.mxu0 %v8814
    %8867 = vmatprep.subr.mxu0 %v8818
    %8868 = vmatpush1.msra.mxu0 %v8817
    %8869 = vmatprep.subr.mxu0 %v8821
    %8870 = vmatpush1.msra.mxu0 %v8820
    %8871 = vmatprep.subr.mxu0 %v8824
    %8872 = vmatpush1.msra.mxu0 %v8823
    %8873 = vmatprep.subr.mxu0 %v8827
    %8874 = vmatpush1.msra.mxu0 %v8826
    %8875 = vmatprep.subr.mxu0 %v8830
    %8876 = vmatpush1.msra.mxu0 %v8829
    %8877 = vmatprep.subr.mxu0 0.0
    %8878 = vmatpush1.msra.mxu0 0.0
    %8879 = vmatprep.subr.mxu0 0.0
    %8880 = vmatpush1.msra.mxu0 0.0
    %8881 = vmatprep.subr.mxu0 0.0
    %8882 = vmatpush1.msra.mxu0 0.0
    %8883 = vmatprep.subr.mxu0 0.0
    %8884 = vmatpush1.msra.mxu0 0.0
    %8885 = vmatprep.subr.mxu0 0.0
    %8886 = vmatpush1.msra.mxu0 0.0
    %8887 = vmatprep.subr.mxu0 0.0
    %8888 = vmatpush1.msra.mxu0 0.0
    %8889 = vmatprep.subr.mxu0 0.0
    %8890 = vmatpush1.msra.mxu0 0.0
    %8891 = vmatprep.subr.mxu0 0.0
    %8892 = vmatpush1.msra.mxu0 0.0
    %8893 = vmatprep.subr.mxu0 0.0
    %8894 = vmatpush1.msra.mxu0 0.0
    %8895 = vmatprep.subr.mxu0 0.0
    %8896 = vmatpush1.msra.mxu0 0.0
    %8897 = vmatprep.subr.mxu0 0.0
    %8898 = vmatpush1.msra.mxu0 0.0
    %8899 = vmatprep.subr.mxu0 0.0
    %8900 = vmatpush1.msra.mxu0 0.0
    %8901 = vmatprep.subr.mxu0 0.0
    %8902 = vmatpush1.msra.mxu0 0.0
    %8903 = vmatprep.subr.mxu0 0.0
    %8904 = vmatpush1.msra.mxu0 0.0
    %8905 = vmatprep.subr.mxu0 0.0
    %8906 = vmatpush1.msra.mxu0 0.0
    %8907 = vmatprep.subr.mxu0 0.0
    %8908 = vmatpush1.msra.mxu0 0.0
    %8909 = vmatprep.subr.mxu0 0.0
    %8910 = vmatpush1.msra.mxu0 0.0
    %8911 = vmatprep.subr.mxu0 0.0
    %8912 = vmatpush1.msra.mxu0 0.0
    %8913 = vmatprep.subr.mxu0 0.0
    %8914 = vmatpush1.msra.mxu0 0.0
    %8915 = vmatprep.subr.mxu0 0.0
    %8916 = vmatpush1.msra.mxu0 0.0
    %8917 = vmatprep.mubr.f32.mxu0 0.0
    %8918 = vmatmul.mubr.f32.gmra.mrb[0].mxu0 %v8851
    %v8919 = vpop.f32.mrb[0].mxu0
    %v8920 = vadd.f32 %v8837, %v8919
    %v8921 = vpop.f32.mrb[0].mxu0
    %v8922 = vadd.f32 %v8841, %v8921
    %8923 = vdwg.mxu0
    %8924 = vmatprep.subr.mxu0 0.0
    %8925 = vmatpush1.msra.mxu0 %v8798
    %8926 = vmatprep.subr.mxu0 0.0
    %8927 = vmatpush1.msra.mxu0 %v8801
    %8928 = vmatprep.subr.mxu0 0.0
    %8929 = vmatpush1.msra.mxu0 %v8804
    %8930 = vmatprep.subr.mxu0 0.0
    %8931 = vmatpush1.msra.mxu0 %v8807
    %8932 = vmatprep.subr.mxu0 0.0
    %8933 = vmatpush1.msra.mxu0 %v8810
    %8934 = vmatprep.subr.mxu0 0.0
    %8935 = vmatpush1.msra.mxu0 %v8813
    %8936 = vmatprep.subr.mxu0 0.0
    %8937 = vmatpush1.msra.mxu0 %v8816
    %8938 = vmatprep.subr.mxu0 0.0
    %8939 = vmatpush1.msra.mxu0 %v8819
    %8940 = vmatprep.subr.mxu0 0.0
    %8941 = vmatpush1.msra.mxu0 %v8822
    %8942 = vmatprep.subr.mxu0 0.0
    %8943 = vmatpush1.msra.mxu0 %v8825
    %8944 = vmatprep.subr.mxu0 0.0
    %8945 = vmatpush1.msra.mxu0 %v8828
    %8946 = vmatprep.subr.mxu0 0.0
    %8947 = vmatpush1.msra.mxu0 %v8831
    %8948 = vmatprep.subr.mxu0 0.0
    %8949 = vmatpush1.msra.mxu0 0.0
    %8950 = vmatprep.subr.mxu0 0.0
    %8951 = vmatpush1.msra.mxu0 0.0
    %8952 = vmatprep.subr.mxu0 0.0
    %8953 = vmatpush1.msra.mxu0 0.0
    %8954 = vmatprep.subr.mxu0 0.0
    %8955 = vmatpush1.msra.mxu0 0.0
    %8956 = vmatprep.subr.mxu0 0.0
    %8957 = vmatpush1.msra.mxu0 0.0
    %8958 = vmatprep.subr.mxu0 0.0
    %8959 = vmatpush1.msra.mxu0 0.0
    %8960 = vmatprep.subr.mxu0 0.0
    %8961 = vmatpush1.msra.mxu0 0.0
    %8962 = vmatprep.subr.mxu0 0.0
    %8963 = vmatpush1.msra.mxu0 0.0
    %8964 = vmatprep.subr.mxu0 0.0
    %8965 = vmatpush1.msra.mxu0 0.0
    %8966 = vmatprep.subr.mxu0 0.0
    %8967 = vmatpush1.msra.mxu0 0.0
    %8968 = vmatprep.subr.mxu0 0.0
    %8969 = vmatpush1.msra.mxu0 0.0
    %8970 = vmatprep.subr.mxu0 0.0
    %8971 = vmatpush1.msra.mxu0 0.0
    %8972 = vmatprep.subr.mxu0 0.0
    %8973 = vmatpush1.msra.mxu0 0.0
    %8974 = vmatprep.subr.mxu0 0.0
    %8975 = vmatpush1.msra.mxu0 0.0
    %8976 = vmatprep.subr.mxu0 0.0
    %8977 = vmatpush1.msra.mxu0 0.0
    %8978 = vmatprep.subr.mxu0 0.0
    %8979 = vmatpush1.msra.mxu0 0.0
    %8980 = vmatprep.subr.mxu0 0.0
    %8981 = vmatpush1.msra.mxu0 0.0
    %8982 = vmatprep.subr.mxu0 0.0
    %8983 = vmatpush1.msra.mxu0 0.0
    %8984 = vmatprep.subr.mxu0 0.0
    %8985 = vmatpush1.msra.mxu0 0.0
    %8986 = vmatprep.subr.mxu0 0.0
    %8987 = vmatpush1.msra.mxu0 0.0
    %8988 = vmatprep.mubr.f32.mxu0 0.0
    %8989 = vmatmul.mubr.f32.gmra.mrb[0].mxu0 %v8851
    %v8990 = vpop.f32.mrb[0].mxu0
    %v8991 = vadd.f32 %v8845, %v8990
    %v8992 = vpop.f32.mrb[0].mxu0
    %8993 = vdwg.mxu0
    %v8994 = vmax.f32 %v8920, 0.0
    %v8995 = vmax.f32 %v8922, 0.0
    %v8996 = vmax.f32 %v8991, 0.0
    %v8997 = vld [vmem:[%s19] sm:$0xff]
    %v8998 = vld [vmem:[%s19 + $0x8] sm:$0xff]
    %v8999 = vld [vmem:[%s19 + $0x10] sm:$0xff]
    %v9000 = vld [vmem:[%s19 + $0x18] sm:$0xff]
    %v9001 = vld [vmem:[%s19 + $0x20] sm:$0xff]
    %v9002 = vld [vmem:[%s19 + $0x28] sm:$0xff]
    %v9003 = vld [vmem:[%s19 + $0x30] sm:$0xff]
    %v9004 = vld [vmem:[%s19 + $0x38] sm:$0xff]
    %v9005 = vld [vmem:[%s19 + $0x40] sm:$0xff]
    %v9006 = vld [vmem:[%s19 + $0x48] sm:$0xff]
    %v9007 = vld [vmem:[%s19 + $0x50] sm:$0xff]
    %v9008 = vld [vmem:[%s19 + $0x58] sm:$0xff]
    %v9009 = vld [vmem:[%s19 + $0x60] sm:$0xff]
    %v9010 = vld [vmem:[%s19 + $0x68] sm:$0xff]
    %v9011 = vld [vmem:[%s19 + $0x70] sm:$0xff]
    %v9012 = vld [vmem:[%s19 + $0x78] sm:$0xff]
    %v9013 = vld [vmem:[%s19 + $0x80] sm:$0xff]
    %v9014 = vld [vmem:[%s19 + $0x88] sm:$0xff]
    %v9015 = vld [vmem:[%s19 + $0x90] sm:$0xff]
    %v9016 = vld [vmem:[%s19 + $0x98] sm:$0xff]
    %v9017 = vld [vmem:[%s19 + $0xa0] sm:$0xff]
    %v9018 = vld [vmem:[%s19 + $0xa8] sm:$0xff]
    %v9019 = vld [vmem:[%s19 + $0xb0] sm:$0xff]
    %v9020 = vld [vmem:[%s19 + $0xb8] sm:$0xff]
    %v9021 = vld [vmem:[%s19 + $0xc0] sm:$0xff]
    %v9022 = vld [vmem:[%s19 + $0xc8] sm:$0xff]
    %v9023 = vld [vmem:[%s19 + $0xd0] sm:$0xff]
    %v9024 = vld [vmem:[%s19 + $0xd8] sm:$0xff]
    %v9025 = vld [vmem:[%s19 + $0xe0] sm:$0xff]
    %v9026 = vld [vmem:[%s19 + $0xe8] sm:$0xff]
    %v9027 = vld [vmem:[%s19 + $0xf0] sm:$0xff]
    %v9028 = vld [vmem:[%s19 + $0xf8] sm:$0xff]
    %v9029 = vld [vmem:[%s19 + $0x100] sm:$0xff]
    %v9030 = vld [vmem:[%s19 + $0x108] sm:$0xff]
    %v9031 = vld [vmem:[%s19 + $0x110] sm:$0xff]
    %v9032 = vld [vmem:[%s19 + $0x118] sm:$0xff]
    %v9033 = vld [vmem:[%s19 + $0x120] sm:$0xff]
    %v9034 = vld [vmem:[%s19 + $0x128] sm:$0xff]
    %v9035 = vld [vmem:[%s19 + $0x130] sm:$0xff]
    %v9036 = vld [vmem:[%s19 + $0x138] sm:$0xff]
    %v9037 = vld [vmem:[%s19 + $0x140] sm:$0xff]
    %v9038 = vld [vmem:[%s19 + $0x148] sm:$0xff]
    %v9039 = vld [vmem:[%s19 + $0x150] sm:$0xff]
    %v9040 = vld [vmem:[%s19 + $0x158] sm:$0xff]
    %v9041 = vld [vmem:[%s19 + $0x160] sm:$0xff]
    %v9042 = vld [vmem:[%s19 + $0x168] sm:$0xff]
    %v9043 = vld [vmem:[%s19 + $0x170] sm:$0xff]
    %v9044 = vld [vmem:[%s19 + $0x178] sm:$0xff]
    %v9045 = vld [vmem:[%s20] sm:$0x1]
    %v9047 = vlaneseq
    %v9048 = vshrl.u32 %v9047, 7
    %v9049 = vsub.s32 0, %v9048
    %v9050 = vrot.slane %v9045, %v9049
    %9052 = vmatprep.subr.mxu0 0.0
    %9053 = vmatpush1.msra.mxu0 %v8997
    %9054 = vmatprep.subr.mxu0 0.0
    %9055 = vmatpush1.msra.mxu0 %v8998
    %9056 = vmatprep.subr.mxu0 0.0
    %9057 = vmatpush1.msra.mxu0 %v8999
    %9058 = vmatprep.subr.mxu0 0.0
    %9059 = vmatpush1.msra.mxu0 %v9000
    %9060 = vmatprep.subr.mxu0 0.0
    %9061 = vmatpush1.msra.mxu0 %v9001
    %9062 = vmatprep.subr.mxu0 0.0
    %9063 = vmatpush1.msra.mxu0 %v9002
    %9064 = vmatprep.subr.mxu0 0.0
    %9065 = vmatpush1.msra.mxu0 %v9003
    %9066 = vmatprep.subr.mxu0 0.0
    %9067 = vmatpush1.msra.mxu0 %v9004
    %9068 = vmatprep.subr.mxu0 0.0
    %9069 = vmatpush1.msra.mxu0 %v9005
    %9070 = vmatprep.subr.mxu0 0.0
    %9071 = vmatpush1.msra.mxu0 %v9006
    %9072 = vmatprep.subr.mxu0 0.0
    %9073 = vmatpush1.msra.mxu0 %v9007
    %9074 = vmatprep.subr.mxu0 0.0
    %9075 = vmatpush1.msra.mxu0 %v9008
    %9076 = vmatprep.subr.mxu0 0.0
    %9077 = vmatpush1.msra.mxu0 %v9009
    %9078 = vmatprep.subr.mxu0 0.0
    %9079 = vmatpush1.msra.mxu0 %v9010
    %9080 = vmatprep.subr.mxu0 0.0
    %9081 = vmatpush1.msra.mxu0 %v9011
    %9082 = vmatprep.subr.mxu0 0.0
    %9083 = vmatpush1.msra.mxu0 %v9012
    %9084 = vmatprep.subr.mxu0 0.0
    %9085 = vmatpush1.msra.mxu0 %v9013
    %9086 = vmatprep.subr.mxu0 0.0
    %9087 = vmatpush1.msra.mxu0 %v9014
    %9088 = vmatprep.subr.mxu0 0.0
    %9089 = vmatpush1.msra.mxu0 %v9015
    %9090 = vmatprep.subr.mxu0 0.0
    %9091 = vmatpush1.msra.mxu0 %v9016
    %9092 = vmatprep.subr.mxu0 0.0
    %9093 = vmatpush1.msra.mxu0 %v9017
    %9094 = vmatprep.subr.mxu0 0.0
    %9095 = vmatpush1.msra.mxu0 %v9018
    %9096 = vmatprep.subr.mxu0 0.0
    %9097 = vmatpush1.msra.mxu0 %v9019
    %9098 = vmatprep.subr.mxu0 0.0
    %9099 = vmatpush1.msra.mxu0 %v9020
    %9100 = vmatprep.subr.mxu0 0.0
    %9101 = vmatpush1.msra.mxu0 %v9021
    %9102 = vmatprep.subr.mxu0 0.0
    %9103 = vmatpush1.msra.mxu0 %v9022
    %9104 = vmatprep.subr.mxu0 0.0
    %9105 = vmatpush1.msra.mxu0 %v9023
    %9106 = vmatprep.subr.mxu0 0.0
    %9107 = vmatpush1.msra.mxu0 %v9024
    %9108 = vmatprep.subr.mxu0 0.0
    %9109 = vmatpush1.msra.mxu0 %v9025
    %9110 = vmatprep.subr.mxu0 0.0
    %9111 = vmatpush1.msra.mxu0 %v9026
    %9112 = vmatprep.subr.mxu0 0.0
    %9113 = vmatpush1.msra.mxu0 %v9027
    %9114 = vmatprep.subr.mxu0 0.0
    %9115 = vmatpush1.msra.mxu0 %v9028
    %9116 = vmatprep.mubr.f32.mxu0 %v8995
    %9117 = vmatmul.mubr.f32.gmra.mrb[0].mxu0 %v8994
    %v9118 = vpop.f32.mrb[0].mxu0
    %v9119 = vadd.f32 %v9050, %v9118
    %v9120 = vpop.f32.mrb[0].mxu0
    %9121 = vdwg.mxu0
    %9122 = vmatprep.subr.mxu0 0.0
    %9123 = vmatpush1.msra.mxu0 %v9029
    %9124 = vmatprep.subr.mxu0 0.0
    %9125 = vmatpush1.msra.mxu0 %v9030
    %9126 = vmatprep.subr.mxu0 0.0
    %9127 = vmatpush1.msra.mxu0 %v9031
    %9128 = vmatprep.subr.mxu0 0.0
    %9129 = vmatpush1.msra.mxu0 %v9032
    %9130 = vmatprep.subr.mxu0 0.0
    %9131 = vmatpush1.msra.mxu0 %v9033
    %9132 = vmatprep.subr.mxu0 0.0
    %9133 = vmatpush1.msra.mxu0 %v9034
    %9134 = vmatprep.subr.mxu0 0.0
    %9135 = vmatpush1.msra.mxu0 %v9035
    %9136 = vmatprep.subr.mxu0 0.0
    %9137 = vmatpush1.msra.mxu0 %v9036
    %9138 = vmatprep.subr.mxu0 0.0
    %9139 = vmatpush1.msra.mxu0 %v9037
    %9140 = vmatprep.subr.mxu0 0.0
    %9141 = vmatpush1.msra.mxu0 %v9038
    %9142 = vmatprep.subr.mxu0 0.0
    %9143 = vmatpush1.msra.mxu0 %v9039
    %9144 = vmatprep.subr.mxu0 0.0
    %9145 = vmatpush1.msra.mxu0 %v9040
    %9146 = vmatprep.subr.mxu0 0.0
    %9147 = vmatpush1.msra.mxu0 %v9041
    %9148 = vmatprep.subr.mxu0 0.0
    %9149 = vmatpush1.msra.mxu0 %v9042
    %9150 = vmatprep.subr.mxu0 0.0
    %9151 = vmatpush1.msra.mxu0 %v9043
    %9152 = vmatprep.subr.mxu0 0.0
    %9153 = vmatpush1.msra.mxu0 %v9044
    %9154 = vmatprep.subr.mxu0 0.0
    %9155 = vmatpush1.msra.mxu0 0.0
    %9156 = vmatprep.subr.mxu0 0.0
    %9157 = vmatpush1.msra.mxu0 0.0
    %9158 = vmatprep.subr.mxu0 0.0
    %9159 = vmatpush1.msra.mxu0 0.0
    %9160 = vmatprep.subr.mxu0 0.0
    %9161 = vmatpush1.msra.mxu0 0.0
    %9162 = vmatprep.subr.mxu0 0.0
    %9163 = vmatpush1.msra.mxu0 0.0
    %9164 = vmatprep.subr.mxu0 0.0
    %9165 = vmatpush1.msra.mxu0 0.0
    %9166 = vmatprep.subr.mxu0 0.0
    %9167 = vmatpush1.msra.mxu0 0.0
    %9168 = vmatprep.subr.mxu0 0.0
    %9169 = vmatpush1.msra.mxu0 0.0
    %9170 = vmatprep.subr.mxu0 0.0
    %9171 = vmatpush1.msra.mxu0 0.0
    %9172 = vmatprep.subr.mxu0 0.0
    %9173 = vmatpush1.msra.mxu0 0.0
    %9174 = vmatprep.subr.mxu0 0.0
    %9175 = vmatpush1.msra.mxu0 0.0
    %9176 = vmatprep.subr.mxu0 0.0
    %9177 = vmatpush1.msra.mxu0 0.0
    %9178 = vmatprep.subr.mxu0 0.0
    %9179 = vmatpush1.msra.mxu0 0.0
    %9180 = vmatprep.subr.mxu0 0.0
    %9181 = vmatpush1.msra.mxu0 0.0
    %9182 = vmatprep.subr.mxu0 0.0
    %9183 = vmatpush1.msra.mxu0 0.0
    %9184 = vmatprep.subr.mxu0 0.0
    %9185 = vmatpush1.msra.mxu0 0.0
    %9186 = vmatprep.mubr.f32.mxu0 0.0
    %9187 = vmatmul.mubr.f32.gmra.mrb[0].mxu0 %v8996
    %v9188 = vpop.f32.mrb[0].mxu0
    %v9189 = vadd.f32 %v9119, %v9188
    %v9190 = vpop.f32.mrb[0].mxu0
    %9191 = vdwg.mxu0
    %vm9192 = vcmask 91136
    %9193 = vst.msk [vmem:[#allocation4] sm:$0x3] %vm9192, %v9189
    %vm9194 = vcmask 779264
    %9195 = vst.msk [vmem:[#allocation6] sm:$0x3] %vm9194, %v8592
    %9196 = vst.msk [vmem:[#allocation8] sm:$0x3] %vm9194, %v8787
    %vm9197 = vcmask 254976
    %9198 = vst.msk [vmem:[#allocation9] sm:$0x3] %vm9197, %v7760
    // Predicated region
    $region86: #{tpu_custom_call.1} parent=1 // pred_check
      _
    $region87: #{tpu_custom_call.1} parent=1 // pred_check_branch
      %9200 = sbr.rel (0) target = $region89
    $region88: #{tpu_custom_call.1} parent=1 // pred_region
      %s9202 = ssub.s32 32, 32
      %9203 = vsyncadd [#allocation5], %s9202
      %s9205 = sshll.u32 [#allocation4], 4
      %s9206 = int_to_ptr.vmem [resolvable:$true] %s9205
      %9208 = dma.vmem_to_hbm [thread:$0]  %s9206, 32, %s21, [#allocation5]
    $region89: #{tpu_custom_call.1} parent=1 // pred_fallthru
      _
    // Predicated region
    $region90: #{tpu_custom_call.1} parent=1 // pred_check
      _
    $region91: #{tpu_custom_call.1} parent=1 // pred_check_branch
      %9210 = sbr.rel (0) target = $region93
    $region92: #{tpu_custom_call.1} parent=1 // pred_region
      %s9212 = ssub.s32 32, 32
      %9213 = vsyncadd [#allocation7], %s9212
      %s9215 = sshll.u32 [#allocation6], 4
      %s9216 = int_to_ptr.vmem [resolvable:$true] %s9215
      %9218 = dma.vmem_to_hbm [thread:$0]  %s9216, 32, %s22, [#allocation7]
    $region93: #{tpu_custom_call.1} parent=1 // pred_fallthru
      _
    // Predicated region
    $region94: #{tpu_custom_call.1} parent=1 // pred_check
      _
    $region95: #{tpu_custom_call.1} parent=1 // pred_check_branch
      %9220 = sbr.rel (0) target = $region97
    $region96: #{tpu_custom_call.1} parent=1 // pred_region
      %s9222 = ssub.s32 32, 32
      %9223 = vsyncadd [#allocation7], %s9222
      %s9225 = sshll.u32 [#allocation8], 4
      %s9226 = int_to_ptr.vmem [resolvable:$true] %s9225
      %9228 = dma.vmem_to_hbm [thread:$0]  %s9226, 32, %s23, [#allocation7]
    $region97: #{tpu_custom_call.1} parent=1 // pred_fallthru
      _
    // Predicated region
    $region98: #{tpu_custom_call.1} parent=1 // pred_check
      _
    $region99: #{tpu_custom_call.1} parent=1 // pred_check_branch
      %9230 = sbr.rel (0) target = $region101
    $region100: #{tpu_custom_call.1} parent=1 // pred_region
      %s9232 = ssub.s32 32, 32
      %9233 = vsyncadd [#allocation10], %s9232
      %s9235 = sshll.u32 [#allocation9], 4
      %s9236 = int_to_ptr.vmem [resolvable:$true] %s9235
      %9238 = dma.vmem_to_hbm [thread:$0]  %s9236, 32, %s24, [#allocation10]
    $region101: #{tpu_custom_call.1} parent=1 // pred_fallthru
      _
    // Predicated region
    $region102: #{tpu_custom_call.1} parent=1 // pred_check
      _
    $region103: #{tpu_custom_call.1} parent=1 // pred_check_branch
      %9240 = sbr.rel (0) target = $region105
    $region104: #{tpu_custom_call.1} parent=1 // pred_region
      %9241 = dma.done [#allocation5], 32
    $region105: #{tpu_custom_call.1} parent=1 // pred_fallthru
      _
    // Predicated region
    $region106: #{tpu_custom_call.1} parent=1 // pred_check
      _
    $region107: #{tpu_custom_call.1} parent=1 // pred_check_branch
      %9243 = sbr.rel (0) target = $region109
    $region108: #{tpu_custom_call.1} parent=1 // pred_region
      %9244 = dma.done [#allocation7], 32
    $region109: #{tpu_custom_call.1} parent=1 // pred_fallthru
      _
    // Predicated region
    $region110: #{tpu_custom_call.1} parent=1 // pred_check
      _
    $region111: #{tpu_custom_call.1} parent=1 // pred_check_branch
      %9246 = sbr.rel (0) target = $region113
    $region112: #{tpu_custom_call.1} parent=1 // pred_region
      %9247 = dma.done [#allocation7], 32
    $region113: #{tpu_custom_call.1} parent=1 // pred_fallthru
      _
    // Predicated region
    $region114: #{tpu_custom_call.1} parent=1 // pred_check
      _
    $region115: #{tpu_custom_call.1} parent=1 // pred_check_branch
      %9249 = sbr.rel (0) target = $region117
    $region116: #{tpu_custom_call.1} parent=1 // pred_region
      %9250 = dma.done [#allocation10], 32
    $region117: #{tpu_custom_call.1} parent=1 // pred_fallthru
      _
    %9251 = vsyncpa [#allocation5], 1
    %9252 = vsyncpa [#allocation7], 1
    %9253 = vsyncpa [#allocation10], 1

</llo_original>
